<compile_context>
chip_gen: v7x
topology: tpu7x:2x2x1
jax: 0.10.0
libtpu: 0.0.40
codegen_flags: <defaults>
</compile_context>

<pallas_src>
import jax
import jax.numpy as jnp
from jax.experimental import pallas as pl
from jax.experimental.pallas import tpu as pltpu

EPS = 1e-5
LANE = 128
CONV_CHANNELS = (32, 64, 128)
VMEM_LIMIT = 48 * 1024 * 1024


def _choose_tm(m, target=512):
    """Largest divisor of m that is a multiple of 8 and <= target; else full m."""
    best = None
    for t in range(8, min(m, target) + 1, 8):
        if m % t == 0:
            best = t
    return best if best is not None else m


# ---------------------------------------------------------------------------
# Pass 1: tiled bf16 matmul + per-tile column sum / sum-of-squares
# ---------------------------------------------------------------------------
def _matmul_stats_kernel(x_ref, w_ref, y_ref, s_ref, ss_ref):
    y = jnp.dot(x_ref[...], w_ref[...], preferred_element_type=jnp.float32)
    y_ref[...] = y
    s_ref[...] = jnp.broadcast_to(jnp.sum(y, axis=0, keepdims=True), s_ref.shape)
    ss_ref[...] = jnp.broadcast_to(jnp.sum(y * y, axis=0, keepdims=True), ss_ref.shape)


def matmul_with_colstats(x_bf16, w_bf16, *, tm_target=512):
    """x: (M, K) bf16, w: (K, N) bf16 -> y (M, N) f32, col_sum (N,), col_sumsq (N,)."""
    M, K = x_bf16.shape
    K2, N = w_bf16.shape
    assert K == K2
    tm = _choose_tm(M, tm_target)
    nmt = M // tm
    cost = pl.CostEstimate(
        flops=2 * M * K * N,
        transcendentals=0,
        bytes_accessed=(M * K + K * N) * 2 + M * N * 4 + 2 * nmt * 8 * N * 4,
    )
    y, s, ss = pl.pallas_call(
        _matmul_stats_kernel,
        out_shape=(
            jax.ShapeDtypeStruct((M, N), jnp.float32),
            jax.ShapeDtypeStruct((nmt * 8, N), jnp.float32),
            jax.ShapeDtypeStruct((nmt * 8, N), jnp.float32),
        ),
        grid=(nmt,),
        in_specs=[
            pl.BlockSpec((tm, K), lambda i: (i, 0)),
            pl.BlockSpec((K, N), lambda i: (0, 0)),
        ],
        out_specs=(
            pl.BlockSpec((tm, N), lambda i: (i, 0)),
            pl.BlockSpec((8, N), lambda i: (i, 0)),
            pl.BlockSpec((8, N), lambda i: (i, 0)),
        ),
        compiler_params=pltpu.CompilerParams(
            dimension_semantics=("parallel",),
            vmem_limit_bytes=VMEM_LIMIT,
        ),
        cost_estimate=cost,
    )(x_bf16, w_bf16)
    col_sum = s.reshape(nmt, 8, N)[:, 0, :].sum(axis=0)
    col_ss = ss.reshape(nmt, 8, N)[:, 0, :].sum(axis=0)
    return y, col_sum, col_ss


# ---------------------------------------------------------------------------
# Pass 2: tiled elementwise BN-apply (scale/shift) + ReLU
# ---------------------------------------------------------------------------
def _bn_relu_kernel(y_ref, scale_ref, shift_ref, o_ref):
    o_ref[...] = jnp.maximum(y_ref[...] * scale_ref[...] + shift_ref[...], 0.0)


def apply_bn_relu(y, scale_row, shift_row, *, tm_target=512):
    M, N = y.shape
    tm = _choose_tm(M, tm_target)
    nmt = M // tm
    return pl.pallas_call(
        _bn_relu_kernel,
        out_shape=jax.ShapeDtypeStruct((M, N), jnp.float32),
        grid=(nmt,),
        in_specs=[
            pl.BlockSpec((tm, N), lambda i: (i, 0)),
            pl.BlockSpec((1, N), lambda i: (0, 0)),
            pl.BlockSpec((1, N), lambda i: (0, 0)),
        ],
        out_specs=pl.BlockSpec((tm, N), lambda i: (i, 0)),
        compiler_params=pltpu.CompilerParams(
            dimension_semantics=("parallel",),
            vmem_limit_bytes=VMEM_LIMIT,
        ),
    )(y, scale_row, shift_row)


# ---------------------------------------------------------------------------
# Fused tail: fc+BN+ReLU -> proj1+BN+ReLU -> proj2 (+bias) in one kernel
# ---------------------------------------------------------------------------
def _tail_kernel(x_ref, fcw_ref, fcg_ref, fcb_ref,
                 p1w_ref, p1g_ref, p1b_ref,
                 p2w_ref, p2bias_ref, o_ref):
    def bn_relu(y, g, b):
        mean = jnp.mean(y, axis=0, keepdims=True)
        var = jnp.maximum(jnp.mean(y * y, axis=0, keepdims=True) - mean * mean, 0.0)
        y = (y - mean) * jax.lax.rsqrt(var + EPS)
        return jnp.maximum(y * g + b, 0.0)

    h = jnp.dot(x_ref[...], fcw_ref[...], preferred_element_type=jnp.float32)
    h = bn_relu(h, fcg_ref[...], fcb_ref[...])
    h = jnp.dot(h.astype(jnp.bfloat16), p1w_ref[...],
                preferred_element_type=jnp.float32)
    h = bn_relu(h, p1g_ref[...], p1b_ref[...])
    h = jnp.dot(h.astype(jnp.bfloat16), p2w_ref[...],
                preferred_element_type=jnp.float32)
    o_ref[...] = h + p2bias_ref[...]


def tail_forward(flat_bf16, prep):
    B, Kf = flat_bf16.shape
    H = prep["fc_w2"].shape[1]

    def full(shp):
        return pl.BlockSpec(shp, lambda i, _s=shp: (0,) * len(_s))

    cost = pl.CostEstimate(
        flops=2 * B * Kf * H + 4 * B * H * H,
        transcendentals=0,
        bytes_accessed=B * Kf * 2 + Kf * H * 2 + 2 * H * H * 2 + B * H * 4,
    )
    return pl.pallas_call(
        _tail_kernel,
        out_shape=jax.ShapeDtypeStruct((B, H), jnp.float32),
        grid=(1,),
        in_specs=[
            full((B, Kf)), full((Kf, H)), full((1, H)), full((1, H)),
            full((H, H)), full((1, H)), full((1, H)),
            full((H, H)), full((1, H)),
        ],
        out_specs=full((B, H)),
        compiler_params=pltpu.CompilerParams(
            dimension_semantics=("arbitrary",),
            vmem_limit_bytes=VMEM_LIMIT,
        ),
        cost_estimate=cost,
    )(flat_bf16, prep["fc_w2"], prep["fc_bn_g_row"], prep["fc_bn_b_row"],
      prep["proj1_w2"], prep["proj_bn_g_row"], prep["proj_bn_b_row"],
      prep["proj2_w2"], prep["proj2_b_row"])


# ---------------------------------------------------------------------------
# Glue: im2col for 3x3 / stride 2 / pad 1 convs on NHWC input
# ---------------------------------------------------------------------------
def im2col_nhwc_3x3_s2_p1(x_nhwc):
    B, H, W, C = x_nhwc.shape
    k, s, p = 3, 2, 1
    Ho = (H + 2 * p - k) // s + 1
    Wo = (W + 2 * p - k) // s + 1
    xp = jnp.pad(x_nhwc, ((0, 0), (p, p), (p, p), (0, 0)))
    cols = []
    for i in range(k):
        for j in range(k):
            cols.append(xp[:, i:i + s * Ho:s, j:j + s * Wo:s, :])
    patches = jnp.stack(cols, axis=3)                 # (B, Ho, Wo, 9, C), (kh,kw,C) order
    return patches.reshape(B * Ho * Wo, k * k * C), Ho, Wo


def conv_bn_relu_layer(x_nhwc, w2d_bf16, gamma_pad, beta_pad):
    B = x_nhwc.shape[0]
    patches, Ho, Wo = im2col_nhwc_3x3_s2_p1(x_nhwc)
    patches = patches.astype(jnp.bfloat16)
    M = patches.shape[0]
    y_raw, col_sum, col_ss = matmul_with_colstats(patches, w2d_bf16)
    mean = col_sum / M
    var = jnp.maximum(col_ss / M - mean * mean, 0.0)   # biased var, clamp cancellation
    scale = gamma_pad * jax.lax.rsqrt(var + EPS)
    shift = beta_pad - mean * scale
    out = apply_bn_relu(y_raw, scale.reshape(1, -1), shift.reshape(1, -1))
    return out.reshape(B, Ho, Wo, -1)


# ---------------------------------------------------------------------------
# Parameter construction (deterministic, synthetic, PyTorch layouts)
# ---------------------------------------------------------------------------
def init_params(key, input_channels, hidden_dim):
    def nrm(k, shape, scale):
        return scale * jax.random.normal(k, shape, dtype=jnp.float32)

    keys = jax.random.split(key, 12)
    p = {}
    p["conv1_w"] = nrm(keys[0], (32, input_channels, 3, 3), 0.1)
    p["conv1_b"] = nrm(keys[1], (32,), 0.05)
    p["conv2_w"] = nrm(keys[2], (64, 32, 3, 3), 0.05)
    p["conv2_b"] = nrm(keys[3], (64,), 0.05)
    p["conv3_w"] = nrm(keys[4], (128, 64, 3, 3), 0.05)
    p["conv3_b"] = nrm(keys[5], (128,), 0.05)
    p["fc_w"] = nrm(keys[6], (hidden_dim, 128 * 9 * 9), 0.01)
    p["fc_b"] = nrm(keys[7], (hidden_dim,), 0.05)
    p["proj1_w"] = nrm(keys[8], (hidden_dim, hidden_dim), 0.1)
    p["proj1_b"] = nrm(keys[9], (hidden_dim,), 0.05)
    p["proj2_w"] = nrm(keys[10], (hidden_dim, hidden_dim), 0.1)
    p["proj2_b"] = nrm(keys[11], (hidden_dim,), 0.05)
    for name, n in (("bn1", 32), ("bn2", 64), ("bn3", 128),
                    ("fc_bn", hidden_dim), ("proj_bn", hidden_dim)):
        p[f"{name}_g"] = jnp.ones((n,), jnp.float32)
        p[f"{name}_b"] = jnp.zeros((n,), jnp.float32)
    return p


def prepare_params(p, hidden_dim):
    """One-time weight layout prep: transpose to (K,N), pad N to 128 lanes, cast bf16.
    Conv / fc / proj1 biases are dropped: training-mode BatchNorm's mean subtraction
    exactly cancels a per-channel constant bias."""
    def conv_w2d(w):
        cout = w.shape[0]
        w2 = w.transpose(2, 3, 1, 0).reshape(-1, cout)      # (9*Cin, Cout), (kh,kw,Cin)
        if cout < LANE:
            w2 = jnp.pad(w2, ((0, 0), (0, LANE - cout)))
        return w2.astype(jnp.bfloat16)

    def pad_vec(v, fill):
        n = v.shape[0]
        if n < LANE:
            v = jnp.concatenate([v, jnp.full((LANE - n,), fill, v.dtype)])
        return v

    q = {}
    q["conv1_w2"] = conv_w2d(p["conv1_w"])
    q["conv2_w2"] = conv_w2d(p["conv2_w"])
    q["conv3_w2"] = conv_w2d(p["conv3_w"])
    for name in ("bn1", "bn2", "bn3"):
        q[f"{name}_g"] = pad_vec(p[f"{name}_g"], 1.0)
        q[f"{name}_b"] = pad_vec(p[f"{name}_b"], 0.0)
    # Permute fc columns from PyTorch NCHW flatten order (c*81+h*9+w) to our NHWC
    # flatten order (h*9*128 + w*128 + c), then transpose to (K, N).
    fc_w = p["fc_w"].reshape(hidden_dim, 128, 9, 9).transpose(2, 3, 1, 0)
    q["fc_w2"] = fc_w.reshape(9 * 9 * 128, hidden_dim).astype(jnp.bfloat16)
    q["proj1_w2"] = p["proj1_w"].T.astype(jnp.bfloat16)
    q["proj2_w2"] = p["proj2_w"].T.astype(jnp.bfloat16)
    q["fc_bn_g_row"] = p["fc_bn_g"].reshape(1, -1)
    q["fc_bn_b_row"] = p["fc_bn_b"].reshape(1, -1)
    q["proj_bn_g_row"] = p["proj_bn_g"].reshape(1, -1)
    q["proj_bn_b_row"] = p["proj_bn_b"].reshape(1, -1)
    q["proj2_b_row"] = p["proj2_b"].reshape(1, -1)
    return q


# ---------------------------------------------------------------------------
# Forward pass
# ---------------------------------------------------------------------------
def encoder_forward(prep, x_nchw):
    B = x_nchw.shape[0]
    h = jnp.transpose(x_nchw, (0, 2, 3, 1))               # one-time NCHW -> NHWC
    for wname, bnname, c_out in zip(("conv1_w2", "conv2_w2", "conv3_w2"),
                                    ("bn1", "bn2", "bn3"),
                                    CONV_CHANNELS):
        h = conv_bn_relu_layer(h, prep[wname], prep[f"{bnname}_g"],
                               prep[f"{bnname}_b"])
        if c_out < LANE:
            h = h[..., :c_out]                            # drop zero-padded channels
    flat = h.reshape(B, -1).astype(jnp.bfloat16)          # NHWC flatten (h, w, c)
    return tail_forward(flat, prep)


# ---------------------------------------------------------------------------
if __name__ == "__main__":
    B, C_IN, H, W = 2, 3, 72, 72       # 72 -> 36 -> 18 -> 9 matches fc (128*9*9)
    HIDDEN = 32

    key = jax.random.PRNGKey(0)
    pkey, xkey = jax.random.split(key)
    params = init_params(pkey, C_IN, HIDDEN)
    prep = prepare_params(params, HIDDEN)                 # one-time, outside jit
    x = jax.random.normal(xkey, (B, C_IN, H, W), dtype=jnp.float32)

    fwd = jax.jit(encoder_forward)
    out = jax.block_until_ready(fwd(prep, x))

    assert out.shape == (B, HIDDEN), out.shape
    assert bool(jnp.all(jnp.isfinite(out)))
    print("KERNEL_OK")
</pallas_src>

<mosaic_0001>
module attributes {stable_mosaic.version = 11 : i64} {
  func.func @_matmul_stats_kernel(%arg0: i32, %arg1: memref<432x27xbf16, #tpu.memory_space<vmem>>, %arg2: memref<27x128xbf16, #tpu.memory_space<vmem>>, %arg3: memref<432x128xf32, #tpu.memory_space<vmem>>, %arg4: memref<8x128xf32, #tpu.memory_space<vmem>>, %arg5: memref<8x128xf32, #tpu.memory_space<vmem>>) attributes {dimension_semantics = [#tpu.dimension_semantics<parallel>], iteration_bounds = array<i64: 6>, scalar_prefetch = 0 : i64, scratch_operands = 0 : i64, tpu.core_type = #tpu.core_type<tc>, window_params = [{transform_indices = @transform_0, window_bounds = array<i64: 432, 27>}, {pipeline_mode = #tpu.pipeline_mode<synchronous>, transform_indices = @transform_1, window_bounds = array<i64: 27, 128>}, {transform_indices = @transform_2, window_bounds = array<i64: 432, 128>}, {transform_indices = @transform_3, window_bounds = array<i64: 8, 128>}, {transform_indices = @transform_4, window_bounds = array<i64: 8, 128>}]} {
    %c0 = arith.constant 0 : index
    %c0_0 = arith.constant 0 : index
    %0 = vector.load %arg1[%c0, %c0_0] : memref<432x27xbf16, #tpu.memory_space<vmem>>, vector<432x27xbf16>
    %c0_1 = arith.constant 0 : index
    %c0_2 = arith.constant 0 : index
    %1 = vector.load %arg2[%c0_1, %c0_2] : memref<27x128xbf16, #tpu.memory_space<vmem>>, vector<27x128xbf16>
    %cst = arith.constant dense<0.000000e+00> : vector<432x128xf32>
    %2 = tpu.matmul %0, %1, %cst {dimension_numbers = #tpu.dot_dimension_numbers<[1], [0], [0], [1], [0, 0, 1, 1], [], []>} : vector<432x27xbf16>, vector<27x128xbf16>, vector<432x128xf32> -> vector<432x128xf32>
    %c0_3 = arith.constant 0 : index
    %c0_4 = arith.constant 0 : index
    %3 = vector.load %arg3[%c0_3, %c0_4] : memref<432x128xf32, #tpu.memory_space<vmem>>, vector<432x128xf32>
    tpu.vector_store %arg3[%c0_3, %c0_4], %2 {strides = array<i32>} : memref<432x128xf32, #tpu.memory_space<vmem>>, vector<432x128xf32>,
    %cst_5 = arith.constant dense<0.000000e+00> : vector<128xf32>
    %4 = vector.multi_reduction <add>, %2, %cst_5 [0] : vector<432x128xf32> to vector<128xf32>
    %5 = vector.shape_cast %4 : vector<128xf32> to vector<1x128xf32>
    %6 = vector.shape_cast %5 : vector<1x128xf32> to vector<1x128xf32>
    %7 = vector.broadcast %6 : vector<1x128xf32> to vector<8x128xf32>
    %c0_6 = arith.constant 0 : index
    %c0_7 = arith.constant 0 : index
    %8 = vector.load %arg4[%c0_6, %c0_7] : memref<8x128xf32, #tpu.memory_space<vmem>>, vector<8x128xf32>
    tpu.vector_store %arg4[%c0_6, %c0_7], %7 {strides = array<i32>} : memref<8x128xf32, #tpu.memory_space<vmem>>, vector<8x128xf32>,
    %9 = arith.mulf %2, %2 : vector<432x128xf32>
    %cst_8 = arith.constant dense<0.000000e+00> : vector<128xf32>
    %10 = vector.multi_reduction <add>, %9, %cst_8 [0] : vector<432x128xf32> to vector<128xf32>
    %11 = vector.shape_cast %10 : vector<128xf32> to vector<1x128xf32>
    %12 = vector.shape_cast %11 : vector<1x128xf32> to vector<1x128xf32>
    %13 = vector.broadcast %12 : vector<1x128xf32> to vector<8x128xf32>
    %c0_9 = arith.constant 0 : index
    %c0_10 = arith.constant 0 : index
    %14 = vector.load %arg5[%c0_9, %c0_10] : memref<8x128xf32, #tpu.memory_space<vmem>>, vector<8x128xf32>
    tpu.vector_store %arg5[%c0_9, %c0_10], %13 {strides = array<i32>} : memref<8x128xf32, #tpu.memory_space<vmem>>, vector<8x128xf32>,
    return
  }
  func.func @transform_0(%arg0: i32) -> (i32, i32) {
    %c0_i32 = arith.constant 0 : i32
    %c0_i32_0 = arith.constant 0 : i32
    return %arg0, %c0_i32 : i32, i32
  }
  func.func @transform_1(%arg0: i32) -> (i32, i32) {
    %c0_i32 = arith.constant 0 : i32
    %c0_i32_0 = arith.constant 0 : i32
    %c0_i32_1 = arith.constant 0 : i32
    return %c0_i32, %c0_i32_0 : i32, i32
  }
  func.func @transform_2(%arg0: i32) -> (i32, i32) {
    %c0_i32 = arith.constant 0 : i32
    %c0_i32_0 = arith.constant 0 : i32
    return %arg0, %c0_i32 : i32, i32
  }
  func.func @transform_3(%arg0: i32) -> (i32, i32) {
    %c0_i32 = arith.constant 0 : i32
    %c0_i32_0 = arith.constant 0 : i32
    return %arg0, %c0_i32 : i32, i32
  }
  func.func @transform_4(%arg0: i32) -> (i32, i32) {
    %c0_i32 = arith.constant 0 : i32
    %c0_i32_0 = arith.constant 0 : i32
    return %arg0, %c0_i32 : i32, i32
  }
}

module attributes {stable_mosaic.version = 11 : i64} {
  func.func @_bn_relu_kernel(%arg0: i32, %arg1: memref<432x128xf32, #tpu.memory_space<vmem>>, %arg2: memref<1x128xf32, #tpu.memory_space<vmem>>, %arg3: memref<1x128xf32, #tpu.memory_space<vmem>>, %arg4: memref<432x128xf32, #tpu.memory_space<vmem>>) attributes {dimension_semantics = [#tpu.dimension_semantics<parallel>], iteration_bounds = array<i64: 6>, scalar_prefetch = 0 : i64, scratch_operands = 0 : i64, tpu.core_type = #tpu.core_type<tc>, window_params = [{transform_indices = @transform_0, window_bounds = array<i64: 432, 128>}, {pipeline_mode = #tpu.pipeline_mode<synchronous>, transform_indices = @transform_1, window_bounds = array<i64: 1, 128>}, {pipeline_mode = #tpu.pipeline_mode<synchronous>, transform_indices = @transform_2, window_bounds = array<i64: 1, 128>}, {transform_indices = @transform_3, window_bounds = array<i64: 432, 128>}]} {
    %c0 = arith.constant 0 : index
    %c0_0 = arith.constant 0 : index
    %0 = vector.load %arg1[%c0, %c0_0] : memref<432x128xf32, #tpu.memory_space<vmem>>, vector<432x128xf32>
    %c0_1 = arith.constant 0 : index
    %c0_2 = arith.constant 0 : index
    %1 = vector.load %arg2[%c0_1, %c0_2] : memref<1x128xf32, #tpu.memory_space<vmem>>, vector<1x128xf32>
    %2 = vector.broadcast %1 : vector<1x128xf32> to vector<432x128xf32>
    %3 = arith.mulf %0, %2 : vector<432x128xf32>
    %c0_3 = arith.constant 0 : index
    %c0_4 = arith.constant 0 : index
    %4 = vector.load %arg3[%c0_3, %c0_4] : memref<1x128xf32, #tpu.memory_space<vmem>>, vector<1x128xf32>
    %5 = vector.broadcast %4 : vector<1x128xf32> to vector<432x128xf32>
    %6 = arith.addf %3, %5 : vector<432x128xf32>
    %cst = arith.constant 0.000000e+00 : f32
    %7 = vector.broadcast %cst : f32 to vector<432x128xf32>
    %8 = arith.maximumf %6, %7 : vector<432x128xf32>
    %c0_5 = arith.constant 0 : index
    %c0_6 = arith.constant 0 : index
    %9 = vector.load %arg4[%c0_5, %c0_6] : memref<432x128xf32, #tpu.memory_space<vmem>>, vector<432x128xf32>
    tpu.vector_store %arg4[%c0_5, %c0_6], %8 {strides = array<i32>} : memref<432x128xf32, #tpu.memory_space<vmem>>, vector<432x128xf32>,
    return
  }
  func.func @transform_0(%arg0: i32) -> (i32, i32) {
    %c0_i32 = arith.constant 0 : i32
    %c0_i32_0 = arith.constant 0 : i32
    return %arg0, %c0_i32 : i32, i32
  }
  func.func @transform_1(%arg0: i32) -> (i32, i32) {
    %c0_i32 = arith.constant 0 : i32
    %c0_i32_0 = arith.constant 0 : i32
    %c0_i32_1 = arith.constant 0 : i32
    return %c0_i32, %c0_i32_0 : i32, i32
  }
  func.func @transform_2(%arg0: i32) -> (i32, i32) {
    %c0_i32 = arith.constant 0 : i32
    %c0_i32_0 = arith.constant 0 : i32
    %c0_i32_1 = arith.constant 0 : i32
    return %c0_i32, %c0_i32_0 : i32, i32
  }
  func.func @transform_3(%arg0: i32) -> (i32, i32) {
    %c0_i32 = arith.constant 0 : i32
    %c0_i32_0 = arith.constant 0 : i32
    return %arg0, %c0_i32 : i32, i32
  }
}

module attributes {stable_mosaic.version = 11 : i64} {
  func.func @_bn_relu_kernel(%arg0: i32, %arg1: memref<216x128xf32, #tpu.memory_space<vmem>>, %arg2: memref<1x128xf32, #tpu.memory_space<vmem>>, %arg3: memref<1x128xf32, #tpu.memory_space<vmem>>, %arg4: memref<216x128xf32, #tpu.memory_space<vmem>>) attributes {dimension_semantics = [#tpu.dimension_semantics<parallel>], iteration_bounds = array<i64: 3>, scalar_prefetch = 0 : i64, scratch_operands = 0 : i64, tpu.core_type = #tpu.core_type<tc>, window_params = [{transform_indices = @transform_0, window_bounds = array<i64: 216, 128>}, {pipeline_mode = #tpu.pipeline_mode<synchronous>, transform_indices = @transform_1, window_bounds = array<i64: 1, 128>}, {pipeline_mode = #tpu.pipeline_mode<synchronous>, transform_indices = @transform_2, window_bounds = array<i64: 1, 128>}, {transform_indices = @transform_3, window_bounds = array<i64: 216, 128>}]} {
    %c0 = arith.constant 0 : index
    %c0_0 = arith.constant 0 : index
    %0 = vector.load %arg1[%c0, %c0_0] : memref<216x128xf32, #tpu.memory_space<vmem>>, vector<216x128xf32>
    %c0_1 = arith.constant 0 : index
    %c0_2 = arith.constant 0 : index
    %1 = vector.load %arg2[%c0_1, %c0_2] : memref<1x128xf32, #tpu.memory_space<vmem>>, vector<1x128xf32>
    %2 = vector.broadcast %1 : vector<1x128xf32> to vector<216x128xf32>
    %3 = arith.mulf %0, %2 : vector<216x128xf32>
    %c0_3 = arith.constant 0 : index
    %c0_4 = arith.constant 0 : index
    %4 = vector.load %arg3[%c0_3, %c0_4] : memref<1x128xf32, #tpu.memory_space<vmem>>, vector<1x128xf32>
    %5 = vector.broadcast %4 : vector<1x128xf32> to vector<216x128xf32>
    %6 = arith.addf %3, %5 : vector<216x128xf32>
    %cst = arith.constant 0.000000e+00 : f32
    %7 = vector.broadcast %cst : f32 to vector<216x128xf32>
    %8 = arith.maximumf %6, %7 : vector<216x128xf32>
    %c0_5 = arith.constant 0 : index
    %c0_6 = arith.constant 0 : index
    %9 = vector.load %arg4[%c0_5, %c0_6] : memref<216x128xf32, #tpu.memory_space<vmem>>, vector<216x128xf32>
    tpu.vector_store %arg4[%c0_5, %c0_6], %8 {strides = array<i32>} : memref<216x128xf32, #tpu.memory_space<vmem>>, vector<216x128xf32>,
    return
  }
  func.func @transform_0(%arg0: i32) -> (i32, i32) {
    %c0_i32 = arith.constant 0 : i32
    %c0_i32_0 = arith.constant 0 : i32
    return %arg0, %c0_i32 : i32, i32
  }
  func.func @transform_1(%arg0: i32) -> (i32, i32) {
    %c0_i32 = arith.constant 0 : i32
    %c0_i32_0 = arith.constant 0 : i32
    %c0_i32_1 = arith.constant 0 : i32
    return %c0_i32, %c0_i32_0 : i32, i32
  }
  func.func @transform_2(%arg0: i32) -> (i32, i32) {
    %c0_i32 = arith.constant 0 : i32
    %c0_i32_0 = arith.constant 0 : i32
    %c0_i32_1 = arith.constant 0 : i32
    return %c0_i32, %c0_i32_0 : i32, i32
  }
  func.func @transform_3(%arg0: i32) -> (i32, i32) {
    %c0_i32 = arith.constant 0 : i32
    %c0_i32_0 = arith.constant 0 : i32
    return %arg0, %c0_i32 : i32, i32
  }
}

module attributes {stable_mosaic.version = 11 : i64} {
  func.func @_matmul_stats_kernel(%arg0: i32, %arg1: memref<216x288xbf16, #tpu.memory_space<vmem>>, %arg2: memref<288x128xbf16, #tpu.memory_space<vmem>>, %arg3: memref<216x128xf32, #tpu.memory_space<vmem>>, %arg4: memref<8x128xf32, #tpu.memory_space<vmem>>, %arg5: memref<8x128xf32, #tpu.memory_space<vmem>>) attributes {dimension_semantics = [#tpu.dimension_semantics<parallel>], iteration_bounds = array<i64: 3>, scalar_prefetch = 0 : i64, scratch_operands = 0 : i64, tpu.core_type = #tpu.core_type<tc>, window_params = [{transform_indices = @transform_0, window_bounds = array<i64: 216, 288>}, {pipeline_mode = #tpu.pipeline_mode<synchronous>, transform_indices = @transform_1, window_bounds = array<i64: 288, 128>}, {transform_indices = @transform_2, window_bounds = array<i64: 216, 128>}, {transform_indices = @transform_3, window_bounds = array<i64: 8, 128>}, {transform_indices = @transform_4, window_bounds = array<i64: 8, 128>}]} {
    %c0 = arith.constant 0 : index
    %c0_0 = arith.constant 0 : index
    %0 = vector.load %arg1[%c0, %c0_0] : memref<216x288xbf16, #tpu.memory_space<vmem>>, vector<216x288xbf16>
    %c0_1 = arith.constant 0 : index
    %c0_2 = arith.constant 0 : index
    %1 = vector.load %arg2[%c0_1, %c0_2] : memref<288x128xbf16, #tpu.memory_space<vmem>>, vector<288x128xbf16>
    %cst = arith.constant dense<0.000000e+00> : vector<216x128xf32>
    %2 = tpu.matmul %0, %1, %cst {dimension_numbers = #tpu.dot_dimension_numbers<[1], [0], [0], [1], [0, 0, 1, 1], [], []>} : vector<216x288xbf16>, vector<288x128xbf16>, vector<216x128xf32> -> vector<216x128xf32>
    %c0_3 = arith.constant 0 : index
    %c0_4 = arith.constant 0 : index
    %3 = vector.load %arg3[%c0_3, %c0_4] : memref<216x128xf32, #tpu.memory_space<vmem>>, vector<216x128xf32>
    tpu.vector_store %arg3[%c0_3, %c0_4], %2 {strides = array<i32>} : memref<216x128xf32, #tpu.memory_space<vmem>>, vector<216x128xf32>,
    %cst_5 = arith.constant dense<0.000000e+00> : vector<128xf32>
    %4 = vector.multi_reduction <add>, %2, %cst_5 [0] : vector<216x128xf32> to vector<128xf32>
    %5 = vector.shape_cast %4 : vector<128xf32> to vector<1x128xf32>
    %6 = vector.shape_cast %5 : vector<1x128xf32> to vector<1x128xf32>
    %7 = vector.broadcast %6 : vector<1x128xf32> to vector<8x128xf32>
    %c0_6 = arith.constant 0 : index
    %c0_7 = arith.constant 0 : index
    %8 = vector.load %arg4[%c0_6, %c0_7] : memref<8x128xf32, #tpu.memory_space<vmem>>, vector<8x128xf32>
    tpu.vector_store %arg4[%c0_6, %c0_7], %7 {strides = array<i32>} : memref<8x128xf32, #tpu.memory_space<vmem>>, vector<8x128xf32>,
    %9 = arith.mulf %2, %2 : vector<216x128xf32>
    %cst_8 = arith.constant dense<0.000000e+00> : vector<128xf32>
    %10 = vector.multi_reduction <add>, %9, %cst_8 [0] : vector<216x128xf32> to vector<128xf32>
    %11 = vector.shape_cast %10 : vector<128xf32> to vector<1x128xf32>
    %12 = vector.shape_cast %11 : vector<1x128xf32> to vector<1x128xf32>
    %13 = vector.broadcast %12 : vector<1x128xf32> to vector<8x128xf32>
    %c0_9 = arith.constant 0 : index
    %c0_10 = arith.constant 0 : index
    %14 = vector.load %arg5[%c0_9, %c0_10] : memref<8x128xf32, #tpu.memory_space<vmem>>, vector<8x128xf32>
    tpu.vector_store %arg5[%c0_9, %c0_10], %13 {strides = array<i32>} : memref<8x128xf32, #tpu.memory_space<vmem>>, vector<8x128xf32>,
    return
  }
  func.func @transform_0(%arg0: i32) -> (i32, i32) {
    %c0_i32 = arith.constant 0 : i32
    %c0_i32_0 = arith.constant 0 : i32
    return %arg0, %c0_i32 : i32, i32
  }
  func.func @transform_1(%arg0: i32) -> (i32, i32) {
    %c0_i32 = arith.constant 0 : i32
    %c0_i32_0 = arith.constant 0 : i32
    %c0_i32_1 = arith.constant 0 : i32
    return %c0_i32, %c0_i32_0 : i32, i32
  }
  func.func @transform_2(%arg0: i32) -> (i32, i32) {
    %c0_i32 = arith.constant 0 : i32
    %c0_i32_0 = arith.constant 0 : i32
    return %arg0, %c0_i32 : i32, i32
  }
  func.func @transform_3(%arg0: i32) -> (i32, i32) {
    %c0_i32 = arith.constant 0 : i32
    %c0_i32_0 = arith.constant 0 : i32
    return %arg0, %c0_i32 : i32, i32
  }
  func.func @transform_4(%arg0: i32) -> (i32, i32) {
    %c0_i32 = arith.constant 0 : i32
    %c0_i32_0 = arith.constant 0 : i32
    return %arg0, %c0_i32 : i32, i32
  }
}

module attributes {stable_mosaic.version = 11 : i64} {
  func.func @_matmul_stats_kernel(%arg0: i32, %arg1: memref<162x576xbf16, #tpu.memory_space<vmem>>, %arg2: memref<576x128xbf16, #tpu.memory_space<vmem>>, %arg3: memref<162x128xf32, #tpu.memory_space<vmem>>, %arg4: memref<8x128xf32, #tpu.memory_space<vmem>>, %arg5: memref<8x128xf32, #tpu.memory_space<vmem>>) attributes {dimension_semantics = [#tpu.dimension_semantics<parallel>], iteration_bounds = array<i64: 1>, scalar_prefetch = 0 : i64, scratch_operands = 0 : i64, tpu.core_type = #tpu.core_type<tc>, window_params = [{transform_indices = @transform_0, window_bounds = array<i64: 162, 576>}, {pipeline_mode = #tpu.pipeline_mode<synchronous>, transform_indices = @transform_1, window_bounds = array<i64: 576, 128>}, {transform_indices = @transform_2, window_bounds = array<i64: 162, 128>}, {transform_indices = @transform_3, window_bounds = array<i64: 8, 128>}, {transform_indices = @transform_4, window_bounds = array<i64: 8, 128>}]} {
    %c0 = arith.constant 0 : index
    %c0_0 = arith.constant 0 : index
    %0 = vector.load %arg1[%c0, %c0_0] : memref<162x576xbf16, #tpu.memory_space<vmem>>, vector<162x576xbf16>
    %c0_1 = arith.constant 0 : index
    %c0_2 = arith.constant 0 : index
    %1 = vector.load %arg2[%c0_1, %c0_2] : memref<576x128xbf16, #tpu.memory_space<vmem>>, vector<576x128xbf16>
    %cst = arith.constant dense<0.000000e+00> : vector<162x128xf32>
    %2 = tpu.matmul %0, %1, %cst {dimension_numbers = #tpu.dot_dimension_numbers<[1], [0], [0], [1], [0, 0, 1, 1], [], []>} : vector<162x576xbf16>, vector<576x128xbf16>, vector<162x128xf32> -> vector<162x128xf32>
    %c0_3 = arith.constant 0 : index
    %c0_4 = arith.constant 0 : index
    %3 = vector.load %arg3[%c0_3, %c0_4] : memref<162x128xf32, #tpu.memory_space<vmem>>, vector<162x128xf32>
    tpu.vector_store %arg3[%c0_3, %c0_4], %2 {strides = array<i32>} : memref<162x128xf32, #tpu.memory_space<vmem>>, vector<162x128xf32>,
    %cst_5 = arith.constant dense<0.000000e+00> : vector<128xf32>
    %4 = vector.multi_reduction <add>, %2, %cst_5 [0] : vector<162x128xf32> to vector<128xf32>
    %5 = vector.shape_cast %4 : vector<128xf32> to vector<1x128xf32>
    %6 = vector.shape_cast %5 : vector<1x128xf32> to vector<1x128xf32>
    %7 = vector.broadcast %6 : vector<1x128xf32> to vector<8x128xf32>
    %c0_6 = arith.constant 0 : index
    %c0_7 = arith.constant 0 : index
    %8 = vector.load %arg4[%c0_6, %c0_7] : memref<8x128xf32, #tpu.memory_space<vmem>>, vector<8x128xf32>
    tpu.vector_store %arg4[%c0_6, %c0_7], %7 {strides = array<i32>} : memref<8x128xf32, #tpu.memory_space<vmem>>, vector<8x128xf32>,
    %9 = arith.mulf %2, %2 : vector<162x128xf32>
    %cst_8 = arith.constant dense<0.000000e+00> : vector<128xf32>
    %10 = vector.multi_reduction <add>, %9, %cst_8 [0] : vector<162x128xf32> to vector<128xf32>
    %11 = vector.shape_cast %10 : vector<128xf32> to vector<1x128xf32>
    %12 = vector.shape_cast %11 : vector<1x128xf32> to vector<1x128xf32>
    %13 = vector.broadcast %12 : vector<1x128xf32> to vector<8x128xf32>
    %c0_9 = arith.constant 0 : index
    %c0_10 = arith.constant 0 : index
    %14 = vector.load %arg5[%c0_9, %c0_10] : memref<8x128xf32, #tpu.memory_space<vmem>>, vector<8x128xf32>
    tpu.vector_store %arg5[%c0_9, %c0_10], %13 {strides = array<i32>} : memref<8x128xf32, #tpu.memory_space<vmem>>, vector<8x128xf32>,
    return
  }
  func.func @transform_0(%arg0: i32) -> (i32, i32) {
    %c0_i32 = arith.constant 0 : i32
    %c0_i32_0 = arith.constant 0 : i32
    return %arg0, %c0_i32 : i32, i32
  }
  func.func @transform_1(%arg0: i32) -> (i32, i32) {
    %c0_i32 = arith.constant 0 : i32
    %c0_i32_0 = arith.constant 0 : i32
    %c0_i32_1 = arith.constant 0 : i32
    return %c0_i32, %c0_i32_0 : i32, i32
  }
  func.func @transform_2(%arg0: i32) -> (i32, i32) {
    %c0_i32 = arith.constant 0 : i32
    %c0_i32_0 = arith.constant 0 : i32
    return %arg0, %c0_i32 : i32, i32
  }
  func.func @transform_3(%arg0: i32) -> (i32, i32) {
    %c0_i32 = arith.constant 0 : i32
    %c0_i32_0 = arith.constant 0 : i32
    return %arg0, %c0_i32 : i32, i32
  }
  func.func @transform_4(%arg0: i32) -> (i32, i32) {
    %c0_i32 = arith.constant 0 : i32
    %c0_i32_0 = arith.constant 0 : i32
    return %arg0, %c0_i32 : i32, i32
  }
}

module attributes {stable_mosaic.version = 11 : i64} {
  func.func @_bn_relu_kernel(%arg0: i32, %arg1: memref<162x128xf32, #tpu.memory_space<vmem>>, %arg2: memref<1x128xf32, #tpu.memory_space<vmem>>, %arg3: memref<1x128xf32, #tpu.memory_space<vmem>>, %arg4: memref<162x128xf32, #tpu.memory_space<vmem>>) attributes {dimension_semantics = [#tpu.dimension_semantics<parallel>], iteration_bounds = array<i64: 1>, scalar_prefetch = 0 : i64, scratch_operands = 0 : i64, tpu.core_type = #tpu.core_type<tc>, window_params = [{transform_indices = @transform_0, window_bounds = array<i64: 162, 128>}, {pipeline_mode = #tpu.pipeline_mode<synchronous>, transform_indices = @transform_1, window_bounds = array<i64: 1, 128>}, {pipeline_mode = #tpu.pipeline_mode<synchronous>, transform_indices = @transform_2, window_bounds = array<i64: 1, 128>}, {transform_indices = @transform_3, window_bounds = array<i64: 162, 128>}]} {
    %c0 = arith.constant 0 : index
    %c0_0 = arith.constant 0 : index
    %0 = vector.load %arg1[%c0, %c0_0] : memref<162x128xf32, #tpu.memory_space<vmem>>, vector<162x128xf32>
    %c0_1 = arith.constant 0 : index
    %c0_2 = arith.constant 0 : index
    %1 = vector.load %arg2[%c0_1, %c0_2] : memref<1x128xf32, #tpu.memory_space<vmem>>, vector<1x128xf32>
    %2 = vector.broadcast %1 : vector<1x128xf32> to vector<162x128xf32>
    %3 = arith.mulf %0, %2 : vector<162x128xf32>
    %c0_3 = arith.constant 0 : index
    %c0_4 = arith.constant 0 : index
    %4 = vector.load %arg3[%c0_3, %c0_4] : memref<1x128xf32, #tpu.memory_space<vmem>>, vector<1x128xf32>
    %5 = vector.broadcast %4 : vector<1x128xf32> to vector<162x128xf32>
    %6 = arith.addf %3, %5 : vector<162x128xf32>
    %cst = arith.constant 0.000000e+00 : f32
    %7 = vector.broadcast %cst : f32 to vector<162x128xf32>
    %8 = arith.maximumf %6, %7 : vector<162x128xf32>
    %c0_5 = arith.constant 0 : index
    %c0_6 = arith.constant 0 : index
    %9 = vector.load %arg4[%c0_5, %c0_6] : memref<162x128xf32, #tpu.memory_space<vmem>>, vector<162x128xf32>
    tpu.vector_store %arg4[%c0_5, %c0_6], %8 {strides = array<i32>} : memref<162x128xf32, #tpu.memory_space<vmem>>, vector<162x128xf32>,
    return
  }
  func.func @transform_0(%arg0: i32) -> (i32, i32) {
    %c0_i32 = arith.constant 0 : i32
    %c0_i32_0 = arith.constant 0 : i32
    return %arg0, %c0_i32 : i32, i32
  }
  func.func @transform_1(%arg0: i32) -> (i32, i32) {
    %c0_i32 = arith.constant 0 : i32
    %c0_i32_0 = arith.constant 0 : i32
    %c0_i32_1 = arith.constant 0 : i32
    return %c0_i32, %c0_i32_0 : i32, i32
  }
  func.func @transform_2(%arg0: i32) -> (i32, i32) {
    %c0_i32 = arith.constant 0 : i32
    %c0_i32_0 = arith.constant 0 : i32
    %c0_i32_1 = arith.constant 0 : i32
    return %c0_i32, %c0_i32_0 : i32, i32
  }
  func.func @transform_3(%arg0: i32) -> (i32, i32) {
    %c0_i32 = arith.constant 0 : i32
    %c0_i32_0 = arith.constant 0 : i32
    return %arg0, %c0_i32 : i32, i32
  }
}

module attributes {stable_mosaic.version = 11 : i64} {
  func.func @_tail_kernel(%arg0: i32, %arg1: memref<2x10368xbf16, #tpu.memory_space<vmem>>, %arg2: memref<10368x32xbf16, #tpu.memory_space<vmem>>, %arg3: memref<1x32xf32, #tpu.memory_space<vmem>>, %arg4: memref<1x32xf32, #tpu.memory_space<vmem>>, %arg5: memref<32x32xbf16, #tpu.memory_space<vmem>>, %arg6: memref<1x32xf32, #tpu.memory_space<vmem>>, %arg7: memref<1x32xf32, #tpu.memory_space<vmem>>, %arg8: memref<32x32xbf16, #tpu.memory_space<vmem>>, %arg9: memref<1x32xf32, #tpu.memory_space<vmem>>, %arg10: memref<2x32xf32, #tpu.memory_space<vmem>>) attributes {dimension_semantics = [#tpu.dimension_semantics<arbitrary>], iteration_bounds = array<i64: 1>, scalar_prefetch = 0 : i64, scratch_operands = 0 : i64, tpu.core_type = #tpu.core_type<tc>, window_params = [{pipeline_mode = #tpu.pipeline_mode<synchronous>, transform_indices = @transform_0, window_bounds = array<i64: 2, 10368>}, {pipeline_mode = #tpu.pipeline_mode<synchronous>, transform_indices = @transform_1, window_bounds = array<i64: 10368, 32>}, {pipeline_mode = #tpu.pipeline_mode<synchronous>, transform_indices = @transform_2, window_bounds = array<i64: 1, 32>}, {pipeline_mode = #tpu.pipeline_mode<synchronous>, transform_indices = @transform_3, window_bounds = array<i64: 1, 32>}, {pipeline_mode = #tpu.pipeline_mode<synchronous>, transform_indices = @transform_4, window_bounds = array<i64: 32, 32>}, {pipeline_mode = #tpu.pipeline_mode<synchronous>, transform_indices = @transform_5, window_bounds = array<i64: 1, 32>}, {pipeline_mode = #tpu.pipeline_mode<synchronous>, transform_indices = @transform_6, window_bounds = array<i64: 1, 32>}, {pipeline_mode = #tpu.pipeline_mode<synchronous>, transform_indices = @transform_7, window_bounds = array<i64: 32, 32>}, {pipeline_mode = #tpu.pipeline_mode<synchronous>, transform_indices = @transform_8, window_bounds = array<i64: 1, 32>}, {pipeline_mode = #tpu.pipeline_mode<synchronous>, transform_indices = @transform_9, window_bounds = array<i64: 2, 32>}]} {
    %c0 = arith.constant 0 : index
    %c0_0 = arith.constant 0 : index
    %0 = vector.load %arg1[%c0, %c0_0] : memref<2x10368xbf16, #tpu.memory_space<vmem>>, vector<2x10368xbf16>
    %c0_1 = arith.constant 0 : index
    %c0_2 = arith.constant 0 : index
    %1 = vector.load %arg2[%c0_1, %c0_2] : memref<10368x32xbf16, #tpu.memory_space<vmem>>, vector<10368x32xbf16>
    %cst = arith.constant dense<0.000000e+00> : vector<2x32xf32>
    %2 = tpu.matmul %0, %1, %cst {dimension_numbers = #tpu.dot_dimension_numbers<[1], [0], [0], [1], [0, 0, 1, 1], [], []>} : vector<2x10368xbf16>, vector<10368x32xbf16>, vector<2x32xf32> -> vector<2x32xf32>
    %c0_3 = arith.constant 0 : index
    %c0_4 = arith.constant 0 : index
    %3 = vector.load %arg3[%c0_3, %c0_4] : memref<1x32xf32, #tpu.memory_space<vmem>>, vector<1x32xf32>
    %c0_5 = arith.constant 0 : index
    %c0_6 = arith.constant 0 : index
    %4 = vector.load %arg4[%c0_5, %c0_6] : memref<1x32xf32, #tpu.memory_space<vmem>>, vector<1x32xf32>
    %cst_7 = arith.constant dense<0.000000e+00> : vector<32xf32>
    %5 = vector.multi_reduction <add>, %2, %cst_7 [0] : vector<2x32xf32> to vector<32xf32>
    %6 = vector.shape_cast %5 : vector<32xf32> to vector<1x32xf32>
    %cst_8 = arith.constant 2.000000e+00 : f32
    %7 = vector.broadcast %cst_8 : f32 to vector<1x32xf32>
    %8 = arith.divf %6, %7 : vector<1x32xf32>
    %9 = arith.mulf %2, %2 : vector<2x32xf32>
    %cst_9 = arith.constant dense<0.000000e+00> : vector<32xf32>
    %10 = vector.multi_reduction <add>, %9, %cst_9 [0] : vector<2x32xf32> to vector<32xf32>
    %11 = vector.shape_cast %10 : vector<32xf32> to vector<1x32xf32>
    %cst_10 = arith.constant 2.000000e+00 : f32
    %12 = vector.broadcast %cst_10 : f32 to vector<1x32xf32>
    %13 = arith.divf %11, %12 : vector<1x32xf32>
    %14 = arith.mulf %8, %8 : vector<1x32xf32>
    %15 = arith.subf %13, %14 : vector<1x32xf32>
    %cst_11 = arith.constant 0.000000e+00 : f32
    %16 = vector.broadcast %cst_11 : f32 to vector<1x32xf32>
    %17 = arith.maximumf %15, %16 : vector<1x32xf32>
    %18 = vector.broadcast %8 : vector<1x32xf32> to vector<2x32xf32>
    %19 = arith.subf %2, %18 : vector<2x32xf32>
    %cst_12 = arith.constant 9.99999974E-6 : f32
    %20 = vector.broadcast %cst_12 : f32 to vector<1x32xf32>
    %21 = arith.addf %17, %20 : vector<1x32xf32>
    %22 = math.rsqrt %21 : vector<1x32xf32>
    %23 = vector.broadcast %22 : vector<1x32xf32> to vector<2x32xf32>
    %24 = arith.mulf %19, %23 : vector<2x32xf32>
    %25 = vector.broadcast %3 : vector<1x32xf32> to vector<2x32xf32>
    %26 = arith.mulf %24, %25 : vector<2x32xf32>
    %27 = vector.broadcast %4 : vector<1x32xf32> to vector<2x32xf32>
    %28 = arith.addf %26, %27 : vector<2x32xf32>
    %cst_13 = arith.constant 0.000000e+00 : f32
    %29 = vector.broadcast %cst_13 : f32 to vector<2x32xf32>
    %30 = arith.maximumf %28, %29 : vector<2x32xf32>
    %31 = arith.truncf %30 : vector<2x32xf32> to vector<2x32xbf16>
    %c0_14 = arith.constant 0 : index
    %c0_15 = arith.constant 0 : index
    %32 = vector.load %arg5[%c0_14, %c0_15] : memref<32x32xbf16, #tpu.memory_space<vmem>>, vector<32x32xbf16>
    %cst_16 = arith.constant dense<0.000000e+00> : vector<2x32xf32>
    %33 = tpu.matmul %31, %32, %cst_16 {dimension_numbers = #tpu.dot_dimension_numbers<[1], [0], [0], [1], [0, 0, 1, 1], [], []>} : vector<2x32xbf16>, vector<32x32xbf16>, vector<2x32xf32> -> vector<2x32xf32>
    %c0_17 = arith.constant 0 : index
    %c0_18 = arith.constant 0 : index
    %34 = vector.load %arg6[%c0_17, %c0_18] : memref<1x32xf32, #tpu.memory_space<vmem>>, vector<1x32xf32>
    %c0_19 = arith.constant 0 : index
    %c0_20 = arith.constant 0 : index
    %35 = vector.load %arg7[%c0_19, %c0_20] : memref<1x32xf32, #tpu.memory_space<vmem>>, vector<1x32xf32>
    %cst_21 = arith.constant dense<0.000000e+00> : vector<32xf32>
    %36 = vector.multi_reduction <add>, %33, %cst_21 [0] : vector<2x32xf32> to vector<32xf32>
    %37 = vector.shape_cast %36 : vector<32xf32> to vector<1x32xf32>
    %cst_22 = arith.constant 2.000000e+00 : f32
    %38 = vector.broadcast %cst_22 : f32 to vector<1x32xf32>
    %39 = arith.divf %37, %38 : vector<1x32xf32>
    %40 = arith.mulf %33, %33 : vector<2x32xf32>
    %cst_23 = arith.constant dense<0.000000e+00> : vector<32xf32>
    %41 = vector.multi_reduction <add>, %40, %cst_23 [0] : vector<2x32xf32> to vector<32xf32>
    %42 = vector.shape_cast %41 : vector<32xf32> to vector<1x32xf32>
    %cst_24 = arith.constant 2.000000e+00 : f32
    %43 = vector.broadcast %cst_24 : f32 to vector<1x32xf32>
    %44 = arith.divf %42, %43 : vector<1x32xf32>
    %45 = arith.mulf %39, %39 : vector<1x32xf32>
    %46 = arith.subf %44, %45 : vector<1x32xf32>
    %cst_25 = arith.constant 0.000000e+00 : f32
    %47 = vector.broadcast %cst_25 : f32 to vector<1x32xf32>
    %48 = arith.maximumf %46, %47 : vector<1x32xf32>
    %49 = vector.broadcast %39 : vector<1x32xf32> to vector<2x32xf32>
    %50 = arith.subf %33, %49 : vector<2x32xf32>
    %cst_26 = arith.constant 9.99999974E-6 : f32
    %51 = vector.broadcast %cst_26 : f32 to vector<1x32xf32>
    %52 = arith.addf %48, %51 : vector<1x32xf32>
    %53 = math.rsqrt %52 : vector<1x32xf32>
    %54 = vector.broadcast %53 : vector<1x32xf32> to vector<2x32xf32>
    %55 = arith.mulf %50, %54 : vector<2x32xf32>
    %56 = vector.broadcast %34 : vector<1x32xf32> to vector<2x32xf32>
    %57 = arith.mulf %55, %56 : vector<2x32xf32>
    %58 = vector.broadcast %35 : vector<1x32xf32> to vector<2x32xf32>
    %59 = arith.addf %57, %58 : vector<2x32xf32>
    %cst_27 = arith.constant 0.000000e+00 : f32
    %60 = vector.broadcast %cst_27 : f32 to vector<2x32xf32>
    %61 = arith.maximumf %59, %60 : vector<2x32xf32>
    %62 = arith.truncf %61 : vector<2x32xf32> to vector<2x32xbf16>
    %c0_28 = arith.constant 0 : index
    %c0_29 = arith.constant 0 : index
    %63 = vector.load %arg8[%c0_28, %c0_29] : memref<32x32xbf16, #tpu.memory_space<vmem>>, vector<32x32xbf16>
    %cst_30 = arith.constant dense<0.000000e+00> : vector<2x32xf32>
    %64 = tpu.matmul %62, %63, %cst_30 {dimension_numbers = #tpu.dot_dimension_numbers<[1], [0], [0], [1], [0, 0, 1, 1], [], []>} : vector<2x32xbf16>, vector<32x32xbf16>, vector<2x32xf32> -> vector<2x32xf32>
    %c0_31 = arith.constant 0 : index
    %c0_32 = arith.constant 0 : index
    %65 = vector.load %arg9[%c0_31, %c0_32] : memref<1x32xf32, #tpu.memory_space<vmem>>, vector<1x32xf32>
    %66 = vector.broadcast %65 : vector<1x32xf32> to vector<2x32xf32>
    %67 = arith.addf %64, %66 : vector<2x32xf32>
    %c0_33 = arith.constant 0 : index
    %c0_34 = arith.constant 0 : index
    %68 = vector.load %arg10[%c0_33, %c0_34] : memref<2x32xf32, #tpu.memory_space<vmem>>, vector<2x32xf32>
    tpu.vector_store %arg10[%c0_33, %c0_34], %67 {strides = array<i32>} : memref<2x32xf32, #tpu.memory_space<vmem>>, vector<2x32xf32>,
    return
  }
  func.func @transform_0(%arg0: i32) -> (i32, i32) {
    %c0_i32 = arith.constant 0 : i32
    %c0_i32_0 = arith.constant 0 : i32
    %c0_i32_1 = arith.constant 0 : i32
    return %c0_i32, %c0_i32_0 : i32, i32
  }
  func.func @transform_1(%arg0: i32) -> (i32, i32) {
    %c0_i32 = arith.constant 0 : i32
    %c0_i32_0 = arith.constant 0 : i32
    %c0_i32_1 = arith.constant 0 : i32
    return %c0_i32, %c0_i32_0 : i32, i32
  }
  func.func @transform_2(%arg0: i32) -> (i32, i32) {
    %c0_i32 = arith.constant 0 : i32
    %c0_i32_0 = arith.constant 0 : i32
    %c0_i32_1 = arith.constant 0 : i32
    return %c0_i32, %c0_i32_0 : i32, i32
  }
  func.func @transform_3(%arg0: i32) -> (i32, i32) {
    %c0_i32 = arith.constant 0 : i32
    %c0_i32_0 = arith.constant 0 : i32
    %c0_i32_1 = arith.constant 0 : i32
    return %c0_i32, %c0_i32_0 : i32, i32
  }
  func.func @transform_4(%arg0: i32) -> (i32, i32) {
    %c0_i32 = arith.constant 0 : i32
    %c0_i32_0 = arith.constant 0 : i32
    %c0_i32_1 = arith.constant 0 : i32
    return %c0_i32, %c0_i32_0 : i32, i32
  }
  func.func @transform_5(%arg0: i32) -> (i32, i32) {
    %c0_i32 = arith.constant 0 : i32
    %c0_i32_0 = arith.constant 0 : i32
    %c0_i32_1 = arith.constant 0 : i32
    return %c0_i32, %c0_i32_0 : i32, i32
  }
  func.func @transform_6(%arg0: i32) -> (i32, i32) {
    %c0_i32 = arith.constant 0 : i32
    %c0_i32_0 = arith.constant 0 : i32
    %c0_i32_1 = arith.constant 0 : i32
    return %c0_i32, %c0_i32_0 : i32, i32
  }
  func.func @transform_7(%arg0: i32) -> (i32, i32) {
    %c0_i32 = arith.constant 0 : i32
    %c0_i32_0 = arith.constant 0 : i32
    %c0_i32_1 = arith.constant 0 : i32
    return %c0_i32, %c0_i32_0 : i32, i32
  }
  func.func @transform_8(%arg0: i32) -> (i32, i32) {
    %c0_i32 = arith.constant 0 : i32
    %c0_i32_0 = arith.constant 0 : i32
    %c0_i32_1 = arith.constant 0 : i32
    return %c0_i32, %c0_i32_0 : i32, i32
  }
  func.func @transform_9(%arg0: i32) -> (i32, i32) {
    %c0_i32 = arith.constant 0 : i32
    %c0_i32_0 = arith.constant 0 : i32
    %c0_i32_1 = arith.constant 0 : i32
    return %c0_i32, %c0_i32_0 : i32, i32
  }
}

</mosaic_0001>

<llo_original>
// kernel: encoder_forward.7
$region0: #{encoder_forward.7}
  #allocation0 [shape = 'u32[]', space=smem, size = 0x4, offset = 0x4, fixed_abs, tag = 'smem constant byte address 0x4 - core index']
  #allocation1 [shape = 'u32[144,128]{1,0:T(1,128)}', space=vmem, size = 0x12000, scoped, tag = 'internal scratch']
  %s0 = inlined_call_operand.vmem [shape: bf16[2592,27], index: 0, kind: input, shape index: {}]
  %s1 = inlined_call_operand.vmem [shape: bf16[27,128], index: 1, kind: input, shape index: {}]
  %s2 = inlined_call_operand.vmem [shape: f32[2592,128], index: 2, kind: output, shape index: {0}]
  %s3 = inlined_call_operand.vmem [shape: f32[48,128], index: 3, kind: output, shape index: {1}]
  %s4 = inlined_call_operand.vmem [shape: f32[48,128], index: 4, kind: output, shape index: {2}]
  %5 = xla_tuple %s2, %s3, %s4
  %s6 = sld [smem:[#allocation0]]
  $region57: #{encoder_forward.7} parent=0
    _
  %s8 = ssub.s32 1, %s6
  %s9 = scalar_select 0, %s8, %s6
  loop: start=0, step=1, limit=8
  $region2: #{encoder_forward.7} parent=0 // loop_pre_header
    _
  $region3: #{encoder_forward.7} parent=0 // loop_header
    %s11 = sphi 0, %s15
    %p12 = scmp.ge.s32.totalorder %s11, 8
    %s21 = sphi 0, %s23
    %s24 = sphi 0, %s21
    %s25 = sphi 0, %s24
    %s41 = sphi 0, %s25
    %s45 = sphi 0, %s45
    %s47 = sphi 0, %s45
    %s48 = sphi 0, %s47
    %s62 = sphi 0, %s48
    %s68 = sphi 0, %s70
    %s71 = sphi 0, %s68
    %s72 = sphi 0, %s71
    %s88 = sphi 0, %s72
    %s94 = sphi 0, %s96
    %s97 = sphi 0, %s94
    %s98 = sphi 0, %s97
    %s114 = sphi 0, %s98
    %s120 = sphi 0, %s122
    %s123 = sphi 0, %s120
    %s124 = sphi 0, %s123
    %s140 = sphi 0, %s124
  $region4: #{encoder_forward.7} parent=0 // loop_header_branch
    %14 = sbr.rel (%p12) target = $region8
  $region5: #{encoder_forward.7} parent=0 // loop_body
    %s16 = ssub.s32 %s11, 1
    %s17 = ssub.s32 %s11, 2
    %s18 = sadd.s32 %s11, 1
    %s19 = ssub.s32 %s11, %s18
    %p20 = scmp.eq.s32.totalorder %s19, 0
    %s22 = sadd.s32 %s21, 1
    %s23 = scalar_select %p20, %s21, %s22
    %p26 = pneg %p20
    %p27 = scmp.eq.s32.totalorder %s11, 5
    %p28 = por %p26, %p27
    %p29 = scmp.ne.s32.totalorder %s21, %s24
    %p30 = scmp.eq.s32.totalorder %s11, 0
    %p31 = por %p29, %p30
    %p32 = scmp.ne.s32.totalorder %s21, %s24
    %p33 = scmp.eq.s32.totalorder %s16, 5
    %p34 = por %p32, %p33
    %p35 = scmp.ne.s32.totalorder %s24, %s25
    %p36 = scmp.eq.s32.totalorder %s16, 0
    %p37 = por %p35, %p36
    %p38 = scmp.ne.s32.totalorder %s24, %s25
    %p39 = scmp.eq.s32.totalorder %s17, 5
    %p40 = por %p38, %p39
    %p42 = scmp.ne.s32.totalorder %s25, %s41
    %p43 = scmp.eq.s32.totalorder %s17, 0
    %p44 = por %p42, %p43
    %s46 = sadd.s32 %s45, 1
    %p49 = scmp.eq.s32.totalorder %s11, 5
    %p50 = scmp.ne.s32.totalorder %s45, %s47
    %p51 = scmp.eq.s32.totalorder %s11, 0
    %p52 = por %p50, %p51
    %p53 = scmp.ne.s32.totalorder %s45, %s47
    %p54 = scmp.eq.s32.totalorder %s16, 5
    %p55 = por %p53, %p54
    %p56 = scmp.ne.s32.totalorder %s47, %s48
    %p57 = scmp.eq.s32.totalorder %s16, 0
    %p58 = por %p56, %p57
    %p59 = scmp.ne.s32.totalorder %s47, %s48
    %p60 = scmp.eq.s32.totalorder %s17, 5
    %p61 = por %p59, %p60
    %p63 = scmp.ne.s32.totalorder %s48, %s62
    %p64 = scmp.eq.s32.totalorder %s17, 0
    %p65 = por %p63, %p64
    %s66 = ssub.s32 %s11, %s18
    %p67 = scmp.eq.s32.totalorder %s66, 0
    %s69 = sadd.s32 %s68, 1
    %s70 = scalar_select %p67, %s68, %s69
    %p73 = pneg %p67
    %p74 = scmp.eq.s32.totalorder %s11, 5
    %p75 = por %p73, %p74
    %p76 = scmp.ne.s32.totalorder %s68, %s71
    %p77 = scmp.eq.s32.totalorder %s11, 0
    %p78 = por %p76, %p77
    %p79 = scmp.ne.s32.totalorder %s68, %s71
    %p80 = scmp.eq.s32.totalorder %s16, 5
    %p81 = por %p79, %p80
    %p82 = scmp.ne.s32.totalorder %s71, %s72
    %p83 = scmp.eq.s32.totalorder %s16, 0
    %p84 = por %p82, %p83
    %p85 = scmp.ne.s32.totalorder %s71, %s72
    %p86 = scmp.eq.s32.totalorder %s17, 5
    %p87 = por %p85, %p86
    %p89 = scmp.ne.s32.totalorder %s72, %s88
    %p90 = scmp.eq.s32.totalorder %s17, 0
    %p91 = por %p89, %p90
    %s92 = ssub.s32 %s11, %s18
    %p93 = scmp.eq.s32.totalorder %s92, 0
    %s95 = sadd.s32 %s94, 1
    %s96 = scalar_select %p93, %s94, %s95
    %p99 = pneg %p93
    %p100 = scmp.eq.s32.totalorder %s11, 5
    %p101 = por %p99, %p100
    %p102 = scmp.ne.s32.totalorder %s94, %s97
    %p103 = scmp.eq.s32.totalorder %s11, 0
    %p104 = por %p102, %p103
    %p105 = scmp.ne.s32.totalorder %s94, %s97
    %p106 = scmp.eq.s32.totalorder %s16, 5
    %p107 = por %p105, %p106
    %p108 = scmp.ne.s32.totalorder %s97, %s98
    %p109 = scmp.eq.s32.totalorder %s16, 0
    %p110 = por %p108, %p109
    %p111 = scmp.ne.s32.totalorder %s97, %s98
    %p112 = scmp.eq.s32.totalorder %s17, 5
    %p113 = por %p111, %p112
    %p115 = scmp.ne.s32.totalorder %s98, %s114
    %p116 = scmp.eq.s32.totalorder %s17, 0
    %p117 = por %p115, %p116
    %s118 = ssub.s32 %s11, %s18
    %p119 = scmp.eq.s32.totalorder %s118, 0
    %s121 = sadd.s32 %s120, 1
    %s122 = scalar_select %p119, %s120, %s121
    %p125 = pneg %p119
    %p126 = scmp.eq.s32.totalorder %s11, 5
    %p127 = por %p125, %p126
    %p128 = scmp.ne.s32.totalorder %s120, %s123
    %p129 = scmp.eq.s32.totalorder %s11, 0
    %p130 = por %p128, %p129
    %p131 = scmp.ne.s32.totalorder %s120, %s123
    %p132 = scmp.eq.s32.totalorder %s16, 5
    %p133 = por %p131, %p132
    %p134 = scmp.ne.s32.totalorder %s123, %s124
    %p135 = scmp.eq.s32.totalorder %s16, 0
    %p136 = por %p134, %p135
    %p137 = scmp.ne.s32.totalorder %s123, %s124
    %p138 = scmp.eq.s32.totalorder %s17, 5
    %p139 = por %p137, %p138
    %p141 = scmp.ne.s32.totalorder %s124, %s140
    %p142 = scmp.eq.s32.totalorder %s17, 0
    %p143 = por %p141, %p142
    %p144 = scmp.le.s32.totalorder 1, %s11
    %p145 = scmp.lt.s32.totalorder %s11, 7
    %p146 = pnand %p144, %p145
    %p147 = pneg %p146
    // Predicated region
    $region9: #{encoder_forward.7} parent=5 // pred_check
      _
    $region10: #{encoder_forward.7} parent=5 // pred_check_branch
      %149 = sbr.rel (%p146) target = $region12
    $region11: #{encoder_forward.7} parent=5 // pred_region
      %s150 = ssub.s32 %s11, 1
      // Predicated region
      $region13: #{encoder_forward.7} parent=11 // pred_check
        %p151 = pneg %p58
      $region14: #{encoder_forward.7} parent=11 // pred_check_branch
        %153 = sbr.rel (%p151) target = $region16
      $region15: #{encoder_forward.7} parent=11 // pred_region
        _
      $region16: #{encoder_forward.7} parent=11 // pred_fallthru
        _
    $region12: #{encoder_forward.7} parent=5 // pred_fallthru
      _
    %p154 = scmp.lt.s32.totalorder %s11, 6
    // Predicated region
    $region17: #{encoder_forward.7} parent=5 // pred_check
      %p155 = pneg %p154
    $region18: #{encoder_forward.7} parent=5 // pred_check_branch
      %157 = sbr.rel (%p155) target = $region20
    $region19: #{encoder_forward.7} parent=5 // pred_region
      // Predicated region
      $region21: #{encoder_forward.7} parent=19 // pred_check
        %p158 = pneg %p31
      $region22: #{encoder_forward.7} parent=19 // pred_check_branch
        %160 = sbr.rel (%p158) target = $region24
      $region23: #{encoder_forward.7} parent=19 // pred_region
        %s161 = smul.u32 54, %s11
        %p162 = scmp.lt.s32.totalorder %s161, 323
        %s163 = scalar_select %p162, %s161, 323
        %s164 = smul.addr %s163, 4
        %s165 = scalar_lea.vmem %s0, %s164
        %s166 = smul.u32 54, %s11
      $region24: #{encoder_forward.7} parent=19 // pred_fallthru
        _
    $region20: #{encoder_forward.7} parent=5 // pred_fallthru
      _
    %p167 = scmp.le.s32.totalorder 1, %s11
    %p168 = scmp.lt.s32.totalorder %s11, 7
    %p169 = pnand %p167, %p168
    %p170 = pneg %p169
    // Predicated region
    $region25: #{encoder_forward.7} parent=5 // pred_check
      _
    $region26: #{encoder_forward.7} parent=5 // pred_check_branch
      %172 = sbr.rel (%p169) target = $region28
    $region27: #{encoder_forward.7} parent=5 // pred_region
      %s173 = ssub.s32 %s11, 1
      %s174 = smul.u32 54, %s16
      %p175 = scmp.lt.s32.totalorder %s174, 323
      %s176 = scalar_select %p175, %s174, 323
      %s177 = smul.addr %s176, 4
      %s178 = scalar_lea.vmem %s0, %s177
      %p179 = pneg %p37
      %p180 = pneg %p34
      %p181 = pneg %p58
      %p182 = pneg %p55
      %p183 = pneg %p84
      %p184 = pneg %p81
      %s185 = smul.u32 54, %s16
      %p186 = scmp.lt.s32.totalorder %s185, 323
      %s187 = scalar_select %p186, %s185, 323
      %s188 = smul.addr %s187, 8
      %s189 = scalar_lea.vmem %s2, %s188
      %p190 = pneg %p110
      %p191 = pneg %p107
      %p192 = scmp.lt.s32.totalorder %s16, 5
      %s193 = scalar_select %p192, %s16, 5
      %s194 = smul.addr %s193, 8
      %s195 = scalar_lea.vmem %s3, %s194
      %p196 = pneg %p136
      %p197 = pneg %p133
      %p198 = scmp.lt.s32.totalorder %s16, 5
      %s199 = scalar_select %p198, %s16, 5
      %s200 = smul.addr %s199, 8
      %s201 = scalar_lea.vmem %s4, %s200
      %s202 = smul.u32 54, %s16
      %p203 = scmp.lt.s32.totalorder %s202, 323
      %s204 = scalar_select %p203, %s202, 323
      %s205 = smul.addr %s204, 4
      %s206 = scalar_lea.vmem %s0, %s205
      %s207 = smul.u32 54, %s16
      %s208 = smul.u32 54, %s16
      %p209 = scmp.lt.s32.totalorder %s208, 323
      %s210 = scalar_select %p209, %s208, 323
      %s211 = smul.addr %s210, 8
      %s212 = scalar_lea.vmem %s2, %s211
      %s213 = smul.u32 54, %s16
      %p214 = scmp.lt.s32.totalorder %s16, 5
      %s215 = scalar_select %p214, %s16, 5
      %s216 = smul.addr %s215, 8
      %s217 = scalar_lea.vmem %s3, %s216
      %p218 = scmp.lt.s32.totalorder %s16, 5
      %s219 = scalar_select %p218, %s16, 5
      %s220 = smul.addr %s219, 8
      %s221 = scalar_lea.vmem %s4, %s220
      %v223 = vld [vmem:[%s206] sm:$0xf]
      %v224 = vld [vmem:[%s206 + $0x4] sm:$0xf]
      %v225 = vld [vmem:[%s206 + $0x8] sm:$0xf]
      %v226 = vld [vmem:[%s206 + $0xc] sm:$0xf]
      %v227 = vld [vmem:[%s206 + $0x10] sm:$0xf]
      %v228 = vld [vmem:[%s206 + $0x14] sm:$0xf]
      %v229 = vld [vmem:[%s206 + $0x18] sm:$0xf]
      %v230 = vld [vmem:[%s206 + $0x1c] sm:$0xf]
      %v231 = vld [vmem:[%s206 + $0x20] sm:$0xf]
      %v232 = vld [vmem:[%s206 + $0x24] sm:$0xf]
      %v233 = vld [vmem:[%s206 + $0x28] sm:$0xf]
      %v234 = vld [vmem:[%s206 + $0x2c] sm:$0xf]
      %v235 = vld [vmem:[%s206 + $0x30] sm:$0xf]
      %v236 = vld [vmem:[%s206 + $0x34] sm:$0xf]
      %v237 = vld [vmem:[%s206 + $0x38] sm:$0xf]
      %v238 = vld [vmem:[%s206 + $0x3c] sm:$0xf]
      %v239 = vld [vmem:[%s206 + $0x40] sm:$0xf]
      %v240 = vld [vmem:[%s206 + $0x44] sm:$0xf]
      %v241 = vld [vmem:[%s206 + $0x48] sm:$0xf]
      %v242 = vld [vmem:[%s206 + $0x4c] sm:$0xf]
      %v243 = vld [vmem:[%s206 + $0x50] sm:$0xf]
      %v244 = vld [vmem:[%s206 + $0x54] sm:$0xf]
      %v245 = vld [vmem:[%s206 + $0x58] sm:$0xf]
      %v246 = vld [vmem:[%s206 + $0x5c] sm:$0xf]
      %v247 = vld [vmem:[%s206 + $0x60] sm:$0xf]
      %v248 = vld [vmem:[%s206 + $0x64] sm:$0xf]
      %v249 = vld [vmem:[%s206 + $0x68] sm:$0xf]
      %v250 = vld [vmem:[%s206 + $0x6c] sm:$0xf]
      %v251 = vld [vmem:[%s206 + $0x70] sm:$0xf]
      %v252 = vld [vmem:[%s206 + $0x74] sm:$0xf]
      %v253 = vld [vmem:[%s206 + $0x78] sm:$0xf]
      %v254 = vld [vmem:[%s206 + $0x7c] sm:$0xf]
      %v255 = vld [vmem:[%s206 + $0x80] sm:$0xf]
      %v256 = vld [vmem:[%s206 + $0x84] sm:$0xf]
      %v257 = vld [vmem:[%s206 + $0x88] sm:$0xf]
      %v258 = vld [vmem:[%s206 + $0x8c] sm:$0xf]
      %v259 = vld [vmem:[%s206 + $0x90] sm:$0xf]
      %v260 = vld [vmem:[%s206 + $0x94] sm:$0xf]
      %v261 = vld [vmem:[%s206 + $0x98] sm:$0xf]
      %v262 = vld [vmem:[%s206 + $0x9c] sm:$0xf]
      %v263 = vld [vmem:[%s206 + $0xa0] sm:$0xf]
      %v264 = vld [vmem:[%s206 + $0xa4] sm:$0xf]
      %v265 = vld [vmem:[%s206 + $0xa8] sm:$0xf]
      %v266 = vld [vmem:[%s206 + $0xac] sm:$0xf]
      %v267 = vld [vmem:[%s206 + $0xb0] sm:$0xf]
      %v268 = vld [vmem:[%s206 + $0xb4] sm:$0xf]
      %v269 = vld [vmem:[%s206 + $0xb8] sm:$0xf]
      %v270 = vld [vmem:[%s206 + $0xbc] sm:$0xf]
      %v271 = vld [vmem:[%s206 + $0xc0] sm:$0xf]
      %v272 = vld [vmem:[%s206 + $0xc4] sm:$0xf]
      %v273 = vld [vmem:[%s206 + $0xc8] sm:$0xf]
      %v274 = vld [vmem:[%s206 + $0xcc] sm:$0xf]
      %v275 = vld [vmem:[%s206 + $0xd0] sm:$0xf]
      %v276 = vld [vmem:[%s206 + $0xd4] sm:$0xf]
      %v277 = vld [vmem:[%s1] sm:$0xf]
      %v278 = vld [vmem:[%s1 + $0x4] sm:$0xf]
      %v279 = vld [vmem:[%s1 + $0x8] sm:$0xf]
      %v280 = vld [vmem:[%s1 + $0xc] sm:$0x3]
      %v335 = vunpack.c.l.b16 %v223
      %v336 = vunpack.c.l.b16 %v224
      %v337 = vunpack.c.l.b16 %v225
      %v338 = vunpack.c.l.b16 %v226
      %v339 = vunpack.c.l.b16 %v227
      %v340 = vunpack.c.l.b16 %v228
      %v341 = vunpack.c.l.b16 %v229
      %v342 = vunpack.c.l.b16 %v230
      %v343 = vunpack.c.l.b16 %v231
      %v344 = vunpack.c.l.b16 %v232
      %v345 = vunpack.c.l.b16 %v233
      %v346 = vunpack.c.l.b16 %v234
      %v347 = vunpack.c.l.b16 %v235
      %v348 = vunpack.c.l.b16 %v236
      %v349 = vunpack.c.l.b16 %v237
      %v350 = vunpack.c.l.b16 %v238
      %v351 = vunpack.c.l.b16 %v239
      %v352 = vunpack.c.l.b16 %v240
      %v353 = vunpack.c.l.b16 %v241
      %v354 = vunpack.c.l.b16 %v242
      %v355 = vunpack.c.l.b16 %v243
      %v356 = vunpack.c.l.b16 %v244
      %v357 = vunpack.c.l.b16 %v245
      %v358 = vunpack.c.l.b16 %v246
      %v359 = vunpack.c.l.b16 %v247
      %v360 = vunpack.c.l.b16 %v248
      %v361 = vunpack.c.l.b16 %v249
      %v362 = vunpack.c.l.b16 %v250
      %v363 = vunpack.c.l.b16 %v251
      %v364 = vunpack.c.l.b16 %v252
      %v365 = vunpack.c.l.b16 %v253
      %v366 = vunpack.c.l.b16 %v254
      %v367 = vunpack.c.l.b16 %v255
      %v368 = vunpack.c.l.b16 %v256
      %v369 = vunpack.c.l.b16 %v257
      %v370 = vunpack.c.l.b16 %v258
      %v371 = vunpack.c.l.b16 %v259
      %v372 = vunpack.c.l.b16 %v260
      %v373 = vunpack.c.l.b16 %v261
      %v374 = vunpack.c.l.b16 %v262
      %v375 = vunpack.c.l.b16 %v263
      %v376 = vunpack.c.l.b16 %v264
      %v377 = vunpack.c.l.b16 %v265
      %v378 = vunpack.c.l.b16 %v266
      %v379 = vunpack.c.l.b16 %v267
      %v380 = vunpack.c.l.b16 %v268
      %v381 = vunpack.c.l.b16 %v269
      %v382 = vunpack.c.l.b16 %v270
      %v383 = vunpack.c.l.b16 %v271
      %v384 = vunpack.c.l.b16 %v272
      %v385 = vunpack.c.l.b16 %v273
      %v386 = vunpack.c.l.b16 %v274
      %v387 = vunpack.c.l.b16 %v275
      %v388 = vunpack.c.l.b16 %v276
      %v389 = vpack.c.b16 %v336, %v335
      %v390 = vpack.c.b16 %v338, %v337
      %v391 = vpack.c.b16 %v340, %v339
      %v392 = vpack.c.b16 %v342, %v341
      %v393 = vpack.c.b16 %v344, %v343
      %v394 = vpack.c.b16 %v346, %v345
      %v395 = vpack.c.b16 %v348, %v347
      %v396 = vpack.c.b16 %v350, %v349
      %v397 = vpack.c.b16 %v352, %v351
      %v398 = vpack.c.b16 %v354, %v353
      %v399 = vpack.c.b16 %v356, %v355
      %v400 = vpack.c.b16 %v358, %v357
      %v401 = vpack.c.b16 %v360, %v359
      %v402 = vpack.c.b16 %v362, %v361
      %v403 = vpack.c.b16 %v364, %v363
      %v404 = vpack.c.b16 %v366, %v365
      %v405 = vpack.c.b16 %v368, %v367
      %v406 = vpack.c.b16 %v370, %v369
      %v407 = vpack.c.b16 %v372, %v371
      %v408 = vpack.c.b16 %v374, %v373
      %v409 = vpack.c.b16 %v376, %v375
      %v410 = vpack.c.b16 %v378, %v377
      %v411 = vpack.c.b16 %v380, %v379
      %v412 = vpack.c.b16 %v382, %v381
      %v413 = vpack.c.b16 %v384, %v383
      %v414 = vpack.c.b16 %v386, %v385
      %v415 = vpack.c.b16 %v388, %v387
      %v420 = vunpack.c.l.b16 %v277
      %v421 = vunpack.c.l.b16 %v278
      %v422 = vunpack.c.l.b16 %v279
      %v423 = vunpack.c.l.b16 %v280
      %v424 = vpack.c.b16 %v421, %v420
      %v425 = vpack.c.b16 %v423, %v422
      %vm427 = vcmask 220160
      %v429 = vsel %vm427, %v389, 0
      %v432 = vsel %vm427, %v390, 0
      %v435 = vsel %vm427, %v391, 0
      %v438 = vsel %vm427, %v392, 0
      %v441 = vsel %vm427, %v393, 0
      %v444 = vsel %vm427, %v394, 0
      %v447 = vsel %vm427, %v395, 0
      %v450 = vsel %vm427, %v396, 0
      %v453 = vsel %vm427, %v397, 0
      %v456 = vsel %vm427, %v398, 0
      %v459 = vsel %vm427, %v399, 0
      %v462 = vsel %vm427, %v400, 0
      %v465 = vsel %vm427, %v401, 0
      %v468 = vsel %vm427, %v402, 0
      %v471 = vsel %vm427, %v403, 0
      %v474 = vsel %vm427, %v404, 0
      %v477 = vsel %vm427, %v405, 0
      %v480 = vsel %vm427, %v406, 0
      %v483 = vsel %vm427, %v407, 0
      %v486 = vsel %vm427, %v408, 0
      %v489 = vsel %vm427, %v409, 0
      %v492 = vsel %vm427, %v410, 0
      %v495 = vsel %vm427, %v411, 0
      %v498 = vsel %vm427, %v412, 0
      %v501 = vsel %vm427, %v413, 0
      %v504 = vsel %vm427, %v414, 0
      %v507 = vsel %vm427, %v415, 0
      %vm509 = vcmask 1044480
      %vm510 = vcmask 1045504
      %v511 = vsel %vm509, 4294967295, 65535
      %v512 = vsel %vm510, %v511, 0
      %v514 = vand.u32 %v425, %v512
      %516 = vmatprep.subr.bf16.mxu0 0
      %517 = vmatpush1.bf16.msra.mxu0 %v424
      %518 = vmatprep.subr.bf16.mxu0 0
      %519 = vmatpush1.bf16.msra.mxu0 %v514
      %520 = vmatprep.subr.bf16.mxu0 0
      %521 = vmatpush1.bf16.msra.mxu0 0
      %522 = vmatprep.subr.bf16.mxu0 0
      %523 = vmatpush1.bf16.msra.mxu0 0
      %524 = vmatprep.subr.bf16.mxu0 0
      %525 = vmatpush1.bf16.msra.mxu0 0
      %526 = vmatprep.subr.bf16.mxu0 0
      %527 = vmatpush1.bf16.msra.mxu0 0
      %528 = vmatprep.subr.bf16.mxu0 0
      %529 = vmatpush1.bf16.msra.mxu0 0
      %530 = vmatprep.subr.bf16.mxu0 0
      %531 = vmatpush1.bf16.msra.mxu0 0
      %532 = vmatprep.subr.bf16.mxu0 0
      %533 = vmatpush1.bf16.msra.mxu0 0
      %534 = vmatprep.subr.bf16.mxu0 0
      %535 = vmatpush1.bf16.msra.mxu0 0
      %536 = vmatprep.subr.bf16.mxu0 0
      %537 = vmatpush1.bf16.msra.mxu0 0
      %538 = vmatprep.subr.bf16.mxu0 0
      %539 = vmatpush1.bf16.msra.mxu0 0
      %540 = vmatprep.subr.bf16.mxu0 0
      %541 = vmatpush1.bf16.msra.mxu0 0
      %542 = vmatprep.subr.bf16.mxu0 0
      %543 = vmatpush1.bf16.msra.mxu0 0
      %544 = vmatprep.subr.bf16.mxu0 0
      %545 = vmatpush1.bf16.msra.mxu0 0
      %546 = vmatprep.subr.bf16.mxu0 0
      %547 = vmatpush1.bf16.msra.mxu0 0
      %548 = vmatprep.mubr.bf16.mxu0 0
      %549 = vmatmul.mubr.bf16.gmra.mrb[0].mxu0 %v429
      %v550 = vpop.f32.mrb[0].mxu0
      %v551 = vadd.f32 0.0, %v550
      %v552 = vpop.f32.mrb[0].mxu0
      %v553 = vpop.f32.mrb[0].mxu0
      %v554 = vadd.f32 0.0, %v553
      %v555 = vpop.f32.mrb[0].mxu0
      %556 = vmatprep.mubr.bf16.mxu0 0
      %557 = vmatmul.mubr.bf16.gmra.mrb[0].mxu0 %v432
      %v558 = vpop.f32.mrb[0].mxu0
      %v559 = vadd.f32 0.0, %v558
      %v560 = vpop.f32.mrb[0].mxu0
      %v561 = vpop.f32.mrb[0].mxu0
      %v562 = vadd.f32 0.0, %v561
      %v563 = vpop.f32.mrb[0].mxu0
      %564 = vmatprep.mubr.bf16.mxu0 0
      %565 = vmatmul.mubr.bf16.gmra.mrb[0].mxu0 %v435
      %v566 = vpop.f32.mrb[0].mxu0
      %v567 = vadd.f32 0.0, %v566
      %v568 = vpop.f32.mrb[0].mxu0
      %v569 = vpop.f32.mrb[0].mxu0
      %v570 = vadd.f32 0.0, %v569
      %v571 = vpop.f32.mrb[0].mxu0
      %572 = vmatprep.mubr.bf16.mxu0 0
      %573 = vmatmul.mubr.bf16.gmra.mrb[0].mxu0 %v438
      %v574 = vpop.f32.mrb[0].mxu0
      %v575 = vadd.f32 0.0, %v574
      %v576 = vpop.f32.mrb[0].mxu0
      %v577 = vpop.f32.mrb[0].mxu0
      %v578 = vadd.f32 0.0, %v577
      %v579 = vpop.f32.mrb[0].mxu0
      %580 = vmatprep.mubr.bf16.mxu0 0
      %581 = vmatmul.mubr.bf16.gmra.mrb[0].mxu0 %v441
      %v582 = vpop.f32.mrb[0].mxu0
      %v583 = vadd.f32 0.0, %v582
      %v584 = vpop.f32.mrb[0].mxu0
      %v585 = vpop.f32.mrb[0].mxu0
      %v586 = vadd.f32 0.0, %v585
      %v587 = vpop.f32.mrb[0].mxu0
      %588 = vmatprep.mubr.bf16.mxu0 0
      %589 = vmatmul.mubr.bf16.gmra.mrb[0].mxu0 %v444
      %v590 = vpop.f32.mrb[0].mxu0
      %v591 = vadd.f32 0.0, %v590
      %v592 = vpop.f32.mrb[0].mxu0
      %v593 = vpop.f32.mrb[0].mxu0
      %v594 = vadd.f32 0.0, %v593
      %v595 = vpop.f32.mrb[0].mxu0
      %596 = vmatprep.mubr.bf16.mxu0 0
      %597 = vmatmul.mubr.bf16.gmra.mrb[0].mxu0 %v447
      %v598 = vpop.f32.mrb[0].mxu0
      %v599 = vadd.f32 0.0, %v598
      %v600 = vpop.f32.mrb[0].mxu0
      %v601 = vpop.f32.mrb[0].mxu0
      %v602 = vadd.f32 0.0, %v601
      %v603 = vpop.f32.mrb[0].mxu0
      %604 = vmatprep.mubr.bf16.mxu0 0
      %605 = vmatmul.mubr.bf16.gmra.mrb[0].mxu0 %v450
      %v606 = vpop.f32.mrb[0].mxu0
      %v607 = vadd.f32 0.0, %v606
      %v608 = vpop.f32.mrb[0].mxu0
      %v609 = vpop.f32.mrb[0].mxu0
      %v610 = vadd.f32 0.0, %v609
      %v611 = vpop.f32.mrb[0].mxu0
      %612 = vmatprep.mubr.bf16.mxu0 0
      %613 = vmatmul.mubr.bf16.gmra.mrb[0].mxu0 %v453
      %v614 = vpop.f32.mrb[0].mxu0
      %v615 = vadd.f32 0.0, %v614
      %v616 = vpop.f32.mrb[0].mxu0
      %v617 = vpop.f32.mrb[0].mxu0
      %v618 = vadd.f32 0.0, %v617
      %v619 = vpop.f32.mrb[0].mxu0
      %620 = vmatprep.mubr.bf16.mxu0 0
      %621 = vmatmul.mubr.bf16.gmra.mrb[0].mxu0 %v456
      %v622 = vpop.f32.mrb[0].mxu0
      %v623 = vadd.f32 0.0, %v622
      %v624 = vpop.f32.mrb[0].mxu0
      %v625 = vpop.f32.mrb[0].mxu0
      %v626 = vadd.f32 0.0, %v625
      %v627 = vpop.f32.mrb[0].mxu0
      %628 = vmatprep.mubr.bf16.mxu0 0
      %629 = vmatmul.mubr.bf16.gmra.mrb[0].mxu0 %v459
      %v630 = vpop.f32.mrb[0].mxu0
      %v631 = vadd.f32 0.0, %v630
      %v632 = vpop.f32.mrb[0].mxu0
      %v633 = vpop.f32.mrb[0].mxu0
      %v634 = vadd.f32 0.0, %v633
      %v635 = vpop.f32.mrb[0].mxu0
      %636 = vmatprep.mubr.bf16.mxu0 0
      %637 = vmatmul.mubr.bf16.gmra.mrb[0].mxu0 %v462
      %v638 = vpop.f32.mrb[0].mxu0
      %v639 = vadd.f32 0.0, %v638
      %v640 = vpop.f32.mrb[0].mxu0
      %v641 = vpop.f32.mrb[0].mxu0
      %v642 = vadd.f32 0.0, %v641
      %v643 = vpop.f32.mrb[0].mxu0
      %644 = vmatprep.mubr.bf16.mxu0 0
      %645 = vmatmul.mubr.bf16.gmra.mrb[0].mxu0 %v465
      %v646 = vpop.f32.mrb[0].mxu0
      %v647 = vadd.f32 0.0, %v646
      %v648 = vpop.f32.mrb[0].mxu0
      %v649 = vpop.f32.mrb[0].mxu0
      %v650 = vadd.f32 0.0, %v649
      %v651 = vpop.f32.mrb[0].mxu0
      %652 = vmatprep.mubr.bf16.mxu0 0
      %653 = vmatmul.mubr.bf16.gmra.mrb[0].mxu0 %v468
      %v654 = vpop.f32.mrb[0].mxu0
      %v655 = vadd.f32 0.0, %v654
      %v656 = vpop.f32.mrb[0].mxu0
      %v657 = vpop.f32.mrb[0].mxu0
      %v658 = vadd.f32 0.0, %v657
      %v659 = vpop.f32.mrb[0].mxu0
      %660 = vmatprep.mubr.bf16.mxu0 0
      %661 = vmatmul.mubr.bf16.gmra.mrb[0].mxu0 %v471
      %v662 = vpop.f32.mrb[0].mxu0
      %v663 = vadd.f32 0.0, %v662
      %v664 = vpop.f32.mrb[0].mxu0
      %v665 = vpop.f32.mrb[0].mxu0
      %v666 = vadd.f32 0.0, %v665
      %v667 = vpop.f32.mrb[0].mxu0
      %668 = vmatprep.mubr.bf16.mxu0 0
      %669 = vmatmul.mubr.bf16.gmra.mrb[0].mxu0 %v474
      %v670 = vpop.f32.mrb[0].mxu0
      %v671 = vadd.f32 0.0, %v670
      %v672 = vpop.f32.mrb[0].mxu0
      %v673 = vpop.f32.mrb[0].mxu0
      %v674 = vadd.f32 0.0, %v673
      %v675 = vpop.f32.mrb[0].mxu0
      %676 = vmatprep.mubr.bf16.mxu0 0
      %677 = vmatmul.mubr.bf16.gmra.mrb[0].mxu0 %v477
      %v678 = vpop.f32.mrb[0].mxu0
      %v679 = vadd.f32 0.0, %v678
      %v680 = vpop.f32.mrb[0].mxu0
      %v681 = vpop.f32.mrb[0].mxu0
      %v682 = vadd.f32 0.0, %v681
      %v683 = vpop.f32.mrb[0].mxu0
      %684 = vmatprep.mubr.bf16.mxu0 0
      %685 = vmatmul.mubr.bf16.gmra.mrb[0].mxu0 %v480
      %v686 = vpop.f32.mrb[0].mxu0
      %v687 = vadd.f32 0.0, %v686
      %v688 = vpop.f32.mrb[0].mxu0
      %v689 = vpop.f32.mrb[0].mxu0
      %v690 = vadd.f32 0.0, %v689
      %v691 = vpop.f32.mrb[0].mxu0
      %692 = vmatprep.mubr.bf16.mxu0 0
      %693 = vmatmul.mubr.bf16.gmra.mrb[0].mxu0 %v483
      %v694 = vpop.f32.mrb[0].mxu0
      %v695 = vadd.f32 0.0, %v694
      %v696 = vpop.f32.mrb[0].mxu0
      %v697 = vpop.f32.mrb[0].mxu0
      %v698 = vadd.f32 0.0, %v697
      %v699 = vpop.f32.mrb[0].mxu0
      %700 = vmatprep.mubr.bf16.mxu0 0
      %701 = vmatmul.mubr.bf16.gmra.mrb[0].mxu0 %v486
      %v702 = vpop.f32.mrb[0].mxu0
      %v703 = vadd.f32 0.0, %v702
      %v704 = vpop.f32.mrb[0].mxu0
      %v705 = vpop.f32.mrb[0].mxu0
      %v706 = vadd.f32 0.0, %v705
      %v707 = vpop.f32.mrb[0].mxu0
      %708 = vmatprep.mubr.bf16.mxu0 0
      %709 = vmatmul.mubr.bf16.gmra.mrb[0].mxu0 %v489
      %v710 = vpop.f32.mrb[0].mxu0
      %v711 = vadd.f32 0.0, %v710
      %v712 = vpop.f32.mrb[0].mxu0
      %v713 = vpop.f32.mrb[0].mxu0
      %v714 = vadd.f32 0.0, %v713
      %v715 = vpop.f32.mrb[0].mxu0
      %716 = vmatprep.mubr.bf16.mxu0 0
      %717 = vmatmul.mubr.bf16.gmra.mrb[0].mxu0 %v492
      %v718 = vpop.f32.mrb[0].mxu0
      %v719 = vadd.f32 0.0, %v718
      %v720 = vpop.f32.mrb[0].mxu0
      %v721 = vpop.f32.mrb[0].mxu0
      %v722 = vadd.f32 0.0, %v721
      %v723 = vpop.f32.mrb[0].mxu0
      %724 = vmatprep.mubr.bf16.mxu0 0
      %725 = vmatmul.mubr.bf16.gmra.mrb[0].mxu0 %v495
      %v726 = vpop.f32.mrb[0].mxu0
      %v727 = vadd.f32 0.0, %v726
      %v728 = vpop.f32.mrb[0].mxu0
      %v729 = vpop.f32.mrb[0].mxu0
      %v730 = vadd.f32 0.0, %v729
      %v731 = vpop.f32.mrb[0].mxu0
      %732 = vmatprep.mubr.bf16.mxu0 0
      %733 = vmatmul.mubr.bf16.gmra.mrb[0].mxu0 %v498
      %v734 = vpop.f32.mrb[0].mxu0
      %v735 = vadd.f32 0.0, %v734
      %v736 = vpop.f32.mrb[0].mxu0
      %v737 = vpop.f32.mrb[0].mxu0
      %v738 = vadd.f32 0.0, %v737
      %v739 = vpop.f32.mrb[0].mxu0
      %740 = vmatprep.mubr.bf16.mxu0 0
      %741 = vmatmul.mubr.bf16.gmra.mrb[0].mxu0 %v501
      %v742 = vpop.f32.mrb[0].mxu0
      %v743 = vadd.f32 0.0, %v742
      %v744 = vpop.f32.mrb[0].mxu0
      %v745 = vpop.f32.mrb[0].mxu0
      %v746 = vadd.f32 0.0, %v745
      %v747 = vpop.f32.mrb[0].mxu0
      %748 = vmatprep.mubr.bf16.mxu0 0
      %749 = vmatmul.mubr.bf16.gmra.mrb[0].mxu0 %v504
      %v750 = vpop.f32.mrb[0].mxu0
      %v751 = vadd.f32 0.0, %v750
      %v752 = vpop.f32.mrb[0].mxu0
      %v753 = vpop.f32.mrb[0].mxu0
      %v754 = vadd.f32 0.0, %v753
      %v755 = vpop.f32.mrb[0].mxu0
      %756 = vmatprep.mubr.bf16.mxu0 0
      %757 = vmatmul.mubr.bf16.gmra.mrb[0].mxu0 %v507
      %v758 = vpop.f32.mrb[0].mxu0
      %v759 = vadd.f32 0.0, %v758
      %v760 = vpop.f32.mrb[0].mxu0
      %v761 = vpop.f32.mrb[0].mxu0
      %v762 = vadd.f32 0.0, %v761
      %v763 = vpop.f32.mrb[0].mxu0
      %764 = vdwg.mxu0
      %765 = vst [vmem:[%s212] sm:$0xff] %v551
      %766 = vst [vmem:[%s212 + $0x8] sm:$0xff] %v554
      %767 = vst [vmem:[%s212 + $0x10] sm:$0xff] %v559
      %768 = vst [vmem:[%s212 + $0x18] sm:$0xff] %v562
      %769 = vst [vmem:[%s212 + $0x20] sm:$0xff] %v567
      %770 = vst [vmem:[%s212 + $0x28] sm:$0xff] %v570
      %771 = vst [vmem:[%s212 + $0x30] sm:$0xff] %v575
      %772 = vst [vmem:[%s212 + $0x38] sm:$0xff] %v578
      %773 = vst [vmem:[%s212 + $0x40] sm:$0xff] %v583
      %774 = vst [vmem:[%s212 + $0x48] sm:$0xff] %v586
      %775 = vst [vmem:[%s212 + $0x50] sm:$0xff] %v591
      %776 = vst [vmem:[%s212 + $0x58] sm:$0xff] %v594
      %777 = vst [vmem:[%s212 + $0x60] sm:$0xff] %v599
      %778 = vst [vmem:[%s212 + $0x68] sm:$0xff] %v602
      %779 = vst [vmem:[%s212 + $0x70] sm:$0xff] %v607
      %780 = vst [vmem:[%s212 + $0x78] sm:$0xff] %v610
      %781 = vst [vmem:[%s212 + $0x80] sm:$0xff] %v615
      %782 = vst [vmem:[%s212 + $0x88] sm:$0xff] %v618
      %783 = vst [vmem:[%s212 + $0x90] sm:$0xff] %v623
      %784 = vst [vmem:[%s212 + $0x98] sm:$0xff] %v626
      %785 = vst [vmem:[%s212 + $0xa0] sm:$0xff] %v631
      %786 = vst [vmem:[%s212 + $0xa8] sm:$0xff] %v634
      %787 = vst [vmem:[%s212 + $0xb0] sm:$0xff] %v639
      %788 = vst [vmem:[%s212 + $0xb8] sm:$0xff] %v642
      %789 = vst [vmem:[%s212 + $0xc0] sm:$0xff] %v647
      %790 = vst [vmem:[%s212 + $0xc8] sm:$0xff] %v650
      %791 = vst [vmem:[%s212 + $0xd0] sm:$0xff] %v655
      %792 = vst [vmem:[%s212 + $0xd8] sm:$0xff] %v658
      %793 = vst [vmem:[%s212 + $0xe0] sm:$0xff] %v663
      %794 = vst [vmem:[%s212 + $0xe8] sm:$0xff] %v666
      %795 = vst [vmem:[%s212 + $0xf0] sm:$0xff] %v671
      %796 = vst [vmem:[%s212 + $0xf8] sm:$0xff] %v674
      %797 = vst [vmem:[%s212 + $0x100] sm:$0xff] %v679
      %798 = vst [vmem:[%s212 + $0x108] sm:$0xff] %v682
      %799 = vst [vmem:[%s212 + $0x110] sm:$0xff] %v687
      %800 = vst [vmem:[%s212 + $0x118] sm:$0xff] %v690
      %801 = vst [vmem:[%s212 + $0x120] sm:$0xff] %v695
      %802 = vst [vmem:[%s212 + $0x128] sm:$0xff] %v698
      %803 = vst [vmem:[%s212 + $0x130] sm:$0xff] %v703
      %804 = vst [vmem:[%s212 + $0x138] sm:$0xff] %v706
      %805 = vst [vmem:[%s212 + $0x140] sm:$0xff] %v711
      %806 = vst [vmem:[%s212 + $0x148] sm:$0xff] %v714
      %807 = vst [vmem:[%s212 + $0x150] sm:$0xff] %v719
      %808 = vst [vmem:[%s212 + $0x158] sm:$0xff] %v722
      %809 = vst [vmem:[%s212 + $0x160] sm:$0xff] %v727
      %810 = vst [vmem:[%s212 + $0x168] sm:$0xff] %v730
      %811 = vst [vmem:[%s212 + $0x170] sm:$0xff] %v735
      %812 = vst [vmem:[%s212 + $0x178] sm:$0xff] %v738
      %813 = vst [vmem:[%s212 + $0x180] sm:$0xff] %v743
      %814 = vst [vmem:[%s212 + $0x188] sm:$0xff] %v746
      %815 = vst [vmem:[%s212 + $0x190] sm:$0xff] %v751
      %816 = vst [vmem:[%s212 + $0x198] sm:$0xff] %v754
      %817 = vst [vmem:[%s212 + $0x1a0] sm:$0xff] %v759
      %818 = vst [vmem:[%s212 + $0x1a8] sm:$0xff] %v762
      %v819 = vadd.f32 %v551, %v554
      %v820 = vadd.f32 %v819, %v559
      %v821 = vadd.f32 %v820, %v562
      %v822 = vadd.f32 %v821, %v567
      %v823 = vadd.f32 %v822, %v570
      %v824 = vadd.f32 %v823, %v575
      %v825 = vadd.f32 %v824, %v578
      %v826 = vadd.f32 %v825, %v583
      %v827 = vadd.f32 %v826, %v586
      %v828 = vadd.f32 %v827, %v591
      %v829 = vadd.f32 %v828, %v594
      %v830 = vadd.f32 %v829, %v599
      %v831 = vadd.f32 %v830, %v602
      %v832 = vadd.f32 %v831, %v607
      %v833 = vadd.f32 %v832, %v610
      %v834 = vadd.f32 %v833, %v615
      %v835 = vadd.f32 %v834, %v618
      %v836 = vadd.f32 %v835, %v623
      %v837 = vadd.f32 %v836, %v626
      %v838 = vadd.f32 %v837, %v631
      %v839 = vadd.f32 %v838, %v634
      %v840 = vadd.f32 %v839, %v639
      %v841 = vadd.f32 %v840, %v642
      %v842 = vadd.f32 %v841, %v647
      %v843 = vadd.f32 %v842, %v650
      %v844 = vadd.f32 %v843, %v655
      %v845 = vadd.f32 %v844, %v658
      %v846 = vadd.f32 %v845, %v663
      %v847 = vadd.f32 %v846, %v666
      %v848 = vadd.f32 %v847, %v671
      %v849 = vadd.f32 %v848, %v674
      %v850 = vadd.f32 %v849, %v679
      %v851 = vadd.f32 %v850, %v682
      %v852 = vadd.f32 %v851, %v687
      %v853 = vadd.f32 %v852, %v690
      %v854 = vadd.f32 %v853, %v695
      %v855 = vadd.f32 %v854, %v698
      %v856 = vadd.f32 %v855, %v703
      %v857 = vadd.f32 %v856, %v706
      %v858 = vadd.f32 %v857, %v711
      %v859 = vadd.f32 %v858, %v714
      %v860 = vadd.f32 %v859, %v719
      %v861 = vadd.f32 %v860, %v722
      %v862 = vadd.f32 %v861, %v727
      %v863 = vadd.f32 %v862, %v730
      %v864 = vadd.f32 %v863, %v735
      %v865 = vadd.f32 %v864, %v738
      %v866 = vadd.f32 %v865, %v743
      %v867 = vadd.f32 %v866, %v746
      %v868 = vadd.f32 %v867, %v751
      %v869 = vadd.f32 %v868, %v754
      %v870 = vadd.f32 %v869, %v759
      %v871 = vadd.f32 %v870, %v762
      %v872 = vrot.slane %v871, 4
      %v873 = vadd.f32 %v871, %v872
      %v874 = vrot.slane %v873, 2
      %v875 = vadd.f32 %v873, %v874
      %v876 = vrot.slane %v875, 1
      %v877 = vadd.f32 %v875, %v876
      %878 = vst [vmem:[%s217] sm:$0xff] %v877
      %v879 = vmul.f32 %v551, %v551
      %v880 = vmul.f32 %v554, %v554
      %v881 = vmul.f32 %v559, %v559
      %v882 = vmul.f32 %v562, %v562
      %v883 = vmul.f32 %v567, %v567
      %v884 = vmul.f32 %v570, %v570
      %v885 = vmul.f32 %v575, %v575
      %v886 = vmul.f32 %v578, %v578
      %v887 = vmul.f32 %v583, %v583
      %v888 = vmul.f32 %v586, %v586
      %v889 = vmul.f32 %v591, %v591
      %v890 = vmul.f32 %v594, %v594
      %v891 = vmul.f32 %v599, %v599
      %v892 = vmul.f32 %v602, %v602
      %v893 = vmul.f32 %v607, %v607
      %v894 = vmul.f32 %v610, %v610
      %v895 = vmul.f32 %v615, %v615
      %v896 = vmul.f32 %v618, %v618
      %v897 = vmul.f32 %v623, %v623
      %v898 = vmul.f32 %v626, %v626
      %v899 = vmul.f32 %v631, %v631
      %v900 = vmul.f32 %v634, %v634
      %v901 = vmul.f32 %v639, %v639
      %v902 = vmul.f32 %v642, %v642
      %v903 = vmul.f32 %v647, %v647
      %v904 = vmul.f32 %v650, %v650
      %v905 = vmul.f32 %v655, %v655
      %v906 = vmul.f32 %v658, %v658
      %v907 = vmul.f32 %v663, %v663
      %v908 = vmul.f32 %v666, %v666
      %v909 = vmul.f32 %v671, %v671
      %v910 = vmul.f32 %v674, %v674
      %v911 = vmul.f32 %v679, %v679
      %v912 = vmul.f32 %v682, %v682
      %v913 = vmul.f32 %v687, %v687
      %v914 = vmul.f32 %v690, %v690
      %v915 = vmul.f32 %v695, %v695
      %v916 = vmul.f32 %v698, %v698
      %v917 = vmul.f32 %v703, %v703
      %v918 = vmul.f32 %v706, %v706
      %v919 = vmul.f32 %v711, %v711
      %v920 = vmul.f32 %v714, %v714
      %v921 = vmul.f32 %v719, %v719
      %v922 = vmul.f32 %v722, %v722
      %v923 = vmul.f32 %v727, %v727
      %v924 = vmul.f32 %v730, %v730
      %v925 = vmul.f32 %v735, %v735
      %v926 = vmul.f32 %v738, %v738
      %v927 = vmul.f32 %v743, %v743
      %v928 = vmul.f32 %v746, %v746
      %v929 = vmul.f32 %v751, %v751
      %v930 = vmul.f32 %v754, %v754
      %v931 = vmul.f32 %v759, %v759
      %v932 = vmul.f32 %v762, %v762
      %v933 = vadd.f32 %v879, %v880
      %v934 = vadd.f32 %v933, %v881
      %v935 = vadd.f32 %v934, %v882
      %v936 = vadd.f32 %v935, %v883
      %v937 = vadd.f32 %v936, %v884
      %v938 = vadd.f32 %v937, %v885
      %v939 = vadd.f32 %v938, %v886
      %v940 = vadd.f32 %v939, %v887
      %v941 = vadd.f32 %v940, %v888
      %v942 = vadd.f32 %v941, %v889
      %v943 = vadd.f32 %v942, %v890
      %v944 = vadd.f32 %v943, %v891
      %v945 = vadd.f32 %v944, %v892
      %v946 = vadd.f32 %v945, %v893
      %v947 = vadd.f32 %v946, %v894
      %v948 = vadd.f32 %v947, %v895
      %v949 = vadd.f32 %v948, %v896
      %v950 = vadd.f32 %v949, %v897
      %v951 = vadd.f32 %v950, %v898
      %v952 = vadd.f32 %v951, %v899
      %v953 = vadd.f32 %v952, %v900
      %v954 = vadd.f32 %v953, %v901
      %v955 = vadd.f32 %v954, %v902
      %v956 = vadd.f32 %v955, %v903
      %v957 = vadd.f32 %v956, %v904
      %v958 = vadd.f32 %v957, %v905
      %v959 = vadd.f32 %v958, %v906
      %v960 = vadd.f32 %v959, %v907
      %v961 = vadd.f32 %v960, %v908
      %v962 = vadd.f32 %v961, %v909
      %v963 = vadd.f32 %v962, %v910
      %v964 = vadd.f32 %v963, %v911
      %v965 = vadd.f32 %v964, %v912
      %v966 = vadd.f32 %v965, %v913
      %v967 = vadd.f32 %v966, %v914
      %v968 = vadd.f32 %v967, %v915
      %v969 = vadd.f32 %v968, %v916
      %v970 = vadd.f32 %v969, %v917
      %v971 = vadd.f32 %v970, %v918
      %v972 = vadd.f32 %v971, %v919
      %v973 = vadd.f32 %v972, %v920
      %v974 = vadd.f32 %v973, %v921
      %v975 = vadd.f32 %v974, %v922
      %v976 = vadd.f32 %v975, %v923
      %v977 = vadd.f32 %v976, %v924
      %v978 = vadd.f32 %v977, %v925
      %v979 = vadd.f32 %v978, %v926
      %v980 = vadd.f32 %v979, %v927
      %v981 = vadd.f32 %v980, %v928
      %v982 = vadd.f32 %v981, %v929
      %v983 = vadd.f32 %v982, %v930
      %v984 = vadd.f32 %v983, %v931
      %v985 = vadd.f32 %v984, %v932
      %v986 = vrot.slane %v985, 4
      %v987 = vadd.f32 %v985, %v986
      %v988 = vrot.slane %v987, 2
      %v989 = vadd.f32 %v987, %v988
      %v990 = vrot.slane %v989, 1
      %v991 = vadd.f32 %v989, %v990
      %992 = vst [vmem:[%s221] sm:$0xff] %v991
      %s993 = smul.u32 54, %s16
      %p994 = scmp.lt.s32.totalorder %s993, 323
      %s995 = scalar_select %p994, %s993, 323
      %s996 = smul.addr %s995, 8
      %s997 = scalar_lea.vmem %s2, %s996
      %p998 = scmp.lt.s32.totalorder %s16, 5
      %s999 = scalar_select %p998, %s16, 5
      %s1000 = smul.addr %s999, 8
      %s1001 = scalar_lea.vmem %s3, %s1000
      %p1002 = scmp.lt.s32.totalorder %s16, 5
      %s1003 = scalar_select %p1002, %s16, 5
      %s1004 = smul.addr %s1003, 8
      %s1005 = scalar_lea.vmem %s4, %s1004
      // Predicated region
      $region29: #{encoder_forward.7} parent=27 // pred_check
        %p1006 = pneg %p81
      $region30: #{encoder_forward.7} parent=27 // pred_check_branch
        %1008 = sbr.rel (%p1006) target = $region32
      $region31: #{encoder_forward.7} parent=27 // pred_region
        %s1009 = smul.u32 54, %s16
      $region32: #{encoder_forward.7} parent=27 // pred_fallthru
        _
      // Predicated region
      $region33: #{encoder_forward.7} parent=27 // pred_check
        %p1010 = pneg %p107
      $region34: #{encoder_forward.7} parent=27 // pred_check_branch
        %1012 = sbr.rel (%p1010) target = $region36
      $region35: #{encoder_forward.7} parent=27 // pred_region
        _
      $region36: #{encoder_forward.7} parent=27 // pred_fallthru
        _
      // Predicated region
      $region37: #{encoder_forward.7} parent=27 // pred_check
        %p1013 = pneg %p133
      $region38: #{encoder_forward.7} parent=27 // pred_check_branch
        %1015 = sbr.rel (%p1013) target = $region40
      $region39: #{encoder_forward.7} parent=27 // pred_region
        _
      $region40: #{encoder_forward.7} parent=27 // pred_fallthru
        _
    $region28: #{encoder_forward.7} parent=5 // pred_fallthru
      _
    %p1016 = scmp.le.s32.totalorder 2, %s11
    // Predicated region
    $region41: #{encoder_forward.7} parent=5 // pred_check
      %p1017 = pneg %p1016
    $region42: #{encoder_forward.7} parent=5 // pred_check_branch
      %1019 = sbr.rel (%p1017) target = $region44
    $region43: #{encoder_forward.7} parent=5 // pred_region
      %s1020 = ssub.s32 %s11, 2
      // Predicated region
      $region45: #{encoder_forward.7} parent=43 // pred_check
        %p1021 = pneg %p87
      $region46: #{encoder_forward.7} parent=43 // pred_check_branch
        %1023 = sbr.rel (%p1021) target = $region48
      $region47: #{encoder_forward.7} parent=43 // pred_region
        %s1024 = smul.u32 54, %s17
        %p1025 = scmp.lt.s32.totalorder %s1024, 323
        %s1026 = scalar_select %p1025, %s1024, 323
        %s1027 = smul.addr %s1026, 8
        %s1028 = scalar_lea.vmem %s2, %s1027
      $region48: #{encoder_forward.7} parent=43 // pred_fallthru
        _
      // Predicated region
      $region49: #{encoder_forward.7} parent=43 // pred_check
        %p1029 = pneg %p113
      $region50: #{encoder_forward.7} parent=43 // pred_check_branch
        %1031 = sbr.rel (%p1029) target = $region52
      $region51: #{encoder_forward.7} parent=43 // pred_region
        %p1032 = scmp.lt.s32.totalorder %s17, 5
        %s1033 = scalar_select %p1032, %s17, 5
        %s1034 = smul.addr %s1033, 8
        %s1035 = scalar_lea.vmem %s3, %s1034
      $region52: #{encoder_forward.7} parent=43 // pred_fallthru
        _
      // Predicated region
      $region53: #{encoder_forward.7} parent=43 // pred_check
        %p1036 = pneg %p139
      $region54: #{encoder_forward.7} parent=43 // pred_check_branch
        %1038 = sbr.rel (%p1036) target = $region56
      $region55: #{encoder_forward.7} parent=43 // pred_region
        %p1039 = scmp.lt.s32.totalorder %s17, 5
        %s1040 = scalar_select %p1039, %s17, 5
        %s1041 = smul.addr %s1040, 8
        %s1042 = scalar_lea.vmem %s4, %s1041
      $region56: #{encoder_forward.7} parent=43 // pred_fallthru
        _
    $region44: #{encoder_forward.7} parent=5 // pred_fallthru
      _
  $region6: #{encoder_forward.7} parent=0 // loop_footer
    %s15 = sadd.s32 1, %s11
  $region7: #{encoder_forward.7} parent=0 // loop_footer_branch
    %10 = sbr.rel target = $region3
  $region8: #{encoder_forward.7} parent=0 // loop_exit
    _

// kernel: encoder_forward.8
$region0: #{encoder_forward.8}
  #allocation0 [shape = 'u32[]', space=smem, size = 0x4, offset = 0x4, fixed_abs, tag = 'smem constant byte address 0x4 - core index']
  #allocation1 [shape = 'u32[144,128]{1,0:T(1,128)}', space=vmem, size = 0x12000, scoped, tag = 'internal scratch']
  %s0 = inlined_call_operand.vmem [shape: f32[2592,128], index: 0, kind: input, shape index: {}]
  %s1 = inlined_call_operand.vmem [shape: f32[1,128], index: 1, kind: input, shape index: {}]
  %s2 = inlined_call_operand.vmem [shape: f32[1,128], index: 2, kind: input, shape index: {}]
  %s3 = inlined_call_operand.vmem [shape: f32[2592,128], index: 3, kind: output, shape index: {}]
  %s4 = sld [smem:[#allocation0]]
  $region45: #{encoder_forward.8} parent=0
    _
  %s6 = ssub.s32 1, %s4
  %s7 = scalar_select 0, %s6, %s4
  loop: start=0, step=1, limit=8
  $region2: #{encoder_forward.8} parent=0 // loop_pre_header
    _
  $region3: #{encoder_forward.8} parent=0 // loop_header
    %s9 = sphi 0, %s13
    %p10 = scmp.ge.s32.totalorder %s9, 8
    %s19 = sphi 0, %s21
    %s22 = sphi 0, %s19
    %s23 = sphi 0, %s22
    %s39 = sphi 0, %s23
    %s43 = sphi 0, %s43
    %s45 = sphi 0, %s43
    %s46 = sphi 0, %s45
    %s60 = sphi 0, %s46
    %s64 = sphi 0, %s64
    %s66 = sphi 0, %s64
    %s67 = sphi 0, %s66
    %s81 = sphi 0, %s67
    %s87 = sphi 0, %s89
    %s90 = sphi 0, %s87
    %s91 = sphi 0, %s90
    %s107 = sphi 0, %s91
  $region4: #{encoder_forward.8} parent=0 // loop_header_branch
    %12 = sbr.rel (%p10) target = $region8
  $region5: #{encoder_forward.8} parent=0 // loop_body
    %s14 = ssub.s32 %s9, 1
    %s15 = ssub.s32 %s9, 2
    %s16 = sadd.s32 %s9, 1
    %s17 = ssub.s32 %s9, %s16
    %p18 = scmp.eq.s32.totalorder %s17, 0
    %s20 = sadd.s32 %s19, 1
    %s21 = scalar_select %p18, %s19, %s20
    %p24 = pneg %p18
    %p25 = scmp.eq.s32.totalorder %s9, 5
    %p26 = por %p24, %p25
    %p27 = scmp.ne.s32.totalorder %s19, %s22
    %p28 = scmp.eq.s32.totalorder %s9, 0
    %p29 = por %p27, %p28
    %p30 = scmp.ne.s32.totalorder %s19, %s22
    %p31 = scmp.eq.s32.totalorder %s14, 5
    %p32 = por %p30, %p31
    %p33 = scmp.ne.s32.totalorder %s22, %s23
    %p34 = scmp.eq.s32.totalorder %s14, 0
    %p35 = por %p33, %p34
    %p36 = scmp.ne.s32.totalorder %s22, %s23
    %p37 = scmp.eq.s32.totalorder %s15, 5
    %p38 = por %p36, %p37
    %p40 = scmp.ne.s32.totalorder %s23, %s39
    %p41 = scmp.eq.s32.totalorder %s15, 0
    %p42 = por %p40, %p41
    %s44 = sadd.s32 %s43, 1
    %p47 = scmp.eq.s32.totalorder %s9, 5
    %p48 = scmp.ne.s32.totalorder %s43, %s45
    %p49 = scmp.eq.s32.totalorder %s9, 0
    %p50 = por %p48, %p49
    %p51 = scmp.ne.s32.totalorder %s43, %s45
    %p52 = scmp.eq.s32.totalorder %s14, 5
    %p53 = por %p51, %p52
    %p54 = scmp.ne.s32.totalorder %s45, %s46
    %p55 = scmp.eq.s32.totalorder %s14, 0
    %p56 = por %p54, %p55
    %p57 = scmp.ne.s32.totalorder %s45, %s46
    %p58 = scmp.eq.s32.totalorder %s15, 5
    %p59 = por %p57, %p58
    %p61 = scmp.ne.s32.totalorder %s46, %s60
    %p62 = scmp.eq.s32.totalorder %s15, 0
    %p63 = por %p61, %p62
    %s65 = sadd.s32 %s64, 1
    %p68 = scmp.eq.s32.totalorder %s9, 5
    %p69 = scmp.ne.s32.totalorder %s64, %s66
    %p70 = scmp.eq.s32.totalorder %s9, 0
    %p71 = por %p69, %p70
    %p72 = scmp.ne.s32.totalorder %s64, %s66
    %p73 = scmp.eq.s32.totalorder %s14, 5
    %p74 = por %p72, %p73
    %p75 = scmp.ne.s32.totalorder %s66, %s67
    %p76 = scmp.eq.s32.totalorder %s14, 0
    %p77 = por %p75, %p76
    %p78 = scmp.ne.s32.totalorder %s66, %s67
    %p79 = scmp.eq.s32.totalorder %s15, 5
    %p80 = por %p78, %p79
    %p82 = scmp.ne.s32.totalorder %s67, %s81
    %p83 = scmp.eq.s32.totalorder %s15, 0
    %p84 = por %p82, %p83
    %s85 = ssub.s32 %s9, %s16
    %p86 = scmp.eq.s32.totalorder %s85, 0
    %s88 = sadd.s32 %s87, 1
    %s89 = scalar_select %p86, %s87, %s88
    %p92 = pneg %p86
    %p93 = scmp.eq.s32.totalorder %s9, 5
    %p94 = por %p92, %p93
    %p95 = scmp.ne.s32.totalorder %s87, %s90
    %p96 = scmp.eq.s32.totalorder %s9, 0
    %p97 = por %p95, %p96
    %p98 = scmp.ne.s32.totalorder %s87, %s90
    %p99 = scmp.eq.s32.totalorder %s14, 5
    %p100 = por %p98, %p99
    %p101 = scmp.ne.s32.totalorder %s90, %s91
    %p102 = scmp.eq.s32.totalorder %s14, 0
    %p103 = por %p101, %p102
    %p104 = scmp.ne.s32.totalorder %s90, %s91
    %p105 = scmp.eq.s32.totalorder %s15, 5
    %p106 = por %p104, %p105
    %p108 = scmp.ne.s32.totalorder %s91, %s107
    %p109 = scmp.eq.s32.totalorder %s15, 0
    %p110 = por %p108, %p109
    %p111 = scmp.le.s32.totalorder 1, %s9
    %p112 = scmp.lt.s32.totalorder %s9, 7
    %p113 = pnand %p111, %p112
    %p114 = pneg %p113
    // Predicated region
    $region9: #{encoder_forward.8} parent=5 // pred_check
      _
    $region10: #{encoder_forward.8} parent=5 // pred_check_branch
      %116 = sbr.rel (%p113) target = $region12
    $region11: #{encoder_forward.8} parent=5 // pred_region
      %s117 = ssub.s32 %s9, 1
      // Predicated region
      $region13: #{encoder_forward.8} parent=11 // pred_check
        %p118 = pneg %p56
      $region14: #{encoder_forward.8} parent=11 // pred_check_branch
        %120 = sbr.rel (%p118) target = $region16
      $region15: #{encoder_forward.8} parent=11 // pred_region
        _
      $region16: #{encoder_forward.8} parent=11 // pred_fallthru
        _
      // Predicated region
      $region17: #{encoder_forward.8} parent=11 // pred_check
        %p121 = pneg %p77
      $region18: #{encoder_forward.8} parent=11 // pred_check_branch
        %123 = sbr.rel (%p121) target = $region20
      $region19: #{encoder_forward.8} parent=11 // pred_region
        _
      $region20: #{encoder_forward.8} parent=11 // pred_fallthru
        _
    $region12: #{encoder_forward.8} parent=5 // pred_fallthru
      _
    %p124 = scmp.lt.s32.totalorder %s9, 6
    // Predicated region
    $region21: #{encoder_forward.8} parent=5 // pred_check
      %p125 = pneg %p124
    $region22: #{encoder_forward.8} parent=5 // pred_check_branch
      %127 = sbr.rel (%p125) target = $region24
    $region23: #{encoder_forward.8} parent=5 // pred_region
      // Predicated region
      $region25: #{encoder_forward.8} parent=23 // pred_check
        %p128 = pneg %p29
      $region26: #{encoder_forward.8} parent=23 // pred_check_branch
        %130 = sbr.rel (%p128) target = $region28
      $region27: #{encoder_forward.8} parent=23 // pred_region
        %s131 = smul.u32 54, %s9
        %p132 = scmp.lt.s32.totalorder %s131, 323
        %s133 = scalar_select %p132, %s131, 323
        %s134 = smul.addr %s133, 8
        %s135 = scalar_lea.vmem %s0, %s134
        %s136 = smul.u32 54, %s9
      $region28: #{encoder_forward.8} parent=23 // pred_fallthru
        _
    $region24: #{encoder_forward.8} parent=5 // pred_fallthru
      _
    %p137 = scmp.le.s32.totalorder 1, %s9
    %p138 = scmp.lt.s32.totalorder %s9, 7
    %p139 = pnand %p137, %p138
    %p140 = pneg %p139
    // Predicated region
    $region29: #{encoder_forward.8} parent=5 // pred_check
      _
    $region30: #{encoder_forward.8} parent=5 // pred_check_branch
      %142 = sbr.rel (%p139) target = $region32
    $region31: #{encoder_forward.8} parent=5 // pred_region
      %s143 = ssub.s32 %s9, 1
      %s144 = smul.u32 54, %s14
      %p145 = scmp.lt.s32.totalorder %s144, 323
      %s146 = scalar_select %p145, %s144, 323
      %s147 = smul.addr %s146, 8
      %s148 = scalar_lea.vmem %s0, %s147
      %p149 = pneg %p35
      %p150 = pneg %p32
      %p151 = pneg %p56
      %p152 = pneg %p53
      %p153 = pneg %p77
      %p154 = pneg %p74
      %p155 = pneg %p103
      %p156 = pneg %p100
      %s157 = smul.u32 54, %s14
      %p158 = scmp.lt.s32.totalorder %s157, 323
      %s159 = scalar_select %p158, %s157, 323
      %s160 = smul.addr %s159, 8
      %s161 = scalar_lea.vmem %s3, %s160
      %s162 = smul.u32 54, %s14
      %p163 = scmp.lt.s32.totalorder %s162, 323
      %s164 = scalar_select %p163, %s162, 323
      %s165 = smul.addr %s164, 8
      %s166 = scalar_lea.vmem %s0, %s165
      %s167 = smul.u32 54, %s14
      %s168 = smul.u32 54, %s14
      %p169 = scmp.lt.s32.totalorder %s168, 323
      %s170 = scalar_select %p169, %s168, 323
      %s171 = smul.addr %s170, 8
      %s172 = scalar_lea.vmem %s3, %s171
      %s173 = smul.u32 54, %s14
      %v174 = vld [vmem:[%s166] sm:$0xff]
      %v175 = vld [vmem:[%s166 + $0x8] sm:$0xff]
      %v176 = vld [vmem:[%s166 + $0x10] sm:$0xff]
      %v177 = vld [vmem:[%s166 + $0x18] sm:$0xff]
      %v178 = vld [vmem:[%s166 + $0x20] sm:$0xff]
      %v179 = vld [vmem:[%s166 + $0x28] sm:$0xff]
      %v180 = vld [vmem:[%s166 + $0x30] sm:$0xff]
      %v181 = vld [vmem:[%s166 + $0x38] sm:$0xff]
      %v182 = vld [vmem:[%s166 + $0x40] sm:$0xff]
      %v183 = vld [vmem:[%s166 + $0x48] sm:$0xff]
      %v184 = vld [vmem:[%s166 + $0x50] sm:$0xff]
      %v185 = vld [vmem:[%s166 + $0x58] sm:$0xff]
      %v186 = vld [vmem:[%s166 + $0x60] sm:$0xff]
      %v187 = vld [vmem:[%s166 + $0x68] sm:$0xff]
      %v188 = vld [vmem:[%s166 + $0x70] sm:$0xff]
      %v189 = vld [vmem:[%s166 + $0x78] sm:$0xff]
      %v190 = vld [vmem:[%s166 + $0x80] sm:$0xff]
      %v191 = vld [vmem:[%s166 + $0x88] sm:$0xff]
      %v192 = vld [vmem:[%s166 + $0x90] sm:$0xff]
      %v193 = vld [vmem:[%s166 + $0x98] sm:$0xff]
      %v194 = vld [vmem:[%s166 + $0xa0] sm:$0xff]
      %v195 = vld [vmem:[%s166 + $0xa8] sm:$0xff]
      %v196 = vld [vmem:[%s166 + $0xb0] sm:$0xff]
      %v197 = vld [vmem:[%s166 + $0xb8] sm:$0xff]
      %v198 = vld [vmem:[%s166 + $0xc0] sm:$0xff]
      %v199 = vld [vmem:[%s166 + $0xc8] sm:$0xff]
      %v200 = vld [vmem:[%s166 + $0xd0] sm:$0xff]
      %v201 = vld [vmem:[%s166 + $0xd8] sm:$0xff]
      %v202 = vld [vmem:[%s166 + $0xe0] sm:$0xff]
      %v203 = vld [vmem:[%s166 + $0xe8] sm:$0xff]
      %v204 = vld [vmem:[%s166 + $0xf0] sm:$0xff]
      %v205 = vld [vmem:[%s166 + $0xf8] sm:$0xff]
      %v206 = vld [vmem:[%s166 + $0x100] sm:$0xff]
      %v207 = vld [vmem:[%s166 + $0x108] sm:$0xff]
      %v208 = vld [vmem:[%s166 + $0x110] sm:$0xff]
      %v209 = vld [vmem:[%s166 + $0x118] sm:$0xff]
      %v210 = vld [vmem:[%s166 + $0x120] sm:$0xff]
      %v211 = vld [vmem:[%s166 + $0x128] sm:$0xff]
      %v212 = vld [vmem:[%s166 + $0x130] sm:$0xff]
      %v213 = vld [vmem:[%s166 + $0x138] sm:$0xff]
      %v214 = vld [vmem:[%s166 + $0x140] sm:$0xff]
      %v215 = vld [vmem:[%s166 + $0x148] sm:$0xff]
      %v216 = vld [vmem:[%s166 + $0x150] sm:$0xff]
      %v217 = vld [vmem:[%s166 + $0x158] sm:$0xff]
      %v218 = vld [vmem:[%s166 + $0x160] sm:$0xff]
      %v219 = vld [vmem:[%s166 + $0x168] sm:$0xff]
      %v220 = vld [vmem:[%s166 + $0x170] sm:$0xff]
      %v221 = vld [vmem:[%s166 + $0x178] sm:$0xff]
      %v222 = vld [vmem:[%s166 + $0x180] sm:$0xff]
      %v223 = vld [vmem:[%s166 + $0x188] sm:$0xff]
      %v224 = vld [vmem:[%s166 + $0x190] sm:$0xff]
      %v225 = vld [vmem:[%s166 + $0x198] sm:$0xff]
      %v226 = vld [vmem:[%s166 + $0x1a0] sm:$0xff]
      %v227 = vld [vmem:[%s166 + $0x1a8] sm:$0xff]
      %v228 = vld [vmem:[%s1] sm:$0x1]
      %v230 = vlaneseq
      %v231 = vshrl.u32 %v230, 7
      %v232 = vsub.s32 0, %v231
      %v233 = vrot.slane %v228, %v232
      %v235 = vmul.f32 %v174, %v233
      %v236 = vmul.f32 %v175, %v233
      %v237 = vmul.f32 %v176, %v233
      %v238 = vmul.f32 %v177, %v233
      %v239 = vmul.f32 %v178, %v233
      %v240 = vmul.f32 %v179, %v233
      %v241 = vmul.f32 %v180, %v233
      %v242 = vmul.f32 %v181, %v233
      %v243 = vmul.f32 %v182, %v233
      %v244 = vmul.f32 %v183, %v233
      %v245 = vmul.f32 %v184, %v233
      %v246 = vmul.f32 %v185, %v233
      %v247 = vmul.f32 %v186, %v233
      %v248 = vmul.f32 %v187, %v233
      %v249 = vmul.f32 %v188, %v233
      %v250 = vmul.f32 %v189, %v233
      %v251 = vmul.f32 %v190, %v233
      %v252 = vmul.f32 %v191, %v233
      %v253 = vmul.f32 %v192, %v233
      %v254 = vmul.f32 %v193, %v233
      %v255 = vmul.f32 %v194, %v233
      %v256 = vmul.f32 %v195, %v233
      %v257 = vmul.f32 %v196, %v233
      %v258 = vmul.f32 %v197, %v233
      %v259 = vmul.f32 %v198, %v233
      %v260 = vmul.f32 %v199, %v233
      %v261 = vmul.f32 %v200, %v233
      %v262 = vmul.f32 %v201, %v233
      %v263 = vmul.f32 %v202, %v233
      %v264 = vmul.f32 %v203, %v233
      %v265 = vmul.f32 %v204, %v233
      %v266 = vmul.f32 %v205, %v233
      %v267 = vmul.f32 %v206, %v233
      %v268 = vmul.f32 %v207, %v233
      %v269 = vmul.f32 %v208, %v233
      %v270 = vmul.f32 %v209, %v233
      %v271 = vmul.f32 %v210, %v233
      %v272 = vmul.f32 %v211, %v233
      %v273 = vmul.f32 %v212, %v233
      %v274 = vmul.f32 %v213, %v233
      %v275 = vmul.f32 %v214, %v233
      %v276 = vmul.f32 %v215, %v233
      %v277 = vmul.f32 %v216, %v233
      %v278 = vmul.f32 %v217, %v233
      %v279 = vmul.f32 %v218, %v233
      %v280 = vmul.f32 %v219, %v233
      %v281 = vmul.f32 %v220, %v233
      %v282 = vmul.f32 %v221, %v233
      %v283 = vmul.f32 %v222, %v233
      %v284 = vmul.f32 %v223, %v233
      %v285 = vmul.f32 %v224, %v233
      %v286 = vmul.f32 %v225, %v233
      %v287 = vmul.f32 %v226, %v233
      %v288 = vmul.f32 %v227, %v233
      %v289 = vld [vmem:[%s2] sm:$0x1]
      %v291 = vlaneseq
      %v292 = vshrl.u32 %v291, 7
      %v293 = vsub.s32 0, %v292
      %v294 = vrot.slane %v289, %v293
      %v296 = vadd.f32 %v235, %v294
      %v297 = vadd.f32 %v236, %v294
      %v298 = vadd.f32 %v237, %v294
      %v299 = vadd.f32 %v238, %v294
      %v300 = vadd.f32 %v239, %v294
      %v301 = vadd.f32 %v240, %v294
      %v302 = vadd.f32 %v241, %v294
      %v303 = vadd.f32 %v242, %v294
      %v304 = vadd.f32 %v243, %v294
      %v305 = vadd.f32 %v244, %v294
      %v306 = vadd.f32 %v245, %v294
      %v307 = vadd.f32 %v246, %v294
      %v308 = vadd.f32 %v247, %v294
      %v309 = vadd.f32 %v248, %v294
      %v310 = vadd.f32 %v249, %v294
      %v311 = vadd.f32 %v250, %v294
      %v312 = vadd.f32 %v251, %v294
      %v313 = vadd.f32 %v252, %v294
      %v314 = vadd.f32 %v253, %v294
      %v315 = vadd.f32 %v254, %v294
      %v316 = vadd.f32 %v255, %v294
      %v317 = vadd.f32 %v256, %v294
      %v318 = vadd.f32 %v257, %v294
      %v319 = vadd.f32 %v258, %v294
      %v320 = vadd.f32 %v259, %v294
      %v321 = vadd.f32 %v260, %v294
      %v322 = vadd.f32 %v261, %v294
      %v323 = vadd.f32 %v262, %v294
      %v324 = vadd.f32 %v263, %v294
      %v325 = vadd.f32 %v264, %v294
      %v326 = vadd.f32 %v265, %v294
      %v327 = vadd.f32 %v266, %v294
      %v328 = vadd.f32 %v267, %v294
      %v329 = vadd.f32 %v268, %v294
      %v330 = vadd.f32 %v269, %v294
      %v331 = vadd.f32 %v270, %v294
      %v332 = vadd.f32 %v271, %v294
      %v333 = vadd.f32 %v272, %v294
      %v334 = vadd.f32 %v273, %v294
      %v335 = vadd.f32 %v274, %v294
      %v336 = vadd.f32 %v275, %v294
      %v337 = vadd.f32 %v276, %v294
      %v338 = vadd.f32 %v277, %v294
      %v339 = vadd.f32 %v278, %v294
      %v340 = vadd.f32 %v279, %v294
      %v341 = vadd.f32 %v280, %v294
      %v342 = vadd.f32 %v281, %v294
      %v343 = vadd.f32 %v282, %v294
      %v344 = vadd.f32 %v283, %v294
      %v345 = vadd.f32 %v284, %v294
      %v346 = vadd.f32 %v285, %v294
      %v347 = vadd.f32 %v286, %v294
      %v348 = vadd.f32 %v287, %v294
      %v349 = vadd.f32 %v288, %v294
      %v350 = vmax.f32 %v296, 0.0
      %v351 = vmax.f32 %v297, 0.0
      %v352 = vmax.f32 %v298, 0.0
      %v353 = vmax.f32 %v299, 0.0
      %v354 = vmax.f32 %v300, 0.0
      %v355 = vmax.f32 %v301, 0.0
      %v356 = vmax.f32 %v302, 0.0
      %v357 = vmax.f32 %v303, 0.0
      %v358 = vmax.f32 %v304, 0.0
      %v359 = vmax.f32 %v305, 0.0
      %v360 = vmax.f32 %v306, 0.0
      %v361 = vmax.f32 %v307, 0.0
      %v362 = vmax.f32 %v308, 0.0
      %v363 = vmax.f32 %v309, 0.0
      %v364 = vmax.f32 %v310, 0.0
      %v365 = vmax.f32 %v311, 0.0
      %v366 = vmax.f32 %v312, 0.0
      %v367 = vmax.f32 %v313, 0.0
      %v368 = vmax.f32 %v314, 0.0
      %v369 = vmax.f32 %v315, 0.0
      %v370 = vmax.f32 %v316, 0.0
      %v371 = vmax.f32 %v317, 0.0
      %v372 = vmax.f32 %v318, 0.0
      %v373 = vmax.f32 %v319, 0.0
      %v374 = vmax.f32 %v320, 0.0
      %v375 = vmax.f32 %v321, 0.0
      %v376 = vmax.f32 %v322, 0.0
      %v377 = vmax.f32 %v323, 0.0
      %v378 = vmax.f32 %v324, 0.0
      %v379 = vmax.f32 %v325, 0.0
      %v380 = vmax.f32 %v326, 0.0
      %v381 = vmax.f32 %v327, 0.0
      %v382 = vmax.f32 %v328, 0.0
      %v383 = vmax.f32 %v329, 0.0
      %v384 = vmax.f32 %v330, 0.0
      %v385 = vmax.f32 %v331, 0.0
      %v386 = vmax.f32 %v332, 0.0
      %v387 = vmax.f32 %v333, 0.0
      %v388 = vmax.f32 %v334, 0.0
      %v389 = vmax.f32 %v335, 0.0
      %v390 = vmax.f32 %v336, 0.0
      %v391 = vmax.f32 %v337, 0.0
      %v392 = vmax.f32 %v338, 0.0
      %v393 = vmax.f32 %v339, 0.0
      %v394 = vmax.f32 %v340, 0.0
      %v395 = vmax.f32 %v341, 0.0
      %v396 = vmax.f32 %v342, 0.0
      %v397 = vmax.f32 %v343, 0.0
      %v398 = vmax.f32 %v344, 0.0
      %v399 = vmax.f32 %v345, 0.0
      %v400 = vmax.f32 %v346, 0.0
      %v401 = vmax.f32 %v347, 0.0
      %v402 = vmax.f32 %v348, 0.0
      %v403 = vmax.f32 %v349, 0.0
      %404 = vst [vmem:[%s172] sm:$0xff] %v350
      %405 = vst [vmem:[%s172 + $0x8] sm:$0xff] %v351
      %406 = vst [vmem:[%s172 + $0x10] sm:$0xff] %v352
      %407 = vst [vmem:[%s172 + $0x18] sm:$0xff] %v353
      %408 = vst [vmem:[%s172 + $0x20] sm:$0xff] %v354
      %409 = vst [vmem:[%s172 + $0x28] sm:$0xff] %v355
      %410 = vst [vmem:[%s172 + $0x30] sm:$0xff] %v356
      %411 = vst [vmem:[%s172 + $0x38] sm:$0xff] %v357
      %412 = vst [vmem:[%s172 + $0x40] sm:$0xff] %v358
      %413 = vst [vmem:[%s172 + $0x48] sm:$0xff] %v359
      %414 = vst [vmem:[%s172 + $0x50] sm:$0xff] %v360
      %415 = vst [vmem:[%s172 + $0x58] sm:$0xff] %v361
      %416 = vst [vmem:[%s172 + $0x60] sm:$0xff] %v362
      %417 = vst [vmem:[%s172 + $0x68] sm:$0xff] %v363
      %418 = vst [vmem:[%s172 + $0x70] sm:$0xff] %v364
      %419 = vst [vmem:[%s172 + $0x78] sm:$0xff] %v365
      %420 = vst [vmem:[%s172 + $0x80] sm:$0xff] %v366
      %421 = vst [vmem:[%s172 + $0x88] sm:$0xff] %v367
      %422 = vst [vmem:[%s172 + $0x90] sm:$0xff] %v368
      %423 = vst [vmem:[%s172 + $0x98] sm:$0xff] %v369
      %424 = vst [vmem:[%s172 + $0xa0] sm:$0xff] %v370
      %425 = vst [vmem:[%s172 + $0xa8] sm:$0xff] %v371
      %426 = vst [vmem:[%s172 + $0xb0] sm:$0xff] %v372
      %427 = vst [vmem:[%s172 + $0xb8] sm:$0xff] %v373
      %428 = vst [vmem:[%s172 + $0xc0] sm:$0xff] %v374
      %429 = vst [vmem:[%s172 + $0xc8] sm:$0xff] %v375
      %430 = vst [vmem:[%s172 + $0xd0] sm:$0xff] %v376
      %431 = vst [vmem:[%s172 + $0xd8] sm:$0xff] %v377
      %432 = vst [vmem:[%s172 + $0xe0] sm:$0xff] %v378
      %433 = vst [vmem:[%s172 + $0xe8] sm:$0xff] %v379
      %434 = vst [vmem:[%s172 + $0xf0] sm:$0xff] %v380
      %435 = vst [vmem:[%s172 + $0xf8] sm:$0xff] %v381
      %436 = vst [vmem:[%s172 + $0x100] sm:$0xff] %v382
      %437 = vst [vmem:[%s172 + $0x108] sm:$0xff] %v383
      %438 = vst [vmem:[%s172 + $0x110] sm:$0xff] %v384
      %439 = vst [vmem:[%s172 + $0x118] sm:$0xff] %v385
      %440 = vst [vmem:[%s172 + $0x120] sm:$0xff] %v386
      %441 = vst [vmem:[%s172 + $0x128] sm:$0xff] %v387
      %442 = vst [vmem:[%s172 + $0x130] sm:$0xff] %v388
      %443 = vst [vmem:[%s172 + $0x138] sm:$0xff] %v389
      %444 = vst [vmem:[%s172 + $0x140] sm:$0xff] %v390
      %445 = vst [vmem:[%s172 + $0x148] sm:$0xff] %v391
      %446 = vst [vmem:[%s172 + $0x150] sm:$0xff] %v392
      %447 = vst [vmem:[%s172 + $0x158] sm:$0xff] %v393
      %448 = vst [vmem:[%s172 + $0x160] sm:$0xff] %v394
      %449 = vst [vmem:[%s172 + $0x168] sm:$0xff] %v395
      %450 = vst [vmem:[%s172 + $0x170] sm:$0xff] %v396
      %451 = vst [vmem:[%s172 + $0x178] sm:$0xff] %v397
      %452 = vst [vmem:[%s172 + $0x180] sm:$0xff] %v398
      %453 = vst [vmem:[%s172 + $0x188] sm:$0xff] %v399
      %454 = vst [vmem:[%s172 + $0x190] sm:$0xff] %v400
      %455 = vst [vmem:[%s172 + $0x198] sm:$0xff] %v401
      %456 = vst [vmem:[%s172 + $0x1a0] sm:$0xff] %v402
      %457 = vst [vmem:[%s172 + $0x1a8] sm:$0xff] %v403
      %s458 = smul.u32 54, %s14
      %p459 = scmp.lt.s32.totalorder %s458, 323
      %s460 = scalar_select %p459, %s458, 323
      %s461 = smul.addr %s460, 8
      %s462 = scalar_lea.vmem %s3, %s461
      // Predicated region
      $region33: #{encoder_forward.8} parent=31 // pred_check
        %p463 = pneg %p100
      $region34: #{encoder_forward.8} parent=31 // pred_check_branch
        %465 = sbr.rel (%p463) target = $region36
      $region35: #{encoder_forward.8} parent=31 // pred_region
        %s466 = smul.u32 54, %s14
      $region36: #{encoder_forward.8} parent=31 // pred_fallthru
        _
    $region32: #{encoder_forward.8} parent=5 // pred_fallthru
      _
    %p467 = scmp.le.s32.totalorder 2, %s9
    // Predicated region
    $region37: #{encoder_forward.8} parent=5 // pred_check
      %p468 = pneg %p467
    $region38: #{encoder_forward.8} parent=5 // pred_check_branch
      %470 = sbr.rel (%p468) target = $region40
    $region39: #{encoder_forward.8} parent=5 // pred_region
      %s471 = ssub.s32 %s9, 2
      // Predicated region
      $region41: #{encoder_forward.8} parent=39 // pred_check
        %p472 = pneg %p106
      $region42: #{encoder_forward.8} parent=39 // pred_check_branch
        %474 = sbr.rel (%p472) target = $region44
      $region43: #{encoder_forward.8} parent=39 // pred_region
        %s475 = smul.u32 54, %s15
        %p476 = scmp.lt.s32.totalorder %s475, 323
        %s477 = scalar_select %p476, %s475, 323
        %s478 = smul.addr %s477, 8
        %s479 = scalar_lea.vmem %s3, %s478
      $region44: #{encoder_forward.8} parent=39 // pred_fallthru
        _
    $region40: #{encoder_forward.8} parent=5 // pred_fallthru
      _
  $region6: #{encoder_forward.8} parent=0 // loop_footer
    %s13 = sadd.s32 1, %s9
  $region7: #{encoder_forward.8} parent=0 // loop_footer_branch
    %8 = sbr.rel target = $region3
  $region8: #{encoder_forward.8} parent=0 // loop_exit
    _

// kernel: encoder_forward.10
$region0: #{encoder_forward.10}
  #allocation0 [shape = 'u32[]', space=smem, size = 0x4, offset = 0x4, fixed_abs, tag = 'smem constant byte address 0x4 - core index']
  #allocation1 [shape = 'u32[144,128]{1,0:T(1,128)}', space=vmem, size = 0x12000, scoped, tag = 'internal scratch']
  %s0 = inlined_call_operand.vmem [shape: f32[648,128], index: 0, kind: input, shape index: {}]
  %s1 = inlined_call_operand.vmem [shape: f32[1,128], index: 1, kind: input, shape index: {}]
  %s2 = inlined_call_operand.vmem [shape: f32[1,128], index: 2, kind: input, shape index: {}]
  %s3 = inlined_call_operand.vmem [shape: f32[648,128], index: 3, kind: output, shape index: {}]
  %s4 = sld [smem:[#allocation0]]
  $region45: #{encoder_forward.10} parent=0
    _
  %s6 = ssub.s32 1, %s4
  %s7 = scalar_select 0, %s6, %s4
  loop: start=0, step=1, limit=5
  $region2: #{encoder_forward.10} parent=0 // loop_pre_header
    _
  $region3: #{encoder_forward.10} parent=0 // loop_header
    %s9 = sphi 0, %s13
    %p10 = scmp.ge.s32.totalorder %s9, 5
    %s19 = sphi 0, %s21
    %s22 = sphi 0, %s19
    %s23 = sphi 0, %s22
    %s39 = sphi 0, %s23
    %s43 = sphi 0, %s43
    %s45 = sphi 0, %s43
    %s46 = sphi 0, %s45
    %s60 = sphi 0, %s46
    %s64 = sphi 0, %s64
    %s66 = sphi 0, %s64
    %s67 = sphi 0, %s66
    %s81 = sphi 0, %s67
    %s87 = sphi 0, %s89
    %s90 = sphi 0, %s87
    %s91 = sphi 0, %s90
    %s107 = sphi 0, %s91
  $region4: #{encoder_forward.10} parent=0 // loop_header_branch
    %12 = sbr.rel (%p10) target = $region8
  $region5: #{encoder_forward.10} parent=0 // loop_body
    %s14 = ssub.s32 %s9, 1
    %s15 = ssub.s32 %s9, 2
    %s16 = sadd.s32 %s9, 1
    %s17 = ssub.s32 %s9, %s16
    %p18 = scmp.eq.s32.totalorder %s17, 0
    %s20 = sadd.s32 %s19, 1
    %s21 = scalar_select %p18, %s19, %s20
    %p24 = pneg %p18
    %p25 = scmp.eq.s32.totalorder %s9, 2
    %p26 = por %p24, %p25
    %p27 = scmp.ne.s32.totalorder %s19, %s22
    %p28 = scmp.eq.s32.totalorder %s9, 0
    %p29 = por %p27, %p28
    %p30 = scmp.ne.s32.totalorder %s19, %s22
    %p31 = scmp.eq.s32.totalorder %s14, 2
    %p32 = por %p30, %p31
    %p33 = scmp.ne.s32.totalorder %s22, %s23
    %p34 = scmp.eq.s32.totalorder %s14, 0
    %p35 = por %p33, %p34
    %p36 = scmp.ne.s32.totalorder %s22, %s23
    %p37 = scmp.eq.s32.totalorder %s15, 2
    %p38 = por %p36, %p37
    %p40 = scmp.ne.s32.totalorder %s23, %s39
    %p41 = scmp.eq.s32.totalorder %s15, 0
    %p42 = por %p40, %p41
    %s44 = sadd.s32 %s43, 1
    %p47 = scmp.eq.s32.totalorder %s9, 2
    %p48 = scmp.ne.s32.totalorder %s43, %s45
    %p49 = scmp.eq.s32.totalorder %s9, 0
    %p50 = por %p48, %p49
    %p51 = scmp.ne.s32.totalorder %s43, %s45
    %p52 = scmp.eq.s32.totalorder %s14, 2
    %p53 = por %p51, %p52
    %p54 = scmp.ne.s32.totalorder %s45, %s46
    %p55 = scmp.eq.s32.totalorder %s14, 0
    %p56 = por %p54, %p55
    %p57 = scmp.ne.s32.totalorder %s45, %s46
    %p58 = scmp.eq.s32.totalorder %s15, 2
    %p59 = por %p57, %p58
    %p61 = scmp.ne.s32.totalorder %s46, %s60
    %p62 = scmp.eq.s32.totalorder %s15, 0
    %p63 = por %p61, %p62
    %s65 = sadd.s32 %s64, 1
    %p68 = scmp.eq.s32.totalorder %s9, 2
    %p69 = scmp.ne.s32.totalorder %s64, %s66
    %p70 = scmp.eq.s32.totalorder %s9, 0
    %p71 = por %p69, %p70
    %p72 = scmp.ne.s32.totalorder %s64, %s66
    %p73 = scmp.eq.s32.totalorder %s14, 2
    %p74 = por %p72, %p73
    %p75 = scmp.ne.s32.totalorder %s66, %s67
    %p76 = scmp.eq.s32.totalorder %s14, 0
    %p77 = por %p75, %p76
    %p78 = scmp.ne.s32.totalorder %s66, %s67
    %p79 = scmp.eq.s32.totalorder %s15, 2
    %p80 = por %p78, %p79
    %p82 = scmp.ne.s32.totalorder %s67, %s81
    %p83 = scmp.eq.s32.totalorder %s15, 0
    %p84 = por %p82, %p83
    %s85 = ssub.s32 %s9, %s16
    %p86 = scmp.eq.s32.totalorder %s85, 0
    %s88 = sadd.s32 %s87, 1
    %s89 = scalar_select %p86, %s87, %s88
    %p92 = pneg %p86
    %p93 = scmp.eq.s32.totalorder %s9, 2
    %p94 = por %p92, %p93
    %p95 = scmp.ne.s32.totalorder %s87, %s90
    %p96 = scmp.eq.s32.totalorder %s9, 0
    %p97 = por %p95, %p96
    %p98 = scmp.ne.s32.totalorder %s87, %s90
    %p99 = scmp.eq.s32.totalorder %s14, 2
    %p100 = por %p98, %p99
    %p101 = scmp.ne.s32.totalorder %s90, %s91
    %p102 = scmp.eq.s32.totalorder %s14, 0
    %p103 = por %p101, %p102
    %p104 = scmp.ne.s32.totalorder %s90, %s91
    %p105 = scmp.eq.s32.totalorder %s15, 2
    %p106 = por %p104, %p105
    %p108 = scmp.ne.s32.totalorder %s91, %s107
    %p109 = scmp.eq.s32.totalorder %s15, 0
    %p110 = por %p108, %p109
    %p111 = scmp.le.s32.totalorder 1, %s9
    %p112 = scmp.lt.s32.totalorder %s9, 4
    %p113 = pnand %p111, %p112
    %p114 = pneg %p113
    // Predicated region
    $region9: #{encoder_forward.10} parent=5 // pred_check
      _
    $region10: #{encoder_forward.10} parent=5 // pred_check_branch
      %116 = sbr.rel (%p113) target = $region12
    $region11: #{encoder_forward.10} parent=5 // pred_region
      %s117 = ssub.s32 %s9, 1
      // Predicated region
      $region13: #{encoder_forward.10} parent=11 // pred_check
        %p118 = pneg %p56
      $region14: #{encoder_forward.10} parent=11 // pred_check_branch
        %120 = sbr.rel (%p118) target = $region16
      $region15: #{encoder_forward.10} parent=11 // pred_region
        _
      $region16: #{encoder_forward.10} parent=11 // pred_fallthru
        _
      // Predicated region
      $region17: #{encoder_forward.10} parent=11 // pred_check
        %p121 = pneg %p77
      $region18: #{encoder_forward.10} parent=11 // pred_check_branch
        %123 = sbr.rel (%p121) target = $region20
      $region19: #{encoder_forward.10} parent=11 // pred_region
        _
      $region20: #{encoder_forward.10} parent=11 // pred_fallthru
        _
    $region12: #{encoder_forward.10} parent=5 // pred_fallthru
      _
    %p124 = scmp.lt.s32.totalorder %s9, 3
    // Predicated region
    $region21: #{encoder_forward.10} parent=5 // pred_check
      %p125 = pneg %p124
    $region22: #{encoder_forward.10} parent=5 // pred_check_branch
      %127 = sbr.rel (%p125) target = $region24
    $region23: #{encoder_forward.10} parent=5 // pred_region
      // Predicated region
      $region25: #{encoder_forward.10} parent=23 // pred_check
        %p128 = pneg %p29
      $region26: #{encoder_forward.10} parent=23 // pred_check_branch
        %130 = sbr.rel (%p128) target = $region28
      $region27: #{encoder_forward.10} parent=23 // pred_region
        %s131 = smul.u32 27, %s9
        %p132 = scmp.lt.s32.totalorder %s131, 80
        %s133 = scalar_select %p132, %s131, 80
        %s134 = smul.addr %s133, 8
        %s135 = scalar_lea.vmem %s0, %s134
        %s136 = smul.u32 27, %s9
      $region28: #{encoder_forward.10} parent=23 // pred_fallthru
        _
    $region24: #{encoder_forward.10} parent=5 // pred_fallthru
      _
    %p137 = scmp.le.s32.totalorder 1, %s9
    %p138 = scmp.lt.s32.totalorder %s9, 4
    %p139 = pnand %p137, %p138
    %p140 = pneg %p139
    // Predicated region
    $region29: #{encoder_forward.10} parent=5 // pred_check
      _
    $region30: #{encoder_forward.10} parent=5 // pred_check_branch
      %142 = sbr.rel (%p139) target = $region32
    $region31: #{encoder_forward.10} parent=5 // pred_region
      %s143 = ssub.s32 %s9, 1
      %s144 = smul.u32 27, %s14
      %p145 = scmp.lt.s32.totalorder %s144, 80
      %s146 = scalar_select %p145, %s144, 80
      %s147 = smul.addr %s146, 8
      %s148 = scalar_lea.vmem %s0, %s147
      %p149 = pneg %p35
      %p150 = pneg %p32
      %p151 = pneg %p56
      %p152 = pneg %p53
      %p153 = pneg %p77
      %p154 = pneg %p74
      %p155 = pneg %p103
      %p156 = pneg %p100
      %s157 = smul.u32 27, %s14
      %p158 = scmp.lt.s32.totalorder %s157, 80
      %s159 = scalar_select %p158, %s157, 80
      %s160 = smul.addr %s159, 8
      %s161 = scalar_lea.vmem %s3, %s160
      %s162 = smul.u32 27, %s14
      %p163 = scmp.lt.s32.totalorder %s162, 80
      %s164 = scalar_select %p163, %s162, 80
      %s165 = smul.addr %s164, 8
      %s166 = scalar_lea.vmem %s0, %s165
      %s167 = smul.u32 27, %s14
      %s168 = smul.u32 27, %s14
      %p169 = scmp.lt.s32.totalorder %s168, 80
      %s170 = scalar_select %p169, %s168, 80
      %s171 = smul.addr %s170, 8
      %s172 = scalar_lea.vmem %s3, %s171
      %s173 = smul.u32 27, %s14
      %v174 = vld [vmem:[%s166] sm:$0xff]
      %v175 = vld [vmem:[%s166 + $0x8] sm:$0xff]
      %v176 = vld [vmem:[%s166 + $0x10] sm:$0xff]
      %v177 = vld [vmem:[%s166 + $0x18] sm:$0xff]
      %v178 = vld [vmem:[%s166 + $0x20] sm:$0xff]
      %v179 = vld [vmem:[%s166 + $0x28] sm:$0xff]
      %v180 = vld [vmem:[%s166 + $0x30] sm:$0xff]
      %v181 = vld [vmem:[%s166 + $0x38] sm:$0xff]
      %v182 = vld [vmem:[%s166 + $0x40] sm:$0xff]
      %v183 = vld [vmem:[%s166 + $0x48] sm:$0xff]
      %v184 = vld [vmem:[%s166 + $0x50] sm:$0xff]
      %v185 = vld [vmem:[%s166 + $0x58] sm:$0xff]
      %v186 = vld [vmem:[%s166 + $0x60] sm:$0xff]
      %v187 = vld [vmem:[%s166 + $0x68] sm:$0xff]
      %v188 = vld [vmem:[%s166 + $0x70] sm:$0xff]
      %v189 = vld [vmem:[%s166 + $0x78] sm:$0xff]
      %v190 = vld [vmem:[%s166 + $0x80] sm:$0xff]
      %v191 = vld [vmem:[%s166 + $0x88] sm:$0xff]
      %v192 = vld [vmem:[%s166 + $0x90] sm:$0xff]
      %v193 = vld [vmem:[%s166 + $0x98] sm:$0xff]
      %v194 = vld [vmem:[%s166 + $0xa0] sm:$0xff]
      %v195 = vld [vmem:[%s166 + $0xa8] sm:$0xff]
      %v196 = vld [vmem:[%s166 + $0xb0] sm:$0xff]
      %v197 = vld [vmem:[%s166 + $0xb8] sm:$0xff]
      %v198 = vld [vmem:[%s166 + $0xc0] sm:$0xff]
      %v199 = vld [vmem:[%s166 + $0xc8] sm:$0xff]
      %v200 = vld [vmem:[%s166 + $0xd0] sm:$0xff]
      %v201 = vld [vmem:[%s1] sm:$0x1]
      %v203 = vlaneseq
      %v204 = vshrl.u32 %v203, 7
      %v205 = vsub.s32 0, %v204
      %v206 = vrot.slane %v201, %v205
      %v208 = vmul.f32 %v174, %v206
      %v209 = vmul.f32 %v175, %v206
      %v210 = vmul.f32 %v176, %v206
      %v211 = vmul.f32 %v177, %v206
      %v212 = vmul.f32 %v178, %v206
      %v213 = vmul.f32 %v179, %v206
      %v214 = vmul.f32 %v180, %v206
      %v215 = vmul.f32 %v181, %v206
      %v216 = vmul.f32 %v182, %v206
      %v217 = vmul.f32 %v183, %v206
      %v218 = vmul.f32 %v184, %v206
      %v219 = vmul.f32 %v185, %v206
      %v220 = vmul.f32 %v186, %v206
      %v221 = vmul.f32 %v187, %v206
      %v222 = vmul.f32 %v188, %v206
      %v223 = vmul.f32 %v189, %v206
      %v224 = vmul.f32 %v190, %v206
      %v225 = vmul.f32 %v191, %v206
      %v226 = vmul.f32 %v192, %v206
      %v227 = vmul.f32 %v193, %v206
      %v228 = vmul.f32 %v194, %v206
      %v229 = vmul.f32 %v195, %v206
      %v230 = vmul.f32 %v196, %v206
      %v231 = vmul.f32 %v197, %v206
      %v232 = vmul.f32 %v198, %v206
      %v233 = vmul.f32 %v199, %v206
      %v234 = vmul.f32 %v200, %v206
      %v235 = vld [vmem:[%s2] sm:$0x1]
      %v237 = vlaneseq
      %v238 = vshrl.u32 %v237, 7
      %v239 = vsub.s32 0, %v238
      %v240 = vrot.slane %v235, %v239
      %v242 = vadd.f32 %v208, %v240
      %v243 = vadd.f32 %v209, %v240
      %v244 = vadd.f32 %v210, %v240
      %v245 = vadd.f32 %v211, %v240
      %v246 = vadd.f32 %v212, %v240
      %v247 = vadd.f32 %v213, %v240
      %v248 = vadd.f32 %v214, %v240
      %v249 = vadd.f32 %v215, %v240
      %v250 = vadd.f32 %v216, %v240
      %v251 = vadd.f32 %v217, %v240
      %v252 = vadd.f32 %v218, %v240
      %v253 = vadd.f32 %v219, %v240
      %v254 = vadd.f32 %v220, %v240
      %v255 = vadd.f32 %v221, %v240
      %v256 = vadd.f32 %v222, %v240
      %v257 = vadd.f32 %v223, %v240
      %v258 = vadd.f32 %v224, %v240
      %v259 = vadd.f32 %v225, %v240
      %v260 = vadd.f32 %v226, %v240
      %v261 = vadd.f32 %v227, %v240
      %v262 = vadd.f32 %v228, %v240
      %v263 = vadd.f32 %v229, %v240
      %v264 = vadd.f32 %v230, %v240
      %v265 = vadd.f32 %v231, %v240
      %v266 = vadd.f32 %v232, %v240
      %v267 = vadd.f32 %v233, %v240
      %v268 = vadd.f32 %v234, %v240
      %v269 = vmax.f32 %v242, 0.0
      %v270 = vmax.f32 %v243, 0.0
      %v271 = vmax.f32 %v244, 0.0
      %v272 = vmax.f32 %v245, 0.0
      %v273 = vmax.f32 %v246, 0.0
      %v274 = vmax.f32 %v247, 0.0
      %v275 = vmax.f32 %v248, 0.0
      %v276 = vmax.f32 %v249, 0.0
      %v277 = vmax.f32 %v250, 0.0
      %v278 = vmax.f32 %v251, 0.0
      %v279 = vmax.f32 %v252, 0.0
      %v280 = vmax.f32 %v253, 0.0
      %v281 = vmax.f32 %v254, 0.0
      %v282 = vmax.f32 %v255, 0.0
      %v283 = vmax.f32 %v256, 0.0
      %v284 = vmax.f32 %v257, 0.0
      %v285 = vmax.f32 %v258, 0.0
      %v286 = vmax.f32 %v259, 0.0
      %v287 = vmax.f32 %v260, 0.0
      %v288 = vmax.f32 %v261, 0.0
      %v289 = vmax.f32 %v262, 0.0
      %v290 = vmax.f32 %v263, 0.0
      %v291 = vmax.f32 %v264, 0.0
      %v292 = vmax.f32 %v265, 0.0
      %v293 = vmax.f32 %v266, 0.0
      %v294 = vmax.f32 %v267, 0.0
      %v295 = vmax.f32 %v268, 0.0
      %296 = vst [vmem:[%s172] sm:$0xff] %v269
      %297 = vst [vmem:[%s172 + $0x8] sm:$0xff] %v270
      %298 = vst [vmem:[%s172 + $0x10] sm:$0xff] %v271
      %299 = vst [vmem:[%s172 + $0x18] sm:$0xff] %v272
      %300 = vst [vmem:[%s172 + $0x20] sm:$0xff] %v273
      %301 = vst [vmem:[%s172 + $0x28] sm:$0xff] %v274
      %302 = vst [vmem:[%s172 + $0x30] sm:$0xff] %v275
      %303 = vst [vmem:[%s172 + $0x38] sm:$0xff] %v276
      %304 = vst [vmem:[%s172 + $0x40] sm:$0xff] %v277
      %305 = vst [vmem:[%s172 + $0x48] sm:$0xff] %v278
      %306 = vst [vmem:[%s172 + $0x50] sm:$0xff] %v279
      %307 = vst [vmem:[%s172 + $0x58] sm:$0xff] %v280
      %308 = vst [vmem:[%s172 + $0x60] sm:$0xff] %v281
      %309 = vst [vmem:[%s172 + $0x68] sm:$0xff] %v282
      %310 = vst [vmem:[%s172 + $0x70] sm:$0xff] %v283
      %311 = vst [vmem:[%s172 + $0x78] sm:$0xff] %v284
      %312 = vst [vmem:[%s172 + $0x80] sm:$0xff] %v285
      %313 = vst [vmem:[%s172 + $0x88] sm:$0xff] %v286
      %314 = vst [vmem:[%s172 + $0x90] sm:$0xff] %v287
      %315 = vst [vmem:[%s172 + $0x98] sm:$0xff] %v288
      %316 = vst [vmem:[%s172 + $0xa0] sm:$0xff] %v289
      %317 = vst [vmem:[%s172 + $0xa8] sm:$0xff] %v290
      %318 = vst [vmem:[%s172 + $0xb0] sm:$0xff] %v291
      %319 = vst [vmem:[%s172 + $0xb8] sm:$0xff] %v292
      %320 = vst [vmem:[%s172 + $0xc0] sm:$0xff] %v293
      %321 = vst [vmem:[%s172 + $0xc8] sm:$0xff] %v294
      %322 = vst [vmem:[%s172 + $0xd0] sm:$0xff] %v295
      %s323 = smul.u32 27, %s14
      %p324 = scmp.lt.s32.totalorder %s323, 80
      %s325 = scalar_select %p324, %s323, 80
      %s326 = smul.addr %s325, 8
      %s327 = scalar_lea.vmem %s3, %s326
      // Predicated region
      $region33: #{encoder_forward.10} parent=31 // pred_check
        %p328 = pneg %p100
      $region34: #{encoder_forward.10} parent=31 // pred_check_branch
        %330 = sbr.rel (%p328) target = $region36
      $region35: #{encoder_forward.10} parent=31 // pred_region
        %s331 = smul.u32 27, %s14
      $region36: #{encoder_forward.10} parent=31 // pred_fallthru
        _
    $region32: #{encoder_forward.10} parent=5 // pred_fallthru
      _
    %p332 = scmp.le.s32.totalorder 2, %s9
    // Predicated region
    $region37: #{encoder_forward.10} parent=5 // pred_check
      %p333 = pneg %p332
    $region38: #{encoder_forward.10} parent=5 // pred_check_branch
      %335 = sbr.rel (%p333) target = $region40
    $region39: #{encoder_forward.10} parent=5 // pred_region
      %s336 = ssub.s32 %s9, 2
      // Predicated region
      $region41: #{encoder_forward.10} parent=39 // pred_check
        %p337 = pneg %p106
      $region42: #{encoder_forward.10} parent=39 // pred_check_branch
        %339 = sbr.rel (%p337) target = $region44
      $region43: #{encoder_forward.10} parent=39 // pred_region
        %s340 = smul.u32 27, %s15
        %p341 = scmp.lt.s32.totalorder %s340, 80
        %s342 = scalar_select %p341, %s340, 80
        %s343 = smul.addr %s342, 8
        %s344 = scalar_lea.vmem %s3, %s343
      $region44: #{encoder_forward.10} parent=39 // pred_fallthru
        _
    $region40: #{encoder_forward.10} parent=5 // pred_fallthru
      _
  $region6: #{encoder_forward.10} parent=0 // loop_footer
    %s13 = sadd.s32 1, %s9
  $region7: #{encoder_forward.10} parent=0 // loop_footer_branch
    %8 = sbr.rel target = $region3
  $region8: #{encoder_forward.10} parent=0 // loop_exit
    _

// kernel: encoder_forward.9
$region0: #{encoder_forward.9}
  #allocation0 [shape = 'u32[]', space=smem, size = 0x4, offset = 0x4, fixed_abs, tag = 'smem constant byte address 0x4 - core index']
  #allocation1 [shape = 'u32[144,128]{1,0:T(1,128)}', space=vmem, size = 0x12000, scoped, tag = 'internal scratch']
  %s0 = inlined_call_operand.vmem [shape: bf16[648,288], index: 0, kind: input, shape index: {}]
  %s1 = inlined_call_operand.vmem [shape: bf16[288,128], index: 1, kind: input, shape index: {}]
  %s2 = inlined_call_operand.vmem [shape: f32[648,128], index: 2, kind: output, shape index: {0}]
  %s3 = inlined_call_operand.vmem [shape: f32[24,128], index: 3, kind: output, shape index: {1}]
  %s4 = inlined_call_operand.vmem [shape: f32[24,128], index: 4, kind: output, shape index: {2}]
  %5 = xla_tuple %s2, %s3, %s4
  %s6 = sld [smem:[#allocation0]]
  $region57: #{encoder_forward.9} parent=0
    _
  %s8 = ssub.s32 1, %s6
  %s9 = scalar_select 0, %s8, %s6
  loop: start=0, step=1, limit=5
  $region2: #{encoder_forward.9} parent=0 // loop_pre_header
    _
  $region3: #{encoder_forward.9} parent=0 // loop_header
    %s11 = sphi 0, %s15
    %p12 = scmp.ge.s32.totalorder %s11, 5
    %s21 = sphi 0, %s23
    %s24 = sphi 0, %s21
    %s25 = sphi 0, %s24
    %s41 = sphi 0, %s25
    %s45 = sphi 0, %s45
    %s47 = sphi 0, %s45
    %s48 = sphi 0, %s47
    %s62 = sphi 0, %s48
    %s68 = sphi 0, %s70
    %s71 = sphi 0, %s68
    %s72 = sphi 0, %s71
    %s88 = sphi 0, %s72
    %s94 = sphi 0, %s96
    %s97 = sphi 0, %s94
    %s98 = sphi 0, %s97
    %s114 = sphi 0, %s98
    %s120 = sphi 0, %s122
    %s123 = sphi 0, %s120
    %s124 = sphi 0, %s123
    %s140 = sphi 0, %s124
  $region4: #{encoder_forward.9} parent=0 // loop_header_branch
    %14 = sbr.rel (%p12) target = $region8
  $region5: #{encoder_forward.9} parent=0 // loop_body
    %s16 = ssub.s32 %s11, 1
    %s17 = ssub.s32 %s11, 2
    %s18 = sadd.s32 %s11, 1
    %s19 = ssub.s32 %s11, %s18
    %p20 = scmp.eq.s32.totalorder %s19, 0
    %s22 = sadd.s32 %s21, 1
    %s23 = scalar_select %p20, %s21, %s22
    %p26 = pneg %p20
    %p27 = scmp.eq.s32.totalorder %s11, 2
    %p28 = por %p26, %p27
    %p29 = scmp.ne.s32.totalorder %s21, %s24
    %p30 = scmp.eq.s32.totalorder %s11, 0
    %p31 = por %p29, %p30
    %p32 = scmp.ne.s32.totalorder %s21, %s24
    %p33 = scmp.eq.s32.totalorder %s16, 2
    %p34 = por %p32, %p33
    %p35 = scmp.ne.s32.totalorder %s24, %s25
    %p36 = scmp.eq.s32.totalorder %s16, 0
    %p37 = por %p35, %p36
    %p38 = scmp.ne.s32.totalorder %s24, %s25
    %p39 = scmp.eq.s32.totalorder %s17, 2
    %p40 = por %p38, %p39
    %p42 = scmp.ne.s32.totalorder %s25, %s41
    %p43 = scmp.eq.s32.totalorder %s17, 0
    %p44 = por %p42, %p43
    %s46 = sadd.s32 %s45, 1
    %p49 = scmp.eq.s32.totalorder %s11, 2
    %p50 = scmp.ne.s32.totalorder %s45, %s47
    %p51 = scmp.eq.s32.totalorder %s11, 0
    %p52 = por %p50, %p51
    %p53 = scmp.ne.s32.totalorder %s45, %s47
    %p54 = scmp.eq.s32.totalorder %s16, 2
    %p55 = por %p53, %p54
    %p56 = scmp.ne.s32.totalorder %s47, %s48
    %p57 = scmp.eq.s32.totalorder %s16, 0
    %p58 = por %p56, %p57
    %p59 = scmp.ne.s32.totalorder %s47, %s48
    %p60 = scmp.eq.s32.totalorder %s17, 2
    %p61 = por %p59, %p60
    %p63 = scmp.ne.s32.totalorder %s48, %s62
    %p64 = scmp.eq.s32.totalorder %s17, 0
    %p65 = por %p63, %p64
    %s66 = ssub.s32 %s11, %s18
    %p67 = scmp.eq.s32.totalorder %s66, 0
    %s69 = sadd.s32 %s68, 1
    %s70 = scalar_select %p67, %s68, %s69
    %p73 = pneg %p67
    %p74 = scmp.eq.s32.totalorder %s11, 2
    %p75 = por %p73, %p74
    %p76 = scmp.ne.s32.totalorder %s68, %s71
    %p77 = scmp.eq.s32.totalorder %s11, 0
    %p78 = por %p76, %p77
    %p79 = scmp.ne.s32.totalorder %s68, %s71
    %p80 = scmp.eq.s32.totalorder %s16, 2
    %p81 = por %p79, %p80
    %p82 = scmp.ne.s32.totalorder %s71, %s72
    %p83 = scmp.eq.s32.totalorder %s16, 0
    %p84 = por %p82, %p83
    %p85 = scmp.ne.s32.totalorder %s71, %s72
    %p86 = scmp.eq.s32.totalorder %s17, 2
    %p87 = por %p85, %p86
    %p89 = scmp.ne.s32.totalorder %s72, %s88
    %p90 = scmp.eq.s32.totalorder %s17, 0
    %p91 = por %p89, %p90
    %s92 = ssub.s32 %s11, %s18
    %p93 = scmp.eq.s32.totalorder %s92, 0
    %s95 = sadd.s32 %s94, 1
    %s96 = scalar_select %p93, %s94, %s95
    %p99 = pneg %p93
    %p100 = scmp.eq.s32.totalorder %s11, 2
    %p101 = por %p99, %p100
    %p102 = scmp.ne.s32.totalorder %s94, %s97
    %p103 = scmp.eq.s32.totalorder %s11, 0
    %p104 = por %p102, %p103
    %p105 = scmp.ne.s32.totalorder %s94, %s97
    %p106 = scmp.eq.s32.totalorder %s16, 2
    %p107 = por %p105, %p106
    %p108 = scmp.ne.s32.totalorder %s97, %s98
    %p109 = scmp.eq.s32.totalorder %s16, 0
    %p110 = por %p108, %p109
    %p111 = scmp.ne.s32.totalorder %s97, %s98
    %p112 = scmp.eq.s32.totalorder %s17, 2
    %p113 = por %p111, %p112
    %p115 = scmp.ne.s32.totalorder %s98, %s114
    %p116 = scmp.eq.s32.totalorder %s17, 0
    %p117 = por %p115, %p116
    %s118 = ssub.s32 %s11, %s18
    %p119 = scmp.eq.s32.totalorder %s118, 0
    %s121 = sadd.s32 %s120, 1
    %s122 = scalar_select %p119, %s120, %s121
    %p125 = pneg %p119
    %p126 = scmp.eq.s32.totalorder %s11, 2
    %p127 = por %p125, %p126
    %p128 = scmp.ne.s32.totalorder %s120, %s123
    %p129 = scmp.eq.s32.totalorder %s11, 0
    %p130 = por %p128, %p129
    %p131 = scmp.ne.s32.totalorder %s120, %s123
    %p132 = scmp.eq.s32.totalorder %s16, 2
    %p133 = por %p131, %p132
    %p134 = scmp.ne.s32.totalorder %s123, %s124
    %p135 = scmp.eq.s32.totalorder %s16, 0
    %p136 = por %p134, %p135
    %p137 = scmp.ne.s32.totalorder %s123, %s124
    %p138 = scmp.eq.s32.totalorder %s17, 2
    %p139 = por %p137, %p138
    %p141 = scmp.ne.s32.totalorder %s124, %s140
    %p142 = scmp.eq.s32.totalorder %s17, 0
    %p143 = por %p141, %p142
    %p144 = scmp.le.s32.totalorder 1, %s11
    %p145 = scmp.lt.s32.totalorder %s11, 4
    %p146 = pnand %p144, %p145
    %p147 = pneg %p146
    // Predicated region
    $region9: #{encoder_forward.9} parent=5 // pred_check
      _
    $region10: #{encoder_forward.9} parent=5 // pred_check_branch
      %149 = sbr.rel (%p146) target = $region12
    $region11: #{encoder_forward.9} parent=5 // pred_region
      %s150 = ssub.s32 %s11, 1
      // Predicated region
      $region13: #{encoder_forward.9} parent=11 // pred_check
        %p151 = pneg %p58
      $region14: #{encoder_forward.9} parent=11 // pred_check_branch
        %153 = sbr.rel (%p151) target = $region16
      $region15: #{encoder_forward.9} parent=11 // pred_region
        _
      $region16: #{encoder_forward.9} parent=11 // pred_fallthru
        _
    $region12: #{encoder_forward.9} parent=5 // pred_fallthru
      _
    %p154 = scmp.lt.s32.totalorder %s11, 3
    // Predicated region
    $region17: #{encoder_forward.9} parent=5 // pred_check
      %p155 = pneg %p154
    $region18: #{encoder_forward.9} parent=5 // pred_check_branch
      %157 = sbr.rel (%p155) target = $region20
    $region19: #{encoder_forward.9} parent=5 // pred_region
      // Predicated region
      $region21: #{encoder_forward.9} parent=19 // pred_check
        %p158 = pneg %p31
      $region22: #{encoder_forward.9} parent=19 // pred_check_branch
        %160 = sbr.rel (%p158) target = $region24
      $region23: #{encoder_forward.9} parent=19 // pred_region
        %s161 = smul.u32 27, %s11
        %p162 = scmp.lt.s32.totalorder %s161, 80
        %s163 = scalar_select %p162, %s161, 80
        %s164 = smul.addr %s163, 3
        %s165 = smul.addr %s164, 4
        %s166 = scalar_lea.vmem %s0, %s165
        %s167 = smul.u32 27, %s11
      $region24: #{encoder_forward.9} parent=19 // pred_fallthru
        _
    $region20: #{encoder_forward.9} parent=5 // pred_fallthru
      _
    %p168 = scmp.le.s32.totalorder 1, %s11
    %p169 = scmp.lt.s32.totalorder %s11, 4
    %p170 = pnand %p168, %p169
    %p171 = pneg %p170
    // Predicated region
    $region25: #{encoder_forward.9} parent=5 // pred_check
      _
    $region26: #{encoder_forward.9} parent=5 // pred_check_branch
      %173 = sbr.rel (%p170) target = $region28
    $region27: #{encoder_forward.9} parent=5 // pred_region
      %s174 = ssub.s32 %s11, 1
      %s175 = smul.u32 27, %s16
      %p176 = scmp.lt.s32.totalorder %s175, 80
      %s177 = scalar_select %p176, %s175, 80
      %s178 = smul.addr %s177, 3
      %s179 = smul.addr %s178, 4
      %s180 = scalar_lea.vmem %s0, %s179
      %p181 = pneg %p37
      %p182 = pneg %p34
      %p183 = pneg %p58
      %p184 = pneg %p55
      %p185 = pneg %p84
      %p186 = pneg %p81
      %s187 = smul.u32 27, %s16
      %p188 = scmp.lt.s32.totalorder %s187, 80
      %s189 = scalar_select %p188, %s187, 80
      %s190 = smul.addr %s189, 8
      %s191 = scalar_lea.vmem %s2, %s190
      %p192 = pneg %p110
      %p193 = pneg %p107
      %p194 = scmp.lt.s32.totalorder %s16, 2
      %s195 = scalar_select %p194, %s16, 2
      %s196 = smul.addr %s195, 8
      %s197 = scalar_lea.vmem %s3, %s196
      %p198 = pneg %p136
      %p199 = pneg %p133
      %p200 = scmp.lt.s32.totalorder %s16, 2
      %s201 = scalar_select %p200, %s16, 2
      %s202 = smul.addr %s201, 8
      %s203 = scalar_lea.vmem %s4, %s202
      %s204 = smul.u32 27, %s16
      %p205 = scmp.lt.s32.totalorder %s204, 80
      %s206 = scalar_select %p205, %s204, 80
      %s207 = smul.addr %s206, 3
      %s208 = smul.addr %s207, 4
      %s209 = scalar_lea.vmem %s0, %s208
      %s210 = smul.u32 27, %s16
      %s211 = smul.u32 27, %s16
      %p212 = scmp.lt.s32.totalorder %s211, 80
      %s213 = scalar_select %p212, %s211, 80
      %s214 = smul.addr %s213, 8
      %s215 = scalar_lea.vmem %s2, %s214
      %s216 = smul.u32 27, %s16
      %p217 = scmp.lt.s32.totalorder %s16, 2
      %s218 = scalar_select %p217, %s16, 2
      %s219 = smul.addr %s218, 8
      %s220 = scalar_lea.vmem %s3, %s219
      %p221 = scmp.lt.s32.totalorder %s16, 2
      %s222 = scalar_select %p221, %s16, 2
      %s223 = smul.addr %s222, 8
      %s224 = scalar_lea.vmem %s4, %s223
      %v226 = vld [vmem:[%s209] sm:$0xff]
      %v227 = vld [vmem:[%s209 + $0x8] sm:$0xf]
      %v228 = vld [vmem:[%s209 + $0xc] sm:$0xff]
      %v229 = vld [vmem:[%s209 + $0x14] sm:$0xf]
      %v230 = vld [vmem:[%s209 + $0x18] sm:$0xff]
      %v231 = vld [vmem:[%s209 + $0x20] sm:$0xf]
      %v232 = vld [vmem:[%s209 + $0x24] sm:$0xff]
      %v233 = vld [vmem:[%s209 + $0x2c] sm:$0xf]
      %v234 = vld [vmem:[%s209 + $0x30] sm:$0xff]
      %v235 = vld [vmem:[%s209 + $0x38] sm:$0xf]
      %v236 = vld [vmem:[%s209 + $0x3c] sm:$0xff]
      %v237 = vld [vmem:[%s209 + $0x44] sm:$0xf]
      %v238 = vld [vmem:[%s209 + $0x48] sm:$0xff]
      %v239 = vld [vmem:[%s209 + $0x50] sm:$0xf]
      %v240 = vld [vmem:[%s209 + $0x54] sm:$0xff]
      %v241 = vld [vmem:[%s209 + $0x5c] sm:$0xf]
      %v242 = vld [vmem:[%s209 + $0x60] sm:$0xff]
      %v243 = vld [vmem:[%s209 + $0x68] sm:$0xf]
      %v244 = vld [vmem:[%s209 + $0x6c] sm:$0xff]
      %v245 = vld [vmem:[%s209 + $0x74] sm:$0xf]
      %v246 = vld [vmem:[%s209 + $0x78] sm:$0xff]
      %v247 = vld [vmem:[%s209 + $0x80] sm:$0xf]
      %v248 = vld [vmem:[%s209 + $0x84] sm:$0xff]
      %v249 = vld [vmem:[%s209 + $0x8c] sm:$0xf]
      %v250 = vld [vmem:[%s209 + $0x90] sm:$0xff]
      %v251 = vld [vmem:[%s209 + $0x98] sm:$0xf]
      %v252 = vld [vmem:[%s209 + $0x9c] sm:$0xff]
      %v253 = vld [vmem:[%s209 + $0xa4] sm:$0xf]
      %v254 = vld [vmem:[%s209 + $0xa8] sm:$0xff]
      %v255 = vld [vmem:[%s209 + $0xb0] sm:$0xf]
      %v256 = vld [vmem:[%s209 + $0xb4] sm:$0xff]
      %v257 = vld [vmem:[%s209 + $0xbc] sm:$0xf]
      %v258 = vld [vmem:[%s209 + $0xc0] sm:$0xff]
      %v259 = vld [vmem:[%s209 + $0xc8] sm:$0xf]
      %v260 = vld [vmem:[%s209 + $0xcc] sm:$0xff]
      %v261 = vld [vmem:[%s209 + $0xd4] sm:$0xf]
      %v262 = vld [vmem:[%s209 + $0xd8] sm:$0xff]
      %v263 = vld [vmem:[%s209 + $0xe0] sm:$0xf]
      %v264 = vld [vmem:[%s209 + $0xe4] sm:$0xff]
      %v265 = vld [vmem:[%s209 + $0xec] sm:$0xf]
      %v266 = vld [vmem:[%s209 + $0xf0] sm:$0xff]
      %v267 = vld [vmem:[%s209 + $0xf8] sm:$0xf]
      %v268 = vld [vmem:[%s209 + $0xfc] sm:$0xff]
      %v269 = vld [vmem:[%s209 + $0x104] sm:$0xf]
      %v270 = vld [vmem:[%s209 + $0x108] sm:$0xff]
      %v271 = vld [vmem:[%s209 + $0x110] sm:$0xf]
      %v272 = vld [vmem:[%s209 + $0x114] sm:$0xff]
      %v273 = vld [vmem:[%s209 + $0x11c] sm:$0xf]
      %v274 = vld [vmem:[%s209 + $0x120] sm:$0xff]
      %v275 = vld [vmem:[%s209 + $0x128] sm:$0xf]
      %v276 = vld [vmem:[%s209 + $0x12c] sm:$0xff]
      %v277 = vld [vmem:[%s209 + $0x134] sm:$0xf]
      %v278 = vld [vmem:[%s209 + $0x138] sm:$0xff]
      %v279 = vld [vmem:[%s209 + $0x140] sm:$0xf]
      %v280 = vld [vmem:[%s1] sm:$0xf]
      %v281 = vld [vmem:[%s1 + $0x4] sm:$0xf]
      %v282 = vld [vmem:[%s1 + $0x8] sm:$0xf]
      %v283 = vld [vmem:[%s1 + $0xc] sm:$0xf]
      %v284 = vld [vmem:[%s1 + $0x10] sm:$0xf]
      %v285 = vld [vmem:[%s1 + $0x14] sm:$0xf]
      %v286 = vld [vmem:[%s1 + $0x18] sm:$0xf]
      %v287 = vld [vmem:[%s1 + $0x1c] sm:$0xf]
      %v288 = vld [vmem:[%s1 + $0x20] sm:$0xf]
      %v289 = vld [vmem:[%s1 + $0x24] sm:$0xf]
      %v290 = vld [vmem:[%s1 + $0x28] sm:$0xf]
      %v291 = vld [vmem:[%s1 + $0x2c] sm:$0xf]
      %v292 = vld [vmem:[%s1 + $0x30] sm:$0xf]
      %v293 = vld [vmem:[%s1 + $0x34] sm:$0xf]
      %v294 = vld [vmem:[%s1 + $0x38] sm:$0xf]
      %v295 = vld [vmem:[%s1 + $0x3c] sm:$0xf]
      %v296 = vld [vmem:[%s1 + $0x40] sm:$0xf]
      %v297 = vld [vmem:[%s1 + $0x44] sm:$0xf]
      %v298 = vld [vmem:[%s1 + $0x48] sm:$0xf]
      %v299 = vld [vmem:[%s1 + $0x4c] sm:$0xf]
      %v300 = vld [vmem:[%s1 + $0x50] sm:$0xf]
      %v301 = vld [vmem:[%s1 + $0x54] sm:$0xf]
      %v302 = vld [vmem:[%s1 + $0x58] sm:$0xf]
      %v303 = vld [vmem:[%s1 + $0x5c] sm:$0xf]
      %v304 = vld [vmem:[%s1 + $0x60] sm:$0xf]
      %v305 = vld [vmem:[%s1 + $0x64] sm:$0xf]
      %v306 = vld [vmem:[%s1 + $0x68] sm:$0xf]
      %v307 = vld [vmem:[%s1 + $0x6c] sm:$0xf]
      %v308 = vld [vmem:[%s1 + $0x70] sm:$0xf]
      %v309 = vld [vmem:[%s1 + $0x74] sm:$0xf]
      %v310 = vld [vmem:[%s1 + $0x78] sm:$0xf]
      %v311 = vld [vmem:[%s1 + $0x7c] sm:$0xf]
      %v312 = vld [vmem:[%s1 + $0x80] sm:$0xf]
      %v313 = vld [vmem:[%s1 + $0x84] sm:$0xf]
      %v314 = vld [vmem:[%s1 + $0x88] sm:$0xf]
      %v315 = vld [vmem:[%s1 + $0x8c] sm:$0xf]
      %v370 = vunpack.c.l.b16 %v226
      %v371 = vunpack.c.h.b16 %v226
      %v372 = vunpack.c.l.b16 %v227
      %v373 = vunpack.c.l.b16 %v228
      %v374 = vunpack.c.h.b16 %v228
      %v375 = vunpack.c.l.b16 %v229
      %v376 = vunpack.c.l.b16 %v230
      %v377 = vunpack.c.h.b16 %v230
      %v378 = vunpack.c.l.b16 %v231
      %v379 = vunpack.c.l.b16 %v232
      %v380 = vunpack.c.h.b16 %v232
      %v381 = vunpack.c.l.b16 %v233
      %v382 = vunpack.c.l.b16 %v234
      %v383 = vunpack.c.h.b16 %v234
      %v384 = vunpack.c.l.b16 %v235
      %v385 = vunpack.c.l.b16 %v236
      %v386 = vunpack.c.h.b16 %v236
      %v387 = vunpack.c.l.b16 %v237
      %v388 = vunpack.c.l.b16 %v238
      %v389 = vunpack.c.h.b16 %v238
      %v390 = vunpack.c.l.b16 %v239
      %v391 = vunpack.c.l.b16 %v240
      %v392 = vunpack.c.h.b16 %v240
      %v393 = vunpack.c.l.b16 %v241
      %v394 = vunpack.c.l.b16 %v242
      %v395 = vunpack.c.h.b16 %v242
      %v396 = vunpack.c.l.b16 %v243
      %v397 = vunpack.c.l.b16 %v244
      %v398 = vunpack.c.h.b16 %v244
      %v399 = vunpack.c.l.b16 %v245
      %v400 = vunpack.c.l.b16 %v246
      %v401 = vunpack.c.h.b16 %v246
      %v402 = vunpack.c.l.b16 %v247
      %v403 = vunpack.c.l.b16 %v248
      %v404 = vunpack.c.h.b16 %v248
      %v405 = vunpack.c.l.b16 %v249
      %v406 = vunpack.c.l.b16 %v250
      %v407 = vunpack.c.h.b16 %v250
      %v408 = vunpack.c.l.b16 %v251
      %v409 = vunpack.c.l.b16 %v252
      %v410 = vunpack.c.h.b16 %v252
      %v411 = vunpack.c.l.b16 %v253
      %v412 = vunpack.c.l.b16 %v254
      %v413 = vunpack.c.h.b16 %v254
      %v414 = vunpack.c.l.b16 %v255
      %v415 = vunpack.c.l.b16 %v256
      %v416 = vunpack.c.h.b16 %v256
      %v417 = vunpack.c.l.b16 %v257
      %v418 = vunpack.c.l.b16 %v258
      %v419 = vunpack.c.h.b16 %v258
      %v420 = vunpack.c.l.b16 %v259
      %v421 = vunpack.c.l.b16 %v260
      %v422 = vunpack.c.h.b16 %v260
      %v423 = vunpack.c.l.b16 %v261
      %v424 = vunpack.c.l.b16 %v262
      %v425 = vunpack.c.h.b16 %v262
      %v426 = vunpack.c.l.b16 %v263
      %v427 = vunpack.c.l.b16 %v264
      %v428 = vunpack.c.h.b16 %v264
      %v429 = vunpack.c.l.b16 %v265
      %v430 = vunpack.c.l.b16 %v266
      %v431 = vunpack.c.h.b16 %v266
      %v432 = vunpack.c.l.b16 %v267
      %v433 = vunpack.c.l.b16 %v268
      %v434 = vunpack.c.h.b16 %v268
      %v435 = vunpack.c.l.b16 %v269
      %v436 = vunpack.c.l.b16 %v270
      %v437 = vunpack.c.h.b16 %v270
      %v438 = vunpack.c.l.b16 %v271
      %v439 = vunpack.c.l.b16 %v272
      %v440 = vunpack.c.h.b16 %v272
      %v441 = vunpack.c.l.b16 %v273
      %v442 = vunpack.c.l.b16 %v274
      %v443 = vunpack.c.h.b16 %v274
      %v444 = vunpack.c.l.b16 %v275
      %v445 = vunpack.c.l.b16 %v276
      %v446 = vunpack.c.h.b16 %v276
      %v447 = vunpack.c.l.b16 %v277
      %v448 = vunpack.c.l.b16 %v278
      %v449 = vunpack.c.h.b16 %v278
      %v450 = vunpack.c.l.b16 %v279
      %v451 = vpack.c.b16 %v373, %v370
      %v452 = vpack.c.b16 %v374, %v371
      %v453 = vpack.c.b16 %v375, %v372
      %v454 = vpack.c.b16 %v379, %v376
      %v455 = vpack.c.b16 %v380, %v377
      %v456 = vpack.c.b16 %v381, %v378
      %v457 = vpack.c.b16 %v385, %v382
      %v458 = vpack.c.b16 %v386, %v383
      %v459 = vpack.c.b16 %v387, %v384
      %v460 = vpack.c.b16 %v391, %v388
      %v461 = vpack.c.b16 %v392, %v389
      %v462 = vpack.c.b16 %v393, %v390
      %v463 = vpack.c.b16 %v397, %v394
      %v464 = vpack.c.b16 %v398, %v395
      %v465 = vpack.c.b16 %v399, %v396
      %v466 = vpack.c.b16 %v403, %v400
      %v467 = vpack.c.b16 %v404, %v401
      %v468 = vpack.c.b16 %v405, %v402
      %v469 = vpack.c.b16 %v409, %v406
      %v470 = vpack.c.b16 %v410, %v407
      %v471 = vpack.c.b16 %v411, %v408
      %v472 = vpack.c.b16 %v415, %v412
      %v473 = vpack.c.b16 %v416, %v413
      %v474 = vpack.c.b16 %v417, %v414
      %v475 = vpack.c.b16 %v421, %v418
      %v476 = vpack.c.b16 %v422, %v419
      %v477 = vpack.c.b16 %v423, %v420
      %v478 = vpack.c.b16 %v427, %v424
      %v479 = vpack.c.b16 %v428, %v425
      %v480 = vpack.c.b16 %v429, %v426
      %v481 = vpack.c.b16 %v433, %v430
      %v482 = vpack.c.b16 %v434, %v431
      %v483 = vpack.c.b16 %v435, %v432
      %v484 = vpack.c.b16 %v439, %v436
      %v485 = vpack.c.b16 %v440, %v437
      %v486 = vpack.c.b16 %v441, %v438
      %v487 = vpack.c.b16 %v445, %v442
      %v488 = vpack.c.b16 %v446, %v443
      %v489 = vpack.c.b16 %v447, %v444
      %v490 = vpack.c.b16 %v448, %v448
      %v491 = vpack.c.b16 %v449, %v449
      %v492 = vpack.c.b16 %v450, %v450
      %v557 = vunpack.c.l.b16 %v280
      %v558 = vunpack.c.l.b16 %v281
      %v559 = vunpack.c.l.b16 %v282
      %v560 = vunpack.c.l.b16 %v283
      %v561 = vunpack.c.l.b16 %v284
      %v562 = vunpack.c.l.b16 %v285
      %v563 = vunpack.c.l.b16 %v286
      %v564 = vunpack.c.l.b16 %v287
      %v565 = vunpack.c.l.b16 %v288
      %v566 = vunpack.c.l.b16 %v289
      %v567 = vunpack.c.l.b16 %v290
      %v568 = vunpack.c.l.b16 %v291
      %v569 = vunpack.c.l.b16 %v292
      %v570 = vunpack.c.l.b16 %v293
      %v571 = vunpack.c.l.b16 %v294
      %v572 = vunpack.c.l.b16 %v295
      %v573 = vunpack.c.l.b16 %v296
      %v574 = vunpack.c.l.b16 %v297
      %v575 = vunpack.c.l.b16 %v298
      %v576 = vunpack.c.l.b16 %v299
      %v577 = vunpack.c.l.b16 %v300
      %v578 = vunpack.c.l.b16 %v301
      %v579 = vunpack.c.l.b16 %v302
      %v580 = vunpack.c.l.b16 %v303
      %v581 = vunpack.c.l.b16 %v304
      %v582 = vunpack.c.l.b16 %v305
      %v583 = vunpack.c.l.b16 %v306
      %v584 = vunpack.c.l.b16 %v307
      %v585 = vunpack.c.l.b16 %v308
      %v586 = vunpack.c.l.b16 %v309
      %v587 = vunpack.c.l.b16 %v310
      %v588 = vunpack.c.l.b16 %v311
      %v589 = vunpack.c.l.b16 %v312
      %v590 = vunpack.c.l.b16 %v313
      %v591 = vunpack.c.l.b16 %v314
      %v592 = vunpack.c.l.b16 %v315
      %v593 = vpack.c.b16 %v558, %v557
      %v594 = vpack.c.b16 %v560, %v559
      %v595 = vpack.c.b16 %v562, %v561
      %v596 = vpack.c.b16 %v564, %v563
      %v597 = vpack.c.b16 %v566, %v565
      %v598 = vpack.c.b16 %v568, %v567
      %v599 = vpack.c.b16 %v570, %v569
      %v600 = vpack.c.b16 %v572, %v571
      %v601 = vpack.c.b16 %v574, %v573
      %v602 = vpack.c.b16 %v576, %v575
      %v603 = vpack.c.b16 %v578, %v577
      %v604 = vpack.c.b16 %v580, %v579
      %v605 = vpack.c.b16 %v582, %v581
      %v606 = vpack.c.b16 %v584, %v583
      %v607 = vpack.c.b16 %v586, %v585
      %v608 = vpack.c.b16 %v588, %v587
      %v609 = vpack.c.b16 %v590, %v589
      %v610 = vpack.c.b16 %v592, %v591
      %vm629 = vcmask 261120
      %v631 = vsel %vm629, %v453, 0
      %v634 = vsel %vm629, %v456, 0
      %v637 = vsel %vm629, %v459, 0
      %v640 = vsel %vm629, %v462, 0
      %v643 = vsel %vm629, %v465, 0
      %v646 = vsel %vm629, %v468, 0
      %v649 = vsel %vm629, %v471, 0
      %v652 = vsel %vm629, %v474, 0
      %v655 = vsel %vm629, %v477, 0
      %v658 = vsel %vm629, %v480, 0
      %v661 = vsel %vm629, %v483, 0
      %v664 = vsel %vm629, %v486, 0
      %v667 = vsel %vm629, %v489, 0
      %v670 = vsel %vm629, %v492, 0
      %672 = vmatprep.subr.bf16.mxu0 0
      %673 = vmatpush1.bf16.msra.mxu0 %v593
      %674 = vmatprep.subr.bf16.mxu0 0
      %675 = vmatpush1.bf16.msra.mxu0 %v594
      %676 = vmatprep.subr.bf16.mxu0 0
      %677 = vmatpush1.bf16.msra.mxu0 %v595
      %678 = vmatprep.subr.bf16.mxu0 0
      %679 = vmatpush1.bf16.msra.mxu0 %v596
      %680 = vmatprep.subr.bf16.mxu0 0
      %681 = vmatpush1.bf16.msra.mxu0 %v597
      %682 = vmatprep.subr.bf16.mxu0 0
      %683 = vmatpush1.bf16.msra.mxu0 %v598
      %684 = vmatprep.subr.bf16.mxu0 0
      %685 = vmatpush1.bf16.msra.mxu0 %v599
      %686 = vmatprep.subr.bf16.mxu0 0
      %687 = vmatpush1.bf16.msra.mxu0 %v600
      %688 = vmatprep.subr.bf16.mxu0 0
      %689 = vmatpush1.bf16.msra.mxu0 %v601
      %690 = vmatprep.subr.bf16.mxu0 0
      %691 = vmatpush1.bf16.msra.mxu0 %v602
      %692 = vmatprep.subr.bf16.mxu0 0
      %693 = vmatpush1.bf16.msra.mxu0 %v603
      %694 = vmatprep.subr.bf16.mxu0 0
      %695 = vmatpush1.bf16.msra.mxu0 %v604
      %696 = vmatprep.subr.bf16.mxu0 0
      %697 = vmatpush1.bf16.msra.mxu0 %v605
      %698 = vmatprep.subr.bf16.mxu0 0
      %699 = vmatpush1.bf16.msra.mxu0 %v606
      %700 = vmatprep.subr.bf16.mxu0 0
      %701 = vmatpush1.bf16.msra.mxu0 %v607
      %702 = vmatprep.subr.bf16.mxu0 0
      %703 = vmatpush1.bf16.msra.mxu0 %v608
      %704 = vmatprep.mubr.bf16.mxu0 %v452
      %705 = vmatmul.mubr.bf16.gmra.mrb[0].mxu0 %v451
      %v706 = vpop.f32.mrb[0].mxu0
      %v707 = vadd.f32 0.0, %v706
      %v708 = vpop.f32.mrb[0].mxu0
      %v709 = vpop.f32.mrb[0].mxu0
      %v710 = vadd.f32 0.0, %v709
      %v711 = vpop.f32.mrb[0].mxu0
      %712 = vmatprep.mubr.bf16.mxu0 %v455
      %713 = vmatmul.mubr.bf16.gmra.mrb[0].mxu0 %v454
      %v714 = vpop.f32.mrb[0].mxu0
      %v715 = vadd.f32 0.0, %v714
      %v716 = vpop.f32.mrb[0].mxu0
      %v717 = vpop.f32.mrb[0].mxu0
      %v718 = vadd.f32 0.0, %v717
      %v719 = vpop.f32.mrb[0].mxu0
      %720 = vmatprep.mubr.bf16.mxu0 %v458
      %721 = vmatmul.mubr.bf16.gmra.mrb[0].mxu0 %v457
      %v722 = vpop.f32.mrb[0].mxu0
      %v723 = vadd.f32 0.0, %v722
      %v724 = vpop.f32.mrb[0].mxu0
      %v725 = vpop.f32.mrb[0].mxu0
      %v726 = vadd.f32 0.0, %v725
      %v727 = vpop.f32.mrb[0].mxu0
      %728 = vmatprep.mubr.bf16.mxu0 %v461
      %729 = vmatmul.mubr.bf16.gmra.mrb[0].mxu0 %v460
      %v730 = vpop.f32.mrb[0].mxu0
      %v731 = vadd.f32 0.0, %v730
      %v732 = vpop.f32.mrb[0].mxu0
      %v733 = vpop.f32.mrb[0].mxu0
      %v734 = vadd.f32 0.0, %v733
      %v735 = vpop.f32.mrb[0].mxu0
      %736 = vmatprep.mubr.bf16.mxu0 %v464
      %737 = vmatmul.mubr.bf16.gmra.mrb[0].mxu0 %v463
      %v738 = vpop.f32.mrb[0].mxu0
      %v739 = vadd.f32 0.0, %v738
      %v740 = vpop.f32.mrb[0].mxu0
      %v741 = vpop.f32.mrb[0].mxu0
      %v742 = vadd.f32 0.0, %v741
      %v743 = vpop.f32.mrb[0].mxu0
      %744 = vmatprep.mubr.bf16.mxu0 %v467
      %745 = vmatmul.mubr.bf16.gmra.mrb[0].mxu0 %v466
      %v746 = vpop.f32.mrb[0].mxu0
      %v747 = vadd.f32 0.0, %v746
      %v748 = vpop.f32.mrb[0].mxu0
      %v749 = vpop.f32.mrb[0].mxu0
      %v750 = vadd.f32 0.0, %v749
      %v751 = vpop.f32.mrb[0].mxu0
      %752 = vmatprep.mubr.bf16.mxu0 %v470
      %753 = vmatmul.mubr.bf16.gmra.mrb[0].mxu0 %v469
      %v754 = vpop.f32.mrb[0].mxu0
      %v755 = vadd.f32 0.0, %v754
      %v756 = vpop.f32.mrb[0].mxu0
      %v757 = vpop.f32.mrb[0].mxu0
      %v758 = vadd.f32 0.0, %v757
      %v759 = vpop.f32.mrb[0].mxu0
      %760 = vmatprep.mubr.bf16.mxu0 %v473
      %761 = vmatmul.mubr.bf16.gmra.mrb[0].mxu0 %v472
      %v762 = vpop.f32.mrb[0].mxu0
      %v763 = vadd.f32 0.0, %v762
      %v764 = vpop.f32.mrb[0].mxu0
      %v765 = vpop.f32.mrb[0].mxu0
      %v766 = vadd.f32 0.0, %v765
      %v767 = vpop.f32.mrb[0].mxu0
      %768 = vmatprep.mubr.bf16.mxu0 %v476
      %769 = vmatmul.mubr.bf16.gmra.mrb[0].mxu0 %v475
      %v770 = vpop.f32.mrb[0].mxu0
      %v771 = vadd.f32 0.0, %v770
      %v772 = vpop.f32.mrb[0].mxu0
      %v773 = vpop.f32.mrb[0].mxu0
      %v774 = vadd.f32 0.0, %v773
      %v775 = vpop.f32.mrb[0].mxu0
      %776 = vmatprep.mubr.bf16.mxu0 %v479
      %777 = vmatmul.mubr.bf16.gmra.mrb[0].mxu0 %v478
      %v778 = vpop.f32.mrb[0].mxu0
      %v779 = vadd.f32 0.0, %v778
      %v780 = vpop.f32.mrb[0].mxu0
      %v781 = vpop.f32.mrb[0].mxu0
      %v782 = vadd.f32 0.0, %v781
      %v783 = vpop.f32.mrb[0].mxu0
      %784 = vmatprep.mubr.bf16.mxu0 %v482
      %785 = vmatmul.mubr.bf16.gmra.mrb[0].mxu0 %v481
      %v786 = vpop.f32.mrb[0].mxu0
      %v787 = vadd.f32 0.0, %v786
      %v788 = vpop.f32.mrb[0].mxu0
      %v789 = vpop.f32.mrb[0].mxu0
      %v790 = vadd.f32 0.0, %v789
      %v791 = vpop.f32.mrb[0].mxu0
      %792 = vmatprep.mubr.bf16.mxu0 %v485
      %793 = vmatmul.mubr.bf16.gmra.mrb[0].mxu0 %v484
      %v794 = vpop.f32.mrb[0].mxu0
      %v795 = vadd.f32 0.0, %v794
      %v796 = vpop.f32.mrb[0].mxu0
      %v797 = vpop.f32.mrb[0].mxu0
      %v798 = vadd.f32 0.0, %v797
      %v799 = vpop.f32.mrb[0].mxu0
      %800 = vmatprep.mubr.bf16.mxu0 %v488
      %801 = vmatmul.mubr.bf16.gmra.mrb[0].mxu0 %v487
      %v802 = vpop.f32.mrb[0].mxu0
      %v803 = vadd.f32 0.0, %v802
      %v804 = vpop.f32.mrb[0].mxu0
      %v805 = vpop.f32.mrb[0].mxu0
      %v806 = vadd.f32 0.0, %v805
      %v807 = vpop.f32.mrb[0].mxu0
      %808 = vmatprep.mubr.bf16.mxu0 %v491
      %809 = vmatmul.mubr.bf16.gmra.mrb[0].mxu0 %v490
      %v810 = vpop.f32.mrb[0].mxu0
      %v811 = vadd.f32 0.0, %v810
      %v812 = vpop.f32.mrb[0].mxu0
      %v813 = vpop.f32.mrb[0].mxu0
      %v814 = vpop.f32.mrb[0].mxu0
      %815 = vdwg.mxu0
      %816 = vmatprep.subr.bf16.mxu0 0
      %817 = vmatpush1.bf16.msra.mxu0 %v609
      %818 = vmatprep.subr.bf16.mxu0 0
      %819 = vmatpush1.bf16.msra.mxu0 %v610
      %820 = vmatprep.subr.bf16.mxu0 0
      %821 = vmatpush1.bf16.msra.mxu0 0
      %822 = vmatprep.subr.bf16.mxu0 0
      %823 = vmatpush1.bf16.msra.mxu0 0
      %824 = vmatprep.subr.bf16.mxu0 0
      %825 = vmatpush1.bf16.msra.mxu0 0
      %826 = vmatprep.subr.bf16.mxu0 0
      %827 = vmatpush1.bf16.msra.mxu0 0
      %828 = vmatprep.subr.bf16.mxu0 0
      %829 = vmatpush1.bf16.msra.mxu0 0
      %830 = vmatprep.subr.bf16.mxu0 0
      %831 = vmatpush1.bf16.msra.mxu0 0
      %832 = vmatprep.subr.bf16.mxu0 0
      %833 = vmatpush1.bf16.msra.mxu0 0
      %834 = vmatprep.subr.bf16.mxu0 0
      %835 = vmatpush1.bf16.msra.mxu0 0
      %836 = vmatprep.subr.bf16.mxu0 0
      %837 = vmatpush1.bf16.msra.mxu0 0
      %838 = vmatprep.subr.bf16.mxu0 0
      %839 = vmatpush1.bf16.msra.mxu0 0
      %840 = vmatprep.subr.bf16.mxu0 0
      %841 = vmatpush1.bf16.msra.mxu0 0
      %842 = vmatprep.subr.bf16.mxu0 0
      %843 = vmatpush1.bf16.msra.mxu0 0
      %844 = vmatprep.subr.bf16.mxu0 0
      %845 = vmatpush1.bf16.msra.mxu0 0
      %846 = vmatprep.subr.bf16.mxu0 0
      %847 = vmatpush1.bf16.msra.mxu0 0
      %848 = vmatprep.mubr.bf16.mxu0 0
      %849 = vmatmul.mubr.bf16.gmra.mrb[0].mxu0 %v631
      %v850 = vpop.f32.mrb[0].mxu0
      %v851 = vadd.f32 %v707, %v850
      %v852 = vpop.f32.mrb[0].mxu0
      %v853 = vpop.f32.mrb[0].mxu0
      %v854 = vadd.f32 %v710, %v853
      %v855 = vpop.f32.mrb[0].mxu0
      %856 = vmatprep.mubr.bf16.mxu0 0
      %857 = vmatmul.mubr.bf16.gmra.mrb[0].mxu0 %v634
      %v858 = vpop.f32.mrb[0].mxu0
      %v859 = vadd.f32 %v715, %v858
      %v860 = vpop.f32.mrb[0].mxu0
      %v861 = vpop.f32.mrb[0].mxu0
      %v862 = vadd.f32 %v718, %v861
      %v863 = vpop.f32.mrb[0].mxu0
      %864 = vmatprep.mubr.bf16.mxu0 0
      %865 = vmatmul.mubr.bf16.gmra.mrb[0].mxu0 %v637
      %v866 = vpop.f32.mrb[0].mxu0
      %v867 = vadd.f32 %v723, %v866
      %v868 = vpop.f32.mrb[0].mxu0
      %v869 = vpop.f32.mrb[0].mxu0
      %v870 = vadd.f32 %v726, %v869
      %v871 = vpop.f32.mrb[0].mxu0
      %872 = vmatprep.mubr.bf16.mxu0 0
      %873 = vmatmul.mubr.bf16.gmra.mrb[0].mxu0 %v640
      %v874 = vpop.f32.mrb[0].mxu0
      %v875 = vadd.f32 %v731, %v874
      %v876 = vpop.f32.mrb[0].mxu0
      %v877 = vpop.f32.mrb[0].mxu0
      %v878 = vadd.f32 %v734, %v877
      %v879 = vpop.f32.mrb[0].mxu0
      %880 = vmatprep.mubr.bf16.mxu0 0
      %881 = vmatmul.mubr.bf16.gmra.mrb[0].mxu0 %v643
      %v882 = vpop.f32.mrb[0].mxu0
      %v883 = vadd.f32 %v739, %v882
      %v884 = vpop.f32.mrb[0].mxu0
      %v885 = vpop.f32.mrb[0].mxu0
      %v886 = vadd.f32 %v742, %v885
      %v887 = vpop.f32.mrb[0].mxu0
      %888 = vmatprep.mubr.bf16.mxu0 0
      %889 = vmatmul.mubr.bf16.gmra.mrb[0].mxu0 %v646
      %v890 = vpop.f32.mrb[0].mxu0
      %v891 = vadd.f32 %v747, %v890
      %v892 = vpop.f32.mrb[0].mxu0
      %v893 = vpop.f32.mrb[0].mxu0
      %v894 = vadd.f32 %v750, %v893
      %v895 = vpop.f32.mrb[0].mxu0
      %896 = vmatprep.mubr.bf16.mxu0 0
      %897 = vmatmul.mubr.bf16.gmra.mrb[0].mxu0 %v649
      %v898 = vpop.f32.mrb[0].mxu0
      %v899 = vadd.f32 %v755, %v898
      %v900 = vpop.f32.mrb[0].mxu0
      %v901 = vpop.f32.mrb[0].mxu0
      %v902 = vadd.f32 %v758, %v901
      %v903 = vpop.f32.mrb[0].mxu0
      %904 = vmatprep.mubr.bf16.mxu0 0
      %905 = vmatmul.mubr.bf16.gmra.mrb[0].mxu0 %v652
      %v906 = vpop.f32.mrb[0].mxu0
      %v907 = vadd.f32 %v763, %v906
      %v908 = vpop.f32.mrb[0].mxu0
      %v909 = vpop.f32.mrb[0].mxu0
      %v910 = vadd.f32 %v766, %v909
      %v911 = vpop.f32.mrb[0].mxu0
      %912 = vmatprep.mubr.bf16.mxu0 0
      %913 = vmatmul.mubr.bf16.gmra.mrb[0].mxu0 %v655
      %v914 = vpop.f32.mrb[0].mxu0
      %v915 = vadd.f32 %v771, %v914
      %v916 = vpop.f32.mrb[0].mxu0
      %v917 = vpop.f32.mrb[0].mxu0
      %v918 = vadd.f32 %v774, %v917
      %v919 = vpop.f32.mrb[0].mxu0
      %920 = vmatprep.mubr.bf16.mxu0 0
      %921 = vmatmul.mubr.bf16.gmra.mrb[0].mxu0 %v658
      %v922 = vpop.f32.mrb[0].mxu0
      %v923 = vadd.f32 %v779, %v922
      %v924 = vpop.f32.mrb[0].mxu0
      %v925 = vpop.f32.mrb[0].mxu0
      %v926 = vadd.f32 %v782, %v925
      %v927 = vpop.f32.mrb[0].mxu0
      %928 = vmatprep.mubr.bf16.mxu0 0
      %929 = vmatmul.mubr.bf16.gmra.mrb[0].mxu0 %v661
      %v930 = vpop.f32.mrb[0].mxu0
      %v931 = vadd.f32 %v787, %v930
      %v932 = vpop.f32.mrb[0].mxu0
      %v933 = vpop.f32.mrb[0].mxu0
      %v934 = vadd.f32 %v790, %v933
      %v935 = vpop.f32.mrb[0].mxu0
      %936 = vmatprep.mubr.bf16.mxu0 0
      %937 = vmatmul.mubr.bf16.gmra.mrb[0].mxu0 %v664
      %v938 = vpop.f32.mrb[0].mxu0
      %v939 = vadd.f32 %v795, %v938
      %v940 = vpop.f32.mrb[0].mxu0
      %v941 = vpop.f32.mrb[0].mxu0
      %v942 = vadd.f32 %v798, %v941
      %v943 = vpop.f32.mrb[0].mxu0
      %944 = vmatprep.mubr.bf16.mxu0 0
      %945 = vmatmul.mubr.bf16.gmra.mrb[0].mxu0 %v667
      %v946 = vpop.f32.mrb[0].mxu0
      %v947 = vadd.f32 %v803, %v946
      %v948 = vpop.f32.mrb[0].mxu0
      %v949 = vpop.f32.mrb[0].mxu0
      %v950 = vadd.f32 %v806, %v949
      %v951 = vpop.f32.mrb[0].mxu0
      %952 = vmatprep.mubr.bf16.mxu0 0
      %953 = vmatmul.mubr.bf16.gmra.mrb[0].mxu0 %v670
      %v954 = vpop.f32.mrb[0].mxu0
      %v955 = vadd.f32 %v811, %v954
      %v956 = vpop.f32.mrb[0].mxu0
      %v957 = vpop.f32.mrb[0].mxu0
      %v958 = vpop.f32.mrb[0].mxu0
      %959 = vdwg.mxu0
      %960 = vst [vmem:[%s215] sm:$0xff] %v851
      %961 = vst [vmem:[%s215 + $0x8] sm:$0xff] %v854
      %962 = vst [vmem:[%s215 + $0x10] sm:$0xff] %v859
      %963 = vst [vmem:[%s215 + $0x18] sm:$0xff] %v862
      %964 = vst [vmem:[%s215 + $0x20] sm:$0xff] %v867
      %965 = vst [vmem:[%s215 + $0x28] sm:$0xff] %v870
      %966 = vst [vmem:[%s215 + $0x30] sm:$0xff] %v875
      %967 = vst [vmem:[%s215 + $0x38] sm:$0xff] %v878
      %968 = vst [vmem:[%s215 + $0x40] sm:$0xff] %v883
      %969 = vst [vmem:[%s215 + $0x48] sm:$0xff] %v886
      %970 = vst [vmem:[%s215 + $0x50] sm:$0xff] %v891
      %971 = vst [vmem:[%s215 + $0x58] sm:$0xff] %v894
      %972 = vst [vmem:[%s215 + $0x60] sm:$0xff] %v899
      %973 = vst [vmem:[%s215 + $0x68] sm:$0xff] %v902
      %974 = vst [vmem:[%s215 + $0x70] sm:$0xff] %v907
      %975 = vst [vmem:[%s215 + $0x78] sm:$0xff] %v910
      %976 = vst [vmem:[%s215 + $0x80] sm:$0xff] %v915
      %977 = vst [vmem:[%s215 + $0x88] sm:$0xff] %v918
      %978 = vst [vmem:[%s215 + $0x90] sm:$0xff] %v923
      %979 = vst [vmem:[%s215 + $0x98] sm:$0xff] %v926
      %980 = vst [vmem:[%s215 + $0xa0] sm:$0xff] %v931
      %981 = vst [vmem:[%s215 + $0xa8] sm:$0xff] %v934
      %982 = vst [vmem:[%s215 + $0xb0] sm:$0xff] %v939
      %983 = vst [vmem:[%s215 + $0xb8] sm:$0xff] %v942
      %984 = vst [vmem:[%s215 + $0xc0] sm:$0xff] %v947
      %985 = vst [vmem:[%s215 + $0xc8] sm:$0xff] %v950
      %986 = vst [vmem:[%s215 + $0xd0] sm:$0xff] %v955
      %v987 = vadd.f32 %v851, %v854
      %v988 = vadd.f32 %v987, %v859
      %v989 = vadd.f32 %v988, %v862
      %v990 = vadd.f32 %v989, %v867
      %v991 = vadd.f32 %v990, %v870
      %v992 = vadd.f32 %v991, %v875
      %v993 = vadd.f32 %v992, %v878
      %v994 = vadd.f32 %v993, %v883
      %v995 = vadd.f32 %v994, %v886
      %v996 = vadd.f32 %v995, %v891
      %v997 = vadd.f32 %v996, %v894
      %v998 = vadd.f32 %v997, %v899
      %v999 = vadd.f32 %v998, %v902
      %v1000 = vadd.f32 %v999, %v907
      %v1001 = vadd.f32 %v1000, %v910
      %v1002 = vadd.f32 %v1001, %v915
      %v1003 = vadd.f32 %v1002, %v918
      %v1004 = vadd.f32 %v1003, %v923
      %v1005 = vadd.f32 %v1004, %v926
      %v1006 = vadd.f32 %v1005, %v931
      %v1007 = vadd.f32 %v1006, %v934
      %v1008 = vadd.f32 %v1007, %v939
      %v1009 = vadd.f32 %v1008, %v942
      %v1010 = vadd.f32 %v1009, %v947
      %v1011 = vadd.f32 %v1010, %v950
      %v1012 = vadd.f32 %v1011, %v955
      %v1013 = vrot.slane %v1012, 4
      %v1014 = vadd.f32 %v1012, %v1013
      %v1015 = vrot.slane %v1014, 2
      %v1016 = vadd.f32 %v1014, %v1015
      %v1017 = vrot.slane %v1016, 1
      %v1018 = vadd.f32 %v1016, %v1017
      %1019 = vst [vmem:[%s220] sm:$0xff] %v1018
      %v1020 = vmul.f32 %v851, %v851
      %v1021 = vmul.f32 %v854, %v854
      %v1022 = vmul.f32 %v859, %v859
      %v1023 = vmul.f32 %v862, %v862
      %v1024 = vmul.f32 %v867, %v867
      %v1025 = vmul.f32 %v870, %v870
      %v1026 = vmul.f32 %v875, %v875
      %v1027 = vmul.f32 %v878, %v878
      %v1028 = vmul.f32 %v883, %v883
      %v1029 = vmul.f32 %v886, %v886
      %v1030 = vmul.f32 %v891, %v891
      %v1031 = vmul.f32 %v894, %v894
      %v1032 = vmul.f32 %v899, %v899
      %v1033 = vmul.f32 %v902, %v902
      %v1034 = vmul.f32 %v907, %v907
      %v1035 = vmul.f32 %v910, %v910
      %v1036 = vmul.f32 %v915, %v915
      %v1037 = vmul.f32 %v918, %v918
      %v1038 = vmul.f32 %v923, %v923
      %v1039 = vmul.f32 %v926, %v926
      %v1040 = vmul.f32 %v931, %v931
      %v1041 = vmul.f32 %v934, %v934
      %v1042 = vmul.f32 %v939, %v939
      %v1043 = vmul.f32 %v942, %v942
      %v1044 = vmul.f32 %v947, %v947
      %v1045 = vmul.f32 %v950, %v950
      %v1046 = vmul.f32 %v955, %v955
      %v1047 = vadd.f32 %v1020, %v1021
      %v1048 = vadd.f32 %v1047, %v1022
      %v1049 = vadd.f32 %v1048, %v1023
      %v1050 = vadd.f32 %v1049, %v1024
      %v1051 = vadd.f32 %v1050, %v1025
      %v1052 = vadd.f32 %v1051, %v1026
      %v1053 = vadd.f32 %v1052, %v1027
      %v1054 = vadd.f32 %v1053, %v1028
      %v1055 = vadd.f32 %v1054, %v1029
      %v1056 = vadd.f32 %v1055, %v1030
      %v1057 = vadd.f32 %v1056, %v1031
      %v1058 = vadd.f32 %v1057, %v1032
      %v1059 = vadd.f32 %v1058, %v1033
      %v1060 = vadd.f32 %v1059, %v1034
      %v1061 = vadd.f32 %v1060, %v1035
      %v1062 = vadd.f32 %v1061, %v1036
      %v1063 = vadd.f32 %v1062, %v1037
      %v1064 = vadd.f32 %v1063, %v1038
      %v1065 = vadd.f32 %v1064, %v1039
      %v1066 = vadd.f32 %v1065, %v1040
      %v1067 = vadd.f32 %v1066, %v1041
      %v1068 = vadd.f32 %v1067, %v1042
      %v1069 = vadd.f32 %v1068, %v1043
      %v1070 = vadd.f32 %v1069, %v1044
      %v1071 = vadd.f32 %v1070, %v1045
      %v1072 = vadd.f32 %v1071, %v1046
      %v1073 = vrot.slane %v1072, 4
      %v1074 = vadd.f32 %v1072, %v1073
      %v1075 = vrot.slane %v1074, 2
      %v1076 = vadd.f32 %v1074, %v1075
      %v1077 = vrot.slane %v1076, 1
      %v1078 = vadd.f32 %v1076, %v1077
      %1079 = vst [vmem:[%s224] sm:$0xff] %v1078
      %s1080 = smul.u32 27, %s16
      %p1081 = scmp.lt.s32.totalorder %s1080, 80
      %s1082 = scalar_select %p1081, %s1080, 80
      %s1083 = smul.addr %s1082, 8
      %s1084 = scalar_lea.vmem %s2, %s1083
      %p1085 = scmp.lt.s32.totalorder %s16, 2
      %s1086 = scalar_select %p1085, %s16, 2
      %s1087 = smul.addr %s1086, 8
      %s1088 = scalar_lea.vmem %s3, %s1087
      %p1089 = scmp.lt.s32.totalorder %s16, 2
      %s1090 = scalar_select %p1089, %s16, 2
      %s1091 = smul.addr %s1090, 8
      %s1092 = scalar_lea.vmem %s4, %s1091
      // Predicated region
      $region29: #{encoder_forward.9} parent=27 // pred_check
        %p1093 = pneg %p81
      $region30: #{encoder_forward.9} parent=27 // pred_check_branch
        %1095 = sbr.rel (%p1093) target = $region32
      $region31: #{encoder_forward.9} parent=27 // pred_region
        %s1096 = smul.u32 27, %s16
      $region32: #{encoder_forward.9} parent=27 // pred_fallthru
        _
      // Predicated region
      $region33: #{encoder_forward.9} parent=27 // pred_check
        %p1097 = pneg %p107
      $region34: #{encoder_forward.9} parent=27 // pred_check_branch
        %1099 = sbr.rel (%p1097) target = $region36
      $region35: #{encoder_forward.9} parent=27 // pred_region
        _
      $region36: #{encoder_forward.9} parent=27 // pred_fallthru
        _
      // Predicated region
      $region37: #{encoder_forward.9} parent=27 // pred_check
        %p1100 = pneg %p133
      $region38: #{encoder_forward.9} parent=27 // pred_check_branch
        %1102 = sbr.rel (%p1100) target = $region40
      $region39: #{encoder_forward.9} parent=27 // pred_region
        _
      $region40: #{encoder_forward.9} parent=27 // pred_fallthru
        _
    $region28: #{encoder_forward.9} parent=5 // pred_fallthru
      _
    %p1103 = scmp.le.s32.totalorder 2, %s11
    // Predicated region
    $region41: #{encoder_forward.9} parent=5 // pred_check
      %p1104 = pneg %p1103
    $region42: #{encoder_forward.9} parent=5 // pred_check_branch
      %1106 = sbr.rel (%p1104) target = $region44
    $region43: #{encoder_forward.9} parent=5 // pred_region
      %s1107 = ssub.s32 %s11, 2
      // Predicated region
      $region45: #{encoder_forward.9} parent=43 // pred_check
        %p1108 = pneg %p87
      $region46: #{encoder_forward.9} parent=43 // pred_check_branch
        %1110 = sbr.rel (%p1108) target = $region48
      $region47: #{encoder_forward.9} parent=43 // pred_region
        %s1111 = smul.u32 27, %s17
        %p1112 = scmp.lt.s32.totalorder %s1111, 80
        %s1113 = scalar_select %p1112, %s1111, 80
        %s1114 = smul.addr %s1113, 8
        %s1115 = scalar_lea.vmem %s2, %s1114
      $region48: #{encoder_forward.9} parent=43 // pred_fallthru
        _
      // Predicated region
      $region49: #{encoder_forward.9} parent=43 // pred_check
        %p1116 = pneg %p113
      $region50: #{encoder_forward.9} parent=43 // pred_check_branch
        %1118 = sbr.rel (%p1116) target = $region52
      $region51: #{encoder_forward.9} parent=43 // pred_region
        %p1119 = scmp.lt.s32.totalorder %s17, 2
        %s1120 = scalar_select %p1119, %s17, 2
        %s1121 = smul.addr %s1120, 8
        %s1122 = scalar_lea.vmem %s3, %s1121
      $region52: #{encoder_forward.9} parent=43 // pred_fallthru
        _
      // Predicated region
      $region53: #{encoder_forward.9} parent=43 // pred_check
        %p1123 = pneg %p139
      $region54: #{encoder_forward.9} parent=43 // pred_check_branch
        %1125 = sbr.rel (%p1123) target = $region56
      $region55: #{encoder_forward.9} parent=43 // pred_region
        %p1126 = scmp.lt.s32.totalorder %s17, 2
        %s1127 = scalar_select %p1126, %s17, 2
        %s1128 = smul.addr %s1127, 8
        %s1129 = scalar_lea.vmem %s4, %s1128
      $region56: #{encoder_forward.9} parent=43 // pred_fallthru
        _
    $region44: #{encoder_forward.9} parent=5 // pred_fallthru
      _
  $region6: #{encoder_forward.9} parent=0 // loop_footer
    %s15 = sadd.s32 1, %s11
  $region7: #{encoder_forward.9} parent=0 // loop_footer_branch
    %10 = sbr.rel target = $region3
  $region8: #{encoder_forward.9} parent=0 // loop_exit
    _

// kernel: encoder_forward.11
$region0: #{encoder_forward.11}
  #allocation0 [shape = 'u32[]', space=smem, size = 0x4, offset = 0x4, fixed_abs, tag = 'smem constant byte address 0x4 - core index']
  #allocation1 [shape = 'u32[144,128]{1,0:T(1,128)}', space=vmem, size = 0x12000, scoped, tag = 'internal scratch']
  %s0 = inlined_call_operand.vmem [shape: bf16[162,576], index: 0, kind: input, shape index: {}]
  %s1 = inlined_call_operand.vmem [shape: bf16[576,128], index: 1, kind: input, shape index: {}]
  %s2 = inlined_call_operand.vmem [shape: f32[162,128], index: 2, kind: output, shape index: {0}]
  %s3 = inlined_call_operand.vmem [shape: f32[8,128], index: 3, kind: output, shape index: {1}]
  %s4 = inlined_call_operand.vmem [shape: f32[8,128], index: 4, kind: output, shape index: {2}]
  %5 = xla_tuple %s2, %s3, %s4
  %s6 = sld [smem:[#allocation0]]
  $region34: #{encoder_forward.11} parent=0
    _
  %s8 = ssub.s32 1, %s6
  %s9 = scalar_select 0, %s8, %s6
  // Predicated region
  $region2: #{encoder_forward.11} parent=0 // pred_check
    _
  $region3: #{encoder_forward.11} parent=0 // pred_check_branch
    %11 = sbr.rel (0) target = $region5
  $region4: #{encoder_forward.11} parent=0 // pred_region
    _
  $region5: #{encoder_forward.11} parent=0 // pred_fallthru
    _
  // Predicated region
  $region6: #{encoder_forward.11} parent=0 // pred_check
    _
  $region7: #{encoder_forward.11} parent=0 // pred_check_branch
    %13 = sbr.rel (0) target = $region9
  $region8: #{encoder_forward.11} parent=0 // pred_region
    _
  $region9: #{encoder_forward.11} parent=0 // pred_fallthru
    _
  %v15 = vld [vmem:[%s0] sm:$0xff]
  %v16 = vld [vmem:[%s0 + $0x8] sm:$0xff]
  %v17 = vld [vmem:[%s0 + $0x10] sm:$0xf]
  %v18 = vld [vmem:[%s0 + $0x14] sm:$0xff]
  %v19 = vld [vmem:[%s0 + $0x1c] sm:$0xff]
  %v20 = vld [vmem:[%s0 + $0x24] sm:$0xf]
  %v21 = vld [vmem:[%s0 + $0x28] sm:$0xff]
  %v22 = vld [vmem:[%s0 + $0x30] sm:$0xff]
  %v23 = vld [vmem:[%s0 + $0x38] sm:$0xf]
  %v24 = vld [vmem:[%s0 + $0x3c] sm:$0xff]
  %v25 = vld [vmem:[%s0 + $0x44] sm:$0xff]
  %v26 = vld [vmem:[%s0 + $0x4c] sm:$0xf]
  %v27 = vld [vmem:[%s0 + $0x50] sm:$0xff]
  %v28 = vld [vmem:[%s0 + $0x58] sm:$0xff]
  %v29 = vld [vmem:[%s0 + $0x60] sm:$0xf]
  %v30 = vld [vmem:[%s0 + $0x64] sm:$0xff]
  %v31 = vld [vmem:[%s0 + $0x6c] sm:$0xff]
  %v32 = vld [vmem:[%s0 + $0x74] sm:$0xf]
  %v33 = vld [vmem:[%s0 + $0x78] sm:$0xff]
  %v34 = vld [vmem:[%s0 + $0x80] sm:$0xff]
  %v35 = vld [vmem:[%s0 + $0x88] sm:$0xf]
  %v36 = vld [vmem:[%s0 + $0x8c] sm:$0xff]
  %v37 = vld [vmem:[%s0 + $0x94] sm:$0xff]
  %v38 = vld [vmem:[%s0 + $0x9c] sm:$0xf]
  %v39 = vld [vmem:[%s0 + $0xa0] sm:$0xff]
  %v40 = vld [vmem:[%s0 + $0xa8] sm:$0xff]
  %v41 = vld [vmem:[%s0 + $0xb0] sm:$0xf]
  %v42 = vld [vmem:[%s0 + $0xb4] sm:$0xff]
  %v43 = vld [vmem:[%s0 + $0xbc] sm:$0xff]
  %v44 = vld [vmem:[%s0 + $0xc4] sm:$0xf]
  %v45 = vld [vmem:[%s0 + $0xc8] sm:$0xff]
  %v46 = vld [vmem:[%s0 + $0xd0] sm:$0xff]
  %v47 = vld [vmem:[%s0 + $0xd8] sm:$0xf]
  %v48 = vld [vmem:[%s0 + $0xdc] sm:$0xff]
  %v49 = vld [vmem:[%s0 + $0xe4] sm:$0xff]
  %v50 = vld [vmem:[%s0 + $0xec] sm:$0xf]
  %v51 = vld [vmem:[%s0 + $0xf0] sm:$0xff]
  %v52 = vld [vmem:[%s0 + $0xf8] sm:$0xff]
  %v53 = vld [vmem:[%s0 + $0x100] sm:$0xf]
  %v54 = vld [vmem:[%s0 + $0x104] sm:$0xff]
  %v55 = vld [vmem:[%s0 + $0x10c] sm:$0xff]
  %v56 = vld [vmem:[%s0 + $0x114] sm:$0xf]
  %v57 = vld [vmem:[%s0 + $0x118] sm:$0xff]
  %v58 = vld [vmem:[%s0 + $0x120] sm:$0xff]
  %v59 = vld [vmem:[%s0 + $0x128] sm:$0xf]
  %v60 = vld [vmem:[%s0 + $0x12c] sm:$0xff]
  %v61 = vld [vmem:[%s0 + $0x134] sm:$0xff]
  %v62 = vld [vmem:[%s0 + $0x13c] sm:$0xf]
  %v63 = vld [vmem:[%s0 + $0x140] sm:$0xff]
  %v64 = vld [vmem:[%s0 + $0x148] sm:$0xff]
  %v65 = vld [vmem:[%s0 + $0x150] sm:$0xf]
  %v66 = vld [vmem:[%s0 + $0x154] sm:$0xff]
  %v67 = vld [vmem:[%s0 + $0x15c] sm:$0xff]
  %v68 = vld [vmem:[%s0 + $0x164] sm:$0xf]
  %v69 = vld [vmem:[%s0 + $0x168] sm:$0xff]
  %v70 = vld [vmem:[%s0 + $0x170] sm:$0xff]
  %v71 = vld [vmem:[%s0 + $0x178] sm:$0xf]
  %v72 = vld [vmem:[%s0 + $0x17c] sm:$0xff]
  %v73 = vld [vmem:[%s0 + $0x184] sm:$0xff]
  %v74 = vld [vmem:[%s0 + $0x18c] sm:$0xf]
  %v75 = vld [vmem:[%s0 + $0x190] sm:$0x11]
  %v76 = vld [vmem:[%s0 + $0x198] sm:$0x11]
  %v77 = vld [vmem:[%s0 + $0x1a0] sm:$0x1]
  %v78 = vld [vmem:[%s1] sm:$0xf]
  %v79 = vld [vmem:[%s1 + $0x4] sm:$0xf]
  %v80 = vld [vmem:[%s1 + $0x8] sm:$0xf]
  %v81 = vld [vmem:[%s1 + $0xc] sm:$0xf]
  %v82 = vld [vmem:[%s1 + $0x10] sm:$0xf]
  %v83 = vld [vmem:[%s1 + $0x14] sm:$0xf]
  %v84 = vld [vmem:[%s1 + $0x18] sm:$0xf]
  %v85 = vld [vmem:[%s1 + $0x1c] sm:$0xf]
  %v86 = vld [vmem:[%s1 + $0x20] sm:$0xf]
  %v87 = vld [vmem:[%s1 + $0x24] sm:$0xf]
  %v88 = vld [vmem:[%s1 + $0x28] sm:$0xf]
  %v89 = vld [vmem:[%s1 + $0x2c] sm:$0xf]
  %v90 = vld [vmem:[%s1 + $0x30] sm:$0xf]
  %v91 = vld [vmem:[%s1 + $0x34] sm:$0xf]
  %v92 = vld [vmem:[%s1 + $0x38] sm:$0xf]
  %v93 = vld [vmem:[%s1 + $0x3c] sm:$0xf]
  %v94 = vld [vmem:[%s1 + $0x40] sm:$0xf]
  %v95 = vld [vmem:[%s1 + $0x44] sm:$0xf]
  %v96 = vld [vmem:[%s1 + $0x48] sm:$0xf]
  %v97 = vld [vmem:[%s1 + $0x4c] sm:$0xf]
  %v98 = vld [vmem:[%s1 + $0x50] sm:$0xf]
  %v99 = vld [vmem:[%s1 + $0x54] sm:$0xf]
  %v100 = vld [vmem:[%s1 + $0x58] sm:$0xf]
  %v101 = vld [vmem:[%s1 + $0x5c] sm:$0xf]
  %v102 = vld [vmem:[%s1 + $0x60] sm:$0xf]
  %v103 = vld [vmem:[%s1 + $0x64] sm:$0xf]
  %v104 = vld [vmem:[%s1 + $0x68] sm:$0xf]
  %v105 = vld [vmem:[%s1 + $0x6c] sm:$0xf]
  %v106 = vld [vmem:[%s1 + $0x70] sm:$0xf]
  %v107 = vld [vmem:[%s1 + $0x74] sm:$0xf]
  %v108 = vld [vmem:[%s1 + $0x78] sm:$0xf]
  %v109 = vld [vmem:[%s1 + $0x7c] sm:$0xf]
  %v110 = vld [vmem:[%s1 + $0x80] sm:$0xf]
  %v111 = vld [vmem:[%s1 + $0x84] sm:$0xf]
  %v112 = vld [vmem:[%s1 + $0x88] sm:$0xf]
  %v113 = vld [vmem:[%s1 + $0x8c] sm:$0xf]
  %v114 = vld [vmem:[%s1 + $0x90] sm:$0xf]
  %v115 = vld [vmem:[%s1 + $0x94] sm:$0xf]
  %v116 = vld [vmem:[%s1 + $0x98] sm:$0xf]
  %v117 = vld [vmem:[%s1 + $0x9c] sm:$0xf]
  %v118 = vld [vmem:[%s1 + $0xa0] sm:$0xf]
  %v119 = vld [vmem:[%s1 + $0xa4] sm:$0xf]
  %v120 = vld [vmem:[%s1 + $0xa8] sm:$0xf]
  %v121 = vld [vmem:[%s1 + $0xac] sm:$0xf]
  %v122 = vld [vmem:[%s1 + $0xb0] sm:$0xf]
  %v123 = vld [vmem:[%s1 + $0xb4] sm:$0xf]
  %v124 = vld [vmem:[%s1 + $0xb8] sm:$0xf]
  %v125 = vld [vmem:[%s1 + $0xbc] sm:$0xf]
  %v126 = vld [vmem:[%s1 + $0xc0] sm:$0xf]
  %v127 = vld [vmem:[%s1 + $0xc4] sm:$0xf]
  %v128 = vld [vmem:[%s1 + $0xc8] sm:$0xf]
  %v129 = vld [vmem:[%s1 + $0xcc] sm:$0xf]
  %v130 = vld [vmem:[%s1 + $0xd0] sm:$0xf]
  %v131 = vld [vmem:[%s1 + $0xd4] sm:$0xf]
  %v132 = vld [vmem:[%s1 + $0xd8] sm:$0xf]
  %v133 = vld [vmem:[%s1 + $0xdc] sm:$0xf]
  %v134 = vld [vmem:[%s1 + $0xe0] sm:$0xf]
  %v135 = vld [vmem:[%s1 + $0xe4] sm:$0xf]
  %v136 = vld [vmem:[%s1 + $0xe8] sm:$0xf]
  %v137 = vld [vmem:[%s1 + $0xec] sm:$0xf]
  %v138 = vld [vmem:[%s1 + $0xf0] sm:$0xf]
  %v139 = vld [vmem:[%s1 + $0xf4] sm:$0xf]
  %v140 = vld [vmem:[%s1 + $0xf8] sm:$0xf]
  %v141 = vld [vmem:[%s1 + $0xfc] sm:$0xf]
  %v142 = vld [vmem:[%s1 + $0x100] sm:$0xf]
  %v143 = vld [vmem:[%s1 + $0x104] sm:$0xf]
  %v144 = vld [vmem:[%s1 + $0x108] sm:$0xf]
  %v145 = vld [vmem:[%s1 + $0x10c] sm:$0xf]
  %v146 = vld [vmem:[%s1 + $0x110] sm:$0xf]
  %v147 = vld [vmem:[%s1 + $0x114] sm:$0xf]
  %v148 = vld [vmem:[%s1 + $0x118] sm:$0xf]
  %v149 = vld [vmem:[%s1 + $0x11c] sm:$0xf]
  %v213 = vunpack.c.l.b16 %v15
  %v214 = vunpack.c.h.b16 %v15
  %v215 = vunpack.c.l.b16 %v16
  %v216 = vunpack.c.h.b16 %v16
  %v217 = vunpack.c.l.b16 %v17
  %v218 = vunpack.c.l.b16 %v18
  %v219 = vunpack.c.h.b16 %v18
  %v220 = vunpack.c.l.b16 %v19
  %v221 = vunpack.c.h.b16 %v19
  %v222 = vunpack.c.l.b16 %v20
  %v223 = vunpack.c.l.b16 %v21
  %v224 = vunpack.c.h.b16 %v21
  %v225 = vunpack.c.l.b16 %v22
  %v226 = vunpack.c.h.b16 %v22
  %v227 = vunpack.c.l.b16 %v23
  %v228 = vunpack.c.l.b16 %v24
  %v229 = vunpack.c.h.b16 %v24
  %v230 = vunpack.c.l.b16 %v25
  %v231 = vunpack.c.h.b16 %v25
  %v232 = vunpack.c.l.b16 %v26
  %v233 = vunpack.c.l.b16 %v27
  %v234 = vunpack.c.h.b16 %v27
  %v235 = vunpack.c.l.b16 %v28
  %v236 = vunpack.c.h.b16 %v28
  %v237 = vunpack.c.l.b16 %v29
  %v238 = vunpack.c.l.b16 %v30
  %v239 = vunpack.c.h.b16 %v30
  %v240 = vunpack.c.l.b16 %v31
  %v241 = vunpack.c.h.b16 %v31
  %v242 = vunpack.c.l.b16 %v32
  %v243 = vunpack.c.l.b16 %v33
  %v244 = vunpack.c.h.b16 %v33
  %v245 = vunpack.c.l.b16 %v34
  %v246 = vunpack.c.h.b16 %v34
  %v247 = vunpack.c.l.b16 %v35
  %v248 = vunpack.c.l.b16 %v36
  %v249 = vunpack.c.h.b16 %v36
  %v250 = vunpack.c.l.b16 %v37
  %v251 = vunpack.c.h.b16 %v37
  %v252 = vunpack.c.l.b16 %v38
  %v253 = vunpack.c.l.b16 %v39
  %v254 = vunpack.c.h.b16 %v39
  %v255 = vunpack.c.l.b16 %v40
  %v256 = vunpack.c.h.b16 %v40
  %v257 = vunpack.c.l.b16 %v41
  %v258 = vunpack.c.l.b16 %v42
  %v259 = vunpack.c.h.b16 %v42
  %v260 = vunpack.c.l.b16 %v43
  %v261 = vunpack.c.h.b16 %v43
  %v262 = vunpack.c.l.b16 %v44
  %v263 = vunpack.c.l.b16 %v45
  %v264 = vunpack.c.h.b16 %v45
  %v265 = vunpack.c.l.b16 %v46
  %v266 = vunpack.c.h.b16 %v46
  %v267 = vunpack.c.l.b16 %v47
  %v268 = vunpack.c.l.b16 %v48
  %v269 = vunpack.c.h.b16 %v48
  %v270 = vunpack.c.l.b16 %v49
  %v271 = vunpack.c.h.b16 %v49
  %v272 = vunpack.c.l.b16 %v50
  %v273 = vunpack.c.l.b16 %v51
  %v274 = vunpack.c.h.b16 %v51
  %v275 = vunpack.c.l.b16 %v52
  %v276 = vunpack.c.h.b16 %v52
  %v277 = vunpack.c.l.b16 %v53
  %v278 = vunpack.c.l.b16 %v54
  %v279 = vunpack.c.h.b16 %v54
  %v280 = vunpack.c.l.b16 %v55
  %v281 = vunpack.c.h.b16 %v55
  %v282 = vunpack.c.l.b16 %v56
  %v283 = vunpack.c.l.b16 %v57
  %v284 = vunpack.c.h.b16 %v57
  %v285 = vunpack.c.l.b16 %v58
  %v286 = vunpack.c.h.b16 %v58
  %v287 = vunpack.c.l.b16 %v59
  %v288 = vunpack.c.l.b16 %v60
  %v289 = vunpack.c.h.b16 %v60
  %v290 = vunpack.c.l.b16 %v61
  %v291 = vunpack.c.h.b16 %v61
  %v292 = vunpack.c.l.b16 %v62
  %v293 = vunpack.c.l.b16 %v63
  %v294 = vunpack.c.h.b16 %v63
  %v295 = vunpack.c.l.b16 %v64
  %v296 = vunpack.c.h.b16 %v64
  %v297 = vunpack.c.l.b16 %v65
  %v298 = vunpack.c.l.b16 %v66
  %v299 = vunpack.c.h.b16 %v66
  %v300 = vunpack.c.l.b16 %v67
  %v301 = vunpack.c.h.b16 %v67
  %v302 = vunpack.c.l.b16 %v68
  %v303 = vunpack.c.l.b16 %v69
  %v304 = vunpack.c.h.b16 %v69
  %v305 = vunpack.c.l.b16 %v70
  %v306 = vunpack.c.h.b16 %v70
  %v307 = vunpack.c.l.b16 %v71
  %v308 = vunpack.c.l.b16 %v72
  %v309 = vunpack.c.h.b16 %v72
  %v310 = vunpack.c.l.b16 %v73
  %v311 = vunpack.c.h.b16 %v73
  %v312 = vunpack.c.l.b16 %v74
  %v313 = vunpack.c.l.b16 %v75
  %v314 = vunpack.c.h.b16 %v75
  %v315 = vunpack.c.l.b16 %v76
  %v316 = vunpack.c.h.b16 %v76
  %v317 = vunpack.c.l.b16 %v77
  %v318 = vpack.c.b16 %v218, %v213
  %v319 = vpack.c.b16 %v219, %v214
  %v320 = vpack.c.b16 %v220, %v215
  %v321 = vpack.c.b16 %v221, %v216
  %v322 = vpack.c.b16 %v222, %v217
  %v323 = vpack.c.b16 %v228, %v223
  %v324 = vpack.c.b16 %v229, %v224
  %v325 = vpack.c.b16 %v230, %v225
  %v326 = vpack.c.b16 %v231, %v226
  %v327 = vpack.c.b16 %v232, %v227
  %v328 = vpack.c.b16 %v238, %v233
  %v329 = vpack.c.b16 %v239, %v234
  %v330 = vpack.c.b16 %v240, %v235
  %v331 = vpack.c.b16 %v241, %v236
  %v332 = vpack.c.b16 %v242, %v237
  %v333 = vpack.c.b16 %v248, %v243
  %v334 = vpack.c.b16 %v249, %v244
  %v335 = vpack.c.b16 %v250, %v245
  %v336 = vpack.c.b16 %v251, %v246
  %v337 = vpack.c.b16 %v252, %v247
  %v338 = vpack.c.b16 %v258, %v253
  %v339 = vpack.c.b16 %v259, %v254
  %v340 = vpack.c.b16 %v260, %v255
  %v341 = vpack.c.b16 %v261, %v256
  %v342 = vpack.c.b16 %v262, %v257
  %v343 = vpack.c.b16 %v268, %v263
  %v344 = vpack.c.b16 %v269, %v264
  %v345 = vpack.c.b16 %v270, %v265
  %v346 = vpack.c.b16 %v271, %v266
  %v347 = vpack.c.b16 %v272, %v267
  %v348 = vpack.c.b16 %v278, %v273
  %v349 = vpack.c.b16 %v279, %v274
  %v350 = vpack.c.b16 %v280, %v275
  %v351 = vpack.c.b16 %v281, %v276
  %v352 = vpack.c.b16 %v282, %v277
  %v353 = vpack.c.b16 %v288, %v283
  %v354 = vpack.c.b16 %v289, %v284
  %v355 = vpack.c.b16 %v290, %v285
  %v356 = vpack.c.b16 %v291, %v286
  %v357 = vpack.c.b16 %v292, %v287
  %v358 = vpack.c.b16 %v298, %v293
  %v359 = vpack.c.b16 %v299, %v294
  %v360 = vpack.c.b16 %v300, %v295
  %v361 = vpack.c.b16 %v301, %v296
  %v362 = vpack.c.b16 %v302, %v297
  %v363 = vpack.c.b16 %v308, %v303
  %v364 = vpack.c.b16 %v309, %v304
  %v365 = vpack.c.b16 %v310, %v305
  %v366 = vpack.c.b16 %v311, %v306
  %v367 = vpack.c.b16 %v312, %v307
  %v368 = vpack.c.b16 %v313, %v313
  %v369 = vpack.c.b16 %v314, %v314
  %v370 = vpack.c.b16 %v315, %v315
  %v371 = vpack.c.b16 %v316, %v316
  %v372 = vpack.c.b16 %v317, %v317
  %v489 = vunpack.c.l.b16 %v78
  %v490 = vunpack.c.l.b16 %v79
  %v491 = vunpack.c.l.b16 %v80
  %v492 = vunpack.c.l.b16 %v81
  %v493 = vunpack.c.l.b16 %v82
  %v494 = vunpack.c.l.b16 %v83
  %v495 = vunpack.c.l.b16 %v84
  %v496 = vunpack.c.l.b16 %v85
  %v497 = vunpack.c.l.b16 %v86
  %v498 = vunpack.c.l.b16 %v87
  %v499 = vunpack.c.l.b16 %v88
  %v500 = vunpack.c.l.b16 %v89
  %v501 = vunpack.c.l.b16 %v90
  %v502 = vunpack.c.l.b16 %v91
  %v503 = vunpack.c.l.b16 %v92
  %v504 = vunpack.c.l.b16 %v93
  %v505 = vunpack.c.l.b16 %v94
  %v506 = vunpack.c.l.b16 %v95
  %v507 = vunpack.c.l.b16 %v96
  %v508 = vunpack.c.l.b16 %v97
  %v509 = vunpack.c.l.b16 %v98
  %v510 = vunpack.c.l.b16 %v99
  %v511 = vunpack.c.l.b16 %v100
  %v512 = vunpack.c.l.b16 %v101
  %v513 = vunpack.c.l.b16 %v102
  %v514 = vunpack.c.l.b16 %v103
  %v515 = vunpack.c.l.b16 %v104
  %v516 = vunpack.c.l.b16 %v105
  %v517 = vunpack.c.l.b16 %v106
  %v518 = vunpack.c.l.b16 %v107
  %v519 = vunpack.c.l.b16 %v108
  %v520 = vunpack.c.l.b16 %v109
  %v521 = vunpack.c.l.b16 %v110
  %v522 = vunpack.c.l.b16 %v111
  %v523 = vunpack.c.l.b16 %v112
  %v524 = vunpack.c.l.b16 %v113
  %v525 = vunpack.c.l.b16 %v114
  %v526 = vunpack.c.l.b16 %v115
  %v527 = vunpack.c.l.b16 %v116
  %v528 = vunpack.c.l.b16 %v117
  %v529 = vunpack.c.l.b16 %v118
  %v530 = vunpack.c.l.b16 %v119
  %v531 = vunpack.c.l.b16 %v120
  %v532 = vunpack.c.l.b16 %v121
  %v533 = vunpack.c.l.b16 %v122
  %v534 = vunpack.c.l.b16 %v123
  %v535 = vunpack.c.l.b16 %v124
  %v536 = vunpack.c.l.b16 %v125
  %v537 = vunpack.c.l.b16 %v126
  %v538 = vunpack.c.l.b16 %v127
  %v539 = vunpack.c.l.b16 %v128
  %v540 = vunpack.c.l.b16 %v129
  %v541 = vunpack.c.l.b16 %v130
  %v542 = vunpack.c.l.b16 %v131
  %v543 = vunpack.c.l.b16 %v132
  %v544 = vunpack.c.l.b16 %v133
  %v545 = vunpack.c.l.b16 %v134
  %v546 = vunpack.c.l.b16 %v135
  %v547 = vunpack.c.l.b16 %v136
  %v548 = vunpack.c.l.b16 %v137
  %v549 = vunpack.c.l.b16 %v138
  %v550 = vunpack.c.l.b16 %v139
  %v551 = vunpack.c.l.b16 %v140
  %v552 = vunpack.c.l.b16 %v141
  %v553 = vunpack.c.l.b16 %v142
  %v554 = vunpack.c.l.b16 %v143
  %v555 = vunpack.c.l.b16 %v144
  %v556 = vunpack.c.l.b16 %v145
  %v557 = vunpack.c.l.b16 %v146
  %v558 = vunpack.c.l.b16 %v147
  %v559 = vunpack.c.l.b16 %v148
  %v560 = vunpack.c.l.b16 %v149
  %v561 = vpack.c.b16 %v490, %v489
  %v562 = vpack.c.b16 %v492, %v491
  %v563 = vpack.c.b16 %v494, %v493
  %v564 = vpack.c.b16 %v496, %v495
  %v565 = vpack.c.b16 %v498, %v497
  %v566 = vpack.c.b16 %v500, %v499
  %v567 = vpack.c.b16 %v502, %v501
  %v568 = vpack.c.b16 %v504, %v503
  %v569 = vpack.c.b16 %v506, %v505
  %v570 = vpack.c.b16 %v508, %v507
  %v571 = vpack.c.b16 %v510, %v509
  %v572 = vpack.c.b16 %v512, %v511
  %v573 = vpack.c.b16 %v514, %v513
  %v574 = vpack.c.b16 %v516, %v515
  %v575 = vpack.c.b16 %v518, %v517
  %v576 = vpack.c.b16 %v520, %v519
  %v577 = vpack.c.b16 %v522, %v521
  %v578 = vpack.c.b16 %v524, %v523
  %v579 = vpack.c.b16 %v526, %v525
  %v580 = vpack.c.b16 %v528, %v527
  %v581 = vpack.c.b16 %v530, %v529
  %v582 = vpack.c.b16 %v532, %v531
  %v583 = vpack.c.b16 %v534, %v533
  %v584 = vpack.c.b16 %v536, %v535
  %v585 = vpack.c.b16 %v538, %v537
  %v586 = vpack.c.b16 %v540, %v539
  %v587 = vpack.c.b16 %v542, %v541
  %v588 = vpack.c.b16 %v544, %v543
  %v589 = vpack.c.b16 %v546, %v545
  %v590 = vpack.c.b16 %v548, %v547
  %v591 = vpack.c.b16 %v550, %v549
  %v592 = vpack.c.b16 %v552, %v551
  %v593 = vpack.c.b16 %v554, %v553
  %v594 = vpack.c.b16 %v556, %v555
  %v595 = vpack.c.b16 %v558, %v557
  %v596 = vpack.c.b16 %v560, %v559
  %vm633 = vcmask 523264
  %v635 = vsel %vm633, %v322, 0
  %v638 = vsel %vm633, %v327, 0
  %v641 = vsel %vm633, %v332, 0
  %v644 = vsel %vm633, %v337, 0
  %v647 = vsel %vm633, %v342, 0
  %v650 = vsel %vm633, %v347, 0
  %v653 = vsel %vm633, %v352, 0
  %v656 = vsel %vm633, %v357, 0
  %v659 = vsel %vm633, %v362, 0
  %v662 = vsel %vm633, %v367, 0
  %v665 = vsel %vm633, %v372, 0
  %667 = vmatprep.subr.bf16.mxu0 0
  %668 = vmatpush1.bf16.msra.mxu0 %v561
  %669 = vmatprep.subr.bf16.mxu0 0
  %670 = vmatpush1.bf16.msra.mxu0 %v562
  %671 = vmatprep.subr.bf16.mxu0 0
  %672 = vmatpush1.bf16.msra.mxu0 %v563
  %673 = vmatprep.subr.bf16.mxu0 0
  %674 = vmatpush1.bf16.msra.mxu0 %v564
  %675 = vmatprep.subr.bf16.mxu0 0
  %676 = vmatpush1.bf16.msra.mxu0 %v565
  %677 = vmatprep.subr.bf16.mxu0 0
  %678 = vmatpush1.bf16.msra.mxu0 %v566
  %679 = vmatprep.subr.bf16.mxu0 0
  %680 = vmatpush1.bf16.msra.mxu0 %v567
  %681 = vmatprep.subr.bf16.mxu0 0
  %682 = vmatpush1.bf16.msra.mxu0 %v568
  %683 = vmatprep.subr.bf16.mxu0 0
  %684 = vmatpush1.bf16.msra.mxu0 %v569
  %685 = vmatprep.subr.bf16.mxu0 0
  %686 = vmatpush1.bf16.msra.mxu0 %v570
  %687 = vmatprep.subr.bf16.mxu0 0
  %688 = vmatpush1.bf16.msra.mxu0 %v571
  %689 = vmatprep.subr.bf16.mxu0 0
  %690 = vmatpush1.bf16.msra.mxu0 %v572
  %691 = vmatprep.subr.bf16.mxu0 0
  %692 = vmatpush1.bf16.msra.mxu0 %v573
  %693 = vmatprep.subr.bf16.mxu0 0
  %694 = vmatpush1.bf16.msra.mxu0 %v574
  %695 = vmatprep.subr.bf16.mxu0 0
  %696 = vmatpush1.bf16.msra.mxu0 %v575
  %697 = vmatprep.subr.bf16.mxu0 0
  %698 = vmatpush1.bf16.msra.mxu0 %v576
  %699 = vmatprep.mubr.bf16.mxu0 %v319
  %700 = vmatmul.mubr.bf16.gmra.mrb[0].mxu0 %v318
  %v701 = vpop.f32.mrb[0].mxu0
  %v702 = vadd.f32 0.0, %v701
  %v703 = vpop.f32.mrb[0].mxu0
  %v704 = vpop.f32.mrb[0].mxu0
  %v705 = vadd.f32 0.0, %v704
  %v706 = vpop.f32.mrb[0].mxu0
  %707 = vmatprep.mubr.bf16.mxu0 %v324
  %708 = vmatmul.mubr.bf16.gmra.mrb[0].mxu0 %v323
  %v709 = vpop.f32.mrb[0].mxu0
  %v710 = vadd.f32 0.0, %v709
  %v711 = vpop.f32.mrb[0].mxu0
  %v712 = vpop.f32.mrb[0].mxu0
  %v713 = vadd.f32 0.0, %v712
  %v714 = vpop.f32.mrb[0].mxu0
  %715 = vmatprep.mubr.bf16.mxu0 %v329
  %716 = vmatmul.mubr.bf16.gmra.mrb[0].mxu0 %v328
  %v717 = vpop.f32.mrb[0].mxu0
  %v718 = vadd.f32 0.0, %v717
  %v719 = vpop.f32.mrb[0].mxu0
  %v720 = vpop.f32.mrb[0].mxu0
  %v721 = vadd.f32 0.0, %v720
  %v722 = vpop.f32.mrb[0].mxu0
  %723 = vmatprep.mubr.bf16.mxu0 %v334
  %724 = vmatmul.mubr.bf16.gmra.mrb[0].mxu0 %v333
  %v725 = vpop.f32.mrb[0].mxu0
  %v726 = vadd.f32 0.0, %v725
  %v727 = vpop.f32.mrb[0].mxu0
  %v728 = vpop.f32.mrb[0].mxu0
  %v729 = vadd.f32 0.0, %v728
  %v730 = vpop.f32.mrb[0].mxu0
  %731 = vmatprep.mubr.bf16.mxu0 %v339
  %732 = vmatmul.mubr.bf16.gmra.mrb[0].mxu0 %v338
  %v733 = vpop.f32.mrb[0].mxu0
  %v734 = vadd.f32 0.0, %v733
  %v735 = vpop.f32.mrb[0].mxu0
  %v736 = vpop.f32.mrb[0].mxu0
  %v737 = vadd.f32 0.0, %v736
  %v738 = vpop.f32.mrb[0].mxu0
  %739 = vmatprep.mubr.bf16.mxu0 %v344
  %740 = vmatmul.mubr.bf16.gmra.mrb[0].mxu0 %v343
  %v741 = vpop.f32.mrb[0].mxu0
  %v742 = vadd.f32 0.0, %v741
  %v743 = vpop.f32.mrb[0].mxu0
  %v744 = vpop.f32.mrb[0].mxu0
  %v745 = vadd.f32 0.0, %v744
  %v746 = vpop.f32.mrb[0].mxu0
  %747 = vmatprep.mubr.bf16.mxu0 %v349
  %748 = vmatmul.mubr.bf16.gmra.mrb[0].mxu0 %v348
  %v749 = vpop.f32.mrb[0].mxu0
  %v750 = vadd.f32 0.0, %v749
  %v751 = vpop.f32.mrb[0].mxu0
  %v752 = vpop.f32.mrb[0].mxu0
  %v753 = vadd.f32 0.0, %v752
  %v754 = vpop.f32.mrb[0].mxu0
  %755 = vmatprep.mubr.bf16.mxu0 %v354
  %756 = vmatmul.mubr.bf16.gmra.mrb[0].mxu0 %v353
  %v757 = vpop.f32.mrb[0].mxu0
  %v758 = vadd.f32 0.0, %v757
  %v759 = vpop.f32.mrb[0].mxu0
  %v760 = vpop.f32.mrb[0].mxu0
  %v761 = vadd.f32 0.0, %v760
  %v762 = vpop.f32.mrb[0].mxu0
  %763 = vmatprep.mubr.bf16.mxu0 %v359
  %764 = vmatmul.mubr.bf16.gmra.mrb[0].mxu0 %v358
  %v765 = vpop.f32.mrb[0].mxu0
  %v766 = vadd.f32 0.0, %v765
  %v767 = vpop.f32.mrb[0].mxu0
  %v768 = vpop.f32.mrb[0].mxu0
  %v769 = vadd.f32 0.0, %v768
  %v770 = vpop.f32.mrb[0].mxu0
  %771 = vmatprep.mubr.bf16.mxu0 %v364
  %772 = vmatmul.mubr.bf16.gmra.mrb[0].mxu0 %v363
  %v773 = vpop.f32.mrb[0].mxu0
  %v774 = vadd.f32 0.0, %v773
  %v775 = vpop.f32.mrb[0].mxu0
  %v776 = vpop.f32.mrb[0].mxu0
  %v777 = vadd.f32 0.0, %v776
  %v778 = vpop.f32.mrb[0].mxu0
  %779 = vmatprep.mubr.bf16.mxu0 %v369
  %780 = vmatmul.mubr.bf16.gmra.mrb[0].mxu0 %v368
  %v781 = vpop.f32.mrb[0].mxu0
  %v782 = vadd.f32 0.0, %v781
  %v783 = vpop.f32.mrb[0].mxu0
  %v784 = vpop.f32.mrb[0].mxu0
  %v785 = vpop.f32.mrb[0].mxu0
  %786 = vdwg.mxu0
  %787 = vmatprep.subr.bf16.mxu0 0
  %788 = vmatpush1.bf16.msra.mxu0 %v577
  %789 = vmatprep.subr.bf16.mxu0 0
  %790 = vmatpush1.bf16.msra.mxu0 %v578
  %791 = vmatprep.subr.bf16.mxu0 0
  %792 = vmatpush1.bf16.msra.mxu0 %v579
  %793 = vmatprep.subr.bf16.mxu0 0
  %794 = vmatpush1.bf16.msra.mxu0 %v580
  %795 = vmatprep.subr.bf16.mxu0 0
  %796 = vmatpush1.bf16.msra.mxu0 %v581
  %797 = vmatprep.subr.bf16.mxu0 0
  %798 = vmatpush1.bf16.msra.mxu0 %v582
  %799 = vmatprep.subr.bf16.mxu0 0
  %800 = vmatpush1.bf16.msra.mxu0 %v583
  %801 = vmatprep.subr.bf16.mxu0 0
  %802 = vmatpush1.bf16.msra.mxu0 %v584
  %803 = vmatprep.subr.bf16.mxu0 0
  %804 = vmatpush1.bf16.msra.mxu0 %v585
  %805 = vmatprep.subr.bf16.mxu0 0
  %806 = vmatpush1.bf16.msra.mxu0 %v586
  %807 = vmatprep.subr.bf16.mxu0 0
  %808 = vmatpush1.bf16.msra.mxu0 %v587
  %809 = vmatprep.subr.bf16.mxu0 0
  %810 = vmatpush1.bf16.msra.mxu0 %v588
  %811 = vmatprep.subr.bf16.mxu0 0
  %812 = vmatpush1.bf16.msra.mxu0 %v589
  %813 = vmatprep.subr.bf16.mxu0 0
  %814 = vmatpush1.bf16.msra.mxu0 %v590
  %815 = vmatprep.subr.bf16.mxu0 0
  %816 = vmatpush1.bf16.msra.mxu0 %v591
  %817 = vmatprep.subr.bf16.mxu0 0
  %818 = vmatpush1.bf16.msra.mxu0 %v592
  %819 = vmatprep.mubr.bf16.mxu0 %v321
  %820 = vmatmul.mubr.bf16.gmra.mrb[0].mxu0 %v320
  %v821 = vpop.f32.mrb[0].mxu0
  %v822 = vadd.f32 %v702, %v821
  %v823 = vpop.f32.mrb[0].mxu0
  %v824 = vpop.f32.mrb[0].mxu0
  %v825 = vadd.f32 %v705, %v824
  %v826 = vpop.f32.mrb[0].mxu0
  %827 = vmatprep.mubr.bf16.mxu0 %v326
  %828 = vmatmul.mubr.bf16.gmra.mrb[0].mxu0 %v325
  %v829 = vpop.f32.mrb[0].mxu0
  %v830 = vadd.f32 %v710, %v829
  %v831 = vpop.f32.mrb[0].mxu0
  %v832 = vpop.f32.mrb[0].mxu0
  %v833 = vadd.f32 %v713, %v832
  %v834 = vpop.f32.mrb[0].mxu0
  %835 = vmatprep.mubr.bf16.mxu0 %v331
  %836 = vmatmul.mubr.bf16.gmra.mrb[0].mxu0 %v330
  %v837 = vpop.f32.mrb[0].mxu0
  %v838 = vadd.f32 %v718, %v837
  %v839 = vpop.f32.mrb[0].mxu0
  %v840 = vpop.f32.mrb[0].mxu0
  %v841 = vadd.f32 %v721, %v840
  %v842 = vpop.f32.mrb[0].mxu0
  %843 = vmatprep.mubr.bf16.mxu0 %v336
  %844 = vmatmul.mubr.bf16.gmra.mrb[0].mxu0 %v335
  %v845 = vpop.f32.mrb[0].mxu0
  %v846 = vadd.f32 %v726, %v845
  %v847 = vpop.f32.mrb[0].mxu0
  %v848 = vpop.f32.mrb[0].mxu0
  %v849 = vadd.f32 %v729, %v848
  %v850 = vpop.f32.mrb[0].mxu0
  %851 = vmatprep.mubr.bf16.mxu0 %v341
  %852 = vmatmul.mubr.bf16.gmra.mrb[0].mxu0 %v340
  %v853 = vpop.f32.mrb[0].mxu0
  %v854 = vadd.f32 %v734, %v853
  %v855 = vpop.f32.mrb[0].mxu0
  %v856 = vpop.f32.mrb[0].mxu0
  %v857 = vadd.f32 %v737, %v856
  %v858 = vpop.f32.mrb[0].mxu0
  %859 = vmatprep.mubr.bf16.mxu0 %v346
  %860 = vmatmul.mubr.bf16.gmra.mrb[0].mxu0 %v345
  %v861 = vpop.f32.mrb[0].mxu0
  %v862 = vadd.f32 %v742, %v861
  %v863 = vpop.f32.mrb[0].mxu0
  %v864 = vpop.f32.mrb[0].mxu0
  %v865 = vadd.f32 %v745, %v864
  %v866 = vpop.f32.mrb[0].mxu0
  %867 = vmatprep.mubr.bf16.mxu0 %v351
  %868 = vmatmul.mubr.bf16.gmra.mrb[0].mxu0 %v350
  %v869 = vpop.f32.mrb[0].mxu0
  %v870 = vadd.f32 %v750, %v869
  %v871 = vpop.f32.mrb[0].mxu0
  %v872 = vpop.f32.mrb[0].mxu0
  %v873 = vadd.f32 %v753, %v872
  %v874 = vpop.f32.mrb[0].mxu0
  %875 = vmatprep.mubr.bf16.mxu0 %v356
  %876 = vmatmul.mubr.bf16.gmra.mrb[0].mxu0 %v355
  %v877 = vpop.f32.mrb[0].mxu0
  %v878 = vadd.f32 %v758, %v877
  %v879 = vpop.f32.mrb[0].mxu0
  %v880 = vpop.f32.mrb[0].mxu0
  %v881 = vadd.f32 %v761, %v880
  %v882 = vpop.f32.mrb[0].mxu0
  %883 = vmatprep.mubr.bf16.mxu0 %v361
  %884 = vmatmul.mubr.bf16.gmra.mrb[0].mxu0 %v360
  %v885 = vpop.f32.mrb[0].mxu0
  %v886 = vadd.f32 %v766, %v885
  %v887 = vpop.f32.mrb[0].mxu0
  %v888 = vpop.f32.mrb[0].mxu0
  %v889 = vadd.f32 %v769, %v888
  %v890 = vpop.f32.mrb[0].mxu0
  %891 = vmatprep.mubr.bf16.mxu0 %v366
  %892 = vmatmul.mubr.bf16.gmra.mrb[0].mxu0 %v365
  %v893 = vpop.f32.mrb[0].mxu0
  %v894 = vadd.f32 %v774, %v893
  %v895 = vpop.f32.mrb[0].mxu0
  %v896 = vpop.f32.mrb[0].mxu0
  %v897 = vadd.f32 %v777, %v896
  %v898 = vpop.f32.mrb[0].mxu0
  %899 = vmatprep.mubr.bf16.mxu0 %v371
  %900 = vmatmul.mubr.bf16.gmra.mrb[0].mxu0 %v370
  %v901 = vpop.f32.mrb[0].mxu0
  %v902 = vadd.f32 %v782, %v901
  %v903 = vpop.f32.mrb[0].mxu0
  %v904 = vpop.f32.mrb[0].mxu0
  %v905 = vpop.f32.mrb[0].mxu0
  %906 = vdwg.mxu0
  %907 = vmatprep.subr.bf16.mxu0 0
  %908 = vmatpush1.bf16.msra.mxu0 %v593
  %909 = vmatprep.subr.bf16.mxu0 0
  %910 = vmatpush1.bf16.msra.mxu0 %v594
  %911 = vmatprep.subr.bf16.mxu0 0
  %912 = vmatpush1.bf16.msra.mxu0 %v595
  %913 = vmatprep.subr.bf16.mxu0 0
  %914 = vmatpush1.bf16.msra.mxu0 %v596
  %915 = vmatprep.subr.bf16.mxu0 0
  %916 = vmatpush1.bf16.msra.mxu0 0
  %917 = vmatprep.subr.bf16.mxu0 0
  %918 = vmatpush1.bf16.msra.mxu0 0
  %919 = vmatprep.subr.bf16.mxu0 0
  %920 = vmatpush1.bf16.msra.mxu0 0
  %921 = vmatprep.subr.bf16.mxu0 0
  %922 = vmatpush1.bf16.msra.mxu0 0
  %923 = vmatprep.subr.bf16.mxu0 0
  %924 = vmatpush1.bf16.msra.mxu0 0
  %925 = vmatprep.subr.bf16.mxu0 0
  %926 = vmatpush1.bf16.msra.mxu0 0
  %927 = vmatprep.subr.bf16.mxu0 0
  %928 = vmatpush1.bf16.msra.mxu0 0
  %929 = vmatprep.subr.bf16.mxu0 0
  %930 = vmatpush1.bf16.msra.mxu0 0
  %931 = vmatprep.subr.bf16.mxu0 0
  %932 = vmatpush1.bf16.msra.mxu0 0
  %933 = vmatprep.subr.bf16.mxu0 0
  %934 = vmatpush1.bf16.msra.mxu0 0
  %935 = vmatprep.subr.bf16.mxu0 0
  %936 = vmatpush1.bf16.msra.mxu0 0
  %937 = vmatprep.subr.bf16.mxu0 0
  %938 = vmatpush1.bf16.msra.mxu0 0
  %939 = vmatprep.mubr.bf16.mxu0 0
  %940 = vmatmul.mubr.bf16.gmra.mrb[0].mxu0 %v635
  %v941 = vpop.f32.mrb[0].mxu0
  %v942 = vadd.f32 %v822, %v941
  %v943 = vpop.f32.mrb[0].mxu0
  %v944 = vpop.f32.mrb[0].mxu0
  %v945 = vadd.f32 %v825, %v944
  %v946 = vpop.f32.mrb[0].mxu0
  %947 = vmatprep.mubr.bf16.mxu0 0
  %948 = vmatmul.mubr.bf16.gmra.mrb[0].mxu0 %v638
  %v949 = vpop.f32.mrb[0].mxu0
  %v950 = vadd.f32 %v830, %v949
  %v951 = vpop.f32.mrb[0].mxu0
  %v952 = vpop.f32.mrb[0].mxu0
  %v953 = vadd.f32 %v833, %v952
  %v954 = vpop.f32.mrb[0].mxu0
  %955 = vmatprep.mubr.bf16.mxu0 0
  %956 = vmatmul.mubr.bf16.gmra.mrb[0].mxu0 %v641
  %v957 = vpop.f32.mrb[0].mxu0
  %v958 = vadd.f32 %v838, %v957
  %v959 = vpop.f32.mrb[0].mxu0
  %v960 = vpop.f32.mrb[0].mxu0
  %v961 = vadd.f32 %v841, %v960
  %v962 = vpop.f32.mrb[0].mxu0
  %963 = vmatprep.mubr.bf16.mxu0 0
  %964 = vmatmul.mubr.bf16.gmra.mrb[0].mxu0 %v644
  %v965 = vpop.f32.mrb[0].mxu0
  %v966 = vadd.f32 %v846, %v965
  %v967 = vpop.f32.mrb[0].mxu0
  %v968 = vpop.f32.mrb[0].mxu0
  %v969 = vadd.f32 %v849, %v968
  %v970 = vpop.f32.mrb[0].mxu0
  %971 = vmatprep.mubr.bf16.mxu0 0
  %972 = vmatmul.mubr.bf16.gmra.mrb[0].mxu0 %v647
  %v973 = vpop.f32.mrb[0].mxu0
  %v974 = vadd.f32 %v854, %v973
  %v975 = vpop.f32.mrb[0].mxu0
  %v976 = vpop.f32.mrb[0].mxu0
  %v977 = vadd.f32 %v857, %v976
  %v978 = vpop.f32.mrb[0].mxu0
  %979 = vmatprep.mubr.bf16.mxu0 0
  %980 = vmatmul.mubr.bf16.gmra.mrb[0].mxu0 %v650
  %v981 = vpop.f32.mrb[0].mxu0
  %v982 = vadd.f32 %v862, %v981
  %v983 = vpop.f32.mrb[0].mxu0
  %v984 = vpop.f32.mrb[0].mxu0
  %v985 = vadd.f32 %v865, %v984
  %v986 = vpop.f32.mrb[0].mxu0
  %987 = vmatprep.mubr.bf16.mxu0 0
  %988 = vmatmul.mubr.bf16.gmra.mrb[0].mxu0 %v653
  %v989 = vpop.f32.mrb[0].mxu0
  %v990 = vadd.f32 %v870, %v989
  %v991 = vpop.f32.mrb[0].mxu0
  %v992 = vpop.f32.mrb[0].mxu0
  %v993 = vadd.f32 %v873, %v992
  %v994 = vpop.f32.mrb[0].mxu0
  %995 = vmatprep.mubr.bf16.mxu0 0
  %996 = vmatmul.mubr.bf16.gmra.mrb[0].mxu0 %v656
  %v997 = vpop.f32.mrb[0].mxu0
  %v998 = vadd.f32 %v878, %v997
  %v999 = vpop.f32.mrb[0].mxu0
  %v1000 = vpop.f32.mrb[0].mxu0
  %v1001 = vadd.f32 %v881, %v1000
  %v1002 = vpop.f32.mrb[0].mxu0
  %1003 = vmatprep.mubr.bf16.mxu0 0
  %1004 = vmatmul.mubr.bf16.gmra.mrb[0].mxu0 %v659
  %v1005 = vpop.f32.mrb[0].mxu0
  %v1006 = vadd.f32 %v886, %v1005
  %v1007 = vpop.f32.mrb[0].mxu0
  %v1008 = vpop.f32.mrb[0].mxu0
  %v1009 = vadd.f32 %v889, %v1008
  %v1010 = vpop.f32.mrb[0].mxu0
  %1011 = vmatprep.mubr.bf16.mxu0 0
  %1012 = vmatmul.mubr.bf16.gmra.mrb[0].mxu0 %v662
  %v1013 = vpop.f32.mrb[0].mxu0
  %v1014 = vadd.f32 %v894, %v1013
  %v1015 = vpop.f32.mrb[0].mxu0
  %v1016 = vpop.f32.mrb[0].mxu0
  %v1017 = vadd.f32 %v897, %v1016
  %v1018 = vpop.f32.mrb[0].mxu0
  %1019 = vmatprep.mubr.bf16.mxu0 0
  %1020 = vmatmul.mubr.bf16.gmra.mrb[0].mxu0 %v665
  %v1021 = vpop.f32.mrb[0].mxu0
  %v1022 = vadd.f32 %v902, %v1021
  %v1023 = vpop.f32.mrb[0].mxu0
  %v1024 = vpop.f32.mrb[0].mxu0
  %v1025 = vpop.f32.mrb[0].mxu0
  %1026 = vdwg.mxu0
  %1027 = vst [vmem:[%s2] sm:$0xff] %v942
  %1028 = vst [vmem:[%s2 + $0x8] sm:$0xff] %v945
  %1029 = vst [vmem:[%s2 + $0x10] sm:$0xff] %v950
  %1030 = vst [vmem:[%s2 + $0x18] sm:$0xff] %v953
  %1031 = vst [vmem:[%s2 + $0x20] sm:$0xff] %v958
  %1032 = vst [vmem:[%s2 + $0x28] sm:$0xff] %v961
  %1033 = vst [vmem:[%s2 + $0x30] sm:$0xff] %v966
  %1034 = vst [vmem:[%s2 + $0x38] sm:$0xff] %v969
  %1035 = vst [vmem:[%s2 + $0x40] sm:$0xff] %v974
  %1036 = vst [vmem:[%s2 + $0x48] sm:$0xff] %v977
  %1037 = vst [vmem:[%s2 + $0x50] sm:$0xff] %v982
  %1038 = vst [vmem:[%s2 + $0x58] sm:$0xff] %v985
  %1039 = vst [vmem:[%s2 + $0x60] sm:$0xff] %v990
  %1040 = vst [vmem:[%s2 + $0x68] sm:$0xff] %v993
  %1041 = vst [vmem:[%s2 + $0x70] sm:$0xff] %v998
  %1042 = vst [vmem:[%s2 + $0x78] sm:$0xff] %v1001
  %1043 = vst [vmem:[%s2 + $0x80] sm:$0xff] %v1006
  %1044 = vst [vmem:[%s2 + $0x88] sm:$0xff] %v1009
  %1045 = vst [vmem:[%s2 + $0x90] sm:$0xff] %v1014
  %1046 = vst [vmem:[%s2 + $0x98] sm:$0xff] %v1017
  %1047 = vst [vmem:[%s2 + $0xa0] sm:$0x3] %v1022
  %v1048 = vadd.f32 %v942, %v945
  %v1049 = vadd.f32 %v1048, %v950
  %v1050 = vadd.f32 %v1049, %v953
  %v1051 = vadd.f32 %v1050, %v958
  %v1052 = vadd.f32 %v1051, %v961
  %v1053 = vadd.f32 %v1052, %v966
  %v1054 = vadd.f32 %v1053, %v969
  %v1055 = vadd.f32 %v1054, %v974
  %v1056 = vadd.f32 %v1055, %v977
  %v1057 = vadd.f32 %v1056, %v982
  %v1058 = vadd.f32 %v1057, %v985
  %v1059 = vadd.f32 %v1058, %v990
  %v1060 = vadd.f32 %v1059, %v993
  %v1061 = vadd.f32 %v1060, %v998
  %v1062 = vadd.f32 %v1061, %v1001
  %v1063 = vadd.f32 %v1062, %v1006
  %v1064 = vadd.f32 %v1063, %v1009
  %v1065 = vadd.f32 %v1064, %v1014
  %v1066 = vadd.f32 %v1065, %v1017
  %vm1067 = vcmask 1041408
  %v1068 = vsel %vm1067, %v1022, 0.0
  %v1069 = vadd.f32 %v1066, %v1068
  %v1070 = vrot.slane %v1069, 4
  %v1071 = vadd.f32 %v1069, %v1070
  %v1072 = vrot.slane %v1071, 2
  %v1073 = vadd.f32 %v1071, %v1072
  %v1074 = vrot.slane %v1073, 1
  %v1075 = vadd.f32 %v1073, %v1074
  %1076 = vst [vmem:[%s3] sm:$0xff] %v1075
  %v1077 = vmul.f32 %v942, %v942
  %v1078 = vmul.f32 %v945, %v945
  %v1079 = vmul.f32 %v950, %v950
  %v1080 = vmul.f32 %v953, %v953
  %v1081 = vmul.f32 %v958, %v958
  %v1082 = vmul.f32 %v961, %v961
  %v1083 = vmul.f32 %v966, %v966
  %v1084 = vmul.f32 %v969, %v969
  %v1085 = vmul.f32 %v974, %v974
  %v1086 = vmul.f32 %v977, %v977
  %v1087 = vmul.f32 %v982, %v982
  %v1088 = vmul.f32 %v985, %v985
  %v1089 = vmul.f32 %v990, %v990
  %v1090 = vmul.f32 %v993, %v993
  %v1091 = vmul.f32 %v998, %v998
  %v1092 = vmul.f32 %v1001, %v1001
  %v1093 = vmul.f32 %v1006, %v1006
  %v1094 = vmul.f32 %v1009, %v1009
  %v1095 = vmul.f32 %v1014, %v1014
  %v1096 = vmul.f32 %v1017, %v1017
  %v1097 = vmul.f32 %v1022, %v1022
  %v1098 = vadd.f32 %v1077, %v1078
  %v1099 = vadd.f32 %v1098, %v1079
  %v1100 = vadd.f32 %v1099, %v1080
  %v1101 = vadd.f32 %v1100, %v1081
  %v1102 = vadd.f32 %v1101, %v1082
  %v1103 = vadd.f32 %v1102, %v1083
  %v1104 = vadd.f32 %v1103, %v1084
  %v1105 = vadd.f32 %v1104, %v1085
  %v1106 = vadd.f32 %v1105, %v1086
  %v1107 = vadd.f32 %v1106, %v1087
  %v1108 = vadd.f32 %v1107, %v1088
  %v1109 = vadd.f32 %v1108, %v1089
  %v1110 = vadd.f32 %v1109, %v1090
  %v1111 = vadd.f32 %v1110, %v1091
  %v1112 = vadd.f32 %v1111, %v1092
  %v1113 = vadd.f32 %v1112, %v1093
  %v1114 = vadd.f32 %v1113, %v1094
  %v1115 = vadd.f32 %v1114, %v1095
  %v1116 = vadd.f32 %v1115, %v1096
  %v1117 = vsel %vm1067, %v1097, 0.0
  %v1118 = vadd.f32 %v1116, %v1117
  %v1119 = vrot.slane %v1118, 4
  %v1120 = vadd.f32 %v1118, %v1119
  %v1121 = vrot.slane %v1120, 2
  %v1122 = vadd.f32 %v1120, %v1121
  %v1123 = vrot.slane %v1122, 1
  %v1124 = vadd.f32 %v1122, %v1123
  %1125 = vst [vmem:[%s4] sm:$0xff] %v1124
  // Predicated region
  $region10: #{encoder_forward.11} parent=0 // pred_check
    _
  $region11: #{encoder_forward.11} parent=0 // pred_check_branch
    %1127 = sbr.rel (0) target = $region13
  $region12: #{encoder_forward.11} parent=0 // pred_region
    _
  $region13: #{encoder_forward.11} parent=0 // pred_fallthru
    _
  // Predicated region
  $region14: #{encoder_forward.11} parent=0 // pred_check
    _
  $region15: #{encoder_forward.11} parent=0 // pred_check_branch
    %1129 = sbr.rel (0) target = $region17
  $region16: #{encoder_forward.11} parent=0 // pred_region
    _
  $region17: #{encoder_forward.11} parent=0 // pred_fallthru
    _
  // Predicated region
  $region18: #{encoder_forward.11} parent=0 // pred_check
    _
  $region19: #{encoder_forward.11} parent=0 // pred_check_branch
    %1131 = sbr.rel (0) target = $region21
  $region20: #{encoder_forward.11} parent=0 // pred_region
    _
  $region21: #{encoder_forward.11} parent=0 // pred_fallthru
    _
  // Predicated region
  $region22: #{encoder_forward.11} parent=0 // pred_check
    _
  $region23: #{encoder_forward.11} parent=0 // pred_check_branch
    %1133 = sbr.rel (0) target = $region25
  $region24: #{encoder_forward.11} parent=0 // pred_region
    _
  $region25: #{encoder_forward.11} parent=0 // pred_fallthru
    _
  // Predicated region
  $region26: #{encoder_forward.11} parent=0 // pred_check
    _
  $region27: #{encoder_forward.11} parent=0 // pred_check_branch
    %1135 = sbr.rel (0) target = $region29
  $region28: #{encoder_forward.11} parent=0 // pred_region
    _
  $region29: #{encoder_forward.11} parent=0 // pred_fallthru
    _
  // Predicated region
  $region30: #{encoder_forward.11} parent=0 // pred_check
    _
  $region31: #{encoder_forward.11} parent=0 // pred_check_branch
    %1137 = sbr.rel (0) target = $region33
  $region32: #{encoder_forward.11} parent=0 // pred_region
    _
  $region33: #{encoder_forward.11} parent=0 // pred_fallthru
    _

// kernel: encoder_forward.12
$region0: #{encoder_forward.12}
  #allocation0 [shape = 'u32[]', space=smem, size = 0x4, offset = 0x4, fixed_abs, tag = 'smem constant byte address 0x4 - core index']
  #allocation1 [shape = 'u32[144,128]{1,0:T(1,128)}', space=vmem, size = 0x12000, scoped, tag = 'internal scratch']
  %s0 = inlined_call_operand.vmem [shape: f32[162,128], index: 0, kind: input, shape index: {}]
  %s1 = inlined_call_operand.vmem [shape: f32[1,128], index: 1, kind: input, shape index: {}]
  %s2 = inlined_call_operand.vmem [shape: f32[1,128], index: 2, kind: input, shape index: {}]
  %s3 = inlined_call_operand.vmem [shape: f32[162,128], index: 3, kind: output, shape index: {}]
  %s4 = sld [smem:[#allocation0]]
  $region22: #{encoder_forward.12} parent=0
    _
  %s6 = ssub.s32 1, %s4
  %s7 = scalar_select 0, %s6, %s4
  // Predicated region
  $region2: #{encoder_forward.12} parent=0 // pred_check
    _
  $region3: #{encoder_forward.12} parent=0 // pred_check_branch
    %9 = sbr.rel (0) target = $region5
  $region4: #{encoder_forward.12} parent=0 // pred_region
    _
  $region5: #{encoder_forward.12} parent=0 // pred_fallthru
    _
  // Predicated region
  $region6: #{encoder_forward.12} parent=0 // pred_check
    _
  $region7: #{encoder_forward.12} parent=0 // pred_check_branch
    %11 = sbr.rel (0) target = $region9
  $region8: #{encoder_forward.12} parent=0 // pred_region
    _
  $region9: #{encoder_forward.12} parent=0 // pred_fallthru
    _
  // Predicated region
  $region10: #{encoder_forward.12} parent=0 // pred_check
    _
  $region11: #{encoder_forward.12} parent=0 // pred_check_branch
    %13 = sbr.rel (0) target = $region13
  $region12: #{encoder_forward.12} parent=0 // pred_region
    _
  $region13: #{encoder_forward.12} parent=0 // pred_fallthru
    _
  %v14 = vld [vmem:[%s0] sm:$0xff]
  %v15 = vld [vmem:[%s0 + $0x8] sm:$0xff]
  %v16 = vld [vmem:[%s0 + $0x10] sm:$0xff]
  %v17 = vld [vmem:[%s0 + $0x18] sm:$0xff]
  %v18 = vld [vmem:[%s0 + $0x20] sm:$0xff]
  %v19 = vld [vmem:[%s0 + $0x28] sm:$0xff]
  %v20 = vld [vmem:[%s0 + $0x30] sm:$0xff]
  %v21 = vld [vmem:[%s0 + $0x38] sm:$0xff]
  %v22 = vld [vmem:[%s0 + $0x40] sm:$0xff]
  %v23 = vld [vmem:[%s0 + $0x48] sm:$0xff]
  %v24 = vld [vmem:[%s0 + $0x50] sm:$0xff]
  %v25 = vld [vmem:[%s0 + $0x58] sm:$0xff]
  %v26 = vld [vmem:[%s0 + $0x60] sm:$0xff]
  %v27 = vld [vmem:[%s0 + $0x68] sm:$0xff]
  %v28 = vld [vmem:[%s0 + $0x70] sm:$0xff]
  %v29 = vld [vmem:[%s0 + $0x78] sm:$0xff]
  %v30 = vld [vmem:[%s0 + $0x80] sm:$0xff]
  %v31 = vld [vmem:[%s0 + $0x88] sm:$0xff]
  %v32 = vld [vmem:[%s0 + $0x90] sm:$0xff]
  %v33 = vld [vmem:[%s0 + $0x98] sm:$0xff]
  %v34 = vld [vmem:[%s0 + $0xa0] sm:$0x3]
  %v35 = vld [vmem:[%s1] sm:$0x1]
  %v37 = vlaneseq
  %v38 = vshrl.u32 %v37, 7
  %v39 = vsub.s32 0, %v38
  %v40 = vrot.slane %v35, %v39
  %v42 = vmul.f32 %v14, %v40
  %v43 = vmul.f32 %v15, %v40
  %v44 = vmul.f32 %v16, %v40
  %v45 = vmul.f32 %v17, %v40
  %v46 = vmul.f32 %v18, %v40
  %v47 = vmul.f32 %v19, %v40
  %v48 = vmul.f32 %v20, %v40
  %v49 = vmul.f32 %v21, %v40
  %v50 = vmul.f32 %v22, %v40
  %v51 = vmul.f32 %v23, %v40
  %v52 = vmul.f32 %v24, %v40
  %v53 = vmul.f32 %v25, %v40
  %v54 = vmul.f32 %v26, %v40
  %v55 = vmul.f32 %v27, %v40
  %v56 = vmul.f32 %v28, %v40
  %v57 = vmul.f32 %v29, %v40
  %v58 = vmul.f32 %v30, %v40
  %v59 = vmul.f32 %v31, %v40
  %v60 = vmul.f32 %v32, %v40
  %v61 = vmul.f32 %v33, %v40
  %v62 = vmul.f32 %v34, %v40
  %v63 = vld [vmem:[%s2] sm:$0x1]
  %v65 = vlaneseq
  %v66 = vshrl.u32 %v65, 7
  %v67 = vsub.s32 0, %v66
  %v68 = vrot.slane %v63, %v67
  %v70 = vadd.f32 %v42, %v68
  %v71 = vadd.f32 %v43, %v68
  %v72 = vadd.f32 %v44, %v68
  %v73 = vadd.f32 %v45, %v68
  %v74 = vadd.f32 %v46, %v68
  %v75 = vadd.f32 %v47, %v68
  %v76 = vadd.f32 %v48, %v68
  %v77 = vadd.f32 %v49, %v68
  %v78 = vadd.f32 %v50, %v68
  %v79 = vadd.f32 %v51, %v68
  %v80 = vadd.f32 %v52, %v68
  %v81 = vadd.f32 %v53, %v68
  %v82 = vadd.f32 %v54, %v68
  %v83 = vadd.f32 %v55, %v68
  %v84 = vadd.f32 %v56, %v68
  %v85 = vadd.f32 %v57, %v68
  %v86 = vadd.f32 %v58, %v68
  %v87 = vadd.f32 %v59, %v68
  %v88 = vadd.f32 %v60, %v68
  %v89 = vadd.f32 %v61, %v68
  %v90 = vadd.f32 %v62, %v68
  %v91 = vmax.f32 %v70, 0.0
  %v92 = vmax.f32 %v71, 0.0
  %v93 = vmax.f32 %v72, 0.0
  %v94 = vmax.f32 %v73, 0.0
  %v95 = vmax.f32 %v74, 0.0
  %v96 = vmax.f32 %v75, 0.0
  %v97 = vmax.f32 %v76, 0.0
  %v98 = vmax.f32 %v77, 0.0
  %v99 = vmax.f32 %v78, 0.0
  %v100 = vmax.f32 %v79, 0.0
  %v101 = vmax.f32 %v80, 0.0
  %v102 = vmax.f32 %v81, 0.0
  %v103 = vmax.f32 %v82, 0.0
  %v104 = vmax.f32 %v83, 0.0
  %v105 = vmax.f32 %v84, 0.0
  %v106 = vmax.f32 %v85, 0.0
  %v107 = vmax.f32 %v86, 0.0
  %v108 = vmax.f32 %v87, 0.0
  %v109 = vmax.f32 %v88, 0.0
  %v110 = vmax.f32 %v89, 0.0
  %v111 = vmax.f32 %v90, 0.0
  %112 = vst [vmem:[%s3] sm:$0xff] %v91
  %113 = vst [vmem:[%s3 + $0x8] sm:$0xff] %v92
  %114 = vst [vmem:[%s3 + $0x10] sm:$0xff] %v93
  %115 = vst [vmem:[%s3 + $0x18] sm:$0xff] %v94
  %116 = vst [vmem:[%s3 + $0x20] sm:$0xff] %v95
  %117 = vst [vmem:[%s3 + $0x28] sm:$0xff] %v96
  %118 = vst [vmem:[%s3 + $0x30] sm:$0xff] %v97
  %119 = vst [vmem:[%s3 + $0x38] sm:$0xff] %v98
  %120 = vst [vmem:[%s3 + $0x40] sm:$0xff] %v99
  %121 = vst [vmem:[%s3 + $0x48] sm:$0xff] %v100
  %122 = vst [vmem:[%s3 + $0x50] sm:$0xff] %v101
  %123 = vst [vmem:[%s3 + $0x58] sm:$0xff] %v102
  %124 = vst [vmem:[%s3 + $0x60] sm:$0xff] %v103
  %125 = vst [vmem:[%s3 + $0x68] sm:$0xff] %v104
  %126 = vst [vmem:[%s3 + $0x70] sm:$0xff] %v105
  %127 = vst [vmem:[%s3 + $0x78] sm:$0xff] %v106
  %128 = vst [vmem:[%s3 + $0x80] sm:$0xff] %v107
  %129 = vst [vmem:[%s3 + $0x88] sm:$0xff] %v108
  %130 = vst [vmem:[%s3 + $0x90] sm:$0xff] %v109
  %131 = vst [vmem:[%s3 + $0x98] sm:$0xff] %v110
  %132 = vst [vmem:[%s3 + $0xa0] sm:$0x3] %v111
  // Predicated region
  $region14: #{encoder_forward.12} parent=0 // pred_check
    _
  $region15: #{encoder_forward.12} parent=0 // pred_check_branch
    %134 = sbr.rel (0) target = $region17
  $region16: #{encoder_forward.12} parent=0 // pred_region
    _
  $region17: #{encoder_forward.12} parent=0 // pred_fallthru
    _
  // Predicated region
  $region18: #{encoder_forward.12} parent=0 // pred_check
    _
  $region19: #{encoder_forward.12} parent=0 // pred_check_branch
    %136 = sbr.rel (0) target = $region21
  $region20: #{encoder_forward.12} parent=0 // pred_region
    _
  $region21: #{encoder_forward.12} parent=0 // pred_fallthru
    _

// kernel: encoder_forward.13
$region0: #{encoder_forward.13}
  #allocation0 [shape = 'u32[]', space=smem, size = 0x4, offset = 0x4, fixed_abs, tag = 'smem constant byte address 0x4 - core index']
  #allocation1 [shape = 'u32[144,128]{1,0:T(1,128)}', space=vmem, size = 0x12000, scoped, tag = 'internal scratch']
  %s0 = inlined_call_operand.vmem [shape: bf16[2,10368], index: 0, kind: input, shape index: {}]
  %s1 = inlined_call_operand.vmem [shape: bf16[10368,32], index: 1, kind: input, shape index: {}]
  %s2 = inlined_call_operand.vmem [shape: f32[1,32], index: 2, kind: input, shape index: {}]
  %s3 = inlined_call_operand.vmem [shape: f32[1,32], index: 3, kind: input, shape index: {}]
  %s4 = inlined_call_operand.vmem [shape: bf16[32,32], index: 4, kind: input, shape index: {}]
  %s5 = inlined_call_operand.vmem [shape: f32[1,32], index: 5, kind: input, shape index: {}]
  %s6 = inlined_call_operand.vmem [shape: f32[1,32], index: 6, kind: input, shape index: {}]
  %s7 = inlined_call_operand.vmem [shape: bf16[32,32], index: 7, kind: input, shape index: {}]
  %s8 = inlined_call_operand.vmem [shape: f32[1,32], index: 8, kind: input, shape index: {}]
  %s9 = inlined_call_operand.hbm [shape: f32[2,32], index: 9, kind: output, shape index: {}]
  %s10 = sld [smem:[#allocation0]]
  $region46: #{encoder_forward.13} parent=0
    _
  %s12 = ssub.s32 1, %s10
  %s13 = scalar_select 0, %s12, %s10
  $region1: #{encoder_forward.13} parent=0
    #allocation2 [shape = 'u8[1024]{0}', space=vmem, size = 0x400, scoped, tag = 'output window, operand 0, single buffered']
    #allocation3 [shape = 's32[1]{0}', space=sflag, size = 0x4, scoped, tag = 'scoped memory for encoder_forward.13']
    %14 = vsyncpa [#allocation3], 0
    // Predicated region
    $region2: #{encoder_forward.13} parent=1 // pred_check
      _
    $region3: #{encoder_forward.13} parent=1 // pred_check_branch
      %16 = sbr.rel (0) target = $region5
    $region4: #{encoder_forward.13} parent=1 // pred_region
      _
    $region5: #{encoder_forward.13} parent=1 // pred_fallthru
      _
    // Predicated region
    $region6: #{encoder_forward.13} parent=1 // pred_check
      _
    $region7: #{encoder_forward.13} parent=1 // pred_check_branch
      %18 = sbr.rel (0) target = $region9
    $region8: #{encoder_forward.13} parent=1 // pred_region
      _
    $region9: #{encoder_forward.13} parent=1 // pred_fallthru
      _
    // Predicated region
    $region10: #{encoder_forward.13} parent=1 // pred_check
      _
    $region11: #{encoder_forward.13} parent=1 // pred_check_branch
      %20 = sbr.rel (0) target = $region13
    $region12: #{encoder_forward.13} parent=1 // pred_region
      _
    $region13: #{encoder_forward.13} parent=1 // pred_fallthru
      _
    // Predicated region
    $region14: #{encoder_forward.13} parent=1 // pred_check
      _
    $region15: #{encoder_forward.13} parent=1 // pred_check_branch
      %22 = sbr.rel (0) target = $region17
    $region16: #{encoder_forward.13} parent=1 // pred_region
      _
    $region17: #{encoder_forward.13} parent=1 // pred_fallthru
      _
    // Predicated region
    $region18: #{encoder_forward.13} parent=1 // pred_check
      _
    $region19: #{encoder_forward.13} parent=1 // pred_check_branch
      %24 = sbr.rel (0) target = $region21
    $region20: #{encoder_forward.13} parent=1 // pred_region
      _
    $region21: #{encoder_forward.13} parent=1 // pred_fallthru
      _
    // Predicated region
    $region22: #{encoder_forward.13} parent=1 // pred_check
      _
    $region23: #{encoder_forward.13} parent=1 // pred_check_branch
      %26 = sbr.rel (0) target = $region25
    $region24: #{encoder_forward.13} parent=1 // pred_region
      _
    $region25: #{encoder_forward.13} parent=1 // pred_fallthru
      _
    // Predicated region
    $region26: #{encoder_forward.13} parent=1 // pred_check
      _
    $region27: #{encoder_forward.13} parent=1 // pred_check_branch
      %28 = sbr.rel (0) target = $region29
    $region28: #{encoder_forward.13} parent=1 // pred_region
      _
    $region29: #{encoder_forward.13} parent=1 // pred_fallthru
      _
    // Predicated region
    $region30: #{encoder_forward.13} parent=1 // pred_check
      _
    $region31: #{encoder_forward.13} parent=1 // pred_check_branch
      %30 = sbr.rel (0) target = $region33
    $region32: #{encoder_forward.13} parent=1 // pred_region
      _
    $region33: #{encoder_forward.13} parent=1 // pred_fallthru
      _
    // Predicated region
    $region34: #{encoder_forward.13} parent=1 // pred_check
      _
    $region35: #{encoder_forward.13} parent=1 // pred_check_branch
      %32 = sbr.rel (0) target = $region37
    $region36: #{encoder_forward.13} parent=1 // pred_region
      _
    $region37: #{encoder_forward.13} parent=1 // pred_fallthru
      _
    %v34 = vld [vmem:[%s0] sm:$0xff]
    %v35 = vld [vmem:[%s0 + $0x8] sm:$0xff]
    %v36 = vld [vmem:[%s0 + $0x10] sm:$0xff]
    %v37 = vld [vmem:[%s0 + $0x18] sm:$0xff]
    %v38 = vld [vmem:[%s0 + $0x20] sm:$0xff]
    %v39 = vld [vmem:[%s0 + $0x28] sm:$0xff]
    %v40 = vld [vmem:[%s0 + $0x30] sm:$0xff]
    %v41 = vld [vmem:[%s0 + $0x38] sm:$0xff]
    %v42 = vld [vmem:[%s0 + $0x40] sm:$0xff]
    %v43 = vld [vmem:[%s0 + $0x48] sm:$0xff]
    %v44 = vld [vmem:[%s0 + $0x50] sm:$0x1]
    %v45 = vld [vmem:[%s1] sm:$0xf]
    %v46 = vld [vmem:[%s1 + $0x4] sm:$0xf]
    %v47 = vld [vmem:[%s1 + $0x8] sm:$0xf]
    %v48 = vld [vmem:[%s1 + $0xc] sm:$0xf]
    %v49 = vld [vmem:[%s1 + $0x10] sm:$0xf]
    %v50 = vld [vmem:[%s1 + $0x14] sm:$0xf]
    %v51 = vld [vmem:[%s1 + $0x18] sm:$0xf]
    %v52 = vld [vmem:[%s1 + $0x1c] sm:$0xf]
    %v53 = vld [vmem:[%s1 + $0x20] sm:$0xf]
    %v54 = vld [vmem:[%s1 + $0x24] sm:$0xf]
    %v55 = vld [vmem:[%s1 + $0x28] sm:$0xf]
    %v56 = vld [vmem:[%s1 + $0x2c] sm:$0xf]
    %v57 = vld [vmem:[%s1 + $0x30] sm:$0xf]
    %v58 = vld [vmem:[%s1 + $0x34] sm:$0xf]
    %v59 = vld [vmem:[%s1 + $0x38] sm:$0xf]
    %v60 = vld [vmem:[%s1 + $0x3c] sm:$0xf]
    %v61 = vld [vmem:[%s1 + $0x40] sm:$0xf]
    %v62 = vld [vmem:[%s1 + $0x44] sm:$0xf]
    %v63 = vld [vmem:[%s1 + $0x48] sm:$0xf]
    %v64 = vld [vmem:[%s1 + $0x4c] sm:$0xf]
    %v65 = vld [vmem:[%s1 + $0x50] sm:$0xf]
    %v66 = vld [vmem:[%s1 + $0x54] sm:$0xf]
    %v67 = vld [vmem:[%s1 + $0x58] sm:$0xf]
    %v68 = vld [vmem:[%s1 + $0x5c] sm:$0xf]
    %v69 = vld [vmem:[%s1 + $0x60] sm:$0xf]
    %v70 = vld [vmem:[%s1 + $0x64] sm:$0xf]
    %v71 = vld [vmem:[%s1 + $0x68] sm:$0xf]
    %v72 = vld [vmem:[%s1 + $0x6c] sm:$0xf]
    %v73 = vld [vmem:[%s1 + $0x70] sm:$0xf]
    %v74 = vld [vmem:[%s1 + $0x74] sm:$0xf]
    %v75 = vld [vmem:[%s1 + $0x78] sm:$0xf]
    %v76 = vld [vmem:[%s1 + $0x7c] sm:$0xf]
    %v77 = vld [vmem:[%s1 + $0x80] sm:$0xf]
    %v78 = vld [vmem:[%s1 + $0x84] sm:$0xf]
    %v79 = vld [vmem:[%s1 + $0x88] sm:$0xf]
    %v80 = vld [vmem:[%s1 + $0x8c] sm:$0xf]
    %v81 = vld [vmem:[%s1 + $0x90] sm:$0xf]
    %v82 = vld [vmem:[%s1 + $0x94] sm:$0xf]
    %v83 = vld [vmem:[%s1 + $0x98] sm:$0xf]
    %v84 = vld [vmem:[%s1 + $0x9c] sm:$0xf]
    %v85 = vld [vmem:[%s1 + $0xa0] sm:$0xf]
    %v86 = vld [vmem:[%s1 + $0xa4] sm:$0xf]
    %v87 = vld [vmem:[%s1 + $0xa8] sm:$0xf]
    %v88 = vld [vmem:[%s1 + $0xac] sm:$0xf]
    %v89 = vld [vmem:[%s1 + $0xb0] sm:$0xf]
    %v90 = vld [vmem:[%s1 + $0xb4] sm:$0xf]
    %v91 = vld [vmem:[%s1 + $0xb8] sm:$0xf]
    %v92 = vld [vmem:[%s1 + $0xbc] sm:$0xf]
    %v93 = vld [vmem:[%s1 + $0xc0] sm:$0xf]
    %v94 = vld [vmem:[%s1 + $0xc4] sm:$0xf]
    %v95 = vld [vmem:[%s1 + $0xc8] sm:$0xf]
    %v96 = vld [vmem:[%s1 + $0xcc] sm:$0xf]
    %v97 = vld [vmem:[%s1 + $0xd0] sm:$0xf]
    %v98 = vld [vmem:[%s1 + $0xd4] sm:$0xf]
    %v99 = vld [vmem:[%s1 + $0xd8] sm:$0xf]
    %v100 = vld [vmem:[%s1 + $0xdc] sm:$0xf]
    %v101 = vld [vmem:[%s1 + $0xe0] sm:$0xf]
    %v102 = vld [vmem:[%s1 + $0xe4] sm:$0xf]
    %v103 = vld [vmem:[%s1 + $0xe8] sm:$0xf]
    %v104 = vld [vmem:[%s1 + $0xec] sm:$0xf]
    %v105 = vld [vmem:[%s1 + $0xf0] sm:$0xf]
    %v106 = vld [vmem:[%s1 + $0xf4] sm:$0xf]
    %v107 = vld [vmem:[%s1 + $0xf8] sm:$0xf]
    %v108 = vld [vmem:[%s1 + $0xfc] sm:$0xf]
    %v109 = vld [vmem:[%s1 + $0x100] sm:$0xf]
    %v110 = vld [vmem:[%s1 + $0x104] sm:$0xf]
    %v111 = vld [vmem:[%s1 + $0x108] sm:$0xf]
    %v112 = vld [vmem:[%s1 + $0x10c] sm:$0xf]
    %v113 = vld [vmem:[%s1 + $0x110] sm:$0xf]
    %v114 = vld [vmem:[%s1 + $0x114] sm:$0xf]
    %v115 = vld [vmem:[%s1 + $0x118] sm:$0xf]
    %v116 = vld [vmem:[%s1 + $0x11c] sm:$0xf]
    %v117 = vld [vmem:[%s1 + $0x120] sm:$0xf]
    %v118 = vld [vmem:[%s1 + $0x124] sm:$0xf]
    %v119 = vld [vmem:[%s1 + $0x128] sm:$0xf]
    %v120 = vld [vmem:[%s1 + $0x12c] sm:$0xf]
    %v121 = vld [vmem:[%s1 + $0x130] sm:$0xf]
    %v122 = vld [vmem:[%s1 + $0x134] sm:$0xf]
    %v123 = vld [vmem:[%s1 + $0x138] sm:$0xf]
    %v124 = vld [vmem:[%s1 + $0x13c] sm:$0xf]
    %v125 = vld [vmem:[%s1 + $0x140] sm:$0xf]
    %v126 = vld [vmem:[%s1 + $0x144] sm:$0xf]
    %v127 = vld [vmem:[%s1 + $0x148] sm:$0xf]
    %v128 = vld [vmem:[%s1 + $0x14c] sm:$0xf]
    %v129 = vld [vmem:[%s1 + $0x150] sm:$0xf]
    %v130 = vld [vmem:[%s1 + $0x154] sm:$0xf]
    %v131 = vld [vmem:[%s1 + $0x158] sm:$0xf]
    %v132 = vld [vmem:[%s1 + $0x15c] sm:$0xf]
    %v133 = vld [vmem:[%s1 + $0x160] sm:$0xf]
    %v134 = vld [vmem:[%s1 + $0x164] sm:$0xf]
    %v135 = vld [vmem:[%s1 + $0x168] sm:$0xf]
    %v136 = vld [vmem:[%s1 + $0x16c] sm:$0xf]
    %v137 = vld [vmem:[%s1 + $0x170] sm:$0xf]
    %v138 = vld [vmem:[%s1 + $0x174] sm:$0xf]
    %v139 = vld [vmem:[%s1 + $0x178] sm:$0xf]
    %v140 = vld [vmem:[%s1 + $0x17c] sm:$0xf]
    %v141 = vld [vmem:[%s1 + $0x180] sm:$0xf]
    %v142 = vld [vmem:[%s1 + $0x184] sm:$0xf]
    %v143 = vld [vmem:[%s1 + $0x188] sm:$0xf]
    %v144 = vld [vmem:[%s1 + $0x18c] sm:$0xf]
    %v145 = vld [vmem:[%s1 + $0x190] sm:$0xf]
    %v146 = vld [vmem:[%s1 + $0x194] sm:$0xf]
    %v147 = vld [vmem:[%s1 + $0x198] sm:$0xf]
    %v148 = vld [vmem:[%s1 + $0x19c] sm:$0xf]
    %v149 = vld [vmem:[%s1 + $0x1a0] sm:$0xf]
    %v150 = vld [vmem:[%s1 + $0x1a4] sm:$0xf]
    %v151 = vld [vmem:[%s1 + $0x1a8] sm:$0xf]
    %v152 = vld [vmem:[%s1 + $0x1ac] sm:$0xf]
    %v153 = vld [vmem:[%s1 + $0x1b0] sm:$0xf]
    %v154 = vld [vmem:[%s1 + $0x1b4] sm:$0xf]
    %v155 = vld [vmem:[%s1 + $0x1b8] sm:$0xf]
    %v156 = vld [vmem:[%s1 + $0x1bc] sm:$0xf]
    %v157 = vld [vmem:[%s1 + $0x1c0] sm:$0xf]
    %v158 = vld [vmem:[%s1 + $0x1c4] sm:$0xf]
    %v159 = vld [vmem:[%s1 + $0x1c8] sm:$0xf]
    %v160 = vld [vmem:[%s1 + $0x1cc] sm:$0xf]
    %v161 = vld [vmem:[%s1 + $0x1d0] sm:$0xf]
    %v162 = vld [vmem:[%s1 + $0x1d4] sm:$0xf]
    %v163 = vld [vmem:[%s1 + $0x1d8] sm:$0xf]
    %v164 = vld [vmem:[%s1 + $0x1dc] sm:$0xf]
    %v165 = vld [vmem:[%s1 + $0x1e0] sm:$0xf]
    %v166 = vld [vmem:[%s1 + $0x1e4] sm:$0xf]
    %v167 = vld [vmem:[%s1 + $0x1e8] sm:$0xf]
    %v168 = vld [vmem:[%s1 + $0x1ec] sm:$0xf]
    %v169 = vld [vmem:[%s1 + $0x1f0] sm:$0xf]
    %v170 = vld [vmem:[%s1 + $0x1f4] sm:$0xf]
    %v171 = vld [vmem:[%s1 + $0x1f8] sm:$0xf]
    %v172 = vld [vmem:[%s1 + $0x1fc] sm:$0xf]
    %v173 = vld [vmem:[%s1 + $0x200] sm:$0xf]
    %v174 = vld [vmem:[%s1 + $0x204] sm:$0xf]
    %v175 = vld [vmem:[%s1 + $0x208] sm:$0xf]
    %v176 = vld [vmem:[%s1 + $0x20c] sm:$0xf]
    %v177 = vld [vmem:[%s1 + $0x210] sm:$0xf]
    %v178 = vld [vmem:[%s1 + $0x214] sm:$0xf]
    %v179 = vld [vmem:[%s1 + $0x218] sm:$0xf]
    %v180 = vld [vmem:[%s1 + $0x21c] sm:$0xf]
    %v181 = vld [vmem:[%s1 + $0x220] sm:$0xf]
    %v182 = vld [vmem:[%s1 + $0x224] sm:$0xf]
    %v183 = vld [vmem:[%s1 + $0x228] sm:$0xf]
    %v184 = vld [vmem:[%s1 + $0x22c] sm:$0xf]
    %v185 = vld [vmem:[%s1 + $0x230] sm:$0xf]
    %v186 = vld [vmem:[%s1 + $0x234] sm:$0xf]
    %v187 = vld [vmem:[%s1 + $0x238] sm:$0xf]
    %v188 = vld [vmem:[%s1 + $0x23c] sm:$0xf]
    %v189 = vld [vmem:[%s1 + $0x240] sm:$0xf]
    %v190 = vld [vmem:[%s1 + $0x244] sm:$0xf]
    %v191 = vld [vmem:[%s1 + $0x248] sm:$0xf]
    %v192 = vld [vmem:[%s1 + $0x24c] sm:$0xf]
    %v193 = vld [vmem:[%s1 + $0x250] sm:$0xf]
    %v194 = vld [vmem:[%s1 + $0x254] sm:$0xf]
    %v195 = vld [vmem:[%s1 + $0x258] sm:$0xf]
    %v196 = vld [vmem:[%s1 + $0x25c] sm:$0xf]
    %v197 = vld [vmem:[%s1 + $0x260] sm:$0xf]
    %v198 = vld [vmem:[%s1 + $0x264] sm:$0xf]
    %v199 = vld [vmem:[%s1 + $0x268] sm:$0xf]
    %v200 = vld [vmem:[%s1 + $0x26c] sm:$0xf]
    %v201 = vld [vmem:[%s1 + $0x270] sm:$0xf]
    %v202 = vld [vmem:[%s1 + $0x274] sm:$0xf]
    %v203 = vld [vmem:[%s1 + $0x278] sm:$0xf]
    %v204 = vld [vmem:[%s1 + $0x27c] sm:$0xf]
    %v205 = vld [vmem:[%s1 + $0x280] sm:$0xf]
    %v206 = vld [vmem:[%s1 + $0x284] sm:$0xf]
    %v207 = vld [vmem:[%s1 + $0x288] sm:$0xf]
    %v208 = vld [vmem:[%s1 + $0x28c] sm:$0xf]
    %v209 = vld [vmem:[%s1 + $0x290] sm:$0xf]
    %v210 = vld [vmem:[%s1 + $0x294] sm:$0xf]
    %v211 = vld [vmem:[%s1 + $0x298] sm:$0xf]
    %v212 = vld [vmem:[%s1 + $0x29c] sm:$0xf]
    %v213 = vld [vmem:[%s1 + $0x2a0] sm:$0xf]
    %v214 = vld [vmem:[%s1 + $0x2a4] sm:$0xf]
    %v215 = vld [vmem:[%s1 + $0x2a8] sm:$0xf]
    %v216 = vld [vmem:[%s1 + $0x2ac] sm:$0xf]
    %v217 = vld [vmem:[%s1 + $0x2b0] sm:$0xf]
    %v218 = vld [vmem:[%s1 + $0x2b4] sm:$0xf]
    %v219 = vld [vmem:[%s1 + $0x2b8] sm:$0xf]
    %v220 = vld [vmem:[%s1 + $0x2bc] sm:$0xf]
    %v221 = vld [vmem:[%s1 + $0x2c0] sm:$0xf]
    %v222 = vld [vmem:[%s1 + $0x2c4] sm:$0xf]
    %v223 = vld [vmem:[%s1 + $0x2c8] sm:$0xf]
    %v224 = vld [vmem:[%s1 + $0x2cc] sm:$0xf]
    %v225 = vld [vmem:[%s1 + $0x2d0] sm:$0xf]
    %v226 = vld [vmem:[%s1 + $0x2d4] sm:$0xf]
    %v227 = vld [vmem:[%s1 + $0x2d8] sm:$0xf]
    %v228 = vld [vmem:[%s1 + $0x2dc] sm:$0xf]
    %v229 = vld [vmem:[%s1 + $0x2e0] sm:$0xf]
    %v230 = vld [vmem:[%s1 + $0x2e4] sm:$0xf]
    %v231 = vld [vmem:[%s1 + $0x2e8] sm:$0xf]
    %v232 = vld [vmem:[%s1 + $0x2ec] sm:$0xf]
    %v233 = vld [vmem:[%s1 + $0x2f0] sm:$0xf]
    %v234 = vld [vmem:[%s1 + $0x2f4] sm:$0xf]
    %v235 = vld [vmem:[%s1 + $0x2f8] sm:$0xf]
    %v236 = vld [vmem:[%s1 + $0x2fc] sm:$0xf]
    %v237 = vld [vmem:[%s1 + $0x300] sm:$0xf]
    %v238 = vld [vmem:[%s1 + $0x304] sm:$0xf]
    %v239 = vld [vmem:[%s1 + $0x308] sm:$0xf]
    %v240 = vld [vmem:[%s1 + $0x30c] sm:$0xf]
    %v241 = vld [vmem:[%s1 + $0x310] sm:$0xf]
    %v242 = vld [vmem:[%s1 + $0x314] sm:$0xf]
    %v243 = vld [vmem:[%s1 + $0x318] sm:$0xf]
    %v244 = vld [vmem:[%s1 + $0x31c] sm:$0xf]
    %v245 = vld [vmem:[%s1 + $0x320] sm:$0xf]
    %v246 = vld [vmem:[%s1 + $0x324] sm:$0xf]
    %v247 = vld [vmem:[%s1 + $0x328] sm:$0xf]
    %v248 = vld [vmem:[%s1 + $0x32c] sm:$0xf]
    %v249 = vld [vmem:[%s1 + $0x330] sm:$0xf]
    %v250 = vld [vmem:[%s1 + $0x334] sm:$0xf]
    %v251 = vld [vmem:[%s1 + $0x338] sm:$0xf]
    %v252 = vld [vmem:[%s1 + $0x33c] sm:$0xf]
    %v253 = vld [vmem:[%s1 + $0x340] sm:$0xf]
    %v254 = vld [vmem:[%s1 + $0x344] sm:$0xf]
    %v255 = vld [vmem:[%s1 + $0x348] sm:$0xf]
    %v256 = vld [vmem:[%s1 + $0x34c] sm:$0xf]
    %v257 = vld [vmem:[%s1 + $0x350] sm:$0xf]
    %v258 = vld [vmem:[%s1 + $0x354] sm:$0xf]
    %v259 = vld [vmem:[%s1 + $0x358] sm:$0xf]
    %v260 = vld [vmem:[%s1 + $0x35c] sm:$0xf]
    %v261 = vld [vmem:[%s1 + $0x360] sm:$0xf]
    %v262 = vld [vmem:[%s1 + $0x364] sm:$0xf]
    %v263 = vld [vmem:[%s1 + $0x368] sm:$0xf]
    %v264 = vld [vmem:[%s1 + $0x36c] sm:$0xf]
    %v265 = vld [vmem:[%s1 + $0x370] sm:$0xf]
    %v266 = vld [vmem:[%s1 + $0x374] sm:$0xf]
    %v267 = vld [vmem:[%s1 + $0x378] sm:$0xf]
    %v268 = vld [vmem:[%s1 + $0x37c] sm:$0xf]
    %v269 = vld [vmem:[%s1 + $0x380] sm:$0xf]
    %v270 = vld [vmem:[%s1 + $0x384] sm:$0xf]
    %v271 = vld [vmem:[%s1 + $0x388] sm:$0xf]
    %v272 = vld [vmem:[%s1 + $0x38c] sm:$0xf]
    %v273 = vld [vmem:[%s1 + $0x390] sm:$0xf]
    %v274 = vld [vmem:[%s1 + $0x394] sm:$0xf]
    %v275 = vld [vmem:[%s1 + $0x398] sm:$0xf]
    %v276 = vld [vmem:[%s1 + $0x39c] sm:$0xf]
    %v277 = vld [vmem:[%s1 + $0x3a0] sm:$0xf]
    %v278 = vld [vmem:[%s1 + $0x3a4] sm:$0xf]
    %v279 = vld [vmem:[%s1 + $0x3a8] sm:$0xf]
    %v280 = vld [vmem:[%s1 + $0x3ac] sm:$0xf]
    %v281 = vld [vmem:[%s1 + $0x3b0] sm:$0xf]
    %v282 = vld [vmem:[%s1 + $0x3b4] sm:$0xf]
    %v283 = vld [vmem:[%s1 + $0x3b8] sm:$0xf]
    %v284 = vld [vmem:[%s1 + $0x3bc] sm:$0xf]
    %v285 = vld [vmem:[%s1 + $0x3c0] sm:$0xf]
    %v286 = vld [vmem:[%s1 + $0x3c4] sm:$0xf]
    %v287 = vld [vmem:[%s1 + $0x3c8] sm:$0xf]
    %v288 = vld [vmem:[%s1 + $0x3cc] sm:$0xf]
    %v289 = vld [vmem:[%s1 + $0x3d0] sm:$0xf]
    %v290 = vld [vmem:[%s1 + $0x3d4] sm:$0xf]
    %v291 = vld [vmem:[%s1 + $0x3d8] sm:$0xf]
    %v292 = vld [vmem:[%s1 + $0x3dc] sm:$0xf]
    %v293 = vld [vmem:[%s1 + $0x3e0] sm:$0xf]
    %v294 = vld [vmem:[%s1 + $0x3e4] sm:$0xf]
    %v295 = vld [vmem:[%s1 + $0x3e8] sm:$0xf]
    %v296 = vld [vmem:[%s1 + $0x3ec] sm:$0xf]
    %v297 = vld [vmem:[%s1 + $0x3f0] sm:$0xf]
    %v298 = vld [vmem:[%s1 + $0x3f4] sm:$0xf]
    %v299 = vld [vmem:[%s1 + $0x3f8] sm:$0xf]
    %v300 = vld [vmem:[%s1 + $0x3fc] sm:$0xf]
    %v301 = vld [vmem:[%s1 + $0x400] sm:$0xf]
    %v302 = vld [vmem:[%s1 + $0x404] sm:$0xf]
    %v303 = vld [vmem:[%s1 + $0x408] sm:$0xf]
    %v304 = vld [vmem:[%s1 + $0x40c] sm:$0xf]
    %v305 = vld [vmem:[%s1 + $0x410] sm:$0xf]
    %v306 = vld [vmem:[%s1 + $0x414] sm:$0xf]
    %v307 = vld [vmem:[%s1 + $0x418] sm:$0xf]
    %v308 = vld [vmem:[%s1 + $0x41c] sm:$0xf]
    %v309 = vld [vmem:[%s1 + $0x420] sm:$0xf]
    %v310 = vld [vmem:[%s1 + $0x424] sm:$0xf]
    %v311 = vld [vmem:[%s1 + $0x428] sm:$0xf]
    %v312 = vld [vmem:[%s1 + $0x42c] sm:$0xf]
    %v313 = vld [vmem:[%s1 + $0x430] sm:$0xf]
    %v314 = vld [vmem:[%s1 + $0x434] sm:$0xf]
    %v315 = vld [vmem:[%s1 + $0x438] sm:$0xf]
    %v316 = vld [vmem:[%s1 + $0x43c] sm:$0xf]
    %v317 = vld [vmem:[%s1 + $0x440] sm:$0xf]
    %v318 = vld [vmem:[%s1 + $0x444] sm:$0xf]
    %v319 = vld [vmem:[%s1 + $0x448] sm:$0xf]
    %v320 = vld [vmem:[%s1 + $0x44c] sm:$0xf]
    %v321 = vld [vmem:[%s1 + $0x450] sm:$0xf]
    %v322 = vld [vmem:[%s1 + $0x454] sm:$0xf]
    %v323 = vld [vmem:[%s1 + $0x458] sm:$0xf]
    %v324 = vld [vmem:[%s1 + $0x45c] sm:$0xf]
    %v325 = vld [vmem:[%s1 + $0x460] sm:$0xf]
    %v326 = vld [vmem:[%s1 + $0x464] sm:$0xf]
    %v327 = vld [vmem:[%s1 + $0x468] sm:$0xf]
    %v328 = vld [vmem:[%s1 + $0x46c] sm:$0xf]
    %v329 = vld [vmem:[%s1 + $0x470] sm:$0xf]
    %v330 = vld [vmem:[%s1 + $0x474] sm:$0xf]
    %v331 = vld [vmem:[%s1 + $0x478] sm:$0xf]
    %v332 = vld [vmem:[%s1 + $0x47c] sm:$0xf]
    %v333 = vld [vmem:[%s1 + $0x480] sm:$0xf]
    %v334 = vld [vmem:[%s1 + $0x484] sm:$0xf]
    %v335 = vld [vmem:[%s1 + $0x488] sm:$0xf]
    %v336 = vld [vmem:[%s1 + $0x48c] sm:$0xf]
    %v337 = vld [vmem:[%s1 + $0x490] sm:$0xf]
    %v338 = vld [vmem:[%s1 + $0x494] sm:$0xf]
    %v339 = vld [vmem:[%s1 + $0x498] sm:$0xf]
    %v340 = vld [vmem:[%s1 + $0x49c] sm:$0xf]
    %v341 = vld [vmem:[%s1 + $0x4a0] sm:$0xf]
    %v342 = vld [vmem:[%s1 + $0x4a4] sm:$0xf]
    %v343 = vld [vmem:[%s1 + $0x4a8] sm:$0xf]
    %v344 = vld [vmem:[%s1 + $0x4ac] sm:$0xf]
    %v345 = vld [vmem:[%s1 + $0x4b0] sm:$0xf]
    %v346 = vld [vmem:[%s1 + $0x4b4] sm:$0xf]
    %v347 = vld [vmem:[%s1 + $0x4b8] sm:$0xf]
    %v348 = vld [vmem:[%s1 + $0x4bc] sm:$0xf]
    %v349 = vld [vmem:[%s1 + $0x4c0] sm:$0xf]
    %v350 = vld [vmem:[%s1 + $0x4c4] sm:$0xf]
    %v351 = vld [vmem:[%s1 + $0x4c8] sm:$0xf]
    %v352 = vld [vmem:[%s1 + $0x4cc] sm:$0xf]
    %v353 = vld [vmem:[%s1 + $0x4d0] sm:$0xf]
    %v354 = vld [vmem:[%s1 + $0x4d4] sm:$0xf]
    %v355 = vld [vmem:[%s1 + $0x4d8] sm:$0xf]
    %v356 = vld [vmem:[%s1 + $0x4dc] sm:$0xf]
    %v357 = vld [vmem:[%s1 + $0x4e0] sm:$0xf]
    %v358 = vld [vmem:[%s1 + $0x4e4] sm:$0xf]
    %v359 = vld [vmem:[%s1 + $0x4e8] sm:$0xf]
    %v360 = vld [vmem:[%s1 + $0x4ec] sm:$0xf]
    %v361 = vld [vmem:[%s1 + $0x4f0] sm:$0xf]
    %v362 = vld [vmem:[%s1 + $0x4f4] sm:$0xf]
    %v363 = vld [vmem:[%s1 + $0x4f8] sm:$0xf]
    %v364 = vld [vmem:[%s1 + $0x4fc] sm:$0xf]
    %v365 = vld [vmem:[%s1 + $0x500] sm:$0xf]
    %v366 = vld [vmem:[%s1 + $0x504] sm:$0xf]
    %v367 = vld [vmem:[%s1 + $0x508] sm:$0xf]
    %v368 = vld [vmem:[%s1 + $0x50c] sm:$0xf]
    %v369 = vld [vmem:[%s1 + $0x510] sm:$0xf]
    %v370 = vld [vmem:[%s1 + $0x514] sm:$0xf]
    %v371 = vld [vmem:[%s1 + $0x518] sm:$0xf]
    %v372 = vld [vmem:[%s1 + $0x51c] sm:$0xf]
    %v373 = vld [vmem:[%s1 + $0x520] sm:$0xf]
    %v374 = vld [vmem:[%s1 + $0x524] sm:$0xf]
    %v375 = vld [vmem:[%s1 + $0x528] sm:$0xf]
    %v376 = vld [vmem:[%s1 + $0x52c] sm:$0xf]
    %v377 = vld [vmem:[%s1 + $0x530] sm:$0xf]
    %v378 = vld [vmem:[%s1 + $0x534] sm:$0xf]
    %v379 = vld [vmem:[%s1 + $0x538] sm:$0xf]
    %v380 = vld [vmem:[%s1 + $0x53c] sm:$0xf]
    %v381 = vld [vmem:[%s1 + $0x540] sm:$0xf]
    %v382 = vld [vmem:[%s1 + $0x544] sm:$0xf]
    %v383 = vld [vmem:[%s1 + $0x548] sm:$0xf]
    %v384 = vld [vmem:[%s1 + $0x54c] sm:$0xf]
    %v385 = vld [vmem:[%s1 + $0x550] sm:$0xf]
    %v386 = vld [vmem:[%s1 + $0x554] sm:$0xf]
    %v387 = vld [vmem:[%s1 + $0x558] sm:$0xf]
    %v388 = vld [vmem:[%s1 + $0x55c] sm:$0xf]
    %v389 = vld [vmem:[%s1 + $0x560] sm:$0xf]
    %v390 = vld [vmem:[%s1 + $0x564] sm:$0xf]
    %v391 = vld [vmem:[%s1 + $0x568] sm:$0xf]
    %v392 = vld [vmem:[%s1 + $0x56c] sm:$0xf]
    %v393 = vld [vmem:[%s1 + $0x570] sm:$0xf]
    %v394 = vld [vmem:[%s1 + $0x574] sm:$0xf]
    %v395 = vld [vmem:[%s1 + $0x578] sm:$0xf]
    %v396 = vld [vmem:[%s1 + $0x57c] sm:$0xf]
    %v397 = vld [vmem:[%s1 + $0x580] sm:$0xf]
    %v398 = vld [vmem:[%s1 + $0x584] sm:$0xf]
    %v399 = vld [vmem:[%s1 + $0x588] sm:$0xf]
    %v400 = vld [vmem:[%s1 + $0x58c] sm:$0xf]
    %v401 = vld [vmem:[%s1 + $0x590] sm:$0xf]
    %v402 = vld [vmem:[%s1 + $0x594] sm:$0xf]
    %v403 = vld [vmem:[%s1 + $0x598] sm:$0xf]
    %v404 = vld [vmem:[%s1 + $0x59c] sm:$0xf]
    %v405 = vld [vmem:[%s1 + $0x5a0] sm:$0xf]
    %v406 = vld [vmem:[%s1 + $0x5a4] sm:$0xf]
    %v407 = vld [vmem:[%s1 + $0x5a8] sm:$0xf]
    %v408 = vld [vmem:[%s1 + $0x5ac] sm:$0xf]
    %v409 = vld [vmem:[%s1 + $0x5b0] sm:$0xf]
    %v410 = vld [vmem:[%s1 + $0x5b4] sm:$0xf]
    %v411 = vld [vmem:[%s1 + $0x5b8] sm:$0xf]
    %v412 = vld [vmem:[%s1 + $0x5bc] sm:$0xf]
    %v413 = vld [vmem:[%s1 + $0x5c0] sm:$0xf]
    %v414 = vld [vmem:[%s1 + $0x5c4] sm:$0xf]
    %v415 = vld [vmem:[%s1 + $0x5c8] sm:$0xf]
    %v416 = vld [vmem:[%s1 + $0x5cc] sm:$0xf]
    %v417 = vld [vmem:[%s1 + $0x5d0] sm:$0xf]
    %v418 = vld [vmem:[%s1 + $0x5d4] sm:$0xf]
    %v419 = vld [vmem:[%s1 + $0x5d8] sm:$0xf]
    %v420 = vld [vmem:[%s1 + $0x5dc] sm:$0xf]
    %v421 = vld [vmem:[%s1 + $0x5e0] sm:$0xf]
    %v422 = vld [vmem:[%s1 + $0x5e4] sm:$0xf]
    %v423 = vld [vmem:[%s1 + $0x5e8] sm:$0xf]
    %v424 = vld [vmem:[%s1 + $0x5ec] sm:$0xf]
    %v425 = vld [vmem:[%s1 + $0x5f0] sm:$0xf]
    %v426 = vld [vmem:[%s1 + $0x5f4] sm:$0xf]
    %v427 = vld [vmem:[%s1 + $0x5f8] sm:$0xf]
    %v428 = vld [vmem:[%s1 + $0x5fc] sm:$0xf]
    %v429 = vld [vmem:[%s1 + $0x600] sm:$0xf]
    %v430 = vld [vmem:[%s1 + $0x604] sm:$0xf]
    %v431 = vld [vmem:[%s1 + $0x608] sm:$0xf]
    %v432 = vld [vmem:[%s1 + $0x60c] sm:$0xf]
    %v433 = vld [vmem:[%s1 + $0x610] sm:$0xf]
    %v434 = vld [vmem:[%s1 + $0x614] sm:$0xf]
    %v435 = vld [vmem:[%s1 + $0x618] sm:$0xf]
    %v436 = vld [vmem:[%s1 + $0x61c] sm:$0xf]
    %v437 = vld [vmem:[%s1 + $0x620] sm:$0xf]
    %v438 = vld [vmem:[%s1 + $0x624] sm:$0xf]
    %v439 = vld [vmem:[%s1 + $0x628] sm:$0xf]
    %v440 = vld [vmem:[%s1 + $0x62c] sm:$0xf]
    %v441 = vld [vmem:[%s1 + $0x630] sm:$0xf]
    %v442 = vld [vmem:[%s1 + $0x634] sm:$0xf]
    %v443 = vld [vmem:[%s1 + $0x638] sm:$0xf]
    %v444 = vld [vmem:[%s1 + $0x63c] sm:$0xf]
    %v445 = vld [vmem:[%s1 + $0x640] sm:$0xf]
    %v446 = vld [vmem:[%s1 + $0x644] sm:$0xf]
    %v447 = vld [vmem:[%s1 + $0x648] sm:$0xf]
    %v448 = vld [vmem:[%s1 + $0x64c] sm:$0xf]
    %v449 = vld [vmem:[%s1 + $0x650] sm:$0xf]
    %v450 = vld [vmem:[%s1 + $0x654] sm:$0xf]
    %v451 = vld [vmem:[%s1 + $0x658] sm:$0xf]
    %v452 = vld [vmem:[%s1 + $0x65c] sm:$0xf]
    %v453 = vld [vmem:[%s1 + $0x660] sm:$0xf]
    %v454 = vld [vmem:[%s1 + $0x664] sm:$0xf]
    %v455 = vld [vmem:[%s1 + $0x668] sm:$0xf]
    %v456 = vld [vmem:[%s1 + $0x66c] sm:$0xf]
    %v457 = vld [vmem:[%s1 + $0x670] sm:$0xf]
    %v458 = vld [vmem:[%s1 + $0x674] sm:$0xf]
    %v459 = vld [vmem:[%s1 + $0x678] sm:$0xf]
    %v460 = vld [vmem:[%s1 + $0x67c] sm:$0xf]
    %v461 = vld [vmem:[%s1 + $0x680] sm:$0xf]
    %v462 = vld [vmem:[%s1 + $0x684] sm:$0xf]
    %v463 = vld [vmem:[%s1 + $0x688] sm:$0xf]
    %v464 = vld [vmem:[%s1 + $0x68c] sm:$0xf]
    %v465 = vld [vmem:[%s1 + $0x690] sm:$0xf]
    %v466 = vld [vmem:[%s1 + $0x694] sm:$0xf]
    %v467 = vld [vmem:[%s1 + $0x698] sm:$0xf]
    %v468 = vld [vmem:[%s1 + $0x69c] sm:$0xf]
    %v469 = vld [vmem:[%s1 + $0x6a0] sm:$0xf]
    %v470 = vld [vmem:[%s1 + $0x6a4] sm:$0xf]
    %v471 = vld [vmem:[%s1 + $0x6a8] sm:$0xf]
    %v472 = vld [vmem:[%s1 + $0x6ac] sm:$0xf]
    %v473 = vld [vmem:[%s1 + $0x6b0] sm:$0xf]
    %v474 = vld [vmem:[%s1 + $0x6b4] sm:$0xf]
    %v475 = vld [vmem:[%s1 + $0x6b8] sm:$0xf]
    %v476 = vld [vmem:[%s1 + $0x6bc] sm:$0xf]
    %v477 = vld [vmem:[%s1 + $0x6c0] sm:$0xf]
    %v478 = vld [vmem:[%s1 + $0x6c4] sm:$0xf]
    %v479 = vld [vmem:[%s1 + $0x6c8] sm:$0xf]
    %v480 = vld [vmem:[%s1 + $0x6cc] sm:$0xf]
    %v481 = vld [vmem:[%s1 + $0x6d0] sm:$0xf]
    %v482 = vld [vmem:[%s1 + $0x6d4] sm:$0xf]
    %v483 = vld [vmem:[%s1 + $0x6d8] sm:$0xf]
    %v484 = vld [vmem:[%s1 + $0x6dc] sm:$0xf]
    %v485 = vld [vmem:[%s1 + $0x6e0] sm:$0xf]
    %v486 = vld [vmem:[%s1 + $0x6e4] sm:$0xf]
    %v487 = vld [vmem:[%s1 + $0x6e8] sm:$0xf]
    %v488 = vld [vmem:[%s1 + $0x6ec] sm:$0xf]
    %v489 = vld [vmem:[%s1 + $0x6f0] sm:$0xf]
    %v490 = vld [vmem:[%s1 + $0x6f4] sm:$0xf]
    %v491 = vld [vmem:[%s1 + $0x6f8] sm:$0xf]
    %v492 = vld [vmem:[%s1 + $0x6fc] sm:$0xf]
    %v493 = vld [vmem:[%s1 + $0x700] sm:$0xf]
    %v494 = vld [vmem:[%s1 + $0x704] sm:$0xf]
    %v495 = vld [vmem:[%s1 + $0x708] sm:$0xf]
    %v496 = vld [vmem:[%s1 + $0x70c] sm:$0xf]
    %v497 = vld [vmem:[%s1 + $0x710] sm:$0xf]
    %v498 = vld [vmem:[%s1 + $0x714] sm:$0xf]
    %v499 = vld [vmem:[%s1 + $0x718] sm:$0xf]
    %v500 = vld [vmem:[%s1 + $0x71c] sm:$0xf]
    %v501 = vld [vmem:[%s1 + $0x720] sm:$0xf]
    %v502 = vld [vmem:[%s1 + $0x724] sm:$0xf]
    %v503 = vld [vmem:[%s1 + $0x728] sm:$0xf]
    %v504 = vld [vmem:[%s1 + $0x72c] sm:$0xf]
    %v505 = vld [vmem:[%s1 + $0x730] sm:$0xf]
    %v506 = vld [vmem:[%s1 + $0x734] sm:$0xf]
    %v507 = vld [vmem:[%s1 + $0x738] sm:$0xf]
    %v508 = vld [vmem:[%s1 + $0x73c] sm:$0xf]
    %v509 = vld [vmem:[%s1 + $0x740] sm:$0xf]
    %v510 = vld [vmem:[%s1 + $0x744] sm:$0xf]
    %v511 = vld [vmem:[%s1 + $0x748] sm:$0xf]
    %v512 = vld [vmem:[%s1 + $0x74c] sm:$0xf]
    %v513 = vld [vmem:[%s1 + $0x750] sm:$0xf]
    %v514 = vld [vmem:[%s1 + $0x754] sm:$0xf]
    %v515 = vld [vmem:[%s1 + $0x758] sm:$0xf]
    %v516 = vld [vmem:[%s1 + $0x75c] sm:$0xf]
    %v517 = vld [vmem:[%s1 + $0x760] sm:$0xf]
    %v518 = vld [vmem:[%s1 + $0x764] sm:$0xf]
    %v519 = vld [vmem:[%s1 + $0x768] sm:$0xf]
    %v520 = vld [vmem:[%s1 + $0x76c] sm:$0xf]
    %v521 = vld [vmem:[%s1 + $0x770] sm:$0xf]
    %v522 = vld [vmem:[%s1 + $0x774] sm:$0xf]
    %v523 = vld [vmem:[%s1 + $0x778] sm:$0xf]
    %v524 = vld [vmem:[%s1 + $0x77c] sm:$0xf]
    %v525 = vld [vmem:[%s1 + $0x780] sm:$0xf]
    %v526 = vld [vmem:[%s1 + $0x784] sm:$0xf]
    %v527 = vld [vmem:[%s1 + $0x788] sm:$0xf]
    %v528 = vld [vmem:[%s1 + $0x78c] sm:$0xf]
    %v529 = vld [vmem:[%s1 + $0x790] sm:$0xf]
    %v530 = vld [vmem:[%s1 + $0x794] sm:$0xf]
    %v531 = vld [vmem:[%s1 + $0x798] sm:$0xf]
    %v532 = vld [vmem:[%s1 + $0x79c] sm:$0xf]
    %v533 = vld [vmem:[%s1 + $0x7a0] sm:$0xf]
    %v534 = vld [vmem:[%s1 + $0x7a4] sm:$0xf]
    %v535 = vld [vmem:[%s1 + $0x7a8] sm:$0xf]
    %v536 = vld [vmem:[%s1 + $0x7ac] sm:$0xf]
    %v537 = vld [vmem:[%s1 + $0x7b0] sm:$0xf]
    %v538 = vld [vmem:[%s1 + $0x7b4] sm:$0xf]
    %v539 = vld [vmem:[%s1 + $0x7b8] sm:$0xf]
    %v540 = vld [vmem:[%s1 + $0x7bc] sm:$0xf]
    %v541 = vld [vmem:[%s1 + $0x7c0] sm:$0xf]
    %v542 = vld [vmem:[%s1 + $0x7c4] sm:$0xf]
    %v543 = vld [vmem:[%s1 + $0x7c8] sm:$0xf]
    %v544 = vld [vmem:[%s1 + $0x7cc] sm:$0xf]
    %v545 = vld [vmem:[%s1 + $0x7d0] sm:$0xf]
    %v546 = vld [vmem:[%s1 + $0x7d4] sm:$0xf]
    %v547 = vld [vmem:[%s1 + $0x7d8] sm:$0xf]
    %v548 = vld [vmem:[%s1 + $0x7dc] sm:$0xf]
    %v549 = vld [vmem:[%s1 + $0x7e0] sm:$0xf]
    %v550 = vld [vmem:[%s1 + $0x7e4] sm:$0xf]
    %v551 = vld [vmem:[%s1 + $0x7e8] sm:$0xf]
    %v552 = vld [vmem:[%s1 + $0x7ec] sm:$0xf]
    %v553 = vld [vmem:[%s1 + $0x7f0] sm:$0xf]
    %v554 = vld [vmem:[%s1 + $0x7f4] sm:$0xf]
    %v555 = vld [vmem:[%s1 + $0x7f8] sm:$0xf]
    %v556 = vld [vmem:[%s1 + $0x7fc] sm:$0xf]
    %v557 = vld [vmem:[%s1 + $0x800] sm:$0xf]
    %v558 = vld [vmem:[%s1 + $0x804] sm:$0xf]
    %v559 = vld [vmem:[%s1 + $0x808] sm:$0xf]
    %v560 = vld [vmem:[%s1 + $0x80c] sm:$0xf]
    %v561 = vld [vmem:[%s1 + $0x810] sm:$0xf]
    %v562 = vld [vmem:[%s1 + $0x814] sm:$0xf]
    %v563 = vld [vmem:[%s1 + $0x818] sm:$0xf]
    %v564 = vld [vmem:[%s1 + $0x81c] sm:$0xf]
    %v565 = vld [vmem:[%s1 + $0x820] sm:$0xf]
    %v566 = vld [vmem:[%s1 + $0x824] sm:$0xf]
    %v567 = vld [vmem:[%s1 + $0x828] sm:$0xf]
    %v568 = vld [vmem:[%s1 + $0x82c] sm:$0xf]
    %v569 = vld [vmem:[%s1 + $0x830] sm:$0xf]
    %v570 = vld [vmem:[%s1 + $0x834] sm:$0xf]
    %v571 = vld [vmem:[%s1 + $0x838] sm:$0xf]
    %v572 = vld [vmem:[%s1 + $0x83c] sm:$0xf]
    %v573 = vld [vmem:[%s1 + $0x840] sm:$0xf]
    %v574 = vld [vmem:[%s1 + $0x844] sm:$0xf]
    %v575 = vld [vmem:[%s1 + $0x848] sm:$0xf]
    %v576 = vld [vmem:[%s1 + $0x84c] sm:$0xf]
    %v577 = vld [vmem:[%s1 + $0x850] sm:$0xf]
    %v578 = vld [vmem:[%s1 + $0x854] sm:$0xf]
    %v579 = vld [vmem:[%s1 + $0x858] sm:$0xf]
    %v580 = vld [vmem:[%s1 + $0x85c] sm:$0xf]
    %v581 = vld [vmem:[%s1 + $0x860] sm:$0xf]
    %v582 = vld [vmem:[%s1 + $0x864] sm:$0xf]
    %v583 = vld [vmem:[%s1 + $0x868] sm:$0xf]
    %v584 = vld [vmem:[%s1 + $0x86c] sm:$0xf]
    %v585 = vld [vmem:[%s1 + $0x870] sm:$0xf]
    %v586 = vld [vmem:[%s1 + $0x874] sm:$0xf]
    %v587 = vld [vmem:[%s1 + $0x878] sm:$0xf]
    %v588 = vld [vmem:[%s1 + $0x87c] sm:$0xf]
    %v589 = vld [vmem:[%s1 + $0x880] sm:$0xf]
    %v590 = vld [vmem:[%s1 + $0x884] sm:$0xf]
    %v591 = vld [vmem:[%s1 + $0x888] sm:$0xf]
    %v592 = vld [vmem:[%s1 + $0x88c] sm:$0xf]
    %v593 = vld [vmem:[%s1 + $0x890] sm:$0xf]
    %v594 = vld [vmem:[%s1 + $0x894] sm:$0xf]
    %v595 = vld [vmem:[%s1 + $0x898] sm:$0xf]
    %v596 = vld [vmem:[%s1 + $0x89c] sm:$0xf]
    %v597 = vld [vmem:[%s1 + $0x8a0] sm:$0xf]
    %v598 = vld [vmem:[%s1 + $0x8a4] sm:$0xf]
    %v599 = vld [vmem:[%s1 + $0x8a8] sm:$0xf]
    %v600 = vld [vmem:[%s1 + $0x8ac] sm:$0xf]
    %v601 = vld [vmem:[%s1 + $0x8b0] sm:$0xf]
    %v602 = vld [vmem:[%s1 + $0x8b4] sm:$0xf]
    %v603 = vld [vmem:[%s1 + $0x8b8] sm:$0xf]
    %v604 = vld [vmem:[%s1 + $0x8bc] sm:$0xf]
    %v605 = vld [vmem:[%s1 + $0x8c0] sm:$0xf]
    %v606 = vld [vmem:[%s1 + $0x8c4] sm:$0xf]
    %v607 = vld [vmem:[%s1 + $0x8c8] sm:$0xf]
    %v608 = vld [vmem:[%s1 + $0x8cc] sm:$0xf]
    %v609 = vld [vmem:[%s1 + $0x8d0] sm:$0xf]
    %v610 = vld [vmem:[%s1 + $0x8d4] sm:$0xf]
    %v611 = vld [vmem:[%s1 + $0x8d8] sm:$0xf]
    %v612 = vld [vmem:[%s1 + $0x8dc] sm:$0xf]
    %v613 = vld [vmem:[%s1 + $0x8e0] sm:$0xf]
    %v614 = vld [vmem:[%s1 + $0x8e4] sm:$0xf]
    %v615 = vld [vmem:[%s1 + $0x8e8] sm:$0xf]
    %v616 = vld [vmem:[%s1 + $0x8ec] sm:$0xf]
    %v617 = vld [vmem:[%s1 + $0x8f0] sm:$0xf]
    %v618 = vld [vmem:[%s1 + $0x8f4] sm:$0xf]
    %v619 = vld [vmem:[%s1 + $0x8f8] sm:$0xf]
    %v620 = vld [vmem:[%s1 + $0x8fc] sm:$0xf]
    %v621 = vld [vmem:[%s1 + $0x900] sm:$0xf]
    %v622 = vld [vmem:[%s1 + $0x904] sm:$0xf]
    %v623 = vld [vmem:[%s1 + $0x908] sm:$0xf]
    %v624 = vld [vmem:[%s1 + $0x90c] sm:$0xf]
    %v625 = vld [vmem:[%s1 + $0x910] sm:$0xf]
    %v626 = vld [vmem:[%s1 + $0x914] sm:$0xf]
    %v627 = vld [vmem:[%s1 + $0x918] sm:$0xf]
    %v628 = vld [vmem:[%s1 + $0x91c] sm:$0xf]
    %v629 = vld [vmem:[%s1 + $0x920] sm:$0xf]
    %v630 = vld [vmem:[%s1 + $0x924] sm:$0xf]
    %v631 = vld [vmem:[%s1 + $0x928] sm:$0xf]
    %v632 = vld [vmem:[%s1 + $0x92c] sm:$0xf]
    %v633 = vld [vmem:[%s1 + $0x930] sm:$0xf]
    %v634 = vld [vmem:[%s1 + $0x934] sm:$0xf]
    %v635 = vld [vmem:[%s1 + $0x938] sm:$0xf]
    %v636 = vld [vmem:[%s1 + $0x93c] sm:$0xf]
    %v637 = vld [vmem:[%s1 + $0x940] sm:$0xf]
    %v638 = vld [vmem:[%s1 + $0x944] sm:$0xf]
    %v639 = vld [vmem:[%s1 + $0x948] sm:$0xf]
    %v640 = vld [vmem:[%s1 + $0x94c] sm:$0xf]
    %v641 = vld [vmem:[%s1 + $0x950] sm:$0xf]
    %v642 = vld [vmem:[%s1 + $0x954] sm:$0xf]
    %v643 = vld [vmem:[%s1 + $0x958] sm:$0xf]
    %v644 = vld [vmem:[%s1 + $0x95c] sm:$0xf]
    %v645 = vld [vmem:[%s1 + $0x960] sm:$0xf]
    %v646 = vld [vmem:[%s1 + $0x964] sm:$0xf]
    %v647 = vld [vmem:[%s1 + $0x968] sm:$0xf]
    %v648 = vld [vmem:[%s1 + $0x96c] sm:$0xf]
    %v649 = vld [vmem:[%s1 + $0x970] sm:$0xf]
    %v650 = vld [vmem:[%s1 + $0x974] sm:$0xf]
    %v651 = vld [vmem:[%s1 + $0x978] sm:$0xf]
    %v652 = vld [vmem:[%s1 + $0x97c] sm:$0xf]
    %v653 = vld [vmem:[%s1 + $0x980] sm:$0xf]
    %v654 = vld [vmem:[%s1 + $0x984] sm:$0xf]
    %v655 = vld [vmem:[%s1 + $0x988] sm:$0xf]
    %v656 = vld [vmem:[%s1 + $0x98c] sm:$0xf]
    %v657 = vld [vmem:[%s1 + $0x990] sm:$0xf]
    %v658 = vld [vmem:[%s1 + $0x994] sm:$0xf]
    %v659 = vld [vmem:[%s1 + $0x998] sm:$0xf]
    %v660 = vld [vmem:[%s1 + $0x99c] sm:$0xf]
    %v661 = vld [vmem:[%s1 + $0x9a0] sm:$0xf]
    %v662 = vld [vmem:[%s1 + $0x9a4] sm:$0xf]
    %v663 = vld [vmem:[%s1 + $0x9a8] sm:$0xf]
    %v664 = vld [vmem:[%s1 + $0x9ac] sm:$0xf]
    %v665 = vld [vmem:[%s1 + $0x9b0] sm:$0xf]
    %v666 = vld [vmem:[%s1 + $0x9b4] sm:$0xf]
    %v667 = vld [vmem:[%s1 + $0x9b8] sm:$0xf]
    %v668 = vld [vmem:[%s1 + $0x9bc] sm:$0xf]
    %v669 = vld [vmem:[%s1 + $0x9c0] sm:$0xf]
    %v670 = vld [vmem:[%s1 + $0x9c4] sm:$0xf]
    %v671 = vld [vmem:[%s1 + $0x9c8] sm:$0xf]
    %v672 = vld [vmem:[%s1 + $0x9cc] sm:$0xf]
    %v673 = vld [vmem:[%s1 + $0x9d0] sm:$0xf]
    %v674 = vld [vmem:[%s1 + $0x9d4] sm:$0xf]
    %v675 = vld [vmem:[%s1 + $0x9d8] sm:$0xf]
    %v676 = vld [vmem:[%s1 + $0x9dc] sm:$0xf]
    %v677 = vld [vmem:[%s1 + $0x9e0] sm:$0xf]
    %v678 = vld [vmem:[%s1 + $0x9e4] sm:$0xf]
    %v679 = vld [vmem:[%s1 + $0x9e8] sm:$0xf]
    %v680 = vld [vmem:[%s1 + $0x9ec] sm:$0xf]
    %v681 = vld [vmem:[%s1 + $0x9f0] sm:$0xf]
    %v682 = vld [vmem:[%s1 + $0x9f4] sm:$0xf]
    %v683 = vld [vmem:[%s1 + $0x9f8] sm:$0xf]
    %v684 = vld [vmem:[%s1 + $0x9fc] sm:$0xf]
    %v685 = vld [vmem:[%s1 + $0xa00] sm:$0xf]
    %v686 = vld [vmem:[%s1 + $0xa04] sm:$0xf]
    %v687 = vld [vmem:[%s1 + $0xa08] sm:$0xf]
    %v688 = vld [vmem:[%s1 + $0xa0c] sm:$0xf]
    %v689 = vld [vmem:[%s1 + $0xa10] sm:$0xf]
    %v690 = vld [vmem:[%s1 + $0xa14] sm:$0xf]
    %v691 = vld [vmem:[%s1 + $0xa18] sm:$0xf]
    %v692 = vld [vmem:[%s1 + $0xa1c] sm:$0xf]
    %v693 = vld [vmem:[%s1 + $0xa20] sm:$0xf]
    %v694 = vld [vmem:[%s1 + $0xa24] sm:$0xf]
    %v695 = vld [vmem:[%s1 + $0xa28] sm:$0xf]
    %v696 = vld [vmem:[%s1 + $0xa2c] sm:$0xf]
    %v697 = vld [vmem:[%s1 + $0xa30] sm:$0xf]
    %v698 = vld [vmem:[%s1 + $0xa34] sm:$0xf]
    %v699 = vld [vmem:[%s1 + $0xa38] sm:$0xf]
    %v700 = vld [vmem:[%s1 + $0xa3c] sm:$0xf]
    %v701 = vld [vmem:[%s1 + $0xa40] sm:$0xf]
    %v702 = vld [vmem:[%s1 + $0xa44] sm:$0xf]
    %v703 = vld [vmem:[%s1 + $0xa48] sm:$0xf]
    %v704 = vld [vmem:[%s1 + $0xa4c] sm:$0xf]
    %v705 = vld [vmem:[%s1 + $0xa50] sm:$0xf]
    %v706 = vld [vmem:[%s1 + $0xa54] sm:$0xf]
    %v707 = vld [vmem:[%s1 + $0xa58] sm:$0xf]
    %v708 = vld [vmem:[%s1 + $0xa5c] sm:$0xf]
    %v709 = vld [vmem:[%s1 + $0xa60] sm:$0xf]
    %v710 = vld [vmem:[%s1 + $0xa64] sm:$0xf]
    %v711 = vld [vmem:[%s1 + $0xa68] sm:$0xf]
    %v712 = vld [vmem:[%s1 + $0xa6c] sm:$0xf]
    %v713 = vld [vmem:[%s1 + $0xa70] sm:$0xf]
    %v714 = vld [vmem:[%s1 + $0xa74] sm:$0xf]
    %v715 = vld [vmem:[%s1 + $0xa78] sm:$0xf]
    %v716 = vld [vmem:[%s1 + $0xa7c] sm:$0xf]
    %v717 = vld [vmem:[%s1 + $0xa80] sm:$0xf]
    %v718 = vld [vmem:[%s1 + $0xa84] sm:$0xf]
    %v719 = vld [vmem:[%s1 + $0xa88] sm:$0xf]
    %v720 = vld [vmem:[%s1 + $0xa8c] sm:$0xf]
    %v721 = vld [vmem:[%s1 + $0xa90] sm:$0xf]
    %v722 = vld [vmem:[%s1 + $0xa94] sm:$0xf]
    %v723 = vld [vmem:[%s1 + $0xa98] sm:$0xf]
    %v724 = vld [vmem:[%s1 + $0xa9c] sm:$0xf]
    %v725 = vld [vmem:[%s1 + $0xaa0] sm:$0xf]
    %v726 = vld [vmem:[%s1 + $0xaa4] sm:$0xf]
    %v727 = vld [vmem:[%s1 + $0xaa8] sm:$0xf]
    %v728 = vld [vmem:[%s1 + $0xaac] sm:$0xf]
    %v729 = vld [vmem:[%s1 + $0xab0] sm:$0xf]
    %v730 = vld [vmem:[%s1 + $0xab4] sm:$0xf]
    %v731 = vld [vmem:[%s1 + $0xab8] sm:$0xf]
    %v732 = vld [vmem:[%s1 + $0xabc] sm:$0xf]
    %v733 = vld [vmem:[%s1 + $0xac0] sm:$0xf]
    %v734 = vld [vmem:[%s1 + $0xac4] sm:$0xf]
    %v735 = vld [vmem:[%s1 + $0xac8] sm:$0xf]
    %v736 = vld [vmem:[%s1 + $0xacc] sm:$0xf]
    %v737 = vld [vmem:[%s1 + $0xad0] sm:$0xf]
    %v738 = vld [vmem:[%s1 + $0xad4] sm:$0xf]
    %v739 = vld [vmem:[%s1 + $0xad8] sm:$0xf]
    %v740 = vld [vmem:[%s1 + $0xadc] sm:$0xf]
    %v741 = vld [vmem:[%s1 + $0xae0] sm:$0xf]
    %v742 = vld [vmem:[%s1 + $0xae4] sm:$0xf]
    %v743 = vld [vmem:[%s1 + $0xae8] sm:$0xf]
    %v744 = vld [vmem:[%s1 + $0xaec] sm:$0xf]
    %v745 = vld [vmem:[%s1 + $0xaf0] sm:$0xf]
    %v746 = vld [vmem:[%s1 + $0xaf4] sm:$0xf]
    %v747 = vld [vmem:[%s1 + $0xaf8] sm:$0xf]
    %v748 = vld [vmem:[%s1 + $0xafc] sm:$0xf]
    %v749 = vld [vmem:[%s1 + $0xb00] sm:$0xf]
    %v750 = vld [vmem:[%s1 + $0xb04] sm:$0xf]
    %v751 = vld [vmem:[%s1 + $0xb08] sm:$0xf]
    %v752 = vld [vmem:[%s1 + $0xb0c] sm:$0xf]
    %v753 = vld [vmem:[%s1 + $0xb10] sm:$0xf]
    %v754 = vld [vmem:[%s1 + $0xb14] sm:$0xf]
    %v755 = vld [vmem:[%s1 + $0xb18] sm:$0xf]
    %v756 = vld [vmem:[%s1 + $0xb1c] sm:$0xf]
    %v757 = vld [vmem:[%s1 + $0xb20] sm:$0xf]
    %v758 = vld [vmem:[%s1 + $0xb24] sm:$0xf]
    %v759 = vld [vmem:[%s1 + $0xb28] sm:$0xf]
    %v760 = vld [vmem:[%s1 + $0xb2c] sm:$0xf]
    %v761 = vld [vmem:[%s1 + $0xb30] sm:$0xf]
    %v762 = vld [vmem:[%s1 + $0xb34] sm:$0xf]
    %v763 = vld [vmem:[%s1 + $0xb38] sm:$0xf]
    %v764 = vld [vmem:[%s1 + $0xb3c] sm:$0xf]
    %v765 = vld [vmem:[%s1 + $0xb40] sm:$0xf]
    %v766 = vld [vmem:[%s1 + $0xb44] sm:$0xf]
    %v767 = vld [vmem:[%s1 + $0xb48] sm:$0xf]
    %v768 = vld [vmem:[%s1 + $0xb4c] sm:$0xf]
    %v769 = vld [vmem:[%s1 + $0xb50] sm:$0xf]
    %v770 = vld [vmem:[%s1 + $0xb54] sm:$0xf]
    %v771 = vld [vmem:[%s1 + $0xb58] sm:$0xf]
    %v772 = vld [vmem:[%s1 + $0xb5c] sm:$0xf]
    %v773 = vld [vmem:[%s1 + $0xb60] sm:$0xf]
    %v774 = vld [vmem:[%s1 + $0xb64] sm:$0xf]
    %v775 = vld [vmem:[%s1 + $0xb68] sm:$0xf]
    %v776 = vld [vmem:[%s1 + $0xb6c] sm:$0xf]
    %v777 = vld [vmem:[%s1 + $0xb70] sm:$0xf]
    %v778 = vld [vmem:[%s1 + $0xb74] sm:$0xf]
    %v779 = vld [vmem:[%s1 + $0xb78] sm:$0xf]
    %v780 = vld [vmem:[%s1 + $0xb7c] sm:$0xf]
    %v781 = vld [vmem:[%s1 + $0xb80] sm:$0xf]
    %v782 = vld [vmem:[%s1 + $0xb84] sm:$0xf]
    %v783 = vld [vmem:[%s1 + $0xb88] sm:$0xf]
    %v784 = vld [vmem:[%s1 + $0xb8c] sm:$0xf]
    %v785 = vld [vmem:[%s1 + $0xb90] sm:$0xf]
    %v786 = vld [vmem:[%s1 + $0xb94] sm:$0xf]
    %v787 = vld [vmem:[%s1 + $0xb98] sm:$0xf]
    %v788 = vld [vmem:[%s1 + $0xb9c] sm:$0xf]
    %v789 = vld [vmem:[%s1 + $0xba0] sm:$0xf]
    %v790 = vld [vmem:[%s1 + $0xba4] sm:$0xf]
    %v791 = vld [vmem:[%s1 + $0xba8] sm:$0xf]
    %v792 = vld [vmem:[%s1 + $0xbac] sm:$0xf]
    %v793 = vld [vmem:[%s1 + $0xbb0] sm:$0xf]
    %v794 = vld [vmem:[%s1 + $0xbb4] sm:$0xf]
    %v795 = vld [vmem:[%s1 + $0xbb8] sm:$0xf]
    %v796 = vld [vmem:[%s1 + $0xbbc] sm:$0xf]
    %v797 = vld [vmem:[%s1 + $0xbc0] sm:$0xf]
    %v798 = vld [vmem:[%s1 + $0xbc4] sm:$0xf]
    %v799 = vld [vmem:[%s1 + $0xbc8] sm:$0xf]
    %v800 = vld [vmem:[%s1 + $0xbcc] sm:$0xf]
    %v801 = vld [vmem:[%s1 + $0xbd0] sm:$0xf]
    %v802 = vld [vmem:[%s1 + $0xbd4] sm:$0xf]
    %v803 = vld [vmem:[%s1 + $0xbd8] sm:$0xf]
    %v804 = vld [vmem:[%s1 + $0xbdc] sm:$0xf]
    %v805 = vld [vmem:[%s1 + $0xbe0] sm:$0xf]
    %v806 = vld [vmem:[%s1 + $0xbe4] sm:$0xf]
    %v807 = vld [vmem:[%s1 + $0xbe8] sm:$0xf]
    %v808 = vld [vmem:[%s1 + $0xbec] sm:$0xf]
    %v809 = vld [vmem:[%s1 + $0xbf0] sm:$0xf]
    %v810 = vld [vmem:[%s1 + $0xbf4] sm:$0xf]
    %v811 = vld [vmem:[%s1 + $0xbf8] sm:$0xf]
    %v812 = vld [vmem:[%s1 + $0xbfc] sm:$0xf]
    %v813 = vld [vmem:[%s1 + $0xc00] sm:$0xf]
    %v814 = vld [vmem:[%s1 + $0xc04] sm:$0xf]
    %v815 = vld [vmem:[%s1 + $0xc08] sm:$0xf]
    %v816 = vld [vmem:[%s1 + $0xc0c] sm:$0xf]
    %v817 = vld [vmem:[%s1 + $0xc10] sm:$0xf]
    %v818 = vld [vmem:[%s1 + $0xc14] sm:$0xf]
    %v819 = vld [vmem:[%s1 + $0xc18] sm:$0xf]
    %v820 = vld [vmem:[%s1 + $0xc1c] sm:$0xf]
    %v821 = vld [vmem:[%s1 + $0xc20] sm:$0xf]
    %v822 = vld [vmem:[%s1 + $0xc24] sm:$0xf]
    %v823 = vld [vmem:[%s1 + $0xc28] sm:$0xf]
    %v824 = vld [vmem:[%s1 + $0xc2c] sm:$0xf]
    %v825 = vld [vmem:[%s1 + $0xc30] sm:$0xf]
    %v826 = vld [vmem:[%s1 + $0xc34] sm:$0xf]
    %v827 = vld [vmem:[%s1 + $0xc38] sm:$0xf]
    %v828 = vld [vmem:[%s1 + $0xc3c] sm:$0xf]
    %v829 = vld [vmem:[%s1 + $0xc40] sm:$0xf]
    %v830 = vld [vmem:[%s1 + $0xc44] sm:$0xf]
    %v831 = vld [vmem:[%s1 + $0xc48] sm:$0xf]
    %v832 = vld [vmem:[%s1 + $0xc4c] sm:$0xf]
    %v833 = vld [vmem:[%s1 + $0xc50] sm:$0xf]
    %v834 = vld [vmem:[%s1 + $0xc54] sm:$0xf]
    %v835 = vld [vmem:[%s1 + $0xc58] sm:$0xf]
    %v836 = vld [vmem:[%s1 + $0xc5c] sm:$0xf]
    %v837 = vld [vmem:[%s1 + $0xc60] sm:$0xf]
    %v838 = vld [vmem:[%s1 + $0xc64] sm:$0xf]
    %v839 = vld [vmem:[%s1 + $0xc68] sm:$0xf]
    %v840 = vld [vmem:[%s1 + $0xc6c] sm:$0xf]
    %v841 = vld [vmem:[%s1 + $0xc70] sm:$0xf]
    %v842 = vld [vmem:[%s1 + $0xc74] sm:$0xf]
    %v843 = vld [vmem:[%s1 + $0xc78] sm:$0xf]
    %v844 = vld [vmem:[%s1 + $0xc7c] sm:$0xf]
    %v845 = vld [vmem:[%s1 + $0xc80] sm:$0xf]
    %v846 = vld [vmem:[%s1 + $0xc84] sm:$0xf]
    %v847 = vld [vmem:[%s1 + $0xc88] sm:$0xf]
    %v848 = vld [vmem:[%s1 + $0xc8c] sm:$0xf]
    %v849 = vld [vmem:[%s1 + $0xc90] sm:$0xf]
    %v850 = vld [vmem:[%s1 + $0xc94] sm:$0xf]
    %v851 = vld [vmem:[%s1 + $0xc98] sm:$0xf]
    %v852 = vld [vmem:[%s1 + $0xc9c] sm:$0xf]
    %v853 = vld [vmem:[%s1 + $0xca0] sm:$0xf]
    %v854 = vld [vmem:[%s1 + $0xca4] sm:$0xf]
    %v855 = vld [vmem:[%s1 + $0xca8] sm:$0xf]
    %v856 = vld [vmem:[%s1 + $0xcac] sm:$0xf]
    %v857 = vld [vmem:[%s1 + $0xcb0] sm:$0xf]
    %v858 = vld [vmem:[%s1 + $0xcb4] sm:$0xf]
    %v859 = vld [vmem:[%s1 + $0xcb8] sm:$0xf]
    %v860 = vld [vmem:[%s1 + $0xcbc] sm:$0xf]
    %v861 = vld [vmem:[%s1 + $0xcc0] sm:$0xf]
    %v862 = vld [vmem:[%s1 + $0xcc4] sm:$0xf]
    %v863 = vld [vmem:[%s1 + $0xcc8] sm:$0xf]
    %v864 = vld [vmem:[%s1 + $0xccc] sm:$0xf]
    %v865 = vld [vmem:[%s1 + $0xcd0] sm:$0xf]
    %v866 = vld [vmem:[%s1 + $0xcd4] sm:$0xf]
    %v867 = vld [vmem:[%s1 + $0xcd8] sm:$0xf]
    %v868 = vld [vmem:[%s1 + $0xcdc] sm:$0xf]
    %v869 = vld [vmem:[%s1 + $0xce0] sm:$0xf]
    %v870 = vld [vmem:[%s1 + $0xce4] sm:$0xf]
    %v871 = vld [vmem:[%s1 + $0xce8] sm:$0xf]
    %v872 = vld [vmem:[%s1 + $0xcec] sm:$0xf]
    %v873 = vld [vmem:[%s1 + $0xcf0] sm:$0xf]
    %v874 = vld [vmem:[%s1 + $0xcf4] sm:$0xf]
    %v875 = vld [vmem:[%s1 + $0xcf8] sm:$0xf]
    %v876 = vld [vmem:[%s1 + $0xcfc] sm:$0xf]
    %v877 = vld [vmem:[%s1 + $0xd00] sm:$0xf]
    %v878 = vld [vmem:[%s1 + $0xd04] sm:$0xf]
    %v879 = vld [vmem:[%s1 + $0xd08] sm:$0xf]
    %v880 = vld [vmem:[%s1 + $0xd0c] sm:$0xf]
    %v881 = vld [vmem:[%s1 + $0xd10] sm:$0xf]
    %v882 = vld [vmem:[%s1 + $0xd14] sm:$0xf]
    %v883 = vld [vmem:[%s1 + $0xd18] sm:$0xf]
    %v884 = vld [vmem:[%s1 + $0xd1c] sm:$0xf]
    %v885 = vld [vmem:[%s1 + $0xd20] sm:$0xf]
    %v886 = vld [vmem:[%s1 + $0xd24] sm:$0xf]
    %v887 = vld [vmem:[%s1 + $0xd28] sm:$0xf]
    %v888 = vld [vmem:[%s1 + $0xd2c] sm:$0xf]
    %v889 = vld [vmem:[%s1 + $0xd30] sm:$0xf]
    %v890 = vld [vmem:[%s1 + $0xd34] sm:$0xf]
    %v891 = vld [vmem:[%s1 + $0xd38] sm:$0xf]
    %v892 = vld [vmem:[%s1 + $0xd3c] sm:$0xf]
    %v893 = vld [vmem:[%s1 + $0xd40] sm:$0xf]
    %v894 = vld [vmem:[%s1 + $0xd44] sm:$0xf]
    %v895 = vld [vmem:[%s1 + $0xd48] sm:$0xf]
    %v896 = vld [vmem:[%s1 + $0xd4c] sm:$0xf]
    %v897 = vld [vmem:[%s1 + $0xd50] sm:$0xf]
    %v898 = vld [vmem:[%s1 + $0xd54] sm:$0xf]
    %v899 = vld [vmem:[%s1 + $0xd58] sm:$0xf]
    %v900 = vld [vmem:[%s1 + $0xd5c] sm:$0xf]
    %v901 = vld [vmem:[%s1 + $0xd60] sm:$0xf]
    %v902 = vld [vmem:[%s1 + $0xd64] sm:$0xf]
    %v903 = vld [vmem:[%s1 + $0xd68] sm:$0xf]
    %v904 = vld [vmem:[%s1 + $0xd6c] sm:$0xf]
    %v905 = vld [vmem:[%s1 + $0xd70] sm:$0xf]
    %v906 = vld [vmem:[%s1 + $0xd74] sm:$0xf]
    %v907 = vld [vmem:[%s1 + $0xd78] sm:$0xf]
    %v908 = vld [vmem:[%s1 + $0xd7c] sm:$0xf]
    %v909 = vld [vmem:[%s1 + $0xd80] sm:$0xf]
    %v910 = vld [vmem:[%s1 + $0xd84] sm:$0xf]
    %v911 = vld [vmem:[%s1 + $0xd88] sm:$0xf]
    %v912 = vld [vmem:[%s1 + $0xd8c] sm:$0xf]
    %v913 = vld [vmem:[%s1 + $0xd90] sm:$0xf]
    %v914 = vld [vmem:[%s1 + $0xd94] sm:$0xf]
    %v915 = vld [vmem:[%s1 + $0xd98] sm:$0xf]
    %v916 = vld [vmem:[%s1 + $0xd9c] sm:$0xf]
    %v917 = vld [vmem:[%s1 + $0xda0] sm:$0xf]
    %v918 = vld [vmem:[%s1 + $0xda4] sm:$0xf]
    %v919 = vld [vmem:[%s1 + $0xda8] sm:$0xf]
    %v920 = vld [vmem:[%s1 + $0xdac] sm:$0xf]
    %v921 = vld [vmem:[%s1 + $0xdb0] sm:$0xf]
    %v922 = vld [vmem:[%s1 + $0xdb4] sm:$0xf]
    %v923 = vld [vmem:[%s1 + $0xdb8] sm:$0xf]
    %v924 = vld [vmem:[%s1 + $0xdbc] sm:$0xf]
    %v925 = vld [vmem:[%s1 + $0xdc0] sm:$0xf]
    %v926 = vld [vmem:[%s1 + $0xdc4] sm:$0xf]
    %v927 = vld [vmem:[%s1 + $0xdc8] sm:$0xf]
    %v928 = vld [vmem:[%s1 + $0xdcc] sm:$0xf]
    %v929 = vld [vmem:[%s1 + $0xdd0] sm:$0xf]
    %v930 = vld [vmem:[%s1 + $0xdd4] sm:$0xf]
    %v931 = vld [vmem:[%s1 + $0xdd8] sm:$0xf]
    %v932 = vld [vmem:[%s1 + $0xddc] sm:$0xf]
    %v933 = vld [vmem:[%s1 + $0xde0] sm:$0xf]
    %v934 = vld [vmem:[%s1 + $0xde4] sm:$0xf]
    %v935 = vld [vmem:[%s1 + $0xde8] sm:$0xf]
    %v936 = vld [vmem:[%s1 + $0xdec] sm:$0xf]
    %v937 = vld [vmem:[%s1 + $0xdf0] sm:$0xf]
    %v938 = vld [vmem:[%s1 + $0xdf4] sm:$0xf]
    %v939 = vld [vmem:[%s1 + $0xdf8] sm:$0xf]
    %v940 = vld [vmem:[%s1 + $0xdfc] sm:$0xf]
    %v941 = vld [vmem:[%s1 + $0xe00] sm:$0xf]
    %v942 = vld [vmem:[%s1 + $0xe04] sm:$0xf]
    %v943 = vld [vmem:[%s1 + $0xe08] sm:$0xf]
    %v944 = vld [vmem:[%s1 + $0xe0c] sm:$0xf]
    %v945 = vld [vmem:[%s1 + $0xe10] sm:$0xf]
    %v946 = vld [vmem:[%s1 + $0xe14] sm:$0xf]
    %v947 = vld [vmem:[%s1 + $0xe18] sm:$0xf]
    %v948 = vld [vmem:[%s1 + $0xe1c] sm:$0xf]
    %v949 = vld [vmem:[%s1 + $0xe20] sm:$0xf]
    %v950 = vld [vmem:[%s1 + $0xe24] sm:$0xf]
    %v951 = vld [vmem:[%s1 + $0xe28] sm:$0xf]
    %v952 = vld [vmem:[%s1 + $0xe2c] sm:$0xf]
    %v953 = vld [vmem:[%s1 + $0xe30] sm:$0xf]
    %v954 = vld [vmem:[%s1 + $0xe34] sm:$0xf]
    %v955 = vld [vmem:[%s1 + $0xe38] sm:$0xf]
    %v956 = vld [vmem:[%s1 + $0xe3c] sm:$0xf]
    %v957 = vld [vmem:[%s1 + $0xe40] sm:$0xf]
    %v958 = vld [vmem:[%s1 + $0xe44] sm:$0xf]
    %v959 = vld [vmem:[%s1 + $0xe48] sm:$0xf]
    %v960 = vld [vmem:[%s1 + $0xe4c] sm:$0xf]
    %v961 = vld [vmem:[%s1 + $0xe50] sm:$0xf]
    %v962 = vld [vmem:[%s1 + $0xe54] sm:$0xf]
    %v963 = vld [vmem:[%s1 + $0xe58] sm:$0xf]
    %v964 = vld [vmem:[%s1 + $0xe5c] sm:$0xf]
    %v965 = vld [vmem:[%s1 + $0xe60] sm:$0xf]
    %v966 = vld [vmem:[%s1 + $0xe64] sm:$0xf]
    %v967 = vld [vmem:[%s1 + $0xe68] sm:$0xf]
    %v968 = vld [vmem:[%s1 + $0xe6c] sm:$0xf]
    %v969 = vld [vmem:[%s1 + $0xe70] sm:$0xf]
    %v970 = vld [vmem:[%s1 + $0xe74] sm:$0xf]
    %v971 = vld [vmem:[%s1 + $0xe78] sm:$0xf]
    %v972 = vld [vmem:[%s1 + $0xe7c] sm:$0xf]
    %v973 = vld [vmem:[%s1 + $0xe80] sm:$0xf]
    %v974 = vld [vmem:[%s1 + $0xe84] sm:$0xf]
    %v975 = vld [vmem:[%s1 + $0xe88] sm:$0xf]
    %v976 = vld [vmem:[%s1 + $0xe8c] sm:$0xf]
    %v977 = vld [vmem:[%s1 + $0xe90] sm:$0xf]
    %v978 = vld [vmem:[%s1 + $0xe94] sm:$0xf]
    %v979 = vld [vmem:[%s1 + $0xe98] sm:$0xf]
    %v980 = vld [vmem:[%s1 + $0xe9c] sm:$0xf]
    %v981 = vld [vmem:[%s1 + $0xea0] sm:$0xf]
    %v982 = vld [vmem:[%s1 + $0xea4] sm:$0xf]
    %v983 = vld [vmem:[%s1 + $0xea8] sm:$0xf]
    %v984 = vld [vmem:[%s1 + $0xeac] sm:$0xf]
    %v985 = vld [vmem:[%s1 + $0xeb0] sm:$0xf]
    %v986 = vld [vmem:[%s1 + $0xeb4] sm:$0xf]
    %v987 = vld [vmem:[%s1 + $0xeb8] sm:$0xf]
    %v988 = vld [vmem:[%s1 + $0xebc] sm:$0xf]
    %v989 = vld [vmem:[%s1 + $0xec0] sm:$0xf]
    %v990 = vld [vmem:[%s1 + $0xec4] sm:$0xf]
    %v991 = vld [vmem:[%s1 + $0xec8] sm:$0xf]
    %v992 = vld [vmem:[%s1 + $0xecc] sm:$0xf]
    %v993 = vld [vmem:[%s1 + $0xed0] sm:$0xf]
    %v994 = vld [vmem:[%s1 + $0xed4] sm:$0xf]
    %v995 = vld [vmem:[%s1 + $0xed8] sm:$0xf]
    %v996 = vld [vmem:[%s1 + $0xedc] sm:$0xf]
    %v997 = vld [vmem:[%s1 + $0xee0] sm:$0xf]
    %v998 = vld [vmem:[%s1 + $0xee4] sm:$0xf]
    %v999 = vld [vmem:[%s1 + $0xee8] sm:$0xf]
    %v1000 = vld [vmem:[%s1 + $0xeec] sm:$0xf]
    %v1001 = vld [vmem:[%s1 + $0xef0] sm:$0xf]
    %v1002 = vld [vmem:[%s1 + $0xef4] sm:$0xf]
    %v1003 = vld [vmem:[%s1 + $0xef8] sm:$0xf]
    %v1004 = vld [vmem:[%s1 + $0xefc] sm:$0xf]
    %v1005 = vld [vmem:[%s1 + $0xf00] sm:$0xf]
    %v1006 = vld [vmem:[%s1 + $0xf04] sm:$0xf]
    %v1007 = vld [vmem:[%s1 + $0xf08] sm:$0xf]
    %v1008 = vld [vmem:[%s1 + $0xf0c] sm:$0xf]
    %v1009 = vld [vmem:[%s1 + $0xf10] sm:$0xf]
    %v1010 = vld [vmem:[%s1 + $0xf14] sm:$0xf]
    %v1011 = vld [vmem:[%s1 + $0xf18] sm:$0xf]
    %v1012 = vld [vmem:[%s1 + $0xf1c] sm:$0xf]
    %v1013 = vld [vmem:[%s1 + $0xf20] sm:$0xf]
    %v1014 = vld [vmem:[%s1 + $0xf24] sm:$0xf]
    %v1015 = vld [vmem:[%s1 + $0xf28] sm:$0xf]
    %v1016 = vld [vmem:[%s1 + $0xf2c] sm:$0xf]
    %v1017 = vld [vmem:[%s1 + $0xf30] sm:$0xf]
    %v1018 = vld [vmem:[%s1 + $0xf34] sm:$0xf]
    %v1019 = vld [vmem:[%s1 + $0xf38] sm:$0xf]
    %v1020 = vld [vmem:[%s1 + $0xf3c] sm:$0xf]
    %v1021 = vld [vmem:[%s1 + $0xf40] sm:$0xf]
    %v1022 = vld [vmem:[%s1 + $0xf44] sm:$0xf]
    %v1023 = vld [vmem:[%s1 + $0xf48] sm:$0xf]
    %v1024 = vld [vmem:[%s1 + $0xf4c] sm:$0xf]
    %v1025 = vld [vmem:[%s1 + $0xf50] sm:$0xf]
    %v1026 = vld [vmem:[%s1 + $0xf54] sm:$0xf]
    %v1027 = vld [vmem:[%s1 + $0xf58] sm:$0xf]
    %v1028 = vld [vmem:[%s1 + $0xf5c] sm:$0xf]
    %v1029 = vld [vmem:[%s1 + $0xf60] sm:$0xf]
    %v1030 = vld [vmem:[%s1 + $0xf64] sm:$0xf]
    %v1031 = vld [vmem:[%s1 + $0xf68] sm:$0xf]
    %v1032 = vld [vmem:[%s1 + $0xf6c] sm:$0xf]
    %v1033 = vld [vmem:[%s1 + $0xf70] sm:$0xf]
    %v1034 = vld [vmem:[%s1 + $0xf74] sm:$0xf]
    %v1035 = vld [vmem:[%s1 + $0xf78] sm:$0xf]
    %v1036 = vld [vmem:[%s1 + $0xf7c] sm:$0xf]
    %v1037 = vld [vmem:[%s1 + $0xf80] sm:$0xf]
    %v1038 = vld [vmem:[%s1 + $0xf84] sm:$0xf]
    %v1039 = vld [vmem:[%s1 + $0xf88] sm:$0xf]
    %v1040 = vld [vmem:[%s1 + $0xf8c] sm:$0xf]
    %v1041 = vld [vmem:[%s1 + $0xf90] sm:$0xf]
    %v1042 = vld [vmem:[%s1 + $0xf94] sm:$0xf]
    %v1043 = vld [vmem:[%s1 + $0xf98] sm:$0xf]
    %v1044 = vld [vmem:[%s1 + $0xf9c] sm:$0xf]
    %v1045 = vld [vmem:[%s1 + $0xfa0] sm:$0xf]
    %v1046 = vld [vmem:[%s1 + $0xfa4] sm:$0xf]
    %v1047 = vld [vmem:[%s1 + $0xfa8] sm:$0xf]
    %v1048 = vld [vmem:[%s1 + $0xfac] sm:$0xf]
    %v1049 = vld [vmem:[%s1 + $0xfb0] sm:$0xf]
    %v1050 = vld [vmem:[%s1 + $0xfb4] sm:$0xf]
    %v1051 = vld [vmem:[%s1 + $0xfb8] sm:$0xf]
    %v1052 = vld [vmem:[%s1 + $0xfbc] sm:$0xf]
    %v1053 = vld [vmem:[%s1 + $0xfc0] sm:$0xf]
    %v1054 = vld [vmem:[%s1 + $0xfc4] sm:$0xf]
    %v1055 = vld [vmem:[%s1 + $0xfc8] sm:$0xf]
    %v1056 = vld [vmem:[%s1 + $0xfcc] sm:$0xf]
    %v1057 = vld [vmem:[%s1 + $0xfd0] sm:$0xf]
    %v1058 = vld [vmem:[%s1 + $0xfd4] sm:$0xf]
    %v1059 = vld [vmem:[%s1 + $0xfd8] sm:$0xf]
    %v1060 = vld [vmem:[%s1 + $0xfdc] sm:$0xf]
    %v1061 = vld [vmem:[%s1 + $0xfe0] sm:$0xf]
    %v1062 = vld [vmem:[%s1 + $0xfe4] sm:$0xf]
    %v1063 = vld [vmem:[%s1 + $0xfe8] sm:$0xf]
    %v1064 = vld [vmem:[%s1 + $0xfec] sm:$0xf]
    %v1065 = vld [vmem:[%s1 + $0xff0] sm:$0xf]
    %v1066 = vld [vmem:[%s1 + $0xff4] sm:$0xf]
    %v1067 = vld [vmem:[%s1 + $0xff8] sm:$0xf]
    %v1068 = vld [vmem:[%s1 + $0xffc] sm:$0xf]
    %v1069 = vld [vmem:[%s1 + $0x1000] sm:$0xf]
    %v1070 = vld [vmem:[%s1 + $0x1004] sm:$0xf]
    %v1071 = vld [vmem:[%s1 + $0x1008] sm:$0xf]
    %v1072 = vld [vmem:[%s1 + $0x100c] sm:$0xf]
    %v1073 = vld [vmem:[%s1 + $0x1010] sm:$0xf]
    %v1074 = vld [vmem:[%s1 + $0x1014] sm:$0xf]
    %v1075 = vld [vmem:[%s1 + $0x1018] sm:$0xf]
    %v1076 = vld [vmem:[%s1 + $0x101c] sm:$0xf]
    %v1077 = vld [vmem:[%s1 + $0x1020] sm:$0xf]
    %v1078 = vld [vmem:[%s1 + $0x1024] sm:$0xf]
    %v1079 = vld [vmem:[%s1 + $0x1028] sm:$0xf]
    %v1080 = vld [vmem:[%s1 + $0x102c] sm:$0xf]
    %v1081 = vld [vmem:[%s1 + $0x1030] sm:$0xf]
    %v1082 = vld [vmem:[%s1 + $0x1034] sm:$0xf]
    %v1083 = vld [vmem:[%s1 + $0x1038] sm:$0xf]
    %v1084 = vld [vmem:[%s1 + $0x103c] sm:$0xf]
    %v1085 = vld [vmem:[%s1 + $0x1040] sm:$0xf]
    %v1086 = vld [vmem:[%s1 + $0x1044] sm:$0xf]
    %v1087 = vld [vmem:[%s1 + $0x1048] sm:$0xf]
    %v1088 = vld [vmem:[%s1 + $0x104c] sm:$0xf]
    %v1089 = vld [vmem:[%s1 + $0x1050] sm:$0xf]
    %v1090 = vld [vmem:[%s1 + $0x1054] sm:$0xf]
    %v1091 = vld [vmem:[%s1 + $0x1058] sm:$0xf]
    %v1092 = vld [vmem:[%s1 + $0x105c] sm:$0xf]
    %v1093 = vld [vmem:[%s1 + $0x1060] sm:$0xf]
    %v1094 = vld [vmem:[%s1 + $0x1064] sm:$0xf]
    %v1095 = vld [vmem:[%s1 + $0x1068] sm:$0xf]
    %v1096 = vld [vmem:[%s1 + $0x106c] sm:$0xf]
    %v1097 = vld [vmem:[%s1 + $0x1070] sm:$0xf]
    %v1098 = vld [vmem:[%s1 + $0x1074] sm:$0xf]
    %v1099 = vld [vmem:[%s1 + $0x1078] sm:$0xf]
    %v1100 = vld [vmem:[%s1 + $0x107c] sm:$0xf]
    %v1101 = vld [vmem:[%s1 + $0x1080] sm:$0xf]
    %v1102 = vld [vmem:[%s1 + $0x1084] sm:$0xf]
    %v1103 = vld [vmem:[%s1 + $0x1088] sm:$0xf]
    %v1104 = vld [vmem:[%s1 + $0x108c] sm:$0xf]
    %v1105 = vld [vmem:[%s1 + $0x1090] sm:$0xf]
    %v1106 = vld [vmem:[%s1 + $0x1094] sm:$0xf]
    %v1107 = vld [vmem:[%s1 + $0x1098] sm:$0xf]
    %v1108 = vld [vmem:[%s1 + $0x109c] sm:$0xf]
    %v1109 = vld [vmem:[%s1 + $0x10a0] sm:$0xf]
    %v1110 = vld [vmem:[%s1 + $0x10a4] sm:$0xf]
    %v1111 = vld [vmem:[%s1 + $0x10a8] sm:$0xf]
    %v1112 = vld [vmem:[%s1 + $0x10ac] sm:$0xf]
    %v1113 = vld [vmem:[%s1 + $0x10b0] sm:$0xf]
    %v1114 = vld [vmem:[%s1 + $0x10b4] sm:$0xf]
    %v1115 = vld [vmem:[%s1 + $0x10b8] sm:$0xf]
    %v1116 = vld [vmem:[%s1 + $0x10bc] sm:$0xf]
    %v1117 = vld [vmem:[%s1 + $0x10c0] sm:$0xf]
    %v1118 = vld [vmem:[%s1 + $0x10c4] sm:$0xf]
    %v1119 = vld [vmem:[%s1 + $0x10c8] sm:$0xf]
    %v1120 = vld [vmem:[%s1 + $0x10cc] sm:$0xf]
    %v1121 = vld [vmem:[%s1 + $0x10d0] sm:$0xf]
    %v1122 = vld [vmem:[%s1 + $0x10d4] sm:$0xf]
    %v1123 = vld [vmem:[%s1 + $0x10d8] sm:$0xf]
    %v1124 = vld [vmem:[%s1 + $0x10dc] sm:$0xf]
    %v1125 = vld [vmem:[%s1 + $0x10e0] sm:$0xf]
    %v1126 = vld [vmem:[%s1 + $0x10e4] sm:$0xf]
    %v1127 = vld [vmem:[%s1 + $0x10e8] sm:$0xf]
    %v1128 = vld [vmem:[%s1 + $0x10ec] sm:$0xf]
    %v1129 = vld [vmem:[%s1 + $0x10f0] sm:$0xf]
    %v1130 = vld [vmem:[%s1 + $0x10f4] sm:$0xf]
    %v1131 = vld [vmem:[%s1 + $0x10f8] sm:$0xf]
    %v1132 = vld [vmem:[%s1 + $0x10fc] sm:$0xf]
    %v1133 = vld [vmem:[%s1 + $0x1100] sm:$0xf]
    %v1134 = vld [vmem:[%s1 + $0x1104] sm:$0xf]
    %v1135 = vld [vmem:[%s1 + $0x1108] sm:$0xf]
    %v1136 = vld [vmem:[%s1 + $0x110c] sm:$0xf]
    %v1137 = vld [vmem:[%s1 + $0x1110] sm:$0xf]
    %v1138 = vld [vmem:[%s1 + $0x1114] sm:$0xf]
    %v1139 = vld [vmem:[%s1 + $0x1118] sm:$0xf]
    %v1140 = vld [vmem:[%s1 + $0x111c] sm:$0xf]
    %v1141 = vld [vmem:[%s1 + $0x1120] sm:$0xf]
    %v1142 = vld [vmem:[%s1 + $0x1124] sm:$0xf]
    %v1143 = vld [vmem:[%s1 + $0x1128] sm:$0xf]
    %v1144 = vld [vmem:[%s1 + $0x112c] sm:$0xf]
    %v1145 = vld [vmem:[%s1 + $0x1130] sm:$0xf]
    %v1146 = vld [vmem:[%s1 + $0x1134] sm:$0xf]
    %v1147 = vld [vmem:[%s1 + $0x1138] sm:$0xf]
    %v1148 = vld [vmem:[%s1 + $0x113c] sm:$0xf]
    %v1149 = vld [vmem:[%s1 + $0x1140] sm:$0xf]
    %v1150 = vld [vmem:[%s1 + $0x1144] sm:$0xf]
    %v1151 = vld [vmem:[%s1 + $0x1148] sm:$0xf]
    %v1152 = vld [vmem:[%s1 + $0x114c] sm:$0xf]
    %v1153 = vld [vmem:[%s1 + $0x1150] sm:$0xf]
    %v1154 = vld [vmem:[%s1 + $0x1154] sm:$0xf]
    %v1155 = vld [vmem:[%s1 + $0x1158] sm:$0xf]
    %v1156 = vld [vmem:[%s1 + $0x115c] sm:$0xf]
    %v1157 = vld [vmem:[%s1 + $0x1160] sm:$0xf]
    %v1158 = vld [vmem:[%s1 + $0x1164] sm:$0xf]
    %v1159 = vld [vmem:[%s1 + $0x1168] sm:$0xf]
    %v1160 = vld [vmem:[%s1 + $0x116c] sm:$0xf]
    %v1161 = vld [vmem:[%s1 + $0x1170] sm:$0xf]
    %v1162 = vld [vmem:[%s1 + $0x1174] sm:$0xf]
    %v1163 = vld [vmem:[%s1 + $0x1178] sm:$0xf]
    %v1164 = vld [vmem:[%s1 + $0x117c] sm:$0xf]
    %v1165 = vld [vmem:[%s1 + $0x1180] sm:$0xf]
    %v1166 = vld [vmem:[%s1 + $0x1184] sm:$0xf]
    %v1167 = vld [vmem:[%s1 + $0x1188] sm:$0xf]
    %v1168 = vld [vmem:[%s1 + $0x118c] sm:$0xf]
    %v1169 = vld [vmem:[%s1 + $0x1190] sm:$0xf]
    %v1170 = vld [vmem:[%s1 + $0x1194] sm:$0xf]
    %v1171 = vld [vmem:[%s1 + $0x1198] sm:$0xf]
    %v1172 = vld [vmem:[%s1 + $0x119c] sm:$0xf]
    %v1173 = vld [vmem:[%s1 + $0x11a0] sm:$0xf]
    %v1174 = vld [vmem:[%s1 + $0x11a4] sm:$0xf]
    %v1175 = vld [vmem:[%s1 + $0x11a8] sm:$0xf]
    %v1176 = vld [vmem:[%s1 + $0x11ac] sm:$0xf]
    %v1177 = vld [vmem:[%s1 + $0x11b0] sm:$0xf]
    %v1178 = vld [vmem:[%s1 + $0x11b4] sm:$0xf]
    %v1179 = vld [vmem:[%s1 + $0x11b8] sm:$0xf]
    %v1180 = vld [vmem:[%s1 + $0x11bc] sm:$0xf]
    %v1181 = vld [vmem:[%s1 + $0x11c0] sm:$0xf]
    %v1182 = vld [vmem:[%s1 + $0x11c4] sm:$0xf]
    %v1183 = vld [vmem:[%s1 + $0x11c8] sm:$0xf]
    %v1184 = vld [vmem:[%s1 + $0x11cc] sm:$0xf]
    %v1185 = vld [vmem:[%s1 + $0x11d0] sm:$0xf]
    %v1186 = vld [vmem:[%s1 + $0x11d4] sm:$0xf]
    %v1187 = vld [vmem:[%s1 + $0x11d8] sm:$0xf]
    %v1188 = vld [vmem:[%s1 + $0x11dc] sm:$0xf]
    %v1189 = vld [vmem:[%s1 + $0x11e0] sm:$0xf]
    %v1190 = vld [vmem:[%s1 + $0x11e4] sm:$0xf]
    %v1191 = vld [vmem:[%s1 + $0x11e8] sm:$0xf]
    %v1192 = vld [vmem:[%s1 + $0x11ec] sm:$0xf]
    %v1193 = vld [vmem:[%s1 + $0x11f0] sm:$0xf]
    %v1194 = vld [vmem:[%s1 + $0x11f4] sm:$0xf]
    %v1195 = vld [vmem:[%s1 + $0x11f8] sm:$0xf]
    %v1196 = vld [vmem:[%s1 + $0x11fc] sm:$0xf]
    %v1197 = vld [vmem:[%s1 + $0x1200] sm:$0xf]
    %v1198 = vld [vmem:[%s1 + $0x1204] sm:$0xf]
    %v1199 = vld [vmem:[%s1 + $0x1208] sm:$0xf]
    %v1200 = vld [vmem:[%s1 + $0x120c] sm:$0xf]
    %v1201 = vld [vmem:[%s1 + $0x1210] sm:$0xf]
    %v1202 = vld [vmem:[%s1 + $0x1214] sm:$0xf]
    %v1203 = vld [vmem:[%s1 + $0x1218] sm:$0xf]
    %v1204 = vld [vmem:[%s1 + $0x121c] sm:$0xf]
    %v1205 = vld [vmem:[%s1 + $0x1220] sm:$0xf]
    %v1206 = vld [vmem:[%s1 + $0x1224] sm:$0xf]
    %v1207 = vld [vmem:[%s1 + $0x1228] sm:$0xf]
    %v1208 = vld [vmem:[%s1 + $0x122c] sm:$0xf]
    %v1209 = vld [vmem:[%s1 + $0x1230] sm:$0xf]
    %v1210 = vld [vmem:[%s1 + $0x1234] sm:$0xf]
    %v1211 = vld [vmem:[%s1 + $0x1238] sm:$0xf]
    %v1212 = vld [vmem:[%s1 + $0x123c] sm:$0xf]
    %v1213 = vld [vmem:[%s1 + $0x1240] sm:$0xf]
    %v1214 = vld [vmem:[%s1 + $0x1244] sm:$0xf]
    %v1215 = vld [vmem:[%s1 + $0x1248] sm:$0xf]
    %v1216 = vld [vmem:[%s1 + $0x124c] sm:$0xf]
    %v1217 = vld [vmem:[%s1 + $0x1250] sm:$0xf]
    %v1218 = vld [vmem:[%s1 + $0x1254] sm:$0xf]
    %v1219 = vld [vmem:[%s1 + $0x1258] sm:$0xf]
    %v1220 = vld [vmem:[%s1 + $0x125c] sm:$0xf]
    %v1221 = vld [vmem:[%s1 + $0x1260] sm:$0xf]
    %v1222 = vld [vmem:[%s1 + $0x1264] sm:$0xf]
    %v1223 = vld [vmem:[%s1 + $0x1268] sm:$0xf]
    %v1224 = vld [vmem:[%s1 + $0x126c] sm:$0xf]
    %v1225 = vld [vmem:[%s1 + $0x1270] sm:$0xf]
    %v1226 = vld [vmem:[%s1 + $0x1274] sm:$0xf]
    %v1227 = vld [vmem:[%s1 + $0x1278] sm:$0xf]
    %v1228 = vld [vmem:[%s1 + $0x127c] sm:$0xf]
    %v1229 = vld [vmem:[%s1 + $0x1280] sm:$0xf]
    %v1230 = vld [vmem:[%s1 + $0x1284] sm:$0xf]
    %v1231 = vld [vmem:[%s1 + $0x1288] sm:$0xf]
    %v1232 = vld [vmem:[%s1 + $0x128c] sm:$0xf]
    %v1233 = vld [vmem:[%s1 + $0x1290] sm:$0xf]
    %v1234 = vld [vmem:[%s1 + $0x1294] sm:$0xf]
    %v1235 = vld [vmem:[%s1 + $0x1298] sm:$0xf]
    %v1236 = vld [vmem:[%s1 + $0x129c] sm:$0xf]
    %v1237 = vld [vmem:[%s1 + $0x12a0] sm:$0xf]
    %v1238 = vld [vmem:[%s1 + $0x12a4] sm:$0xf]
    %v1239 = vld [vmem:[%s1 + $0x12a8] sm:$0xf]
    %v1240 = vld [vmem:[%s1 + $0x12ac] sm:$0xf]
    %v1241 = vld [vmem:[%s1 + $0x12b0] sm:$0xf]
    %v1242 = vld [vmem:[%s1 + $0x12b4] sm:$0xf]
    %v1243 = vld [vmem:[%s1 + $0x12b8] sm:$0xf]
    %v1244 = vld [vmem:[%s1 + $0x12bc] sm:$0xf]
    %v1245 = vld [vmem:[%s1 + $0x12c0] sm:$0xf]
    %v1246 = vld [vmem:[%s1 + $0x12c4] sm:$0xf]
    %v1247 = vld [vmem:[%s1 + $0x12c8] sm:$0xf]
    %v1248 = vld [vmem:[%s1 + $0x12cc] sm:$0xf]
    %v1249 = vld [vmem:[%s1 + $0x12d0] sm:$0xf]
    %v1250 = vld [vmem:[%s1 + $0x12d4] sm:$0xf]
    %v1251 = vld [vmem:[%s1 + $0x12d8] sm:$0xf]
    %v1252 = vld [vmem:[%s1 + $0x12dc] sm:$0xf]
    %v1253 = vld [vmem:[%s1 + $0x12e0] sm:$0xf]
    %v1254 = vld [vmem:[%s1 + $0x12e4] sm:$0xf]
    %v1255 = vld [vmem:[%s1 + $0x12e8] sm:$0xf]
    %v1256 = vld [vmem:[%s1 + $0x12ec] sm:$0xf]
    %v1257 = vld [vmem:[%s1 + $0x12f0] sm:$0xf]
    %v1258 = vld [vmem:[%s1 + $0x12f4] sm:$0xf]
    %v1259 = vld [vmem:[%s1 + $0x12f8] sm:$0xf]
    %v1260 = vld [vmem:[%s1 + $0x12fc] sm:$0xf]
    %v1261 = vld [vmem:[%s1 + $0x1300] sm:$0xf]
    %v1262 = vld [vmem:[%s1 + $0x1304] sm:$0xf]
    %v1263 = vld [vmem:[%s1 + $0x1308] sm:$0xf]
    %v1264 = vld [vmem:[%s1 + $0x130c] sm:$0xf]
    %v1265 = vld [vmem:[%s1 + $0x1310] sm:$0xf]
    %v1266 = vld [vmem:[%s1 + $0x1314] sm:$0xf]
    %v1267 = vld [vmem:[%s1 + $0x1318] sm:$0xf]
    %v1268 = vld [vmem:[%s1 + $0x131c] sm:$0xf]
    %v1269 = vld [vmem:[%s1 + $0x1320] sm:$0xf]
    %v1270 = vld [vmem:[%s1 + $0x1324] sm:$0xf]
    %v1271 = vld [vmem:[%s1 + $0x1328] sm:$0xf]
    %v1272 = vld [vmem:[%s1 + $0x132c] sm:$0xf]
    %v1273 = vld [vmem:[%s1 + $0x1330] sm:$0xf]
    %v1274 = vld [vmem:[%s1 + $0x1334] sm:$0xf]
    %v1275 = vld [vmem:[%s1 + $0x1338] sm:$0xf]
    %v1276 = vld [vmem:[%s1 + $0x133c] sm:$0xf]
    %v1277 = vld [vmem:[%s1 + $0x1340] sm:$0xf]
    %v1278 = vld [vmem:[%s1 + $0x1344] sm:$0xf]
    %v1279 = vld [vmem:[%s1 + $0x1348] sm:$0xf]
    %v1280 = vld [vmem:[%s1 + $0x134c] sm:$0xf]
    %v1281 = vld [vmem:[%s1 + $0x1350] sm:$0xf]
    %v1282 = vld [vmem:[%s1 + $0x1354] sm:$0xf]
    %v1283 = vld [vmem:[%s1 + $0x1358] sm:$0xf]
    %v1284 = vld [vmem:[%s1 + $0x135c] sm:$0xf]
    %v1285 = vld [vmem:[%s1 + $0x1360] sm:$0xf]
    %v1286 = vld [vmem:[%s1 + $0x1364] sm:$0xf]
    %v1287 = vld [vmem:[%s1 + $0x1368] sm:$0xf]
    %v1288 = vld [vmem:[%s1 + $0x136c] sm:$0xf]
    %v1289 = vld [vmem:[%s1 + $0x1370] sm:$0xf]
    %v1290 = vld [vmem:[%s1 + $0x1374] sm:$0xf]
    %v1291 = vld [vmem:[%s1 + $0x1378] sm:$0xf]
    %v1292 = vld [vmem:[%s1 + $0x137c] sm:$0xf]
    %v1293 = vld [vmem:[%s1 + $0x1380] sm:$0xf]
    %v1294 = vld [vmem:[%s1 + $0x1384] sm:$0xf]
    %v1295 = vld [vmem:[%s1 + $0x1388] sm:$0xf]
    %v1296 = vld [vmem:[%s1 + $0x138c] sm:$0xf]
    %v1297 = vld [vmem:[%s1 + $0x1390] sm:$0xf]
    %v1298 = vld [vmem:[%s1 + $0x1394] sm:$0xf]
    %v1299 = vld [vmem:[%s1 + $0x1398] sm:$0xf]
    %v1300 = vld [vmem:[%s1 + $0x139c] sm:$0xf]
    %v1301 = vld [vmem:[%s1 + $0x13a0] sm:$0xf]
    %v1302 = vld [vmem:[%s1 + $0x13a4] sm:$0xf]
    %v1303 = vld [vmem:[%s1 + $0x13a8] sm:$0xf]
    %v1304 = vld [vmem:[%s1 + $0x13ac] sm:$0xf]
    %v1305 = vld [vmem:[%s1 + $0x13b0] sm:$0xf]
    %v1306 = vld [vmem:[%s1 + $0x13b4] sm:$0xf]
    %v1307 = vld [vmem:[%s1 + $0x13b8] sm:$0xf]
    %v1308 = vld [vmem:[%s1 + $0x13bc] sm:$0xf]
    %v1309 = vld [vmem:[%s1 + $0x13c0] sm:$0xf]
    %v1310 = vld [vmem:[%s1 + $0x13c4] sm:$0xf]
    %v1311 = vld [vmem:[%s1 + $0x13c8] sm:$0xf]
    %v1312 = vld [vmem:[%s1 + $0x13cc] sm:$0xf]
    %v1313 = vld [vmem:[%s1 + $0x13d0] sm:$0xf]
    %v1314 = vld [vmem:[%s1 + $0x13d4] sm:$0xf]
    %v1315 = vld [vmem:[%s1 + $0x13d8] sm:$0xf]
    %v1316 = vld [vmem:[%s1 + $0x13dc] sm:$0xf]
    %v1317 = vld [vmem:[%s1 + $0x13e0] sm:$0xf]
    %v1318 = vld [vmem:[%s1 + $0x13e4] sm:$0xf]
    %v1319 = vld [vmem:[%s1 + $0x13e8] sm:$0xf]
    %v1320 = vld [vmem:[%s1 + $0x13ec] sm:$0xf]
    %v1321 = vld [vmem:[%s1 + $0x13f0] sm:$0xf]
    %v1322 = vld [vmem:[%s1 + $0x13f4] sm:$0xf]
    %v1323 = vld [vmem:[%s1 + $0x13f8] sm:$0xf]
    %v1324 = vld [vmem:[%s1 + $0x13fc] sm:$0xf]
    %v1325 = vld [vmem:[%s1 + $0x1400] sm:$0xf]
    %v1326 = vld [vmem:[%s1 + $0x1404] sm:$0xf]
    %v1327 = vld [vmem:[%s1 + $0x1408] sm:$0xf]
    %v1328 = vld [vmem:[%s1 + $0x140c] sm:$0xf]
    %v1329 = vld [vmem:[%s1 + $0x1410] sm:$0xf]
    %v1330 = vld [vmem:[%s1 + $0x1414] sm:$0xf]
    %v1331 = vld [vmem:[%s1 + $0x1418] sm:$0xf]
    %v1332 = vld [vmem:[%s1 + $0x141c] sm:$0xf]
    %v1333 = vld [vmem:[%s1 + $0x1420] sm:$0xf]
    %v1334 = vld [vmem:[%s1 + $0x1424] sm:$0xf]
    %v1335 = vld [vmem:[%s1 + $0x1428] sm:$0xf]
    %v1336 = vld [vmem:[%s1 + $0x142c] sm:$0xf]
    %v1337 = vld [vmem:[%s1 + $0x1430] sm:$0xf]
    %v1338 = vld [vmem:[%s1 + $0x1434] sm:$0xf]
    %v1339 = vld [vmem:[%s1 + $0x1438] sm:$0xf]
    %v1340 = vld [vmem:[%s1 + $0x143c] sm:$0xf]
    %v1352 = vcombine.high %v34, %v34
    %v1354 = vunpack.c.l.s4 1966171168
    %v1355 = vunpack.c.0.s8 %v1354
    %v1356 = vlaneseq
    %v1357 = vshrl.u32 %v1356, 7
    %v1358 = vsub.s32 %v1355, %v1357
    %v1359 = vrot.slane %v34, %v1358
    %v1361 = vunpack.c.l.s4 1966171168
    %v1362 = vunpack.c.0.s8 %v1361
    %v1363 = vlaneseq
    %v1364 = vshrl.u32 %v1363, 7
    %v1365 = vsub.s32 %v1362, %v1364
    %v1366 = vrot.slane %v1352, %v1365
    %v1367 = vcombine.high %v1359, %v1359
    %v1368 = vcombine.high %v1366, %v1366
    %v1370 = vunpack.c.l.s4 1966171168
    %v1371 = vunpack.c.0.s8 %v1370
    %v1372 = vlaneseq
    %v1373 = vshrl.u32 %v1372, 7
    %v1374 = vsub.s32 %v1371, %v1373
    %v1375 = vrot.slane %v1359, %v1374
    %v1377 = vunpack.c.l.s4 1966171168
    %v1378 = vunpack.c.0.s8 %v1377
    %v1379 = vlaneseq
    %v1380 = vshrl.u32 %v1379, 7
    %v1381 = vsub.s32 %v1378, %v1380
    %v1382 = vrot.slane %v1366, %v1381
    %v1384 = vunpack.c.l.s4 1966171168
    %v1385 = vunpack.c.0.s8 %v1384
    %v1386 = vlaneseq
    %v1387 = vshrl.u32 %v1386, 7
    %v1388 = vsub.s32 %v1385, %v1387
    %v1389 = vrot.slane %v1367, %v1388
    %v1391 = vunpack.c.l.s4 1966171168
    %v1392 = vunpack.c.0.s8 %v1391
    %v1393 = vlaneseq
    %v1394 = vshrl.u32 %v1393, 7
    %v1395 = vsub.s32 %v1392, %v1394
    %v1396 = vrot.slane %v1368, %v1395
    %v1397 = vcombine.high %v1375, %v1375
    %v1398 = vcombine.high %v1382, %v1382
    %v1399 = vcombine.high %v1389, %v1389
    %v1400 = vcombine.high %v1396, %v1396
    %v1401 = vcombine.high %v35, %v35
    %v1403 = vunpack.c.l.s4 1966171168
    %v1404 = vunpack.c.0.s8 %v1403
    %v1405 = vlaneseq
    %v1406 = vshrl.u32 %v1405, 7
    %v1407 = vsub.s32 %v1404, %v1406
    %v1408 = vrot.slane %v35, %v1407
    %v1410 = vunpack.c.l.s4 1966171168
    %v1411 = vunpack.c.0.s8 %v1410
    %v1412 = vlaneseq
    %v1413 = vshrl.u32 %v1412, 7
    %v1414 = vsub.s32 %v1411, %v1413
    %v1415 = vrot.slane %v1401, %v1414
    %v1416 = vcombine.high %v1408, %v1408
    %v1417 = vcombine.high %v1415, %v1415
    %v1419 = vunpack.c.l.s4 1966171168
    %v1420 = vunpack.c.0.s8 %v1419
    %v1421 = vlaneseq
    %v1422 = vshrl.u32 %v1421, 7
    %v1423 = vsub.s32 %v1420, %v1422
    %v1424 = vrot.slane %v1408, %v1423
    %v1426 = vunpack.c.l.s4 1966171168
    %v1427 = vunpack.c.0.s8 %v1426
    %v1428 = vlaneseq
    %v1429 = vshrl.u32 %v1428, 7
    %v1430 = vsub.s32 %v1427, %v1429
    %v1431 = vrot.slane %v1415, %v1430
    %v1433 = vunpack.c.l.s4 1966171168
    %v1434 = vunpack.c.0.s8 %v1433
    %v1435 = vlaneseq
    %v1436 = vshrl.u32 %v1435, 7
    %v1437 = vsub.s32 %v1434, %v1436
    %v1438 = vrot.slane %v1416, %v1437
    %v1440 = vunpack.c.l.s4 1966171168
    %v1441 = vunpack.c.0.s8 %v1440
    %v1442 = vlaneseq
    %v1443 = vshrl.u32 %v1442, 7
    %v1444 = vsub.s32 %v1441, %v1443
    %v1445 = vrot.slane %v1417, %v1444
    %v1446 = vcombine.high %v1424, %v1424
    %v1447 = vcombine.high %v1431, %v1431
    %v1448 = vcombine.high %v1438, %v1438
    %v1449 = vcombine.high %v1445, %v1445
    %v1450 = vcombine.high %v36, %v36
    %v1452 = vunpack.c.l.s4 1966171168
    %v1453 = vunpack.c.0.s8 %v1452
    %v1454 = vlaneseq
    %v1455 = vshrl.u32 %v1454, 7
    %v1456 = vsub.s32 %v1453, %v1455
    %v1457 = vrot.slane %v36, %v1456
    %v1459 = vunpack.c.l.s4 1966171168
    %v1460 = vunpack.c.0.s8 %v1459
    %v1461 = vlaneseq
    %v1462 = vshrl.u32 %v1461, 7
    %v1463 = vsub.s32 %v1460, %v1462
    %v1464 = vrot.slane %v1450, %v1463
    %v1465 = vcombine.high %v1457, %v1457
    %v1466 = vcombine.high %v1464, %v1464
    %v1468 = vunpack.c.l.s4 1966171168
    %v1469 = vunpack.c.0.s8 %v1468
    %v1470 = vlaneseq
    %v1471 = vshrl.u32 %v1470, 7
    %v1472 = vsub.s32 %v1469, %v1471
    %v1473 = vrot.slane %v1457, %v1472
    %v1475 = vunpack.c.l.s4 1966171168
    %v1476 = vunpack.c.0.s8 %v1475
    %v1477 = vlaneseq
    %v1478 = vshrl.u32 %v1477, 7
    %v1479 = vsub.s32 %v1476, %v1478
    %v1480 = vrot.slane %v1464, %v1479
    %v1482 = vunpack.c.l.s4 1966171168
    %v1483 = vunpack.c.0.s8 %v1482
    %v1484 = vlaneseq
    %v1485 = vshrl.u32 %v1484, 7
    %v1486 = vsub.s32 %v1483, %v1485
    %v1487 = vrot.slane %v1465, %v1486
    %v1489 = vunpack.c.l.s4 1966171168
    %v1490 = vunpack.c.0.s8 %v1489
    %v1491 = vlaneseq
    %v1492 = vshrl.u32 %v1491, 7
    %v1493 = vsub.s32 %v1490, %v1492
    %v1494 = vrot.slane %v1466, %v1493
    %v1495 = vcombine.high %v1473, %v1473
    %v1496 = vcombine.high %v1480, %v1480
    %v1497 = vcombine.high %v1487, %v1487
    %v1498 = vcombine.high %v1494, %v1494
    %v1499 = vcombine.high %v37, %v37
    %v1501 = vunpack.c.l.s4 1966171168
    %v1502 = vunpack.c.0.s8 %v1501
    %v1503 = vlaneseq
    %v1504 = vshrl.u32 %v1503, 7
    %v1505 = vsub.s32 %v1502, %v1504
    %v1506 = vrot.slane %v37, %v1505
    %v1508 = vunpack.c.l.s4 1966171168
    %v1509 = vunpack.c.0.s8 %v1508
    %v1510 = vlaneseq
    %v1511 = vshrl.u32 %v1510, 7
    %v1512 = vsub.s32 %v1509, %v1511
    %v1513 = vrot.slane %v1499, %v1512
    %v1514 = vcombine.high %v1506, %v1506
    %v1515 = vcombine.high %v1513, %v1513
    %v1517 = vunpack.c.l.s4 1966171168
    %v1518 = vunpack.c.0.s8 %v1517
    %v1519 = vlaneseq
    %v1520 = vshrl.u32 %v1519, 7
    %v1521 = vsub.s32 %v1518, %v1520
    %v1522 = vrot.slane %v1506, %v1521
    %v1524 = vunpack.c.l.s4 1966171168
    %v1525 = vunpack.c.0.s8 %v1524
    %v1526 = vlaneseq
    %v1527 = vshrl.u32 %v1526, 7
    %v1528 = vsub.s32 %v1525, %v1527
    %v1529 = vrot.slane %v1513, %v1528
    %v1531 = vunpack.c.l.s4 1966171168
    %v1532 = vunpack.c.0.s8 %v1531
    %v1533 = vlaneseq
    %v1534 = vshrl.u32 %v1533, 7
    %v1535 = vsub.s32 %v1532, %v1534
    %v1536 = vrot.slane %v1514, %v1535
    %v1538 = vunpack.c.l.s4 1966171168
    %v1539 = vunpack.c.0.s8 %v1538
    %v1540 = vlaneseq
    %v1541 = vshrl.u32 %v1540, 7
    %v1542 = vsub.s32 %v1539, %v1541
    %v1543 = vrot.slane %v1515, %v1542
    %v1544 = vcombine.high %v1522, %v1522
    %v1545 = vcombine.high %v1529, %v1529
    %v1546 = vcombine.high %v1536, %v1536
    %v1547 = vcombine.high %v1543, %v1543
    %v1548 = vcombine.high %v38, %v38
    %v1550 = vunpack.c.l.s4 1966171168
    %v1551 = vunpack.c.0.s8 %v1550
    %v1552 = vlaneseq
    %v1553 = vshrl.u32 %v1552, 7
    %v1554 = vsub.s32 %v1551, %v1553
    %v1555 = vrot.slane %v38, %v1554
    %v1557 = vunpack.c.l.s4 1966171168
    %v1558 = vunpack.c.0.s8 %v1557
    %v1559 = vlaneseq
    %v1560 = vshrl.u32 %v1559, 7
    %v1561 = vsub.s32 %v1558, %v1560
    %v1562 = vrot.slane %v1548, %v1561
    %v1563 = vcombine.high %v1555, %v1555
    %v1564 = vcombine.high %v1562, %v1562
    %v1566 = vunpack.c.l.s4 1966171168
    %v1567 = vunpack.c.0.s8 %v1566
    %v1568 = vlaneseq
    %v1569 = vshrl.u32 %v1568, 7
    %v1570 = vsub.s32 %v1567, %v1569
    %v1571 = vrot.slane %v1555, %v1570
    %v1573 = vunpack.c.l.s4 1966171168
    %v1574 = vunpack.c.0.s8 %v1573
    %v1575 = vlaneseq
    %v1576 = vshrl.u32 %v1575, 7
    %v1577 = vsub.s32 %v1574, %v1576
    %v1578 = vrot.slane %v1562, %v1577
    %v1580 = vunpack.c.l.s4 1966171168
    %v1581 = vunpack.c.0.s8 %v1580
    %v1582 = vlaneseq
    %v1583 = vshrl.u32 %v1582, 7
    %v1584 = vsub.s32 %v1581, %v1583
    %v1585 = vrot.slane %v1563, %v1584
    %v1587 = vunpack.c.l.s4 1966171168
    %v1588 = vunpack.c.0.s8 %v1587
    %v1589 = vlaneseq
    %v1590 = vshrl.u32 %v1589, 7
    %v1591 = vsub.s32 %v1588, %v1590
    %v1592 = vrot.slane %v1564, %v1591
    %v1593 = vcombine.high %v1571, %v1571
    %v1594 = vcombine.high %v1578, %v1578
    %v1595 = vcombine.high %v1585, %v1585
    %v1596 = vcombine.high %v1592, %v1592
    %v1597 = vcombine.high %v39, %v39
    %v1599 = vunpack.c.l.s4 1966171168
    %v1600 = vunpack.c.0.s8 %v1599
    %v1601 = vlaneseq
    %v1602 = vshrl.u32 %v1601, 7
    %v1603 = vsub.s32 %v1600, %v1602
    %v1604 = vrot.slane %v39, %v1603
    %v1606 = vunpack.c.l.s4 1966171168
    %v1607 = vunpack.c.0.s8 %v1606
    %v1608 = vlaneseq
    %v1609 = vshrl.u32 %v1608, 7
    %v1610 = vsub.s32 %v1607, %v1609
    %v1611 = vrot.slane %v1597, %v1610
    %v1612 = vcombine.high %v1604, %v1604
    %v1613 = vcombine.high %v1611, %v1611
    %v1615 = vunpack.c.l.s4 1966171168
    %v1616 = vunpack.c.0.s8 %v1615
    %v1617 = vlaneseq
    %v1618 = vshrl.u32 %v1617, 7
    %v1619 = vsub.s32 %v1616, %v1618
    %v1620 = vrot.slane %v1604, %v1619
    %v1622 = vunpack.c.l.s4 1966171168
    %v1623 = vunpack.c.0.s8 %v1622
    %v1624 = vlaneseq
    %v1625 = vshrl.u32 %v1624, 7
    %v1626 = vsub.s32 %v1623, %v1625
    %v1627 = vrot.slane %v1611, %v1626
    %v1629 = vunpack.c.l.s4 1966171168
    %v1630 = vunpack.c.0.s8 %v1629
    %v1631 = vlaneseq
    %v1632 = vshrl.u32 %v1631, 7
    %v1633 = vsub.s32 %v1630, %v1632
    %v1634 = vrot.slane %v1612, %v1633
    %v1636 = vunpack.c.l.s4 1966171168
    %v1637 = vunpack.c.0.s8 %v1636
    %v1638 = vlaneseq
    %v1639 = vshrl.u32 %v1638, 7
    %v1640 = vsub.s32 %v1637, %v1639
    %v1641 = vrot.slane %v1613, %v1640
    %v1642 = vcombine.high %v1620, %v1620
    %v1643 = vcombine.high %v1627, %v1627
    %v1644 = vcombine.high %v1634, %v1634
    %v1645 = vcombine.high %v1641, %v1641
    %v1646 = vcombine.high %v40, %v40
    %v1648 = vunpack.c.l.s4 1966171168
    %v1649 = vunpack.c.0.s8 %v1648
    %v1650 = vlaneseq
    %v1651 = vshrl.u32 %v1650, 7
    %v1652 = vsub.s32 %v1649, %v1651
    %v1653 = vrot.slane %v40, %v1652
    %v1655 = vunpack.c.l.s4 1966171168
    %v1656 = vunpack.c.0.s8 %v1655
    %v1657 = vlaneseq
    %v1658 = vshrl.u32 %v1657, 7
    %v1659 = vsub.s32 %v1656, %v1658
    %v1660 = vrot.slane %v1646, %v1659
    %v1661 = vcombine.high %v1653, %v1653
    %v1662 = vcombine.high %v1660, %v1660
    %v1664 = vunpack.c.l.s4 1966171168
    %v1665 = vunpack.c.0.s8 %v1664
    %v1666 = vlaneseq
    %v1667 = vshrl.u32 %v1666, 7
    %v1668 = vsub.s32 %v1665, %v1667
    %v1669 = vrot.slane %v1653, %v1668
    %v1671 = vunpack.c.l.s4 1966171168
    %v1672 = vunpack.c.0.s8 %v1671
    %v1673 = vlaneseq
    %v1674 = vshrl.u32 %v1673, 7
    %v1675 = vsub.s32 %v1672, %v1674
    %v1676 = vrot.slane %v1660, %v1675
    %v1678 = vunpack.c.l.s4 1966171168
    %v1679 = vunpack.c.0.s8 %v1678
    %v1680 = vlaneseq
    %v1681 = vshrl.u32 %v1680, 7
    %v1682 = vsub.s32 %v1679, %v1681
    %v1683 = vrot.slane %v1661, %v1682
    %v1685 = vunpack.c.l.s4 1966171168
    %v1686 = vunpack.c.0.s8 %v1685
    %v1687 = vlaneseq
    %v1688 = vshrl.u32 %v1687, 7
    %v1689 = vsub.s32 %v1686, %v1688
    %v1690 = vrot.slane %v1662, %v1689
    %v1691 = vcombine.high %v1669, %v1669
    %v1692 = vcombine.high %v1676, %v1676
    %v1693 = vcombine.high %v1683, %v1683
    %v1694 = vcombine.high %v1690, %v1690
    %v1695 = vcombine.high %v41, %v41
    %v1697 = vunpack.c.l.s4 1966171168
    %v1698 = vunpack.c.0.s8 %v1697
    %v1699 = vlaneseq
    %v1700 = vshrl.u32 %v1699, 7
    %v1701 = vsub.s32 %v1698, %v1700
    %v1702 = vrot.slane %v41, %v1701
    %v1704 = vunpack.c.l.s4 1966171168
    %v1705 = vunpack.c.0.s8 %v1704
    %v1706 = vlaneseq
    %v1707 = vshrl.u32 %v1706, 7
    %v1708 = vsub.s32 %v1705, %v1707
    %v1709 = vrot.slane %v1695, %v1708
    %v1710 = vcombine.high %v1702, %v1702
    %v1711 = vcombine.high %v1709, %v1709
    %v1713 = vunpack.c.l.s4 1966171168
    %v1714 = vunpack.c.0.s8 %v1713
    %v1715 = vlaneseq
    %v1716 = vshrl.u32 %v1715, 7
    %v1717 = vsub.s32 %v1714, %v1716
    %v1718 = vrot.slane %v1702, %v1717
    %v1720 = vunpack.c.l.s4 1966171168
    %v1721 = vunpack.c.0.s8 %v1720
    %v1722 = vlaneseq
    %v1723 = vshrl.u32 %v1722, 7
    %v1724 = vsub.s32 %v1721, %v1723
    %v1725 = vrot.slane %v1709, %v1724
    %v1727 = vunpack.c.l.s4 1966171168
    %v1728 = vunpack.c.0.s8 %v1727
    %v1729 = vlaneseq
    %v1730 = vshrl.u32 %v1729, 7
    %v1731 = vsub.s32 %v1728, %v1730
    %v1732 = vrot.slane %v1710, %v1731
    %v1734 = vunpack.c.l.s4 1966171168
    %v1735 = vunpack.c.0.s8 %v1734
    %v1736 = vlaneseq
    %v1737 = vshrl.u32 %v1736, 7
    %v1738 = vsub.s32 %v1735, %v1737
    %v1739 = vrot.slane %v1711, %v1738
    %v1740 = vcombine.high %v1718, %v1718
    %v1741 = vcombine.high %v1725, %v1725
    %v1742 = vcombine.high %v1732, %v1732
    %v1743 = vcombine.high %v1739, %v1739
    %v1744 = vcombine.high %v42, %v42
    %v1746 = vunpack.c.l.s4 1966171168
    %v1747 = vunpack.c.0.s8 %v1746
    %v1748 = vlaneseq
    %v1749 = vshrl.u32 %v1748, 7
    %v1750 = vsub.s32 %v1747, %v1749
    %v1751 = vrot.slane %v42, %v1750
    %v1753 = vunpack.c.l.s4 1966171168
    %v1754 = vunpack.c.0.s8 %v1753
    %v1755 = vlaneseq
    %v1756 = vshrl.u32 %v1755, 7
    %v1757 = vsub.s32 %v1754, %v1756
    %v1758 = vrot.slane %v1744, %v1757
    %v1759 = vcombine.high %v1751, %v1751
    %v1760 = vcombine.high %v1758, %v1758
    %v1762 = vunpack.c.l.s4 1966171168
    %v1763 = vunpack.c.0.s8 %v1762
    %v1764 = vlaneseq
    %v1765 = vshrl.u32 %v1764, 7
    %v1766 = vsub.s32 %v1763, %v1765
    %v1767 = vrot.slane %v1751, %v1766
    %v1769 = vunpack.c.l.s4 1966171168
    %v1770 = vunpack.c.0.s8 %v1769
    %v1771 = vlaneseq
    %v1772 = vshrl.u32 %v1771, 7
    %v1773 = vsub.s32 %v1770, %v1772
    %v1774 = vrot.slane %v1758, %v1773
    %v1776 = vunpack.c.l.s4 1966171168
    %v1777 = vunpack.c.0.s8 %v1776
    %v1778 = vlaneseq
    %v1779 = vshrl.u32 %v1778, 7
    %v1780 = vsub.s32 %v1777, %v1779
    %v1781 = vrot.slane %v1759, %v1780
    %v1783 = vunpack.c.l.s4 1966171168
    %v1784 = vunpack.c.0.s8 %v1783
    %v1785 = vlaneseq
    %v1786 = vshrl.u32 %v1785, 7
    %v1787 = vsub.s32 %v1784, %v1786
    %v1788 = vrot.slane %v1760, %v1787
    %v1789 = vcombine.high %v1767, %v1767
    %v1790 = vcombine.high %v1774, %v1774
    %v1791 = vcombine.high %v1781, %v1781
    %v1792 = vcombine.high %v1788, %v1788
    %v1793 = vcombine.high %v43, %v43
    %v1795 = vunpack.c.l.s4 1966171168
    %v1796 = vunpack.c.0.s8 %v1795
    %v1797 = vlaneseq
    %v1798 = vshrl.u32 %v1797, 7
    %v1799 = vsub.s32 %v1796, %v1798
    %v1800 = vrot.slane %v43, %v1799
    %v1802 = vunpack.c.l.s4 1966171168
    %v1803 = vunpack.c.0.s8 %v1802
    %v1804 = vlaneseq
    %v1805 = vshrl.u32 %v1804, 7
    %v1806 = vsub.s32 %v1803, %v1805
    %v1807 = vrot.slane %v1793, %v1806
    %v1808 = vcombine.high %v1800, %v1800
    %v1809 = vcombine.high %v1807, %v1807
    %v1811 = vunpack.c.l.s4 1966171168
    %v1812 = vunpack.c.0.s8 %v1811
    %v1813 = vlaneseq
    %v1814 = vshrl.u32 %v1813, 7
    %v1815 = vsub.s32 %v1812, %v1814
    %v1816 = vrot.slane %v1800, %v1815
    %v1818 = vunpack.c.l.s4 1966171168
    %v1819 = vunpack.c.0.s8 %v1818
    %v1820 = vlaneseq
    %v1821 = vshrl.u32 %v1820, 7
    %v1822 = vsub.s32 %v1819, %v1821
    %v1823 = vrot.slane %v1807, %v1822
    %v1825 = vunpack.c.l.s4 1966171168
    %v1826 = vunpack.c.0.s8 %v1825
    %v1827 = vlaneseq
    %v1828 = vshrl.u32 %v1827, 7
    %v1829 = vsub.s32 %v1826, %v1828
    %v1830 = vrot.slane %v1808, %v1829
    %v1832 = vunpack.c.l.s4 1966171168
    %v1833 = vunpack.c.0.s8 %v1832
    %v1834 = vlaneseq
    %v1835 = vshrl.u32 %v1834, 7
    %v1836 = vsub.s32 %v1833, %v1835
    %v1837 = vrot.slane %v1809, %v1836
    %v1838 = vcombine.high %v1816, %v1816
    %v1839 = vcombine.high %v1823, %v1823
    %v1840 = vcombine.high %v1830, %v1830
    %v1841 = vcombine.high %v1837, %v1837
    %v1843 = vunpack.c.l.s4 1966171168
    %v1844 = vunpack.c.0.s8 %v1843
    %v1845 = vlaneseq
    %v1846 = vshrl.u32 %v1845, 7
    %v1847 = vsub.s32 %v1844, %v1846
    %v1848 = vrot.slane %v44, %v1847
    %v1850 = vunpack.c.l.s4 1966171168
    %v1851 = vunpack.c.0.s8 %v1850
    %v1852 = vlaneseq
    %v1853 = vshrl.u32 %v1852, 7
    %v1854 = vsub.s32 %v1851, %v1853
    %v1855 = vrot.slane %v1848, %v1854
    %v3233 = vunpack.c.l.b16 %v45
    %v3234 = vunpack.c.l.b16 %v46
    %v3235 = vunpack.c.l.b16 %v47
    %v3236 = vunpack.c.l.b16 %v48
    %v3237 = vunpack.c.l.b16 %v49
    %v3238 = vunpack.c.l.b16 %v50
    %v3239 = vunpack.c.l.b16 %v51
    %v3240 = vunpack.c.l.b16 %v52
    %v3241 = vunpack.c.l.b16 %v53
    %v3242 = vunpack.c.l.b16 %v54
    %v3243 = vunpack.c.l.b16 %v55
    %v3244 = vunpack.c.l.b16 %v56
    %v3245 = vunpack.c.l.b16 %v57
    %v3246 = vunpack.c.l.b16 %v58
    %v3247 = vunpack.c.l.b16 %v59
    %v3248 = vunpack.c.l.b16 %v60
    %v3249 = vunpack.c.l.b16 %v61
    %v3250 = vunpack.c.l.b16 %v62
    %v3251 = vunpack.c.l.b16 %v63
    %v3252 = vunpack.c.l.b16 %v64
    %v3253 = vunpack.c.l.b16 %v65
    %v3254 = vunpack.c.l.b16 %v66
    %v3255 = vunpack.c.l.b16 %v67
    %v3256 = vunpack.c.l.b16 %v68
    %v3257 = vunpack.c.l.b16 %v69
    %v3258 = vunpack.c.l.b16 %v70
    %v3259 = vunpack.c.l.b16 %v71
    %v3260 = vunpack.c.l.b16 %v72
    %v3261 = vunpack.c.l.b16 %v73
    %v3262 = vunpack.c.l.b16 %v74
    %v3263 = vunpack.c.l.b16 %v75
    %v3264 = vunpack.c.l.b16 %v76
    %v3265 = vunpack.c.l.b16 %v77
    %v3266 = vunpack.c.l.b16 %v78
    %v3267 = vunpack.c.l.b16 %v79
    %v3268 = vunpack.c.l.b16 %v80
    %v3269 = vunpack.c.l.b16 %v81
    %v3270 = vunpack.c.l.b16 %v82
    %v3271 = vunpack.c.l.b16 %v83
    %v3272 = vunpack.c.l.b16 %v84
    %v3273 = vunpack.c.l.b16 %v85
    %v3274 = vunpack.c.l.b16 %v86
    %v3275 = vunpack.c.l.b16 %v87
    %v3276 = vunpack.c.l.b16 %v88
    %v3277 = vunpack.c.l.b16 %v89
    %v3278 = vunpack.c.l.b16 %v90
    %v3279 = vunpack.c.l.b16 %v91
    %v3280 = vunpack.c.l.b16 %v92
    %v3281 = vunpack.c.l.b16 %v93
    %v3282 = vunpack.c.l.b16 %v94
    %v3283 = vunpack.c.l.b16 %v95
    %v3284 = vunpack.c.l.b16 %v96
    %v3285 = vunpack.c.l.b16 %v97
    %v3286 = vunpack.c.l.b16 %v98
    %v3287 = vunpack.c.l.b16 %v99
    %v3288 = vunpack.c.l.b16 %v100
    %v3289 = vunpack.c.l.b16 %v101
    %v3290 = vunpack.c.l.b16 %v102
    %v3291 = vunpack.c.l.b16 %v103
    %v3292 = vunpack.c.l.b16 %v104
    %v3293 = vunpack.c.l.b16 %v105
    %v3294 = vunpack.c.l.b16 %v106
    %v3295 = vunpack.c.l.b16 %v107
    %v3296 = vunpack.c.l.b16 %v108
    %v3297 = vunpack.c.l.b16 %v109
    %v3298 = vunpack.c.l.b16 %v110
    %v3299 = vunpack.c.l.b16 %v111
    %v3300 = vunpack.c.l.b16 %v112
    %v3301 = vunpack.c.l.b16 %v113
    %v3302 = vunpack.c.l.b16 %v114
    %v3303 = vunpack.c.l.b16 %v115
    %v3304 = vunpack.c.l.b16 %v116
    %v3305 = vunpack.c.l.b16 %v117
    %v3306 = vunpack.c.l.b16 %v118
    %v3307 = vunpack.c.l.b16 %v119
    %v3308 = vunpack.c.l.b16 %v120
    %v3309 = vunpack.c.l.b16 %v121
    %v3310 = vunpack.c.l.b16 %v122
    %v3311 = vunpack.c.l.b16 %v123
    %v3312 = vunpack.c.l.b16 %v124
    %v3313 = vunpack.c.l.b16 %v125
    %v3314 = vunpack.c.l.b16 %v126
    %v3315 = vunpack.c.l.b16 %v127
    %v3316 = vunpack.c.l.b16 %v128
    %v3317 = vunpack.c.l.b16 %v129
    %v3318 = vunpack.c.l.b16 %v130
    %v3319 = vunpack.c.l.b16 %v131
    %v3320 = vunpack.c.l.b16 %v132
    %v3321 = vunpack.c.l.b16 %v133
    %v3322 = vunpack.c.l.b16 %v134
    %v3323 = vunpack.c.l.b16 %v135
    %v3324 = vunpack.c.l.b16 %v136
    %v3325 = vunpack.c.l.b16 %v137
    %v3326 = vunpack.c.l.b16 %v138
    %v3327 = vunpack.c.l.b16 %v139
    %v3328 = vunpack.c.l.b16 %v140
    %v3329 = vunpack.c.l.b16 %v141
    %v3330 = vunpack.c.l.b16 %v142
    %v3331 = vunpack.c.l.b16 %v143
    %v3332 = vunpack.c.l.b16 %v144
    %v3333 = vunpack.c.l.b16 %v145
    %v3334 = vunpack.c.l.b16 %v146
    %v3335 = vunpack.c.l.b16 %v147
    %v3336 = vunpack.c.l.b16 %v148
    %v3337 = vunpack.c.l.b16 %v149
    %v3338 = vunpack.c.l.b16 %v150
    %v3339 = vunpack.c.l.b16 %v151
    %v3340 = vunpack.c.l.b16 %v152
    %v3341 = vunpack.c.l.b16 %v153
    %v3342 = vunpack.c.l.b16 %v154
    %v3343 = vunpack.c.l.b16 %v155
    %v3344 = vunpack.c.l.b16 %v156
    %v3345 = vunpack.c.l.b16 %v157
    %v3346 = vunpack.c.l.b16 %v158
    %v3347 = vunpack.c.l.b16 %v159
    %v3348 = vunpack.c.l.b16 %v160
    %v3349 = vunpack.c.l.b16 %v161
    %v3350 = vunpack.c.l.b16 %v162
    %v3351 = vunpack.c.l.b16 %v163
    %v3352 = vunpack.c.l.b16 %v164
    %v3353 = vunpack.c.l.b16 %v165
    %v3354 = vunpack.c.l.b16 %v166
    %v3355 = vunpack.c.l.b16 %v167
    %v3356 = vunpack.c.l.b16 %v168
    %v3357 = vunpack.c.l.b16 %v169
    %v3358 = vunpack.c.l.b16 %v170
    %v3359 = vunpack.c.l.b16 %v171
    %v3360 = vunpack.c.l.b16 %v172
    %v3361 = vunpack.c.l.b16 %v173
    %v3362 = vunpack.c.l.b16 %v174
    %v3363 = vunpack.c.l.b16 %v175
    %v3364 = vunpack.c.l.b16 %v176
    %v3365 = vunpack.c.l.b16 %v177
    %v3366 = vunpack.c.l.b16 %v178
    %v3367 = vunpack.c.l.b16 %v179
    %v3368 = vunpack.c.l.b16 %v180
    %v3369 = vunpack.c.l.b16 %v181
    %v3370 = vunpack.c.l.b16 %v182
    %v3371 = vunpack.c.l.b16 %v183
    %v3372 = vunpack.c.l.b16 %v184
    %v3373 = vunpack.c.l.b16 %v185
    %v3374 = vunpack.c.l.b16 %v186
    %v3375 = vunpack.c.l.b16 %v187
    %v3376 = vunpack.c.l.b16 %v188
    %v3377 = vunpack.c.l.b16 %v189
    %v3378 = vunpack.c.l.b16 %v190
    %v3379 = vunpack.c.l.b16 %v191
    %v3380 = vunpack.c.l.b16 %v192
    %v3381 = vunpack.c.l.b16 %v193
    %v3382 = vunpack.c.l.b16 %v194
    %v3383 = vunpack.c.l.b16 %v195
    %v3384 = vunpack.c.l.b16 %v196
    %v3385 = vunpack.c.l.b16 %v197
    %v3386 = vunpack.c.l.b16 %v198
    %v3387 = vunpack.c.l.b16 %v199
    %v3388 = vunpack.c.l.b16 %v200
    %v3389 = vunpack.c.l.b16 %v201
    %v3390 = vunpack.c.l.b16 %v202
    %v3391 = vunpack.c.l.b16 %v203
    %v3392 = vunpack.c.l.b16 %v204
    %v3393 = vunpack.c.l.b16 %v205
    %v3394 = vunpack.c.l.b16 %v206
    %v3395 = vunpack.c.l.b16 %v207
    %v3396 = vunpack.c.l.b16 %v208
    %v3397 = vunpack.c.l.b16 %v209
    %v3398 = vunpack.c.l.b16 %v210
    %v3399 = vunpack.c.l.b16 %v211
    %v3400 = vunpack.c.l.b16 %v212
    %v3401 = vunpack.c.l.b16 %v213
    %v3402 = vunpack.c.l.b16 %v214
    %v3403 = vunpack.c.l.b16 %v215
    %v3404 = vunpack.c.l.b16 %v216
    %v3405 = vunpack.c.l.b16 %v217
    %v3406 = vunpack.c.l.b16 %v218
    %v3407 = vunpack.c.l.b16 %v219
    %v3408 = vunpack.c.l.b16 %v220
    %v3409 = vunpack.c.l.b16 %v221
    %v3410 = vunpack.c.l.b16 %v222
    %v3411 = vunpack.c.l.b16 %v223
    %v3412 = vunpack.c.l.b16 %v224
    %v3413 = vunpack.c.l.b16 %v225
    %v3414 = vunpack.c.l.b16 %v226
    %v3415 = vunpack.c.l.b16 %v227
    %v3416 = vunpack.c.l.b16 %v228
    %v3417 = vunpack.c.l.b16 %v229
    %v3418 = vunpack.c.l.b16 %v230
    %v3419 = vunpack.c.l.b16 %v231
    %v3420 = vunpack.c.l.b16 %v232
    %v3421 = vunpack.c.l.b16 %v233
    %v3422 = vunpack.c.l.b16 %v234
    %v3423 = vunpack.c.l.b16 %v235
    %v3424 = vunpack.c.l.b16 %v236
    %v3425 = vunpack.c.l.b16 %v237
    %v3426 = vunpack.c.l.b16 %v238
    %v3427 = vunpack.c.l.b16 %v239
    %v3428 = vunpack.c.l.b16 %v240
    %v3429 = vunpack.c.l.b16 %v241
    %v3430 = vunpack.c.l.b16 %v242
    %v3431 = vunpack.c.l.b16 %v243
    %v3432 = vunpack.c.l.b16 %v244
    %v3433 = vunpack.c.l.b16 %v245
    %v3434 = vunpack.c.l.b16 %v246
    %v3435 = vunpack.c.l.b16 %v247
    %v3436 = vunpack.c.l.b16 %v248
    %v3437 = vunpack.c.l.b16 %v249
    %v3438 = vunpack.c.l.b16 %v250
    %v3439 = vunpack.c.l.b16 %v251
    %v3440 = vunpack.c.l.b16 %v252
    %v3441 = vunpack.c.l.b16 %v253
    %v3442 = vunpack.c.l.b16 %v254
    %v3443 = vunpack.c.l.b16 %v255
    %v3444 = vunpack.c.l.b16 %v256
    %v3445 = vunpack.c.l.b16 %v257
    %v3446 = vunpack.c.l.b16 %v258
    %v3447 = vunpack.c.l.b16 %v259
    %v3448 = vunpack.c.l.b16 %v260
    %v3449 = vunpack.c.l.b16 %v261
    %v3450 = vunpack.c.l.b16 %v262
    %v3451 = vunpack.c.l.b16 %v263
    %v3452 = vunpack.c.l.b16 %v264
    %v3453 = vunpack.c.l.b16 %v265
    %v3454 = vunpack.c.l.b16 %v266
    %v3455 = vunpack.c.l.b16 %v267
    %v3456 = vunpack.c.l.b16 %v268
    %v3457 = vunpack.c.l.b16 %v269
    %v3458 = vunpack.c.l.b16 %v270
    %v3459 = vunpack.c.l.b16 %v271
    %v3460 = vunpack.c.l.b16 %v272
    %v3461 = vunpack.c.l.b16 %v273
    %v3462 = vunpack.c.l.b16 %v274
    %v3463 = vunpack.c.l.b16 %v275
    %v3464 = vunpack.c.l.b16 %v276
    %v3465 = vunpack.c.l.b16 %v277
    %v3466 = vunpack.c.l.b16 %v278
    %v3467 = vunpack.c.l.b16 %v279
    %v3468 = vunpack.c.l.b16 %v280
    %v3469 = vunpack.c.l.b16 %v281
    %v3470 = vunpack.c.l.b16 %v282
    %v3471 = vunpack.c.l.b16 %v283
    %v3472 = vunpack.c.l.b16 %v284
    %v3473 = vunpack.c.l.b16 %v285
    %v3474 = vunpack.c.l.b16 %v286
    %v3475 = vunpack.c.l.b16 %v287
    %v3476 = vunpack.c.l.b16 %v288
    %v3477 = vunpack.c.l.b16 %v289
    %v3478 = vunpack.c.l.b16 %v290
    %v3479 = vunpack.c.l.b16 %v291
    %v3480 = vunpack.c.l.b16 %v292
    %v3481 = vunpack.c.l.b16 %v293
    %v3482 = vunpack.c.l.b16 %v294
    %v3483 = vunpack.c.l.b16 %v295
    %v3484 = vunpack.c.l.b16 %v296
    %v3485 = vunpack.c.l.b16 %v297
    %v3486 = vunpack.c.l.b16 %v298
    %v3487 = vunpack.c.l.b16 %v299
    %v3488 = vunpack.c.l.b16 %v300
    %v3489 = vunpack.c.l.b16 %v301
    %v3490 = vunpack.c.l.b16 %v302
    %v3491 = vunpack.c.l.b16 %v303
    %v3492 = vunpack.c.l.b16 %v304
    %v3493 = vunpack.c.l.b16 %v305
    %v3494 = vunpack.c.l.b16 %v306
    %v3495 = vunpack.c.l.b16 %v307
    %v3496 = vunpack.c.l.b16 %v308
    %v3497 = vunpack.c.l.b16 %v309
    %v3498 = vunpack.c.l.b16 %v310
    %v3499 = vunpack.c.l.b16 %v311
    %v3500 = vunpack.c.l.b16 %v312
    %v3501 = vunpack.c.l.b16 %v313
    %v3502 = vunpack.c.l.b16 %v314
    %v3503 = vunpack.c.l.b16 %v315
    %v3504 = vunpack.c.l.b16 %v316
    %v3505 = vunpack.c.l.b16 %v317
    %v3506 = vunpack.c.l.b16 %v318
    %v3507 = vunpack.c.l.b16 %v319
    %v3508 = vunpack.c.l.b16 %v320
    %v3509 = vunpack.c.l.b16 %v321
    %v3510 = vunpack.c.l.b16 %v322
    %v3511 = vunpack.c.l.b16 %v323
    %v3512 = vunpack.c.l.b16 %v324
    %v3513 = vunpack.c.l.b16 %v325
    %v3514 = vunpack.c.l.b16 %v326
    %v3515 = vunpack.c.l.b16 %v327
    %v3516 = vunpack.c.l.b16 %v328
    %v3517 = vunpack.c.l.b16 %v329
    %v3518 = vunpack.c.l.b16 %v330
    %v3519 = vunpack.c.l.b16 %v331
    %v3520 = vunpack.c.l.b16 %v332
    %v3521 = vunpack.c.l.b16 %v333
    %v3522 = vunpack.c.l.b16 %v334
    %v3523 = vunpack.c.l.b16 %v335
    %v3524 = vunpack.c.l.b16 %v336
    %v3525 = vunpack.c.l.b16 %v337
    %v3526 = vunpack.c.l.b16 %v338
    %v3527 = vunpack.c.l.b16 %v339
    %v3528 = vunpack.c.l.b16 %v340
    %v3529 = vunpack.c.l.b16 %v341
    %v3530 = vunpack.c.l.b16 %v342
    %v3531 = vunpack.c.l.b16 %v343
    %v3532 = vunpack.c.l.b16 %v344
    %v3533 = vunpack.c.l.b16 %v345
    %v3534 = vunpack.c.l.b16 %v346
    %v3535 = vunpack.c.l.b16 %v347
    %v3536 = vunpack.c.l.b16 %v348
    %v3537 = vunpack.c.l.b16 %v349
    %v3538 = vunpack.c.l.b16 %v350
    %v3539 = vunpack.c.l.b16 %v351
    %v3540 = vunpack.c.l.b16 %v352
    %v3541 = vunpack.c.l.b16 %v353
    %v3542 = vunpack.c.l.b16 %v354
    %v3543 = vunpack.c.l.b16 %v355
    %v3544 = vunpack.c.l.b16 %v356
    %v3545 = vunpack.c.l.b16 %v357
    %v3546 = vunpack.c.l.b16 %v358
    %v3547 = vunpack.c.l.b16 %v359
    %v3548 = vunpack.c.l.b16 %v360
    %v3549 = vunpack.c.l.b16 %v361
    %v3550 = vunpack.c.l.b16 %v362
    %v3551 = vunpack.c.l.b16 %v363
    %v3552 = vunpack.c.l.b16 %v364
    %v3553 = vunpack.c.l.b16 %v365
    %v3554 = vunpack.c.l.b16 %v366
    %v3555 = vunpack.c.l.b16 %v367
    %v3556 = vunpack.c.l.b16 %v368
    %v3557 = vunpack.c.l.b16 %v369
    %v3558 = vunpack.c.l.b16 %v370
    %v3559 = vunpack.c.l.b16 %v371
    %v3560 = vunpack.c.l.b16 %v372
    %v3561 = vunpack.c.l.b16 %v373
    %v3562 = vunpack.c.l.b16 %v374
    %v3563 = vunpack.c.l.b16 %v375
    %v3564 = vunpack.c.l.b16 %v376
    %v3565 = vunpack.c.l.b16 %v377
    %v3566 = vunpack.c.l.b16 %v378
    %v3567 = vunpack.c.l.b16 %v379
    %v3568 = vunpack.c.l.b16 %v380
    %v3569 = vunpack.c.l.b16 %v381
    %v3570 = vunpack.c.l.b16 %v382
    %v3571 = vunpack.c.l.b16 %v383
    %v3572 = vunpack.c.l.b16 %v384
    %v3573 = vunpack.c.l.b16 %v385
    %v3574 = vunpack.c.l.b16 %v386
    %v3575 = vunpack.c.l.b16 %v387
    %v3576 = vunpack.c.l.b16 %v388
    %v3577 = vunpack.c.l.b16 %v389
    %v3578 = vunpack.c.l.b16 %v390
    %v3579 = vunpack.c.l.b16 %v391
    %v3580 = vunpack.c.l.b16 %v392
    %v3581 = vunpack.c.l.b16 %v393
    %v3582 = vunpack.c.l.b16 %v394
    %v3583 = vunpack.c.l.b16 %v395
    %v3584 = vunpack.c.l.b16 %v396
    %v3585 = vunpack.c.l.b16 %v397
    %v3586 = vunpack.c.l.b16 %v398
    %v3587 = vunpack.c.l.b16 %v399
    %v3588 = vunpack.c.l.b16 %v400
    %v3589 = vunpack.c.l.b16 %v401
    %v3590 = vunpack.c.l.b16 %v402
    %v3591 = vunpack.c.l.b16 %v403
    %v3592 = vunpack.c.l.b16 %v404
    %v3593 = vunpack.c.l.b16 %v405
    %v3594 = vunpack.c.l.b16 %v406
    %v3595 = vunpack.c.l.b16 %v407
    %v3596 = vunpack.c.l.b16 %v408
    %v3597 = vunpack.c.l.b16 %v409
    %v3598 = vunpack.c.l.b16 %v410
    %v3599 = vunpack.c.l.b16 %v411
    %v3600 = vunpack.c.l.b16 %v412
    %v3601 = vunpack.c.l.b16 %v413
    %v3602 = vunpack.c.l.b16 %v414
    %v3603 = vunpack.c.l.b16 %v415
    %v3604 = vunpack.c.l.b16 %v416
    %v3605 = vunpack.c.l.b16 %v417
    %v3606 = vunpack.c.l.b16 %v418
    %v3607 = vunpack.c.l.b16 %v419
    %v3608 = vunpack.c.l.b16 %v420
    %v3609 = vunpack.c.l.b16 %v421
    %v3610 = vunpack.c.l.b16 %v422
    %v3611 = vunpack.c.l.b16 %v423
    %v3612 = vunpack.c.l.b16 %v424
    %v3613 = vunpack.c.l.b16 %v425
    %v3614 = vunpack.c.l.b16 %v426
    %v3615 = vunpack.c.l.b16 %v427
    %v3616 = vunpack.c.l.b16 %v428
    %v3617 = vunpack.c.l.b16 %v429
    %v3618 = vunpack.c.l.b16 %v430
    %v3619 = vunpack.c.l.b16 %v431
    %v3620 = vunpack.c.l.b16 %v432
    %v3621 = vunpack.c.l.b16 %v433
    %v3622 = vunpack.c.l.b16 %v434
    %v3623 = vunpack.c.l.b16 %v435
    %v3624 = vunpack.c.l.b16 %v436
    %v3625 = vunpack.c.l.b16 %v437
    %v3626 = vunpack.c.l.b16 %v438
    %v3627 = vunpack.c.l.b16 %v439
    %v3628 = vunpack.c.l.b16 %v440
    %v3629 = vunpack.c.l.b16 %v441
    %v3630 = vunpack.c.l.b16 %v442
    %v3631 = vunpack.c.l.b16 %v443
    %v3632 = vunpack.c.l.b16 %v444
    %v3633 = vunpack.c.l.b16 %v445
    %v3634 = vunpack.c.l.b16 %v446
    %v3635 = vunpack.c.l.b16 %v447
    %v3636 = vunpack.c.l.b16 %v448
    %v3637 = vunpack.c.l.b16 %v449
    %v3638 = vunpack.c.l.b16 %v450
    %v3639 = vunpack.c.l.b16 %v451
    %v3640 = vunpack.c.l.b16 %v452
    %v3641 = vunpack.c.l.b16 %v453
    %v3642 = vunpack.c.l.b16 %v454
    %v3643 = vunpack.c.l.b16 %v455
    %v3644 = vunpack.c.l.b16 %v456
    %v3645 = vunpack.c.l.b16 %v457
    %v3646 = vunpack.c.l.b16 %v458
    %v3647 = vunpack.c.l.b16 %v459
    %v3648 = vunpack.c.l.b16 %v460
    %v3649 = vunpack.c.l.b16 %v461
    %v3650 = vunpack.c.l.b16 %v462
    %v3651 = vunpack.c.l.b16 %v463
    %v3652 = vunpack.c.l.b16 %v464
    %v3653 = vunpack.c.l.b16 %v465
    %v3654 = vunpack.c.l.b16 %v466
    %v3655 = vunpack.c.l.b16 %v467
    %v3656 = vunpack.c.l.b16 %v468
    %v3657 = vunpack.c.l.b16 %v469
    %v3658 = vunpack.c.l.b16 %v470
    %v3659 = vunpack.c.l.b16 %v471
    %v3660 = vunpack.c.l.b16 %v472
    %v3661 = vunpack.c.l.b16 %v473
    %v3662 = vunpack.c.l.b16 %v474
    %v3663 = vunpack.c.l.b16 %v475
    %v3664 = vunpack.c.l.b16 %v476
    %v3665 = vunpack.c.l.b16 %v477
    %v3666 = vunpack.c.l.b16 %v478
    %v3667 = vunpack.c.l.b16 %v479
    %v3668 = vunpack.c.l.b16 %v480
    %v3669 = vunpack.c.l.b16 %v481
    %v3670 = vunpack.c.l.b16 %v482
    %v3671 = vunpack.c.l.b16 %v483
    %v3672 = vunpack.c.l.b16 %v484
    %v3673 = vunpack.c.l.b16 %v485
    %v3674 = vunpack.c.l.b16 %v486
    %v3675 = vunpack.c.l.b16 %v487
    %v3676 = vunpack.c.l.b16 %v488
    %v3677 = vunpack.c.l.b16 %v489
    %v3678 = vunpack.c.l.b16 %v490
    %v3679 = vunpack.c.l.b16 %v491
    %v3680 = vunpack.c.l.b16 %v492
    %v3681 = vunpack.c.l.b16 %v493
    %v3682 = vunpack.c.l.b16 %v494
    %v3683 = vunpack.c.l.b16 %v495
    %v3684 = vunpack.c.l.b16 %v496
    %v3685 = vunpack.c.l.b16 %v497
    %v3686 = vunpack.c.l.b16 %v498
    %v3687 = vunpack.c.l.b16 %v499
    %v3688 = vunpack.c.l.b16 %v500
    %v3689 = vunpack.c.l.b16 %v501
    %v3690 = vunpack.c.l.b16 %v502
    %v3691 = vunpack.c.l.b16 %v503
    %v3692 = vunpack.c.l.b16 %v504
    %v3693 = vunpack.c.l.b16 %v505
    %v3694 = vunpack.c.l.b16 %v506
    %v3695 = vunpack.c.l.b16 %v507
    %v3696 = vunpack.c.l.b16 %v508
    %v3697 = vunpack.c.l.b16 %v509
    %v3698 = vunpack.c.l.b16 %v510
    %v3699 = vunpack.c.l.b16 %v511
    %v3700 = vunpack.c.l.b16 %v512
    %v3701 = vunpack.c.l.b16 %v513
    %v3702 = vunpack.c.l.b16 %v514
    %v3703 = vunpack.c.l.b16 %v515
    %v3704 = vunpack.c.l.b16 %v516
    %v3705 = vunpack.c.l.b16 %v517
    %v3706 = vunpack.c.l.b16 %v518
    %v3707 = vunpack.c.l.b16 %v519
    %v3708 = vunpack.c.l.b16 %v520
    %v3709 = vunpack.c.l.b16 %v521
    %v3710 = vunpack.c.l.b16 %v522
    %v3711 = vunpack.c.l.b16 %v523
    %v3712 = vunpack.c.l.b16 %v524
    %v3713 = vunpack.c.l.b16 %v525
    %v3714 = vunpack.c.l.b16 %v526
    %v3715 = vunpack.c.l.b16 %v527
    %v3716 = vunpack.c.l.b16 %v528
    %v3717 = vunpack.c.l.b16 %v529
    %v3718 = vunpack.c.l.b16 %v530
    %v3719 = vunpack.c.l.b16 %v531
    %v3720 = vunpack.c.l.b16 %v532
    %v3721 = vunpack.c.l.b16 %v533
    %v3722 = vunpack.c.l.b16 %v534
    %v3723 = vunpack.c.l.b16 %v535
    %v3724 = vunpack.c.l.b16 %v536
    %v3725 = vunpack.c.l.b16 %v537
    %v3726 = vunpack.c.l.b16 %v538
    %v3727 = vunpack.c.l.b16 %v539
    %v3728 = vunpack.c.l.b16 %v540
    %v3729 = vunpack.c.l.b16 %v541
    %v3730 = vunpack.c.l.b16 %v542
    %v3731 = vunpack.c.l.b16 %v543
    %v3732 = vunpack.c.l.b16 %v544
    %v3733 = vunpack.c.l.b16 %v545
    %v3734 = vunpack.c.l.b16 %v546
    %v3735 = vunpack.c.l.b16 %v547
    %v3736 = vunpack.c.l.b16 %v548
    %v3737 = vunpack.c.l.b16 %v549
    %v3738 = vunpack.c.l.b16 %v550
    %v3739 = vunpack.c.l.b16 %v551
    %v3740 = vunpack.c.l.b16 %v552
    %v3741 = vunpack.c.l.b16 %v553
    %v3742 = vunpack.c.l.b16 %v554
    %v3743 = vunpack.c.l.b16 %v555
    %v3744 = vunpack.c.l.b16 %v556
    %v3745 = vunpack.c.l.b16 %v557
    %v3746 = vunpack.c.l.b16 %v558
    %v3747 = vunpack.c.l.b16 %v559
    %v3748 = vunpack.c.l.b16 %v560
    %v3749 = vunpack.c.l.b16 %v561
    %v3750 = vunpack.c.l.b16 %v562
    %v3751 = vunpack.c.l.b16 %v563
    %v3752 = vunpack.c.l.b16 %v564
    %v3753 = vunpack.c.l.b16 %v565
    %v3754 = vunpack.c.l.b16 %v566
    %v3755 = vunpack.c.l.b16 %v567
    %v3756 = vunpack.c.l.b16 %v568
    %v3757 = vunpack.c.l.b16 %v569
    %v3758 = vunpack.c.l.b16 %v570
    %v3759 = vunpack.c.l.b16 %v571
    %v3760 = vunpack.c.l.b16 %v572
    %v3761 = vunpack.c.l.b16 %v573
    %v3762 = vunpack.c.l.b16 %v574
    %v3763 = vunpack.c.l.b16 %v575
    %v3764 = vunpack.c.l.b16 %v576
    %v3765 = vunpack.c.l.b16 %v577
    %v3766 = vunpack.c.l.b16 %v578
    %v3767 = vunpack.c.l.b16 %v579
    %v3768 = vunpack.c.l.b16 %v580
    %v3769 = vunpack.c.l.b16 %v581
    %v3770 = vunpack.c.l.b16 %v582
    %v3771 = vunpack.c.l.b16 %v583
    %v3772 = vunpack.c.l.b16 %v584
    %v3773 = vunpack.c.l.b16 %v585
    %v3774 = vunpack.c.l.b16 %v586
    %v3775 = vunpack.c.l.b16 %v587
    %v3776 = vunpack.c.l.b16 %v588
    %v3777 = vunpack.c.l.b16 %v589
    %v3778 = vunpack.c.l.b16 %v590
    %v3779 = vunpack.c.l.b16 %v591
    %v3780 = vunpack.c.l.b16 %v592
    %v3781 = vunpack.c.l.b16 %v593
    %v3782 = vunpack.c.l.b16 %v594
    %v3783 = vunpack.c.l.b16 %v595
    %v3784 = vunpack.c.l.b16 %v596
    %v3785 = vunpack.c.l.b16 %v597
    %v3786 = vunpack.c.l.b16 %v598
    %v3787 = vunpack.c.l.b16 %v599
    %v3788 = vunpack.c.l.b16 %v600
    %v3789 = vunpack.c.l.b16 %v601
    %v3790 = vunpack.c.l.b16 %v602
    %v3791 = vunpack.c.l.b16 %v603
    %v3792 = vunpack.c.l.b16 %v604
    %v3793 = vunpack.c.l.b16 %v605
    %v3794 = vunpack.c.l.b16 %v606
    %v3795 = vunpack.c.l.b16 %v607
    %v3796 = vunpack.c.l.b16 %v608
    %v3797 = vunpack.c.l.b16 %v609
    %v3798 = vunpack.c.l.b16 %v610
    %v3799 = vunpack.c.l.b16 %v611
    %v3800 = vunpack.c.l.b16 %v612
    %v3801 = vunpack.c.l.b16 %v613
    %v3802 = vunpack.c.l.b16 %v614
    %v3803 = vunpack.c.l.b16 %v615
    %v3804 = vunpack.c.l.b16 %v616
    %v3805 = vunpack.c.l.b16 %v617
    %v3806 = vunpack.c.l.b16 %v618
    %v3807 = vunpack.c.l.b16 %v619
    %v3808 = vunpack.c.l.b16 %v620
    %v3809 = vunpack.c.l.b16 %v621
    %v3810 = vunpack.c.l.b16 %v622
    %v3811 = vunpack.c.l.b16 %v623
    %v3812 = vunpack.c.l.b16 %v624
    %v3813 = vunpack.c.l.b16 %v625
    %v3814 = vunpack.c.l.b16 %v626
    %v3815 = vunpack.c.l.b16 %v627
    %v3816 = vunpack.c.l.b16 %v628
    %v3817 = vunpack.c.l.b16 %v629
    %v3818 = vunpack.c.l.b16 %v630
    %v3819 = vunpack.c.l.b16 %v631
    %v3820 = vunpack.c.l.b16 %v632
    %v3821 = vunpack.c.l.b16 %v633
    %v3822 = vunpack.c.l.b16 %v634
    %v3823 = vunpack.c.l.b16 %v635
    %v3824 = vunpack.c.l.b16 %v636
    %v3825 = vunpack.c.l.b16 %v637
    %v3826 = vunpack.c.l.b16 %v638
    %v3827 = vunpack.c.l.b16 %v639
    %v3828 = vunpack.c.l.b16 %v640
    %v3829 = vunpack.c.l.b16 %v641
    %v3830 = vunpack.c.l.b16 %v642
    %v3831 = vunpack.c.l.b16 %v643
    %v3832 = vunpack.c.l.b16 %v644
    %v3833 = vunpack.c.l.b16 %v645
    %v3834 = vunpack.c.l.b16 %v646
    %v3835 = vunpack.c.l.b16 %v647
    %v3836 = vunpack.c.l.b16 %v648
    %v3837 = vunpack.c.l.b16 %v649
    %v3838 = vunpack.c.l.b16 %v650
    %v3839 = vunpack.c.l.b16 %v651
    %v3840 = vunpack.c.l.b16 %v652
    %v3841 = vunpack.c.l.b16 %v653
    %v3842 = vunpack.c.l.b16 %v654
    %v3843 = vunpack.c.l.b16 %v655
    %v3844 = vunpack.c.l.b16 %v656
    %v3845 = vunpack.c.l.b16 %v657
    %v3846 = vunpack.c.l.b16 %v658
    %v3847 = vunpack.c.l.b16 %v659
    %v3848 = vunpack.c.l.b16 %v660
    %v3849 = vunpack.c.l.b16 %v661
    %v3850 = vunpack.c.l.b16 %v662
    %v3851 = vunpack.c.l.b16 %v663
    %v3852 = vunpack.c.l.b16 %v664
    %v3853 = vunpack.c.l.b16 %v665
    %v3854 = vunpack.c.l.b16 %v666
    %v3855 = vunpack.c.l.b16 %v667
    %v3856 = vunpack.c.l.b16 %v668
    %v3857 = vunpack.c.l.b16 %v669
    %v3858 = vunpack.c.l.b16 %v670
    %v3859 = vunpack.c.l.b16 %v671
    %v3860 = vunpack.c.l.b16 %v672
    %v3861 = vunpack.c.l.b16 %v673
    %v3862 = vunpack.c.l.b16 %v674
    %v3863 = vunpack.c.l.b16 %v675
    %v3864 = vunpack.c.l.b16 %v676
    %v3865 = vunpack.c.l.b16 %v677
    %v3866 = vunpack.c.l.b16 %v678
    %v3867 = vunpack.c.l.b16 %v679
    %v3868 = vunpack.c.l.b16 %v680
    %v3869 = vunpack.c.l.b16 %v681
    %v3870 = vunpack.c.l.b16 %v682
    %v3871 = vunpack.c.l.b16 %v683
    %v3872 = vunpack.c.l.b16 %v684
    %v3873 = vunpack.c.l.b16 %v685
    %v3874 = vunpack.c.l.b16 %v686
    %v3875 = vunpack.c.l.b16 %v687
    %v3876 = vunpack.c.l.b16 %v688
    %v3877 = vunpack.c.l.b16 %v689
    %v3878 = vunpack.c.l.b16 %v690
    %v3879 = vunpack.c.l.b16 %v691
    %v3880 = vunpack.c.l.b16 %v692
    %v3881 = vunpack.c.l.b16 %v693
    %v3882 = vunpack.c.l.b16 %v694
    %v3883 = vunpack.c.l.b16 %v695
    %v3884 = vunpack.c.l.b16 %v696
    %v3885 = vunpack.c.l.b16 %v697
    %v3886 = vunpack.c.l.b16 %v698
    %v3887 = vunpack.c.l.b16 %v699
    %v3888 = vunpack.c.l.b16 %v700
    %v3889 = vunpack.c.l.b16 %v701
    %v3890 = vunpack.c.l.b16 %v702
    %v3891 = vunpack.c.l.b16 %v703
    %v3892 = vunpack.c.l.b16 %v704
    %v3893 = vunpack.c.l.b16 %v705
    %v3894 = vunpack.c.l.b16 %v706
    %v3895 = vunpack.c.l.b16 %v707
    %v3896 = vunpack.c.l.b16 %v708
    %v3897 = vunpack.c.l.b16 %v709
    %v3898 = vunpack.c.l.b16 %v710
    %v3899 = vunpack.c.l.b16 %v711
    %v3900 = vunpack.c.l.b16 %v712
    %v3901 = vunpack.c.l.b16 %v713
    %v3902 = vunpack.c.l.b16 %v714
    %v3903 = vunpack.c.l.b16 %v715
    %v3904 = vunpack.c.l.b16 %v716
    %v3905 = vunpack.c.l.b16 %v717
    %v3906 = vunpack.c.l.b16 %v718
    %v3907 = vunpack.c.l.b16 %v719
    %v3908 = vunpack.c.l.b16 %v720
    %v3909 = vunpack.c.l.b16 %v721
    %v3910 = vunpack.c.l.b16 %v722
    %v3911 = vunpack.c.l.b16 %v723
    %v3912 = vunpack.c.l.b16 %v724
    %v3913 = vunpack.c.l.b16 %v725
    %v3914 = vunpack.c.l.b16 %v726
    %v3915 = vunpack.c.l.b16 %v727
    %v3916 = vunpack.c.l.b16 %v728
    %v3917 = vunpack.c.l.b16 %v729
    %v3918 = vunpack.c.l.b16 %v730
    %v3919 = vunpack.c.l.b16 %v731
    %v3920 = vunpack.c.l.b16 %v732
    %v3921 = vunpack.c.l.b16 %v733
    %v3922 = vunpack.c.l.b16 %v734
    %v3923 = vunpack.c.l.b16 %v735
    %v3924 = vunpack.c.l.b16 %v736
    %v3925 = vunpack.c.l.b16 %v737
    %v3926 = vunpack.c.l.b16 %v738
    %v3927 = vunpack.c.l.b16 %v739
    %v3928 = vunpack.c.l.b16 %v740
    %v3929 = vunpack.c.l.b16 %v741
    %v3930 = vunpack.c.l.b16 %v742
    %v3931 = vunpack.c.l.b16 %v743
    %v3932 = vunpack.c.l.b16 %v744
    %v3933 = vunpack.c.l.b16 %v745
    %v3934 = vunpack.c.l.b16 %v746
    %v3935 = vunpack.c.l.b16 %v747
    %v3936 = vunpack.c.l.b16 %v748
    %v3937 = vunpack.c.l.b16 %v749
    %v3938 = vunpack.c.l.b16 %v750
    %v3939 = vunpack.c.l.b16 %v751
    %v3940 = vunpack.c.l.b16 %v752
    %v3941 = vunpack.c.l.b16 %v753
    %v3942 = vunpack.c.l.b16 %v754
    %v3943 = vunpack.c.l.b16 %v755
    %v3944 = vunpack.c.l.b16 %v756
    %v3945 = vunpack.c.l.b16 %v757
    %v3946 = vunpack.c.l.b16 %v758
    %v3947 = vunpack.c.l.b16 %v759
    %v3948 = vunpack.c.l.b16 %v760
    %v3949 = vunpack.c.l.b16 %v761
    %v3950 = vunpack.c.l.b16 %v762
    %v3951 = vunpack.c.l.b16 %v763
    %v3952 = vunpack.c.l.b16 %v764
    %v3953 = vunpack.c.l.b16 %v765
    %v3954 = vunpack.c.l.b16 %v766
    %v3955 = vunpack.c.l.b16 %v767
    %v3956 = vunpack.c.l.b16 %v768
    %v3957 = vunpack.c.l.b16 %v769
    %v3958 = vunpack.c.l.b16 %v770
    %v3959 = vunpack.c.l.b16 %v771
    %v3960 = vunpack.c.l.b16 %v772
    %v3961 = vunpack.c.l.b16 %v773
    %v3962 = vunpack.c.l.b16 %v774
    %v3963 = vunpack.c.l.b16 %v775
    %v3964 = vunpack.c.l.b16 %v776
    %v3965 = vunpack.c.l.b16 %v777
    %v3966 = vunpack.c.l.b16 %v778
    %v3967 = vunpack.c.l.b16 %v779
    %v3968 = vunpack.c.l.b16 %v780
    %v3969 = vunpack.c.l.b16 %v781
    %v3970 = vunpack.c.l.b16 %v782
    %v3971 = vunpack.c.l.b16 %v783
    %v3972 = vunpack.c.l.b16 %v784
    %v3973 = vunpack.c.l.b16 %v785
    %v3974 = vunpack.c.l.b16 %v786
    %v3975 = vunpack.c.l.b16 %v787
    %v3976 = vunpack.c.l.b16 %v788
    %v3977 = vunpack.c.l.b16 %v789
    %v3978 = vunpack.c.l.b16 %v790
    %v3979 = vunpack.c.l.b16 %v791
    %v3980 = vunpack.c.l.b16 %v792
    %v3981 = vunpack.c.l.b16 %v793
    %v3982 = vunpack.c.l.b16 %v794
    %v3983 = vunpack.c.l.b16 %v795
    %v3984 = vunpack.c.l.b16 %v796
    %v3985 = vunpack.c.l.b16 %v797
    %v3986 = vunpack.c.l.b16 %v798
    %v3987 = vunpack.c.l.b16 %v799
    %v3988 = vunpack.c.l.b16 %v800
    %v3989 = vunpack.c.l.b16 %v801
    %v3990 = vunpack.c.l.b16 %v802
    %v3991 = vunpack.c.l.b16 %v803
    %v3992 = vunpack.c.l.b16 %v804
    %v3993 = vunpack.c.l.b16 %v805
    %v3994 = vunpack.c.l.b16 %v806
    %v3995 = vunpack.c.l.b16 %v807
    %v3996 = vunpack.c.l.b16 %v808
    %v3997 = vunpack.c.l.b16 %v809
    %v3998 = vunpack.c.l.b16 %v810
    %v3999 = vunpack.c.l.b16 %v811
    %v4000 = vunpack.c.l.b16 %v812
    %v4001 = vunpack.c.l.b16 %v813
    %v4002 = vunpack.c.l.b16 %v814
    %v4003 = vunpack.c.l.b16 %v815
    %v4004 = vunpack.c.l.b16 %v816
    %v4005 = vunpack.c.l.b16 %v817
    %v4006 = vunpack.c.l.b16 %v818
    %v4007 = vunpack.c.l.b16 %v819
    %v4008 = vunpack.c.l.b16 %v820
    %v4009 = vunpack.c.l.b16 %v821
    %v4010 = vunpack.c.l.b16 %v822
    %v4011 = vunpack.c.l.b16 %v823
    %v4012 = vunpack.c.l.b16 %v824
    %v4013 = vunpack.c.l.b16 %v825
    %v4014 = vunpack.c.l.b16 %v826
    %v4015 = vunpack.c.l.b16 %v827
    %v4016 = vunpack.c.l.b16 %v828
    %v4017 = vunpack.c.l.b16 %v829
    %v4018 = vunpack.c.l.b16 %v830
    %v4019 = vunpack.c.l.b16 %v831
    %v4020 = vunpack.c.l.b16 %v832
    %v4021 = vunpack.c.l.b16 %v833
    %v4022 = vunpack.c.l.b16 %v834
    %v4023 = vunpack.c.l.b16 %v835
    %v4024 = vunpack.c.l.b16 %v836
    %v4025 = vunpack.c.l.b16 %v837
    %v4026 = vunpack.c.l.b16 %v838
    %v4027 = vunpack.c.l.b16 %v839
    %v4028 = vunpack.c.l.b16 %v840
    %v4029 = vunpack.c.l.b16 %v841
    %v4030 = vunpack.c.l.b16 %v842
    %v4031 = vunpack.c.l.b16 %v843
    %v4032 = vunpack.c.l.b16 %v844
    %v4033 = vunpack.c.l.b16 %v845
    %v4034 = vunpack.c.l.b16 %v846
    %v4035 = vunpack.c.l.b16 %v847
    %v4036 = vunpack.c.l.b16 %v848
    %v4037 = vunpack.c.l.b16 %v849
    %v4038 = vunpack.c.l.b16 %v850
    %v4039 = vunpack.c.l.b16 %v851
    %v4040 = vunpack.c.l.b16 %v852
    %v4041 = vunpack.c.l.b16 %v853
    %v4042 = vunpack.c.l.b16 %v854
    %v4043 = vunpack.c.l.b16 %v855
    %v4044 = vunpack.c.l.b16 %v856
    %v4045 = vunpack.c.l.b16 %v857
    %v4046 = vunpack.c.l.b16 %v858
    %v4047 = vunpack.c.l.b16 %v859
    %v4048 = vunpack.c.l.b16 %v860
    %v4049 = vunpack.c.l.b16 %v861
    %v4050 = vunpack.c.l.b16 %v862
    %v4051 = vunpack.c.l.b16 %v863
    %v4052 = vunpack.c.l.b16 %v864
    %v4053 = vunpack.c.l.b16 %v865
    %v4054 = vunpack.c.l.b16 %v866
    %v4055 = vunpack.c.l.b16 %v867
    %v4056 = vunpack.c.l.b16 %v868
    %v4057 = vunpack.c.l.b16 %v869
    %v4058 = vunpack.c.l.b16 %v870
    %v4059 = vunpack.c.l.b16 %v871
    %v4060 = vunpack.c.l.b16 %v872
    %v4061 = vunpack.c.l.b16 %v873
    %v4062 = vunpack.c.l.b16 %v874
    %v4063 = vunpack.c.l.b16 %v875
    %v4064 = vunpack.c.l.b16 %v876
    %v4065 = vunpack.c.l.b16 %v877
    %v4066 = vunpack.c.l.b16 %v878
    %v4067 = vunpack.c.l.b16 %v879
    %v4068 = vunpack.c.l.b16 %v880
    %v4069 = vunpack.c.l.b16 %v881
    %v4070 = vunpack.c.l.b16 %v882
    %v4071 = vunpack.c.l.b16 %v883
    %v4072 = vunpack.c.l.b16 %v884
    %v4073 = vunpack.c.l.b16 %v885
    %v4074 = vunpack.c.l.b16 %v886
    %v4075 = vunpack.c.l.b16 %v887
    %v4076 = vunpack.c.l.b16 %v888
    %v4077 = vunpack.c.l.b16 %v889
    %v4078 = vunpack.c.l.b16 %v890
    %v4079 = vunpack.c.l.b16 %v891
    %v4080 = vunpack.c.l.b16 %v892
    %v4081 = vunpack.c.l.b16 %v893
    %v4082 = vunpack.c.l.b16 %v894
    %v4083 = vunpack.c.l.b16 %v895
    %v4084 = vunpack.c.l.b16 %v896
    %v4085 = vunpack.c.l.b16 %v897
    %v4086 = vunpack.c.l.b16 %v898
    %v4087 = vunpack.c.l.b16 %v899
    %v4088 = vunpack.c.l.b16 %v900
    %v4089 = vunpack.c.l.b16 %v901
    %v4090 = vunpack.c.l.b16 %v902
    %v4091 = vunpack.c.l.b16 %v903
    %v4092 = vunpack.c.l.b16 %v904
    %v4093 = vunpack.c.l.b16 %v905
    %v4094 = vunpack.c.l.b16 %v906
    %v4095 = vunpack.c.l.b16 %v907
    %v4096 = vunpack.c.l.b16 %v908
    %v4097 = vunpack.c.l.b16 %v909
    %v4098 = vunpack.c.l.b16 %v910
    %v4099 = vunpack.c.l.b16 %v911
    %v4100 = vunpack.c.l.b16 %v912
    %v4101 = vunpack.c.l.b16 %v913
    %v4102 = vunpack.c.l.b16 %v914
    %v4103 = vunpack.c.l.b16 %v915
    %v4104 = vunpack.c.l.b16 %v916
    %v4105 = vunpack.c.l.b16 %v917
    %v4106 = vunpack.c.l.b16 %v918
    %v4107 = vunpack.c.l.b16 %v919
    %v4108 = vunpack.c.l.b16 %v920
    %v4109 = vunpack.c.l.b16 %v921
    %v4110 = vunpack.c.l.b16 %v922
    %v4111 = vunpack.c.l.b16 %v923
    %v4112 = vunpack.c.l.b16 %v924
    %v4113 = vunpack.c.l.b16 %v925
    %v4114 = vunpack.c.l.b16 %v926
    %v4115 = vunpack.c.l.b16 %v927
    %v4116 = vunpack.c.l.b16 %v928
    %v4117 = vunpack.c.l.b16 %v929
    %v4118 = vunpack.c.l.b16 %v930
    %v4119 = vunpack.c.l.b16 %v931
    %v4120 = vunpack.c.l.b16 %v932
    %v4121 = vunpack.c.l.b16 %v933
    %v4122 = vunpack.c.l.b16 %v934
    %v4123 = vunpack.c.l.b16 %v935
    %v4124 = vunpack.c.l.b16 %v936
    %v4125 = vunpack.c.l.b16 %v937
    %v4126 = vunpack.c.l.b16 %v938
    %v4127 = vunpack.c.l.b16 %v939
    %v4128 = vunpack.c.l.b16 %v940
    %v4129 = vunpack.c.l.b16 %v941
    %v4130 = vunpack.c.l.b16 %v942
    %v4131 = vunpack.c.l.b16 %v943
    %v4132 = vunpack.c.l.b16 %v944
    %v4133 = vunpack.c.l.b16 %v945
    %v4134 = vunpack.c.l.b16 %v946
    %v4135 = vunpack.c.l.b16 %v947
    %v4136 = vunpack.c.l.b16 %v948
    %v4137 = vunpack.c.l.b16 %v949
    %v4138 = vunpack.c.l.b16 %v950
    %v4139 = vunpack.c.l.b16 %v951
    %v4140 = vunpack.c.l.b16 %v952
    %v4141 = vunpack.c.l.b16 %v953
    %v4142 = vunpack.c.l.b16 %v954
    %v4143 = vunpack.c.l.b16 %v955
    %v4144 = vunpack.c.l.b16 %v956
    %v4145 = vunpack.c.l.b16 %v957
    %v4146 = vunpack.c.l.b16 %v958
    %v4147 = vunpack.c.l.b16 %v959
    %v4148 = vunpack.c.l.b16 %v960
    %v4149 = vunpack.c.l.b16 %v961
    %v4150 = vunpack.c.l.b16 %v962
    %v4151 = vunpack.c.l.b16 %v963
    %v4152 = vunpack.c.l.b16 %v964
    %v4153 = vunpack.c.l.b16 %v965
    %v4154 = vunpack.c.l.b16 %v966
    %v4155 = vunpack.c.l.b16 %v967
    %v4156 = vunpack.c.l.b16 %v968
    %v4157 = vunpack.c.l.b16 %v969
    %v4158 = vunpack.c.l.b16 %v970
    %v4159 = vunpack.c.l.b16 %v971
    %v4160 = vunpack.c.l.b16 %v972
    %v4161 = vunpack.c.l.b16 %v973
    %v4162 = vunpack.c.l.b16 %v974
    %v4163 = vunpack.c.l.b16 %v975
    %v4164 = vunpack.c.l.b16 %v976
    %v4165 = vunpack.c.l.b16 %v977
    %v4166 = vunpack.c.l.b16 %v978
    %v4167 = vunpack.c.l.b16 %v979
    %v4168 = vunpack.c.l.b16 %v980
    %v4169 = vunpack.c.l.b16 %v981
    %v4170 = vunpack.c.l.b16 %v982
    %v4171 = vunpack.c.l.b16 %v983
    %v4172 = vunpack.c.l.b16 %v984
    %v4173 = vunpack.c.l.b16 %v985
    %v4174 = vunpack.c.l.b16 %v986
    %v4175 = vunpack.c.l.b16 %v987
    %v4176 = vunpack.c.l.b16 %v988
    %v4177 = vunpack.c.l.b16 %v989
    %v4178 = vunpack.c.l.b16 %v990
    %v4179 = vunpack.c.l.b16 %v991
    %v4180 = vunpack.c.l.b16 %v992
    %v4181 = vunpack.c.l.b16 %v993
    %v4182 = vunpack.c.l.b16 %v994
    %v4183 = vunpack.c.l.b16 %v995
    %v4184 = vunpack.c.l.b16 %v996
    %v4185 = vunpack.c.l.b16 %v997
    %v4186 = vunpack.c.l.b16 %v998
    %v4187 = vunpack.c.l.b16 %v999
    %v4188 = vunpack.c.l.b16 %v1000
    %v4189 = vunpack.c.l.b16 %v1001
    %v4190 = vunpack.c.l.b16 %v1002
    %v4191 = vunpack.c.l.b16 %v1003
    %v4192 = vunpack.c.l.b16 %v1004
    %v4193 = vunpack.c.l.b16 %v1005
    %v4194 = vunpack.c.l.b16 %v1006
    %v4195 = vunpack.c.l.b16 %v1007
    %v4196 = vunpack.c.l.b16 %v1008
    %v4197 = vunpack.c.l.b16 %v1009
    %v4198 = vunpack.c.l.b16 %v1010
    %v4199 = vunpack.c.l.b16 %v1011
    %v4200 = vunpack.c.l.b16 %v1012
    %v4201 = vunpack.c.l.b16 %v1013
    %v4202 = vunpack.c.l.b16 %v1014
    %v4203 = vunpack.c.l.b16 %v1015
    %v4204 = vunpack.c.l.b16 %v1016
    %v4205 = vunpack.c.l.b16 %v1017
    %v4206 = vunpack.c.l.b16 %v1018
    %v4207 = vunpack.c.l.b16 %v1019
    %v4208 = vunpack.c.l.b16 %v1020
    %v4209 = vunpack.c.l.b16 %v1021
    %v4210 = vunpack.c.l.b16 %v1022
    %v4211 = vunpack.c.l.b16 %v1023
    %v4212 = vunpack.c.l.b16 %v1024
    %v4213 = vunpack.c.l.b16 %v1025
    %v4214 = vunpack.c.l.b16 %v1026
    %v4215 = vunpack.c.l.b16 %v1027
    %v4216 = vunpack.c.l.b16 %v1028
    %v4217 = vunpack.c.l.b16 %v1029
    %v4218 = vunpack.c.l.b16 %v1030
    %v4219 = vunpack.c.l.b16 %v1031
    %v4220 = vunpack.c.l.b16 %v1032
    %v4221 = vunpack.c.l.b16 %v1033
    %v4222 = vunpack.c.l.b16 %v1034
    %v4223 = vunpack.c.l.b16 %v1035
    %v4224 = vunpack.c.l.b16 %v1036
    %v4225 = vunpack.c.l.b16 %v1037
    %v4226 = vunpack.c.l.b16 %v1038
    %v4227 = vunpack.c.l.b16 %v1039
    %v4228 = vunpack.c.l.b16 %v1040
    %v4229 = vunpack.c.l.b16 %v1041
    %v4230 = vunpack.c.l.b16 %v1042
    %v4231 = vunpack.c.l.b16 %v1043
    %v4232 = vunpack.c.l.b16 %v1044
    %v4233 = vunpack.c.l.b16 %v1045
    %v4234 = vunpack.c.l.b16 %v1046
    %v4235 = vunpack.c.l.b16 %v1047
    %v4236 = vunpack.c.l.b16 %v1048
    %v4237 = vunpack.c.l.b16 %v1049
    %v4238 = vunpack.c.l.b16 %v1050
    %v4239 = vunpack.c.l.b16 %v1051
    %v4240 = vunpack.c.l.b16 %v1052
    %v4241 = vunpack.c.l.b16 %v1053
    %v4242 = vunpack.c.l.b16 %v1054
    %v4243 = vunpack.c.l.b16 %v1055
    %v4244 = vunpack.c.l.b16 %v1056
    %v4245 = vunpack.c.l.b16 %v1057
    %v4246 = vunpack.c.l.b16 %v1058
    %v4247 = vunpack.c.l.b16 %v1059
    %v4248 = vunpack.c.l.b16 %v1060
    %v4249 = vunpack.c.l.b16 %v1061
    %v4250 = vunpack.c.l.b16 %v1062
    %v4251 = vunpack.c.l.b16 %v1063
    %v4252 = vunpack.c.l.b16 %v1064
    %v4253 = vunpack.c.l.b16 %v1065
    %v4254 = vunpack.c.l.b16 %v1066
    %v4255 = vunpack.c.l.b16 %v1067
    %v4256 = vunpack.c.l.b16 %v1068
    %v4257 = vunpack.c.l.b16 %v1069
    %v4258 = vunpack.c.l.b16 %v1070
    %v4259 = vunpack.c.l.b16 %v1071
    %v4260 = vunpack.c.l.b16 %v1072
    %v4261 = vunpack.c.l.b16 %v1073
    %v4262 = vunpack.c.l.b16 %v1074
    %v4263 = vunpack.c.l.b16 %v1075
    %v4264 = vunpack.c.l.b16 %v1076
    %v4265 = vunpack.c.l.b16 %v1077
    %v4266 = vunpack.c.l.b16 %v1078
    %v4267 = vunpack.c.l.b16 %v1079
    %v4268 = vunpack.c.l.b16 %v1080
    %v4269 = vunpack.c.l.b16 %v1081
    %v4270 = vunpack.c.l.b16 %v1082
    %v4271 = vunpack.c.l.b16 %v1083
    %v4272 = vunpack.c.l.b16 %v1084
    %v4273 = vunpack.c.l.b16 %v1085
    %v4274 = vunpack.c.l.b16 %v1086
    %v4275 = vunpack.c.l.b16 %v1087
    %v4276 = vunpack.c.l.b16 %v1088
    %v4277 = vunpack.c.l.b16 %v1089
    %v4278 = vunpack.c.l.b16 %v1090
    %v4279 = vunpack.c.l.b16 %v1091
    %v4280 = vunpack.c.l.b16 %v1092
    %v4281 = vunpack.c.l.b16 %v1093
    %v4282 = vunpack.c.l.b16 %v1094
    %v4283 = vunpack.c.l.b16 %v1095
    %v4284 = vunpack.c.l.b16 %v1096
    %v4285 = vunpack.c.l.b16 %v1097
    %v4286 = vunpack.c.l.b16 %v1098
    %v4287 = vunpack.c.l.b16 %v1099
    %v4288 = vunpack.c.l.b16 %v1100
    %v4289 = vunpack.c.l.b16 %v1101
    %v4290 = vunpack.c.l.b16 %v1102
    %v4291 = vunpack.c.l.b16 %v1103
    %v4292 = vunpack.c.l.b16 %v1104
    %v4293 = vunpack.c.l.b16 %v1105
    %v4294 = vunpack.c.l.b16 %v1106
    %v4295 = vunpack.c.l.b16 %v1107
    %v4296 = vunpack.c.l.b16 %v1108
    %v4297 = vunpack.c.l.b16 %v1109
    %v4298 = vunpack.c.l.b16 %v1110
    %v4299 = vunpack.c.l.b16 %v1111
    %v4300 = vunpack.c.l.b16 %v1112
    %v4301 = vunpack.c.l.b16 %v1113
    %v4302 = vunpack.c.l.b16 %v1114
    %v4303 = vunpack.c.l.b16 %v1115
    %v4304 = vunpack.c.l.b16 %v1116
    %v4305 = vunpack.c.l.b16 %v1117
    %v4306 = vunpack.c.l.b16 %v1118
    %v4307 = vunpack.c.l.b16 %v1119
    %v4308 = vunpack.c.l.b16 %v1120
    %v4309 = vunpack.c.l.b16 %v1121
    %v4310 = vunpack.c.l.b16 %v1122
    %v4311 = vunpack.c.l.b16 %v1123
    %v4312 = vunpack.c.l.b16 %v1124
    %v4313 = vunpack.c.l.b16 %v1125
    %v4314 = vunpack.c.l.b16 %v1126
    %v4315 = vunpack.c.l.b16 %v1127
    %v4316 = vunpack.c.l.b16 %v1128
    %v4317 = vunpack.c.l.b16 %v1129
    %v4318 = vunpack.c.l.b16 %v1130
    %v4319 = vunpack.c.l.b16 %v1131
    %v4320 = vunpack.c.l.b16 %v1132
    %v4321 = vunpack.c.l.b16 %v1133
    %v4322 = vunpack.c.l.b16 %v1134
    %v4323 = vunpack.c.l.b16 %v1135
    %v4324 = vunpack.c.l.b16 %v1136
    %v4325 = vunpack.c.l.b16 %v1137
    %v4326 = vunpack.c.l.b16 %v1138
    %v4327 = vunpack.c.l.b16 %v1139
    %v4328 = vunpack.c.l.b16 %v1140
    %v4329 = vunpack.c.l.b16 %v1141
    %v4330 = vunpack.c.l.b16 %v1142
    %v4331 = vunpack.c.l.b16 %v1143
    %v4332 = vunpack.c.l.b16 %v1144
    %v4333 = vunpack.c.l.b16 %v1145
    %v4334 = vunpack.c.l.b16 %v1146
    %v4335 = vunpack.c.l.b16 %v1147
    %v4336 = vunpack.c.l.b16 %v1148
    %v4337 = vunpack.c.l.b16 %v1149
    %v4338 = vunpack.c.l.b16 %v1150
    %v4339 = vunpack.c.l.b16 %v1151
    %v4340 = vunpack.c.l.b16 %v1152
    %v4341 = vunpack.c.l.b16 %v1153
    %v4342 = vunpack.c.l.b16 %v1154
    %v4343 = vunpack.c.l.b16 %v1155
    %v4344 = vunpack.c.l.b16 %v1156
    %v4345 = vunpack.c.l.b16 %v1157
    %v4346 = vunpack.c.l.b16 %v1158
    %v4347 = vunpack.c.l.b16 %v1159
    %v4348 = vunpack.c.l.b16 %v1160
    %v4349 = vunpack.c.l.b16 %v1161
    %v4350 = vunpack.c.l.b16 %v1162
    %v4351 = vunpack.c.l.b16 %v1163
    %v4352 = vunpack.c.l.b16 %v1164
    %v4353 = vunpack.c.l.b16 %v1165
    %v4354 = vunpack.c.l.b16 %v1166
    %v4355 = vunpack.c.l.b16 %v1167
    %v4356 = vunpack.c.l.b16 %v1168
    %v4357 = vunpack.c.l.b16 %v1169
    %v4358 = vunpack.c.l.b16 %v1170
    %v4359 = vunpack.c.l.b16 %v1171
    %v4360 = vunpack.c.l.b16 %v1172
    %v4361 = vunpack.c.l.b16 %v1173
    %v4362 = vunpack.c.l.b16 %v1174
    %v4363 = vunpack.c.l.b16 %v1175
    %v4364 = vunpack.c.l.b16 %v1176
    %v4365 = vunpack.c.l.b16 %v1177
    %v4366 = vunpack.c.l.b16 %v1178
    %v4367 = vunpack.c.l.b16 %v1179
    %v4368 = vunpack.c.l.b16 %v1180
    %v4369 = vunpack.c.l.b16 %v1181
    %v4370 = vunpack.c.l.b16 %v1182
    %v4371 = vunpack.c.l.b16 %v1183
    %v4372 = vunpack.c.l.b16 %v1184
    %v4373 = vunpack.c.l.b16 %v1185
    %v4374 = vunpack.c.l.b16 %v1186
    %v4375 = vunpack.c.l.b16 %v1187
    %v4376 = vunpack.c.l.b16 %v1188
    %v4377 = vunpack.c.l.b16 %v1189
    %v4378 = vunpack.c.l.b16 %v1190
    %v4379 = vunpack.c.l.b16 %v1191
    %v4380 = vunpack.c.l.b16 %v1192
    %v4381 = vunpack.c.l.b16 %v1193
    %v4382 = vunpack.c.l.b16 %v1194
    %v4383 = vunpack.c.l.b16 %v1195
    %v4384 = vunpack.c.l.b16 %v1196
    %v4385 = vunpack.c.l.b16 %v1197
    %v4386 = vunpack.c.l.b16 %v1198
    %v4387 = vunpack.c.l.b16 %v1199
    %v4388 = vunpack.c.l.b16 %v1200
    %v4389 = vunpack.c.l.b16 %v1201
    %v4390 = vunpack.c.l.b16 %v1202
    %v4391 = vunpack.c.l.b16 %v1203
    %v4392 = vunpack.c.l.b16 %v1204
    %v4393 = vunpack.c.l.b16 %v1205
    %v4394 = vunpack.c.l.b16 %v1206
    %v4395 = vunpack.c.l.b16 %v1207
    %v4396 = vunpack.c.l.b16 %v1208
    %v4397 = vunpack.c.l.b16 %v1209
    %v4398 = vunpack.c.l.b16 %v1210
    %v4399 = vunpack.c.l.b16 %v1211
    %v4400 = vunpack.c.l.b16 %v1212
    %v4401 = vunpack.c.l.b16 %v1213
    %v4402 = vunpack.c.l.b16 %v1214
    %v4403 = vunpack.c.l.b16 %v1215
    %v4404 = vunpack.c.l.b16 %v1216
    %v4405 = vunpack.c.l.b16 %v1217
    %v4406 = vunpack.c.l.b16 %v1218
    %v4407 = vunpack.c.l.b16 %v1219
    %v4408 = vunpack.c.l.b16 %v1220
    %v4409 = vunpack.c.l.b16 %v1221
    %v4410 = vunpack.c.l.b16 %v1222
    %v4411 = vunpack.c.l.b16 %v1223
    %v4412 = vunpack.c.l.b16 %v1224
    %v4413 = vunpack.c.l.b16 %v1225
    %v4414 = vunpack.c.l.b16 %v1226
    %v4415 = vunpack.c.l.b16 %v1227
    %v4416 = vunpack.c.l.b16 %v1228
    %v4417 = vunpack.c.l.b16 %v1229
    %v4418 = vunpack.c.l.b16 %v1230
    %v4419 = vunpack.c.l.b16 %v1231
    %v4420 = vunpack.c.l.b16 %v1232
    %v4421 = vunpack.c.l.b16 %v1233
    %v4422 = vunpack.c.l.b16 %v1234
    %v4423 = vunpack.c.l.b16 %v1235
    %v4424 = vunpack.c.l.b16 %v1236
    %v4425 = vunpack.c.l.b16 %v1237
    %v4426 = vunpack.c.l.b16 %v1238
    %v4427 = vunpack.c.l.b16 %v1239
    %v4428 = vunpack.c.l.b16 %v1240
    %v4429 = vunpack.c.l.b16 %v1241
    %v4430 = vunpack.c.l.b16 %v1242
    %v4431 = vunpack.c.l.b16 %v1243
    %v4432 = vunpack.c.l.b16 %v1244
    %v4433 = vunpack.c.l.b16 %v1245
    %v4434 = vunpack.c.l.b16 %v1246
    %v4435 = vunpack.c.l.b16 %v1247
    %v4436 = vunpack.c.l.b16 %v1248
    %v4437 = vunpack.c.l.b16 %v1249
    %v4438 = vunpack.c.l.b16 %v1250
    %v4439 = vunpack.c.l.b16 %v1251
    %v4440 = vunpack.c.l.b16 %v1252
    %v4441 = vunpack.c.l.b16 %v1253
    %v4442 = vunpack.c.l.b16 %v1254
    %v4443 = vunpack.c.l.b16 %v1255
    %v4444 = vunpack.c.l.b16 %v1256
    %v4445 = vunpack.c.l.b16 %v1257
    %v4446 = vunpack.c.l.b16 %v1258
    %v4447 = vunpack.c.l.b16 %v1259
    %v4448 = vunpack.c.l.b16 %v1260
    %v4449 = vunpack.c.l.b16 %v1261
    %v4450 = vunpack.c.l.b16 %v1262
    %v4451 = vunpack.c.l.b16 %v1263
    %v4452 = vunpack.c.l.b16 %v1264
    %v4453 = vunpack.c.l.b16 %v1265
    %v4454 = vunpack.c.l.b16 %v1266
    %v4455 = vunpack.c.l.b16 %v1267
    %v4456 = vunpack.c.l.b16 %v1268
    %v4457 = vunpack.c.l.b16 %v1269
    %v4458 = vunpack.c.l.b16 %v1270
    %v4459 = vunpack.c.l.b16 %v1271
    %v4460 = vunpack.c.l.b16 %v1272
    %v4461 = vunpack.c.l.b16 %v1273
    %v4462 = vunpack.c.l.b16 %v1274
    %v4463 = vunpack.c.l.b16 %v1275
    %v4464 = vunpack.c.l.b16 %v1276
    %v4465 = vunpack.c.l.b16 %v1277
    %v4466 = vunpack.c.l.b16 %v1278
    %v4467 = vunpack.c.l.b16 %v1279
    %v4468 = vunpack.c.l.b16 %v1280
    %v4469 = vunpack.c.l.b16 %v1281
    %v4470 = vunpack.c.l.b16 %v1282
    %v4471 = vunpack.c.l.b16 %v1283
    %v4472 = vunpack.c.l.b16 %v1284
    %v4473 = vunpack.c.l.b16 %v1285
    %v4474 = vunpack.c.l.b16 %v1286
    %v4475 = vunpack.c.l.b16 %v1287
    %v4476 = vunpack.c.l.b16 %v1288
    %v4477 = vunpack.c.l.b16 %v1289
    %v4478 = vunpack.c.l.b16 %v1290
    %v4479 = vunpack.c.l.b16 %v1291
    %v4480 = vunpack.c.l.b16 %v1292
    %v4481 = vunpack.c.l.b16 %v1293
    %v4482 = vunpack.c.l.b16 %v1294
    %v4483 = vunpack.c.l.b16 %v1295
    %v4484 = vunpack.c.l.b16 %v1296
    %v4485 = vunpack.c.l.b16 %v1297
    %v4486 = vunpack.c.l.b16 %v1298
    %v4487 = vunpack.c.l.b16 %v1299
    %v4488 = vunpack.c.l.b16 %v1300
    %v4489 = vunpack.c.l.b16 %v1301
    %v4490 = vunpack.c.l.b16 %v1302
    %v4491 = vunpack.c.l.b16 %v1303
    %v4492 = vunpack.c.l.b16 %v1304
    %v4493 = vunpack.c.l.b16 %v1305
    %v4494 = vunpack.c.l.b16 %v1306
    %v4495 = vunpack.c.l.b16 %v1307
    %v4496 = vunpack.c.l.b16 %v1308
    %v4497 = vunpack.c.l.b16 %v1309
    %v4498 = vunpack.c.l.b16 %v1310
    %v4499 = vunpack.c.l.b16 %v1311
    %v4500 = vunpack.c.l.b16 %v1312
    %v4501 = vunpack.c.l.b16 %v1313
    %v4502 = vunpack.c.l.b16 %v1314
    %v4503 = vunpack.c.l.b16 %v1315
    %v4504 = vunpack.c.l.b16 %v1316
    %v4505 = vunpack.c.l.b16 %v1317
    %v4506 = vunpack.c.l.b16 %v1318
    %v4507 = vunpack.c.l.b16 %v1319
    %v4508 = vunpack.c.l.b16 %v1320
    %v4509 = vunpack.c.l.b16 %v1321
    %v4510 = vunpack.c.l.b16 %v1322
    %v4511 = vunpack.c.l.b16 %v1323
    %v4512 = vunpack.c.l.b16 %v1324
    %v4513 = vunpack.c.l.b16 %v1325
    %v4514 = vunpack.c.l.b16 %v1326
    %v4515 = vunpack.c.l.b16 %v1327
    %v4516 = vunpack.c.l.b16 %v1328
    %v4517 = vunpack.c.l.b16 %v1329
    %v4518 = vunpack.c.l.b16 %v1330
    %v4519 = vunpack.c.l.b16 %v1331
    %v4520 = vunpack.c.l.b16 %v1332
    %v4521 = vunpack.c.l.b16 %v1333
    %v4522 = vunpack.c.l.b16 %v1334
    %v4523 = vunpack.c.l.b16 %v1335
    %v4524 = vunpack.c.l.b16 %v1336
    %v4525 = vunpack.c.l.b16 %v1337
    %v4526 = vunpack.c.l.b16 %v1338
    %v4527 = vunpack.c.l.b16 %v1339
    %v4528 = vunpack.c.l.b16 %v1340
    %v4529 = vpack.c.b16 %v3234, %v3233
    %v4530 = vpack.c.b16 %v3236, %v3235
    %v4531 = vpack.c.b16 %v3238, %v3237
    %v4532 = vpack.c.b16 %v3240, %v3239
    %v4533 = vpack.c.b16 %v3242, %v3241
    %v4534 = vpack.c.b16 %v3244, %v3243
    %v4535 = vpack.c.b16 %v3246, %v3245
    %v4536 = vpack.c.b16 %v3248, %v3247
    %v4537 = vpack.c.b16 %v3250, %v3249
    %v4538 = vpack.c.b16 %v3252, %v3251
    %v4539 = vpack.c.b16 %v3254, %v3253
    %v4540 = vpack.c.b16 %v3256, %v3255
    %v4541 = vpack.c.b16 %v3258, %v3257
    %v4542 = vpack.c.b16 %v3260, %v3259
    %v4543 = vpack.c.b16 %v3262, %v3261
    %v4544 = vpack.c.b16 %v3264, %v3263
    %v4545 = vpack.c.b16 %v3266, %v3265
    %v4546 = vpack.c.b16 %v3268, %v3267
    %v4547 = vpack.c.b16 %v3270, %v3269
    %v4548 = vpack.c.b16 %v3272, %v3271
    %v4549 = vpack.c.b16 %v3274, %v3273
    %v4550 = vpack.c.b16 %v3276, %v3275
    %v4551 = vpack.c.b16 %v3278, %v3277
    %v4552 = vpack.c.b16 %v3280, %v3279
    %v4553 = vpack.c.b16 %v3282, %v3281
    %v4554 = vpack.c.b16 %v3284, %v3283
    %v4555 = vpack.c.b16 %v3286, %v3285
    %v4556 = vpack.c.b16 %v3288, %v3287
    %v4557 = vpack.c.b16 %v3290, %v3289
    %v4558 = vpack.c.b16 %v3292, %v3291
    %v4559 = vpack.c.b16 %v3294, %v3293
    %v4560 = vpack.c.b16 %v3296, %v3295
    %v4561 = vpack.c.b16 %v3298, %v3297
    %v4562 = vpack.c.b16 %v3300, %v3299
    %v4563 = vpack.c.b16 %v3302, %v3301
    %v4564 = vpack.c.b16 %v3304, %v3303
    %v4565 = vpack.c.b16 %v3306, %v3305
    %v4566 = vpack.c.b16 %v3308, %v3307
    %v4567 = vpack.c.b16 %v3310, %v3309
    %v4568 = vpack.c.b16 %v3312, %v3311
    %v4569 = vpack.c.b16 %v3314, %v3313
    %v4570 = vpack.c.b16 %v3316, %v3315
    %v4571 = vpack.c.b16 %v3318, %v3317
    %v4572 = vpack.c.b16 %v3320, %v3319
    %v4573 = vpack.c.b16 %v3322, %v3321
    %v4574 = vpack.c.b16 %v3324, %v3323
    %v4575 = vpack.c.b16 %v3326, %v3325
    %v4576 = vpack.c.b16 %v3328, %v3327
    %v4577 = vpack.c.b16 %v3330, %v3329
    %v4578 = vpack.c.b16 %v3332, %v3331
    %v4579 = vpack.c.b16 %v3334, %v3333
    %v4580 = vpack.c.b16 %v3336, %v3335
    %v4581 = vpack.c.b16 %v3338, %v3337
    %v4582 = vpack.c.b16 %v3340, %v3339
    %v4583 = vpack.c.b16 %v3342, %v3341
    %v4584 = vpack.c.b16 %v3344, %v3343
    %v4585 = vpack.c.b16 %v3346, %v3345
    %v4586 = vpack.c.b16 %v3348, %v3347
    %v4587 = vpack.c.b16 %v3350, %v3349
    %v4588 = vpack.c.b16 %v3352, %v3351
    %v4589 = vpack.c.b16 %v3354, %v3353
    %v4590 = vpack.c.b16 %v3356, %v3355
    %v4591 = vpack.c.b16 %v3358, %v3357
    %v4592 = vpack.c.b16 %v3360, %v3359
    %v4593 = vpack.c.b16 %v3362, %v3361
    %v4594 = vpack.c.b16 %v3364, %v3363
    %v4595 = vpack.c.b16 %v3366, %v3365
    %v4596 = vpack.c.b16 %v3368, %v3367
    %v4597 = vpack.c.b16 %v3370, %v3369
    %v4598 = vpack.c.b16 %v3372, %v3371
    %v4599 = vpack.c.b16 %v3374, %v3373
    %v4600 = vpack.c.b16 %v3376, %v3375
    %v4601 = vpack.c.b16 %v3378, %v3377
    %v4602 = vpack.c.b16 %v3380, %v3379
    %v4603 = vpack.c.b16 %v3382, %v3381
    %v4604 = vpack.c.b16 %v3384, %v3383
    %v4605 = vpack.c.b16 %v3386, %v3385
    %v4606 = vpack.c.b16 %v3388, %v3387
    %v4607 = vpack.c.b16 %v3390, %v3389
    %v4608 = vpack.c.b16 %v3392, %v3391
    %v4609 = vpack.c.b16 %v3394, %v3393
    %v4610 = vpack.c.b16 %v3396, %v3395
    %v4611 = vpack.c.b16 %v3398, %v3397
    %v4612 = vpack.c.b16 %v3400, %v3399
    %v4613 = vpack.c.b16 %v3402, %v3401
    %v4614 = vpack.c.b16 %v3404, %v3403
    %v4615 = vpack.c.b16 %v3406, %v3405
    %v4616 = vpack.c.b16 %v3408, %v3407
    %v4617 = vpack.c.b16 %v3410, %v3409
    %v4618 = vpack.c.b16 %v3412, %v3411
    %v4619 = vpack.c.b16 %v3414, %v3413
    %v4620 = vpack.c.b16 %v3416, %v3415
    %v4621 = vpack.c.b16 %v3418, %v3417
    %v4622 = vpack.c.b16 %v3420, %v3419
    %v4623 = vpack.c.b16 %v3422, %v3421
    %v4624 = vpack.c.b16 %v3424, %v3423
    %v4625 = vpack.c.b16 %v3426, %v3425
    %v4626 = vpack.c.b16 %v3428, %v3427
    %v4627 = vpack.c.b16 %v3430, %v3429
    %v4628 = vpack.c.b16 %v3432, %v3431
    %v4629 = vpack.c.b16 %v3434, %v3433
    %v4630 = vpack.c.b16 %v3436, %v3435
    %v4631 = vpack.c.b16 %v3438, %v3437
    %v4632 = vpack.c.b16 %v3440, %v3439
    %v4633 = vpack.c.b16 %v3442, %v3441
    %v4634 = vpack.c.b16 %v3444, %v3443
    %v4635 = vpack.c.b16 %v3446, %v3445
    %v4636 = vpack.c.b16 %v3448, %v3447
    %v4637 = vpack.c.b16 %v3450, %v3449
    %v4638 = vpack.c.b16 %v3452, %v3451
    %v4639 = vpack.c.b16 %v3454, %v3453
    %v4640 = vpack.c.b16 %v3456, %v3455
    %v4641 = vpack.c.b16 %v3458, %v3457
    %v4642 = vpack.c.b16 %v3460, %v3459
    %v4643 = vpack.c.b16 %v3462, %v3461
    %v4644 = vpack.c.b16 %v3464, %v3463
    %v4645 = vpack.c.b16 %v3466, %v3465
    %v4646 = vpack.c.b16 %v3468, %v3467
    %v4647 = vpack.c.b16 %v3470, %v3469
    %v4648 = vpack.c.b16 %v3472, %v3471
    %v4649 = vpack.c.b16 %v3474, %v3473
    %v4650 = vpack.c.b16 %v3476, %v3475
    %v4651 = vpack.c.b16 %v3478, %v3477
    %v4652 = vpack.c.b16 %v3480, %v3479
    %v4653 = vpack.c.b16 %v3482, %v3481
    %v4654 = vpack.c.b16 %v3484, %v3483
    %v4655 = vpack.c.b16 %v3486, %v3485
    %v4656 = vpack.c.b16 %v3488, %v3487
    %v4657 = vpack.c.b16 %v3490, %v3489
    %v4658 = vpack.c.b16 %v3492, %v3491
    %v4659 = vpack.c.b16 %v3494, %v3493
    %v4660 = vpack.c.b16 %v3496, %v3495
    %v4661 = vpack.c.b16 %v3498, %v3497
    %v4662 = vpack.c.b16 %v3500, %v3499
    %v4663 = vpack.c.b16 %v3502, %v3501
    %v4664 = vpack.c.b16 %v3504, %v3503
    %v4665 = vpack.c.b16 %v3506, %v3505
    %v4666 = vpack.c.b16 %v3508, %v3507
    %v4667 = vpack.c.b16 %v3510, %v3509
    %v4668 = vpack.c.b16 %v3512, %v3511
    %v4669 = vpack.c.b16 %v3514, %v3513
    %v4670 = vpack.c.b16 %v3516, %v3515
    %v4671 = vpack.c.b16 %v3518, %v3517
    %v4672 = vpack.c.b16 %v3520, %v3519
    %v4673 = vpack.c.b16 %v3522, %v3521
    %v4674 = vpack.c.b16 %v3524, %v3523
    %v4675 = vpack.c.b16 %v3526, %v3525
    %v4676 = vpack.c.b16 %v3528, %v3527
    %v4677 = vpack.c.b16 %v3530, %v3529
    %v4678 = vpack.c.b16 %v3532, %v3531
    %v4679 = vpack.c.b16 %v3534, %v3533
    %v4680 = vpack.c.b16 %v3536, %v3535
    %v4681 = vpack.c.b16 %v3538, %v3537
    %v4682 = vpack.c.b16 %v3540, %v3539
    %v4683 = vpack.c.b16 %v3542, %v3541
    %v4684 = vpack.c.b16 %v3544, %v3543
    %v4685 = vpack.c.b16 %v3546, %v3545
    %v4686 = vpack.c.b16 %v3548, %v3547
    %v4687 = vpack.c.b16 %v3550, %v3549
    %v4688 = vpack.c.b16 %v3552, %v3551
    %v4689 = vpack.c.b16 %v3554, %v3553
    %v4690 = vpack.c.b16 %v3556, %v3555
    %v4691 = vpack.c.b16 %v3558, %v3557
    %v4692 = vpack.c.b16 %v3560, %v3559
    %v4693 = vpack.c.b16 %v3562, %v3561
    %v4694 = vpack.c.b16 %v3564, %v3563
    %v4695 = vpack.c.b16 %v3566, %v3565
    %v4696 = vpack.c.b16 %v3568, %v3567
    %v4697 = vpack.c.b16 %v3570, %v3569
    %v4698 = vpack.c.b16 %v3572, %v3571
    %v4699 = vpack.c.b16 %v3574, %v3573
    %v4700 = vpack.c.b16 %v3576, %v3575
    %v4701 = vpack.c.b16 %v3578, %v3577
    %v4702 = vpack.c.b16 %v3580, %v3579
    %v4703 = vpack.c.b16 %v3582, %v3581
    %v4704 = vpack.c.b16 %v3584, %v3583
    %v4705 = vpack.c.b16 %v3586, %v3585
    %v4706 = vpack.c.b16 %v3588, %v3587
    %v4707 = vpack.c.b16 %v3590, %v3589
    %v4708 = vpack.c.b16 %v3592, %v3591
    %v4709 = vpack.c.b16 %v3594, %v3593
    %v4710 = vpack.c.b16 %v3596, %v3595
    %v4711 = vpack.c.b16 %v3598, %v3597
    %v4712 = vpack.c.b16 %v3600, %v3599
    %v4713 = vpack.c.b16 %v3602, %v3601
    %v4714 = vpack.c.b16 %v3604, %v3603
    %v4715 = vpack.c.b16 %v3606, %v3605
    %v4716 = vpack.c.b16 %v3608, %v3607
    %v4717 = vpack.c.b16 %v3610, %v3609
    %v4718 = vpack.c.b16 %v3612, %v3611
    %v4719 = vpack.c.b16 %v3614, %v3613
    %v4720 = vpack.c.b16 %v3616, %v3615
    %v4721 = vpack.c.b16 %v3618, %v3617
    %v4722 = vpack.c.b16 %v3620, %v3619
    %v4723 = vpack.c.b16 %v3622, %v3621
    %v4724 = vpack.c.b16 %v3624, %v3623
    %v4725 = vpack.c.b16 %v3626, %v3625
    %v4726 = vpack.c.b16 %v3628, %v3627
    %v4727 = vpack.c.b16 %v3630, %v3629
    %v4728 = vpack.c.b16 %v3632, %v3631
    %v4729 = vpack.c.b16 %v3634, %v3633
    %v4730 = vpack.c.b16 %v3636, %v3635
    %v4731 = vpack.c.b16 %v3638, %v3637
    %v4732 = vpack.c.b16 %v3640, %v3639
    %v4733 = vpack.c.b16 %v3642, %v3641
    %v4734 = vpack.c.b16 %v3644, %v3643
    %v4735 = vpack.c.b16 %v3646, %v3645
    %v4736 = vpack.c.b16 %v3648, %v3647
    %v4737 = vpack.c.b16 %v3650, %v3649
    %v4738 = vpack.c.b16 %v3652, %v3651
    %v4739 = vpack.c.b16 %v3654, %v3653
    %v4740 = vpack.c.b16 %v3656, %v3655
    %v4741 = vpack.c.b16 %v3658, %v3657
    %v4742 = vpack.c.b16 %v3660, %v3659
    %v4743 = vpack.c.b16 %v3662, %v3661
    %v4744 = vpack.c.b16 %v3664, %v3663
    %v4745 = vpack.c.b16 %v3666, %v3665
    %v4746 = vpack.c.b16 %v3668, %v3667
    %v4747 = vpack.c.b16 %v3670, %v3669
    %v4748 = vpack.c.b16 %v3672, %v3671
    %v4749 = vpack.c.b16 %v3674, %v3673
    %v4750 = vpack.c.b16 %v3676, %v3675
    %v4751 = vpack.c.b16 %v3678, %v3677
    %v4752 = vpack.c.b16 %v3680, %v3679
    %v4753 = vpack.c.b16 %v3682, %v3681
    %v4754 = vpack.c.b16 %v3684, %v3683
    %v4755 = vpack.c.b16 %v3686, %v3685
    %v4756 = vpack.c.b16 %v3688, %v3687
    %v4757 = vpack.c.b16 %v3690, %v3689
    %v4758 = vpack.c.b16 %v3692, %v3691
    %v4759 = vpack.c.b16 %v3694, %v3693
    %v4760 = vpack.c.b16 %v3696, %v3695
    %v4761 = vpack.c.b16 %v3698, %v3697
    %v4762 = vpack.c.b16 %v3700, %v3699
    %v4763 = vpack.c.b16 %v3702, %v3701
    %v4764 = vpack.c.b16 %v3704, %v3703
    %v4765 = vpack.c.b16 %v3706, %v3705
    %v4766 = vpack.c.b16 %v3708, %v3707
    %v4767 = vpack.c.b16 %v3710, %v3709
    %v4768 = vpack.c.b16 %v3712, %v3711
    %v4769 = vpack.c.b16 %v3714, %v3713
    %v4770 = vpack.c.b16 %v3716, %v3715
    %v4771 = vpack.c.b16 %v3718, %v3717
    %v4772 = vpack.c.b16 %v3720, %v3719
    %v4773 = vpack.c.b16 %v3722, %v3721
    %v4774 = vpack.c.b16 %v3724, %v3723
    %v4775 = vpack.c.b16 %v3726, %v3725
    %v4776 = vpack.c.b16 %v3728, %v3727
    %v4777 = vpack.c.b16 %v3730, %v3729
    %v4778 = vpack.c.b16 %v3732, %v3731
    %v4779 = vpack.c.b16 %v3734, %v3733
    %v4780 = vpack.c.b16 %v3736, %v3735
    %v4781 = vpack.c.b16 %v3738, %v3737
    %v4782 = vpack.c.b16 %v3740, %v3739
    %v4783 = vpack.c.b16 %v3742, %v3741
    %v4784 = vpack.c.b16 %v3744, %v3743
    %v4785 = vpack.c.b16 %v3746, %v3745
    %v4786 = vpack.c.b16 %v3748, %v3747
    %v4787 = vpack.c.b16 %v3750, %v3749
    %v4788 = vpack.c.b16 %v3752, %v3751
    %v4789 = vpack.c.b16 %v3754, %v3753
    %v4790 = vpack.c.b16 %v3756, %v3755
    %v4791 = vpack.c.b16 %v3758, %v3757
    %v4792 = vpack.c.b16 %v3760, %v3759
    %v4793 = vpack.c.b16 %v3762, %v3761
    %v4794 = vpack.c.b16 %v3764, %v3763
    %v4795 = vpack.c.b16 %v3766, %v3765
    %v4796 = vpack.c.b16 %v3768, %v3767
    %v4797 = vpack.c.b16 %v3770, %v3769
    %v4798 = vpack.c.b16 %v3772, %v3771
    %v4799 = vpack.c.b16 %v3774, %v3773
    %v4800 = vpack.c.b16 %v3776, %v3775
    %v4801 = vpack.c.b16 %v3778, %v3777
    %v4802 = vpack.c.b16 %v3780, %v3779
    %v4803 = vpack.c.b16 %v3782, %v3781
    %v4804 = vpack.c.b16 %v3784, %v3783
    %v4805 = vpack.c.b16 %v3786, %v3785
    %v4806 = vpack.c.b16 %v3788, %v3787
    %v4807 = vpack.c.b16 %v3790, %v3789
    %v4808 = vpack.c.b16 %v3792, %v3791
    %v4809 = vpack.c.b16 %v3794, %v3793
    %v4810 = vpack.c.b16 %v3796, %v3795
    %v4811 = vpack.c.b16 %v3798, %v3797
    %v4812 = vpack.c.b16 %v3800, %v3799
    %v4813 = vpack.c.b16 %v3802, %v3801
    %v4814 = vpack.c.b16 %v3804, %v3803
    %v4815 = vpack.c.b16 %v3806, %v3805
    %v4816 = vpack.c.b16 %v3808, %v3807
    %v4817 = vpack.c.b16 %v3810, %v3809
    %v4818 = vpack.c.b16 %v3812, %v3811
    %v4819 = vpack.c.b16 %v3814, %v3813
    %v4820 = vpack.c.b16 %v3816, %v3815
    %v4821 = vpack.c.b16 %v3818, %v3817
    %v4822 = vpack.c.b16 %v3820, %v3819
    %v4823 = vpack.c.b16 %v3822, %v3821
    %v4824 = vpack.c.b16 %v3824, %v3823
    %v4825 = vpack.c.b16 %v3826, %v3825
    %v4826 = vpack.c.b16 %v3828, %v3827
    %v4827 = vpack.c.b16 %v3830, %v3829
    %v4828 = vpack.c.b16 %v3832, %v3831
    %v4829 = vpack.c.b16 %v3834, %v3833
    %v4830 = vpack.c.b16 %v3836, %v3835
    %v4831 = vpack.c.b16 %v3838, %v3837
    %v4832 = vpack.c.b16 %v3840, %v3839
    %v4833 = vpack.c.b16 %v3842, %v3841
    %v4834 = vpack.c.b16 %v3844, %v3843
    %v4835 = vpack.c.b16 %v3846, %v3845
    %v4836 = vpack.c.b16 %v3848, %v3847
    %v4837 = vpack.c.b16 %v3850, %v3849
    %v4838 = vpack.c.b16 %v3852, %v3851
    %v4839 = vpack.c.b16 %v3854, %v3853
    %v4840 = vpack.c.b16 %v3856, %v3855
    %v4841 = vpack.c.b16 %v3858, %v3857
    %v4842 = vpack.c.b16 %v3860, %v3859
    %v4843 = vpack.c.b16 %v3862, %v3861
    %v4844 = vpack.c.b16 %v3864, %v3863
    %v4845 = vpack.c.b16 %v3866, %v3865
    %v4846 = vpack.c.b16 %v3868, %v3867
    %v4847 = vpack.c.b16 %v3870, %v3869
    %v4848 = vpack.c.b16 %v3872, %v3871
    %v4849 = vpack.c.b16 %v3874, %v3873
    %v4850 = vpack.c.b16 %v3876, %v3875
    %v4851 = vpack.c.b16 %v3878, %v3877
    %v4852 = vpack.c.b16 %v3880, %v3879
    %v4853 = vpack.c.b16 %v3882, %v3881
    %v4854 = vpack.c.b16 %v3884, %v3883
    %v4855 = vpack.c.b16 %v3886, %v3885
    %v4856 = vpack.c.b16 %v3888, %v3887
    %v4857 = vpack.c.b16 %v3890, %v3889
    %v4858 = vpack.c.b16 %v3892, %v3891
    %v4859 = vpack.c.b16 %v3894, %v3893
    %v4860 = vpack.c.b16 %v3896, %v3895
    %v4861 = vpack.c.b16 %v3898, %v3897
    %v4862 = vpack.c.b16 %v3900, %v3899
    %v4863 = vpack.c.b16 %v3902, %v3901
    %v4864 = vpack.c.b16 %v3904, %v3903
    %v4865 = vpack.c.b16 %v3906, %v3905
    %v4866 = vpack.c.b16 %v3908, %v3907
    %v4867 = vpack.c.b16 %v3910, %v3909
    %v4868 = vpack.c.b16 %v3912, %v3911
    %v4869 = vpack.c.b16 %v3914, %v3913
    %v4870 = vpack.c.b16 %v3916, %v3915
    %v4871 = vpack.c.b16 %v3918, %v3917
    %v4872 = vpack.c.b16 %v3920, %v3919
    %v4873 = vpack.c.b16 %v3922, %v3921
    %v4874 = vpack.c.b16 %v3924, %v3923
    %v4875 = vpack.c.b16 %v3926, %v3925
    %v4876 = vpack.c.b16 %v3928, %v3927
    %v4877 = vpack.c.b16 %v3930, %v3929
    %v4878 = vpack.c.b16 %v3932, %v3931
    %v4879 = vpack.c.b16 %v3934, %v3933
    %v4880 = vpack.c.b16 %v3936, %v3935
    %v4881 = vpack.c.b16 %v3938, %v3937
    %v4882 = vpack.c.b16 %v3940, %v3939
    %v4883 = vpack.c.b16 %v3942, %v3941
    %v4884 = vpack.c.b16 %v3944, %v3943
    %v4885 = vpack.c.b16 %v3946, %v3945
    %v4886 = vpack.c.b16 %v3948, %v3947
    %v4887 = vpack.c.b16 %v3950, %v3949
    %v4888 = vpack.c.b16 %v3952, %v3951
    %v4889 = vpack.c.b16 %v3954, %v3953
    %v4890 = vpack.c.b16 %v3956, %v3955
    %v4891 = vpack.c.b16 %v3958, %v3957
    %v4892 = vpack.c.b16 %v3960, %v3959
    %v4893 = vpack.c.b16 %v3962, %v3961
    %v4894 = vpack.c.b16 %v3964, %v3963
    %v4895 = vpack.c.b16 %v3966, %v3965
    %v4896 = vpack.c.b16 %v3968, %v3967
    %v4897 = vpack.c.b16 %v3970, %v3969
    %v4898 = vpack.c.b16 %v3972, %v3971
    %v4899 = vpack.c.b16 %v3974, %v3973
    %v4900 = vpack.c.b16 %v3976, %v3975
    %v4901 = vpack.c.b16 %v3978, %v3977
    %v4902 = vpack.c.b16 %v3980, %v3979
    %v4903 = vpack.c.b16 %v3982, %v3981
    %v4904 = vpack.c.b16 %v3984, %v3983
    %v4905 = vpack.c.b16 %v3986, %v3985
    %v4906 = vpack.c.b16 %v3988, %v3987
    %v4907 = vpack.c.b16 %v3990, %v3989
    %v4908 = vpack.c.b16 %v3992, %v3991
    %v4909 = vpack.c.b16 %v3994, %v3993
    %v4910 = vpack.c.b16 %v3996, %v3995
    %v4911 = vpack.c.b16 %v3998, %v3997
    %v4912 = vpack.c.b16 %v4000, %v3999
    %v4913 = vpack.c.b16 %v4002, %v4001
    %v4914 = vpack.c.b16 %v4004, %v4003
    %v4915 = vpack.c.b16 %v4006, %v4005
    %v4916 = vpack.c.b16 %v4008, %v4007
    %v4917 = vpack.c.b16 %v4010, %v4009
    %v4918 = vpack.c.b16 %v4012, %v4011
    %v4919 = vpack.c.b16 %v4014, %v4013
    %v4920 = vpack.c.b16 %v4016, %v4015
    %v4921 = vpack.c.b16 %v4018, %v4017
    %v4922 = vpack.c.b16 %v4020, %v4019
    %v4923 = vpack.c.b16 %v4022, %v4021
    %v4924 = vpack.c.b16 %v4024, %v4023
    %v4925 = vpack.c.b16 %v4026, %v4025
    %v4926 = vpack.c.b16 %v4028, %v4027
    %v4927 = vpack.c.b16 %v4030, %v4029
    %v4928 = vpack.c.b16 %v4032, %v4031
    %v4929 = vpack.c.b16 %v4034, %v4033
    %v4930 = vpack.c.b16 %v4036, %v4035
    %v4931 = vpack.c.b16 %v4038, %v4037
    %v4932 = vpack.c.b16 %v4040, %v4039
    %v4933 = vpack.c.b16 %v4042, %v4041
    %v4934 = vpack.c.b16 %v4044, %v4043
    %v4935 = vpack.c.b16 %v4046, %v4045
    %v4936 = vpack.c.b16 %v4048, %v4047
    %v4937 = vpack.c.b16 %v4050, %v4049
    %v4938 = vpack.c.b16 %v4052, %v4051
    %v4939 = vpack.c.b16 %v4054, %v4053
    %v4940 = vpack.c.b16 %v4056, %v4055
    %v4941 = vpack.c.b16 %v4058, %v4057
    %v4942 = vpack.c.b16 %v4060, %v4059
    %v4943 = vpack.c.b16 %v4062, %v4061
    %v4944 = vpack.c.b16 %v4064, %v4063
    %v4945 = vpack.c.b16 %v4066, %v4065
    %v4946 = vpack.c.b16 %v4068, %v4067
    %v4947 = vpack.c.b16 %v4070, %v4069
    %v4948 = vpack.c.b16 %v4072, %v4071
    %v4949 = vpack.c.b16 %v4074, %v4073
    %v4950 = vpack.c.b16 %v4076, %v4075
    %v4951 = vpack.c.b16 %v4078, %v4077
    %v4952 = vpack.c.b16 %v4080, %v4079
    %v4953 = vpack.c.b16 %v4082, %v4081
    %v4954 = vpack.c.b16 %v4084, %v4083
    %v4955 = vpack.c.b16 %v4086, %v4085
    %v4956 = vpack.c.b16 %v4088, %v4087
    %v4957 = vpack.c.b16 %v4090, %v4089
    %v4958 = vpack.c.b16 %v4092, %v4091
    %v4959 = vpack.c.b16 %v4094, %v4093
    %v4960 = vpack.c.b16 %v4096, %v4095
    %v4961 = vpack.c.b16 %v4098, %v4097
    %v4962 = vpack.c.b16 %v4100, %v4099
    %v4963 = vpack.c.b16 %v4102, %v4101
    %v4964 = vpack.c.b16 %v4104, %v4103
    %v4965 = vpack.c.b16 %v4106, %v4105
    %v4966 = vpack.c.b16 %v4108, %v4107
    %v4967 = vpack.c.b16 %v4110, %v4109
    %v4968 = vpack.c.b16 %v4112, %v4111
    %v4969 = vpack.c.b16 %v4114, %v4113
    %v4970 = vpack.c.b16 %v4116, %v4115
    %v4971 = vpack.c.b16 %v4118, %v4117
    %v4972 = vpack.c.b16 %v4120, %v4119
    %v4973 = vpack.c.b16 %v4122, %v4121
    %v4974 = vpack.c.b16 %v4124, %v4123
    %v4975 = vpack.c.b16 %v4126, %v4125
    %v4976 = vpack.c.b16 %v4128, %v4127
    %v4977 = vpack.c.b16 %v4130, %v4129
    %v4978 = vpack.c.b16 %v4132, %v4131
    %v4979 = vpack.c.b16 %v4134, %v4133
    %v4980 = vpack.c.b16 %v4136, %v4135
    %v4981 = vpack.c.b16 %v4138, %v4137
    %v4982 = vpack.c.b16 %v4140, %v4139
    %v4983 = vpack.c.b16 %v4142, %v4141
    %v4984 = vpack.c.b16 %v4144, %v4143
    %v4985 = vpack.c.b16 %v4146, %v4145
    %v4986 = vpack.c.b16 %v4148, %v4147
    %v4987 = vpack.c.b16 %v4150, %v4149
    %v4988 = vpack.c.b16 %v4152, %v4151
    %v4989 = vpack.c.b16 %v4154, %v4153
    %v4990 = vpack.c.b16 %v4156, %v4155
    %v4991 = vpack.c.b16 %v4158, %v4157
    %v4992 = vpack.c.b16 %v4160, %v4159
    %v4993 = vpack.c.b16 %v4162, %v4161
    %v4994 = vpack.c.b16 %v4164, %v4163
    %v4995 = vpack.c.b16 %v4166, %v4165
    %v4996 = vpack.c.b16 %v4168, %v4167
    %v4997 = vpack.c.b16 %v4170, %v4169
    %v4998 = vpack.c.b16 %v4172, %v4171
    %v4999 = vpack.c.b16 %v4174, %v4173
    %v5000 = vpack.c.b16 %v4176, %v4175
    %v5001 = vpack.c.b16 %v4178, %v4177
    %v5002 = vpack.c.b16 %v4180, %v4179
    %v5003 = vpack.c.b16 %v4182, %v4181
    %v5004 = vpack.c.b16 %v4184, %v4183
    %v5005 = vpack.c.b16 %v4186, %v4185
    %v5006 = vpack.c.b16 %v4188, %v4187
    %v5007 = vpack.c.b16 %v4190, %v4189
    %v5008 = vpack.c.b16 %v4192, %v4191
    %v5009 = vpack.c.b16 %v4194, %v4193
    %v5010 = vpack.c.b16 %v4196, %v4195
    %v5011 = vpack.c.b16 %v4198, %v4197
    %v5012 = vpack.c.b16 %v4200, %v4199
    %v5013 = vpack.c.b16 %v4202, %v4201
    %v5014 = vpack.c.b16 %v4204, %v4203
    %v5015 = vpack.c.b16 %v4206, %v4205
    %v5016 = vpack.c.b16 %v4208, %v4207
    %v5017 = vpack.c.b16 %v4210, %v4209
    %v5018 = vpack.c.b16 %v4212, %v4211
    %v5019 = vpack.c.b16 %v4214, %v4213
    %v5020 = vpack.c.b16 %v4216, %v4215
    %v5021 = vpack.c.b16 %v4218, %v4217
    %v5022 = vpack.c.b16 %v4220, %v4219
    %v5023 = vpack.c.b16 %v4222, %v4221
    %v5024 = vpack.c.b16 %v4224, %v4223
    %v5025 = vpack.c.b16 %v4226, %v4225
    %v5026 = vpack.c.b16 %v4228, %v4227
    %v5027 = vpack.c.b16 %v4230, %v4229
    %v5028 = vpack.c.b16 %v4232, %v4231
    %v5029 = vpack.c.b16 %v4234, %v4233
    %v5030 = vpack.c.b16 %v4236, %v4235
    %v5031 = vpack.c.b16 %v4238, %v4237
    %v5032 = vpack.c.b16 %v4240, %v4239
    %v5033 = vpack.c.b16 %v4242, %v4241
    %v5034 = vpack.c.b16 %v4244, %v4243
    %v5035 = vpack.c.b16 %v4246, %v4245
    %v5036 = vpack.c.b16 %v4248, %v4247
    %v5037 = vpack.c.b16 %v4250, %v4249
    %v5038 = vpack.c.b16 %v4252, %v4251
    %v5039 = vpack.c.b16 %v4254, %v4253
    %v5040 = vpack.c.b16 %v4256, %v4255
    %v5041 = vpack.c.b16 %v4258, %v4257
    %v5042 = vpack.c.b16 %v4260, %v4259
    %v5043 = vpack.c.b16 %v4262, %v4261
    %v5044 = vpack.c.b16 %v4264, %v4263
    %v5045 = vpack.c.b16 %v4266, %v4265
    %v5046 = vpack.c.b16 %v4268, %v4267
    %v5047 = vpack.c.b16 %v4270, %v4269
    %v5048 = vpack.c.b16 %v4272, %v4271
    %v5049 = vpack.c.b16 %v4274, %v4273
    %v5050 = vpack.c.b16 %v4276, %v4275
    %v5051 = vpack.c.b16 %v4278, %v4277
    %v5052 = vpack.c.b16 %v4280, %v4279
    %v5053 = vpack.c.b16 %v4282, %v4281
    %v5054 = vpack.c.b16 %v4284, %v4283
    %v5055 = vpack.c.b16 %v4286, %v4285
    %v5056 = vpack.c.b16 %v4288, %v4287
    %v5057 = vpack.c.b16 %v4290, %v4289
    %v5058 = vpack.c.b16 %v4292, %v4291
    %v5059 = vpack.c.b16 %v4294, %v4293
    %v5060 = vpack.c.b16 %v4296, %v4295
    %v5061 = vpack.c.b16 %v4298, %v4297
    %v5062 = vpack.c.b16 %v4300, %v4299
    %v5063 = vpack.c.b16 %v4302, %v4301
    %v5064 = vpack.c.b16 %v4304, %v4303
    %v5065 = vpack.c.b16 %v4306, %v4305
    %v5066 = vpack.c.b16 %v4308, %v4307
    %v5067 = vpack.c.b16 %v4310, %v4309
    %v5068 = vpack.c.b16 %v4312, %v4311
    %v5069 = vpack.c.b16 %v4314, %v4313
    %v5070 = vpack.c.b16 %v4316, %v4315
    %v5071 = vpack.c.b16 %v4318, %v4317
    %v5072 = vpack.c.b16 %v4320, %v4319
    %v5073 = vpack.c.b16 %v4322, %v4321
    %v5074 = vpack.c.b16 %v4324, %v4323
    %v5075 = vpack.c.b16 %v4326, %v4325
    %v5076 = vpack.c.b16 %v4328, %v4327
    %v5077 = vpack.c.b16 %v4330, %v4329
    %v5078 = vpack.c.b16 %v4332, %v4331
    %v5079 = vpack.c.b16 %v4334, %v4333
    %v5080 = vpack.c.b16 %v4336, %v4335
    %v5081 = vpack.c.b16 %v4338, %v4337
    %v5082 = vpack.c.b16 %v4340, %v4339
    %v5083 = vpack.c.b16 %v4342, %v4341
    %v5084 = vpack.c.b16 %v4344, %v4343
    %v5085 = vpack.c.b16 %v4346, %v4345
    %v5086 = vpack.c.b16 %v4348, %v4347
    %v5087 = vpack.c.b16 %v4350, %v4349
    %v5088 = vpack.c.b16 %v4352, %v4351
    %v5089 = vpack.c.b16 %v4354, %v4353
    %v5090 = vpack.c.b16 %v4356, %v4355
    %v5091 = vpack.c.b16 %v4358, %v4357
    %v5092 = vpack.c.b16 %v4360, %v4359
    %v5093 = vpack.c.b16 %v4362, %v4361
    %v5094 = vpack.c.b16 %v4364, %v4363
    %v5095 = vpack.c.b16 %v4366, %v4365
    %v5096 = vpack.c.b16 %v4368, %v4367
    %v5097 = vpack.c.b16 %v4370, %v4369
    %v5098 = vpack.c.b16 %v4372, %v4371
    %v5099 = vpack.c.b16 %v4374, %v4373
    %v5100 = vpack.c.b16 %v4376, %v4375
    %v5101 = vpack.c.b16 %v4378, %v4377
    %v5102 = vpack.c.b16 %v4380, %v4379
    %v5103 = vpack.c.b16 %v4382, %v4381
    %v5104 = vpack.c.b16 %v4384, %v4383
    %v5105 = vpack.c.b16 %v4386, %v4385
    %v5106 = vpack.c.b16 %v4388, %v4387
    %v5107 = vpack.c.b16 %v4390, %v4389
    %v5108 = vpack.c.b16 %v4392, %v4391
    %v5109 = vpack.c.b16 %v4394, %v4393
    %v5110 = vpack.c.b16 %v4396, %v4395
    %v5111 = vpack.c.b16 %v4398, %v4397
    %v5112 = vpack.c.b16 %v4400, %v4399
    %v5113 = vpack.c.b16 %v4402, %v4401
    %v5114 = vpack.c.b16 %v4404, %v4403
    %v5115 = vpack.c.b16 %v4406, %v4405
    %v5116 = vpack.c.b16 %v4408, %v4407
    %v5117 = vpack.c.b16 %v4410, %v4409
    %v5118 = vpack.c.b16 %v4412, %v4411
    %v5119 = vpack.c.b16 %v4414, %v4413
    %v5120 = vpack.c.b16 %v4416, %v4415
    %v5121 = vpack.c.b16 %v4418, %v4417
    %v5122 = vpack.c.b16 %v4420, %v4419
    %v5123 = vpack.c.b16 %v4422, %v4421
    %v5124 = vpack.c.b16 %v4424, %v4423
    %v5125 = vpack.c.b16 %v4426, %v4425
    %v5126 = vpack.c.b16 %v4428, %v4427
    %v5127 = vpack.c.b16 %v4430, %v4429
    %v5128 = vpack.c.b16 %v4432, %v4431
    %v5129 = vpack.c.b16 %v4434, %v4433
    %v5130 = vpack.c.b16 %v4436, %v4435
    %v5131 = vpack.c.b16 %v4438, %v4437
    %v5132 = vpack.c.b16 %v4440, %v4439
    %v5133 = vpack.c.b16 %v4442, %v4441
    %v5134 = vpack.c.b16 %v4444, %v4443
    %v5135 = vpack.c.b16 %v4446, %v4445
    %v5136 = vpack.c.b16 %v4448, %v4447
    %v5137 = vpack.c.b16 %v4450, %v4449
    %v5138 = vpack.c.b16 %v4452, %v4451
    %v5139 = vpack.c.b16 %v4454, %v4453
    %v5140 = vpack.c.b16 %v4456, %v4455
    %v5141 = vpack.c.b16 %v4458, %v4457
    %v5142 = vpack.c.b16 %v4460, %v4459
    %v5143 = vpack.c.b16 %v4462, %v4461
    %v5144 = vpack.c.b16 %v4464, %v4463
    %v5145 = vpack.c.b16 %v4466, %v4465
    %v5146 = vpack.c.b16 %v4468, %v4467
    %v5147 = vpack.c.b16 %v4470, %v4469
    %v5148 = vpack.c.b16 %v4472, %v4471
    %v5149 = vpack.c.b16 %v4474, %v4473
    %v5150 = vpack.c.b16 %v4476, %v4475
    %v5151 = vpack.c.b16 %v4478, %v4477
    %v5152 = vpack.c.b16 %v4480, %v4479
    %v5153 = vpack.c.b16 %v4482, %v4481
    %v5154 = vpack.c.b16 %v4484, %v4483
    %v5155 = vpack.c.b16 %v4486, %v4485
    %v5156 = vpack.c.b16 %v4488, %v4487
    %v5157 = vpack.c.b16 %v4490, %v4489
    %v5158 = vpack.c.b16 %v4492, %v4491
    %v5159 = vpack.c.b16 %v4494, %v4493
    %v5160 = vpack.c.b16 %v4496, %v4495
    %v5161 = vpack.c.b16 %v4498, %v4497
    %v5162 = vpack.c.b16 %v4500, %v4499
    %v5163 = vpack.c.b16 %v4502, %v4501
    %v5164 = vpack.c.b16 %v4504, %v4503
    %v5165 = vpack.c.b16 %v4506, %v4505
    %v5166 = vpack.c.b16 %v4508, %v4507
    %v5167 = vpack.c.b16 %v4510, %v4509
    %v5168 = vpack.c.b16 %v4512, %v4511
    %v5169 = vpack.c.b16 %v4514, %v4513
    %v5170 = vpack.c.b16 %v4516, %v4515
    %v5171 = vpack.c.b16 %v4518, %v4517
    %v5172 = vpack.c.b16 %v4520, %v4519
    %v5173 = vpack.c.b16 %v4522, %v4521
    %v5174 = vpack.c.b16 %v4524, %v4523
    %v5175 = vpack.c.b16 %v4526, %v4525
    %v5176 = vpack.c.b16 %v4528, %v4527
    %5825 = vmatprep.subr.bf16.mxu0 0
    %5826 = vmatpush1.bf16.msra.mxu0 %v4529
    %5827 = vmatprep.subr.bf16.mxu0 0
    %5828 = vmatpush1.bf16.msra.mxu0 %v4530
    %5829 = vmatprep.subr.bf16.mxu0 0
    %5830 = vmatpush1.bf16.msra.mxu0 %v4531
    %5831 = vmatprep.subr.bf16.mxu0 0
    %5832 = vmatpush1.bf16.msra.mxu0 %v4532
    %5833 = vmatprep.subr.bf16.mxu0 0
    %5834 = vmatpush1.bf16.msra.mxu0 %v4533
    %5835 = vmatprep.subr.bf16.mxu0 0
    %5836 = vmatpush1.bf16.msra.mxu0 %v4534
    %5837 = vmatprep.subr.bf16.mxu0 0
    %5838 = vmatpush1.bf16.msra.mxu0 %v4535
    %5839 = vmatprep.subr.bf16.mxu0 0
    %5840 = vmatpush1.bf16.msra.mxu0 %v4536
    %5841 = vmatprep.subr.bf16.mxu0 0
    %5842 = vmatpush1.bf16.msra.mxu0 %v4537
    %5843 = vmatprep.subr.bf16.mxu0 0
    %5844 = vmatpush1.bf16.msra.mxu0 %v4538
    %5845 = vmatprep.subr.bf16.mxu0 0
    %5846 = vmatpush1.bf16.msra.mxu0 %v4539
    %5847 = vmatprep.subr.bf16.mxu0 0
    %5848 = vmatpush1.bf16.msra.mxu0 %v4540
    %5849 = vmatprep.subr.bf16.mxu0 0
    %5850 = vmatpush1.bf16.msra.mxu0 %v4541
    %5851 = vmatprep.subr.bf16.mxu0 0
    %5852 = vmatpush1.bf16.msra.mxu0 %v4542
    %5853 = vmatprep.subr.bf16.mxu0 0
    %5854 = vmatpush1.bf16.msra.mxu0 %v4543
    %5855 = vmatprep.subr.bf16.mxu0 0
    %5856 = vmatpush1.bf16.msra.mxu0 %v4544
    %5857 = vmatprep.mubr.bf16.mxu0 %v1389
    %5858 = vmatmul.mubr.bf16.gmra.mrb[0].mxu0 %v1375
    %v5859 = vpop.f32.mrb[0].mxu0
    %v5860 = vadd.f32 0.0, %v5859
    %v5861 = vpop.f32.mrb[0].mxu0
    %v5862 = vpop.f32.mrb[0].mxu0
    %v5863 = vpop.f32.mrb[0].mxu0
    %5864 = vdwg.mxu0
    %5865 = vmatprep.subr.bf16.mxu0 0
    %5866 = vmatpush1.bf16.msra.mxu0 %v4545
    %5867 = vmatprep.subr.bf16.mxu0 0
    %5868 = vmatpush1.bf16.msra.mxu0 %v4546
    %5869 = vmatprep.subr.bf16.mxu0 0
    %5870 = vmatpush1.bf16.msra.mxu0 %v4547
    %5871 = vmatprep.subr.bf16.mxu0 0
    %5872 = vmatpush1.bf16.msra.mxu0 %v4548
    %5873 = vmatprep.subr.bf16.mxu0 0
    %5874 = vmatpush1.bf16.msra.mxu0 %v4549
    %5875 = vmatprep.subr.bf16.mxu0 0
    %5876 = vmatpush1.bf16.msra.mxu0 %v4550
    %5877 = vmatprep.subr.bf16.mxu0 0
    %5878 = vmatpush1.bf16.msra.mxu0 %v4551
    %5879 = vmatprep.subr.bf16.mxu0 0
    %5880 = vmatpush1.bf16.msra.mxu0 %v4552
    %5881 = vmatprep.subr.bf16.mxu0 0
    %5882 = vmatpush1.bf16.msra.mxu0 %v4553
    %5883 = vmatprep.subr.bf16.mxu0 0
    %5884 = vmatpush1.bf16.msra.mxu0 %v4554
    %5885 = vmatprep.subr.bf16.mxu0 0
    %5886 = vmatpush1.bf16.msra.mxu0 %v4555
    %5887 = vmatprep.subr.bf16.mxu0 0
    %5888 = vmatpush1.bf16.msra.mxu0 %v4556
    %5889 = vmatprep.subr.bf16.mxu0 0
    %5890 = vmatpush1.bf16.msra.mxu0 %v4557
    %5891 = vmatprep.subr.bf16.mxu0 0
    %5892 = vmatpush1.bf16.msra.mxu0 %v4558
    %5893 = vmatprep.subr.bf16.mxu0 0
    %5894 = vmatpush1.bf16.msra.mxu0 %v4559
    %5895 = vmatprep.subr.bf16.mxu0 0
    %5896 = vmatpush1.bf16.msra.mxu0 %v4560
    %5897 = vmatprep.mubr.bf16.mxu0 %v1399
    %5898 = vmatmul.mubr.bf16.gmra.mrb[0].mxu0 %v1397
    %v5899 = vpop.f32.mrb[0].mxu0
    %v5900 = vadd.f32 %v5860, %v5899
    %v5901 = vpop.f32.mrb[0].mxu0
    %v5902 = vpop.f32.mrb[0].mxu0
    %v5903 = vpop.f32.mrb[0].mxu0
    %5904 = vdwg.mxu0
    %5905 = vmatprep.subr.bf16.mxu0 0
    %5906 = vmatpush1.bf16.msra.mxu0 %v4561
    %5907 = vmatprep.subr.bf16.mxu0 0
    %5908 = vmatpush1.bf16.msra.mxu0 %v4562
    %5909 = vmatprep.subr.bf16.mxu0 0
    %5910 = vmatpush1.bf16.msra.mxu0 %v4563
    %5911 = vmatprep.subr.bf16.mxu0 0
    %5912 = vmatpush1.bf16.msra.mxu0 %v4564
    %5913 = vmatprep.subr.bf16.mxu0 0
    %5914 = vmatpush1.bf16.msra.mxu0 %v4565
    %5915 = vmatprep.subr.bf16.mxu0 0
    %5916 = vmatpush1.bf16.msra.mxu0 %v4566
    %5917 = vmatprep.subr.bf16.mxu0 0
    %5918 = vmatpush1.bf16.msra.mxu0 %v4567
    %5919 = vmatprep.subr.bf16.mxu0 0
    %5920 = vmatpush1.bf16.msra.mxu0 %v4568
    %5921 = vmatprep.subr.bf16.mxu0 0
    %5922 = vmatpush1.bf16.msra.mxu0 %v4569
    %5923 = vmatprep.subr.bf16.mxu0 0
    %5924 = vmatpush1.bf16.msra.mxu0 %v4570
    %5925 = vmatprep.subr.bf16.mxu0 0
    %5926 = vmatpush1.bf16.msra.mxu0 %v4571
    %5927 = vmatprep.subr.bf16.mxu0 0
    %5928 = vmatpush1.bf16.msra.mxu0 %v4572
    %5929 = vmatprep.subr.bf16.mxu0 0
    %5930 = vmatpush1.bf16.msra.mxu0 %v4573
    %5931 = vmatprep.subr.bf16.mxu0 0
    %5932 = vmatpush1.bf16.msra.mxu0 %v4574
    %5933 = vmatprep.subr.bf16.mxu0 0
    %5934 = vmatpush1.bf16.msra.mxu0 %v4575
    %5935 = vmatprep.subr.bf16.mxu0 0
    %5936 = vmatpush1.bf16.msra.mxu0 %v4576
    %5937 = vmatprep.mubr.bf16.mxu0 %v1396
    %5938 = vmatmul.mubr.bf16.gmra.mrb[0].mxu0 %v1382
    %v5939 = vpop.f32.mrb[0].mxu0
    %v5940 = vadd.f32 %v5900, %v5939
    %v5941 = vpop.f32.mrb[0].mxu0
    %v5942 = vpop.f32.mrb[0].mxu0
    %v5943 = vpop.f32.mrb[0].mxu0
    %5944 = vdwg.mxu0
    %5945 = vmatprep.subr.bf16.mxu0 0
    %5946 = vmatpush1.bf16.msra.mxu0 %v4577
    %5947 = vmatprep.subr.bf16.mxu0 0
    %5948 = vmatpush1.bf16.msra.mxu0 %v4578
    %5949 = vmatprep.subr.bf16.mxu0 0
    %5950 = vmatpush1.bf16.msra.mxu0 %v4579
    %5951 = vmatprep.subr.bf16.mxu0 0
    %5952 = vmatpush1.bf16.msra.mxu0 %v4580
    %5953 = vmatprep.subr.bf16.mxu0 0
    %5954 = vmatpush1.bf16.msra.mxu0 %v4581
    %5955 = vmatprep.subr.bf16.mxu0 0
    %5956 = vmatpush1.bf16.msra.mxu0 %v4582
    %5957 = vmatprep.subr.bf16.mxu0 0
    %5958 = vmatpush1.bf16.msra.mxu0 %v4583
    %5959 = vmatprep.subr.bf16.mxu0 0
    %5960 = vmatpush1.bf16.msra.mxu0 %v4584
    %5961 = vmatprep.subr.bf16.mxu0 0
    %5962 = vmatpush1.bf16.msra.mxu0 %v4585
    %5963 = vmatprep.subr.bf16.mxu0 0
    %5964 = vmatpush1.bf16.msra.mxu0 %v4586
    %5965 = vmatprep.subr.bf16.mxu0 0
    %5966 = vmatpush1.bf16.msra.mxu0 %v4587
    %5967 = vmatprep.subr.bf16.mxu0 0
    %5968 = vmatpush1.bf16.msra.mxu0 %v4588
    %5969 = vmatprep.subr.bf16.mxu0 0
    %5970 = vmatpush1.bf16.msra.mxu0 %v4589
    %5971 = vmatprep.subr.bf16.mxu0 0
    %5972 = vmatpush1.bf16.msra.mxu0 %v4590
    %5973 = vmatprep.subr.bf16.mxu0 0
    %5974 = vmatpush1.bf16.msra.mxu0 %v4591
    %5975 = vmatprep.subr.bf16.mxu0 0
    %5976 = vmatpush1.bf16.msra.mxu0 %v4592
    %5977 = vmatprep.mubr.bf16.mxu0 %v1400
    %5978 = vmatmul.mubr.bf16.gmra.mrb[0].mxu0 %v1398
    %v5979 = vpop.f32.mrb[0].mxu0
    %v5980 = vadd.f32 %v5940, %v5979
    %v5981 = vpop.f32.mrb[0].mxu0
    %v5982 = vpop.f32.mrb[0].mxu0
    %v5983 = vpop.f32.mrb[0].mxu0
    %5984 = vdwg.mxu0
    %5985 = vmatprep.subr.bf16.mxu0 0
    %5986 = vmatpush1.bf16.msra.mxu0 %v4593
    %5987 = vmatprep.subr.bf16.mxu0 0
    %5988 = vmatpush1.bf16.msra.mxu0 %v4594
    %5989 = vmatprep.subr.bf16.mxu0 0
    %5990 = vmatpush1.bf16.msra.mxu0 %v4595
    %5991 = vmatprep.subr.bf16.mxu0 0
    %5992 = vmatpush1.bf16.msra.mxu0 %v4596
    %5993 = vmatprep.subr.bf16.mxu0 0
    %5994 = vmatpush1.bf16.msra.mxu0 %v4597
    %5995 = vmatprep.subr.bf16.mxu0 0
    %5996 = vmatpush1.bf16.msra.mxu0 %v4598
    %5997 = vmatprep.subr.bf16.mxu0 0
    %5998 = vmatpush1.bf16.msra.mxu0 %v4599
    %5999 = vmatprep.subr.bf16.mxu0 0
    %6000 = vmatpush1.bf16.msra.mxu0 %v4600
    %6001 = vmatprep.subr.bf16.mxu0 0
    %6002 = vmatpush1.bf16.msra.mxu0 %v4601
    %6003 = vmatprep.subr.bf16.mxu0 0
    %6004 = vmatpush1.bf16.msra.mxu0 %v4602
    %6005 = vmatprep.subr.bf16.mxu0 0
    %6006 = vmatpush1.bf16.msra.mxu0 %v4603
    %6007 = vmatprep.subr.bf16.mxu0 0
    %6008 = vmatpush1.bf16.msra.mxu0 %v4604
    %6009 = vmatprep.subr.bf16.mxu0 0
    %6010 = vmatpush1.bf16.msra.mxu0 %v4605
    %6011 = vmatprep.subr.bf16.mxu0 0
    %6012 = vmatpush1.bf16.msra.mxu0 %v4606
    %6013 = vmatprep.subr.bf16.mxu0 0
    %6014 = vmatpush1.bf16.msra.mxu0 %v4607
    %6015 = vmatprep.subr.bf16.mxu0 0
    %6016 = vmatpush1.bf16.msra.mxu0 %v4608
    %6017 = vmatprep.mubr.bf16.mxu0 %v1438
    %6018 = vmatmul.mubr.bf16.gmra.mrb[0].mxu0 %v1424
    %v6019 = vpop.f32.mrb[0].mxu0
    %v6020 = vadd.f32 %v5980, %v6019
    %v6021 = vpop.f32.mrb[0].mxu0
    %v6022 = vpop.f32.mrb[0].mxu0
    %v6023 = vpop.f32.mrb[0].mxu0
    %6024 = vdwg.mxu0
    %6025 = vmatprep.subr.bf16.mxu0 0
    %6026 = vmatpush1.bf16.msra.mxu0 %v4609
    %6027 = vmatprep.subr.bf16.mxu0 0
    %6028 = vmatpush1.bf16.msra.mxu0 %v4610
    %6029 = vmatprep.subr.bf16.mxu0 0
    %6030 = vmatpush1.bf16.msra.mxu0 %v4611
    %6031 = vmatprep.subr.bf16.mxu0 0
    %6032 = vmatpush1.bf16.msra.mxu0 %v4612
    %6033 = vmatprep.subr.bf16.mxu0 0
    %6034 = vmatpush1.bf16.msra.mxu0 %v4613
    %6035 = vmatprep.subr.bf16.mxu0 0
    %6036 = vmatpush1.bf16.msra.mxu0 %v4614
    %6037 = vmatprep.subr.bf16.mxu0 0
    %6038 = vmatpush1.bf16.msra.mxu0 %v4615
    %6039 = vmatprep.subr.bf16.mxu0 0
    %6040 = vmatpush1.bf16.msra.mxu0 %v4616
    %6041 = vmatprep.subr.bf16.mxu0 0
    %6042 = vmatpush1.bf16.msra.mxu0 %v4617
    %6043 = vmatprep.subr.bf16.mxu0 0
    %6044 = vmatpush1.bf16.msra.mxu0 %v4618
    %6045 = vmatprep.subr.bf16.mxu0 0
    %6046 = vmatpush1.bf16.msra.mxu0 %v4619
    %6047 = vmatprep.subr.bf16.mxu0 0
    %6048 = vmatpush1.bf16.msra.mxu0 %v4620
    %6049 = vmatprep.subr.bf16.mxu0 0
    %6050 = vmatpush1.bf16.msra.mxu0 %v4621
    %6051 = vmatprep.subr.bf16.mxu0 0
    %6052 = vmatpush1.bf16.msra.mxu0 %v4622
    %6053 = vmatprep.subr.bf16.mxu0 0
    %6054 = vmatpush1.bf16.msra.mxu0 %v4623
    %6055 = vmatprep.subr.bf16.mxu0 0
    %6056 = vmatpush1.bf16.msra.mxu0 %v4624
    %6057 = vmatprep.mubr.bf16.mxu0 %v1448
    %6058 = vmatmul.mubr.bf16.gmra.mrb[0].mxu0 %v1446
    %v6059 = vpop.f32.mrb[0].mxu0
    %v6060 = vadd.f32 %v6020, %v6059
    %v6061 = vpop.f32.mrb[0].mxu0
    %v6062 = vpop.f32.mrb[0].mxu0
    %v6063 = vpop.f32.mrb[0].mxu0
    %6064 = vdwg.mxu0
    %6065 = vmatprep.subr.bf16.mxu0 0
    %6066 = vmatpush1.bf16.msra.mxu0 %v4625
    %6067 = vmatprep.subr.bf16.mxu0 0
    %6068 = vmatpush1.bf16.msra.mxu0 %v4626
    %6069 = vmatprep.subr.bf16.mxu0 0
    %6070 = vmatpush1.bf16.msra.mxu0 %v4627
    %6071 = vmatprep.subr.bf16.mxu0 0
    %6072 = vmatpush1.bf16.msra.mxu0 %v4628
    %6073 = vmatprep.subr.bf16.mxu0 0
    %6074 = vmatpush1.bf16.msra.mxu0 %v4629
    %6075 = vmatprep.subr.bf16.mxu0 0
    %6076 = vmatpush1.bf16.msra.mxu0 %v4630
    %6077 = vmatprep.subr.bf16.mxu0 0
    %6078 = vmatpush1.bf16.msra.mxu0 %v4631
    %6079 = vmatprep.subr.bf16.mxu0 0
    %6080 = vmatpush1.bf16.msra.mxu0 %v4632
    %6081 = vmatprep.subr.bf16.mxu0 0
    %6082 = vmatpush1.bf16.msra.mxu0 %v4633
    %6083 = vmatprep.subr.bf16.mxu0 0
    %6084 = vmatpush1.bf16.msra.mxu0 %v4634
    %6085 = vmatprep.subr.bf16.mxu0 0
    %6086 = vmatpush1.bf16.msra.mxu0 %v4635
    %6087 = vmatprep.subr.bf16.mxu0 0
    %6088 = vmatpush1.bf16.msra.mxu0 %v4636
    %6089 = vmatprep.subr.bf16.mxu0 0
    %6090 = vmatpush1.bf16.msra.mxu0 %v4637
    %6091 = vmatprep.subr.bf16.mxu0 0
    %6092 = vmatpush1.bf16.msra.mxu0 %v4638
    %6093 = vmatprep.subr.bf16.mxu0 0
    %6094 = vmatpush1.bf16.msra.mxu0 %v4639
    %6095 = vmatprep.subr.bf16.mxu0 0
    %6096 = vmatpush1.bf16.msra.mxu0 %v4640
    %6097 = vmatprep.mubr.bf16.mxu0 %v1445
    %6098 = vmatmul.mubr.bf16.gmra.mrb[0].mxu0 %v1431
    %v6099 = vpop.f32.mrb[0].mxu0
    %v6100 = vadd.f32 %v6060, %v6099
    %v6101 = vpop.f32.mrb[0].mxu0
    %v6102 = vpop.f32.mrb[0].mxu0
    %v6103 = vpop.f32.mrb[0].mxu0
    %6104 = vdwg.mxu0
    %6105 = vmatprep.subr.bf16.mxu0 0
    %6106 = vmatpush1.bf16.msra.mxu0 %v4641
    %6107 = vmatprep.subr.bf16.mxu0 0
    %6108 = vmatpush1.bf16.msra.mxu0 %v4642
    %6109 = vmatprep.subr.bf16.mxu0 0
    %6110 = vmatpush1.bf16.msra.mxu0 %v4643
    %6111 = vmatprep.subr.bf16.mxu0 0
    %6112 = vmatpush1.bf16.msra.mxu0 %v4644
    %6113 = vmatprep.subr.bf16.mxu0 0
    %6114 = vmatpush1.bf16.msra.mxu0 %v4645
    %6115 = vmatprep.subr.bf16.mxu0 0
    %6116 = vmatpush1.bf16.msra.mxu0 %v4646
    %6117 = vmatprep.subr.bf16.mxu0 0
    %6118 = vmatpush1.bf16.msra.mxu0 %v4647
    %6119 = vmatprep.subr.bf16.mxu0 0
    %6120 = vmatpush1.bf16.msra.mxu0 %v4648
    %6121 = vmatprep.subr.bf16.mxu0 0
    %6122 = vmatpush1.bf16.msra.mxu0 %v4649
    %6123 = vmatprep.subr.bf16.mxu0 0
    %6124 = vmatpush1.bf16.msra.mxu0 %v4650
    %6125 = vmatprep.subr.bf16.mxu0 0
    %6126 = vmatpush1.bf16.msra.mxu0 %v4651
    %6127 = vmatprep.subr.bf16.mxu0 0
    %6128 = vmatpush1.bf16.msra.mxu0 %v4652
    %6129 = vmatprep.subr.bf16.mxu0 0
    %6130 = vmatpush1.bf16.msra.mxu0 %v4653
    %6131 = vmatprep.subr.bf16.mxu0 0
    %6132 = vmatpush1.bf16.msra.mxu0 %v4654
    %6133 = vmatprep.subr.bf16.mxu0 0
    %6134 = vmatpush1.bf16.msra.mxu0 %v4655
    %6135 = vmatprep.subr.bf16.mxu0 0
    %6136 = vmatpush1.bf16.msra.mxu0 %v4656
    %6137 = vmatprep.mubr.bf16.mxu0 %v1449
    %6138 = vmatmul.mubr.bf16.gmra.mrb[0].mxu0 %v1447
    %v6139 = vpop.f32.mrb[0].mxu0
    %v6140 = vadd.f32 %v6100, %v6139
    %v6141 = vpop.f32.mrb[0].mxu0
    %v6142 = vpop.f32.mrb[0].mxu0
    %v6143 = vpop.f32.mrb[0].mxu0
    %6144 = vdwg.mxu0
    %6145 = vmatprep.subr.bf16.mxu0 0
    %6146 = vmatpush1.bf16.msra.mxu0 %v4657
    %6147 = vmatprep.subr.bf16.mxu0 0
    %6148 = vmatpush1.bf16.msra.mxu0 %v4658
    %6149 = vmatprep.subr.bf16.mxu0 0
    %6150 = vmatpush1.bf16.msra.mxu0 %v4659
    %6151 = vmatprep.subr.bf16.mxu0 0
    %6152 = vmatpush1.bf16.msra.mxu0 %v4660
    %6153 = vmatprep.subr.bf16.mxu0 0
    %6154 = vmatpush1.bf16.msra.mxu0 %v4661
    %6155 = vmatprep.subr.bf16.mxu0 0
    %6156 = vmatpush1.bf16.msra.mxu0 %v4662
    %6157 = vmatprep.subr.bf16.mxu0 0
    %6158 = vmatpush1.bf16.msra.mxu0 %v4663
    %6159 = vmatprep.subr.bf16.mxu0 0
    %6160 = vmatpush1.bf16.msra.mxu0 %v4664
    %6161 = vmatprep.subr.bf16.mxu0 0
    %6162 = vmatpush1.bf16.msra.mxu0 %v4665
    %6163 = vmatprep.subr.bf16.mxu0 0
    %6164 = vmatpush1.bf16.msra.mxu0 %v4666
    %6165 = vmatprep.subr.bf16.mxu0 0
    %6166 = vmatpush1.bf16.msra.mxu0 %v4667
    %6167 = vmatprep.subr.bf16.mxu0 0
    %6168 = vmatpush1.bf16.msra.mxu0 %v4668
    %6169 = vmatprep.subr.bf16.mxu0 0
    %6170 = vmatpush1.bf16.msra.mxu0 %v4669
    %6171 = vmatprep.subr.bf16.mxu0 0
    %6172 = vmatpush1.bf16.msra.mxu0 %v4670
    %6173 = vmatprep.subr.bf16.mxu0 0
    %6174 = vmatpush1.bf16.msra.mxu0 %v4671
    %6175 = vmatprep.subr.bf16.mxu0 0
    %6176 = vmatpush1.bf16.msra.mxu0 %v4672
    %6177 = vmatprep.mubr.bf16.mxu0 %v1487
    %6178 = vmatmul.mubr.bf16.gmra.mrb[0].mxu0 %v1473
    %v6179 = vpop.f32.mrb[0].mxu0
    %v6180 = vadd.f32 %v6140, %v6179
    %v6181 = vpop.f32.mrb[0].mxu0
    %v6182 = vpop.f32.mrb[0].mxu0
    %v6183 = vpop.f32.mrb[0].mxu0
    %6184 = vdwg.mxu0
    %6185 = vmatprep.subr.bf16.mxu0 0
    %6186 = vmatpush1.bf16.msra.mxu0 %v4673
    %6187 = vmatprep.subr.bf16.mxu0 0
    %6188 = vmatpush1.bf16.msra.mxu0 %v4674
    %6189 = vmatprep.subr.bf16.mxu0 0
    %6190 = vmatpush1.bf16.msra.mxu0 %v4675
    %6191 = vmatprep.subr.bf16.mxu0 0
    %6192 = vmatpush1.bf16.msra.mxu0 %v4676
    %6193 = vmatprep.subr.bf16.mxu0 0
    %6194 = vmatpush1.bf16.msra.mxu0 %v4677
    %6195 = vmatprep.subr.bf16.mxu0 0
    %6196 = vmatpush1.bf16.msra.mxu0 %v4678
    %6197 = vmatprep.subr.bf16.mxu0 0
    %6198 = vmatpush1.bf16.msra.mxu0 %v4679
    %6199 = vmatprep.subr.bf16.mxu0 0
    %6200 = vmatpush1.bf16.msra.mxu0 %v4680
    %6201 = vmatprep.subr.bf16.mxu0 0
    %6202 = vmatpush1.bf16.msra.mxu0 %v4681
    %6203 = vmatprep.subr.bf16.mxu0 0
    %6204 = vmatpush1.bf16.msra.mxu0 %v4682
    %6205 = vmatprep.subr.bf16.mxu0 0
    %6206 = vmatpush1.bf16.msra.mxu0 %v4683
    %6207 = vmatprep.subr.bf16.mxu0 0
    %6208 = vmatpush1.bf16.msra.mxu0 %v4684
    %6209 = vmatprep.subr.bf16.mxu0 0
    %6210 = vmatpush1.bf16.msra.mxu0 %v4685
    %6211 = vmatprep.subr.bf16.mxu0 0
    %6212 = vmatpush1.bf16.msra.mxu0 %v4686
    %6213 = vmatprep.subr.bf16.mxu0 0
    %6214 = vmatpush1.bf16.msra.mxu0 %v4687
    %6215 = vmatprep.subr.bf16.mxu0 0
    %6216 = vmatpush1.bf16.msra.mxu0 %v4688
    %6217 = vmatprep.mubr.bf16.mxu0 %v1497
    %6218 = vmatmul.mubr.bf16.gmra.mrb[0].mxu0 %v1495
    %v6219 = vpop.f32.mrb[0].mxu0
    %v6220 = vadd.f32 %v6180, %v6219
    %v6221 = vpop.f32.mrb[0].mxu0
    %v6222 = vpop.f32.mrb[0].mxu0
    %v6223 = vpop.f32.mrb[0].mxu0
    %6224 = vdwg.mxu0
    %6225 = vmatprep.subr.bf16.mxu0 0
    %6226 = vmatpush1.bf16.msra.mxu0 %v4689
    %6227 = vmatprep.subr.bf16.mxu0 0
    %6228 = vmatpush1.bf16.msra.mxu0 %v4690
    %6229 = vmatprep.subr.bf16.mxu0 0
    %6230 = vmatpush1.bf16.msra.mxu0 %v4691
    %6231 = vmatprep.subr.bf16.mxu0 0
    %6232 = vmatpush1.bf16.msra.mxu0 %v4692
    %6233 = vmatprep.subr.bf16.mxu0 0
    %6234 = vmatpush1.bf16.msra.mxu0 %v4693
    %6235 = vmatprep.subr.bf16.mxu0 0
    %6236 = vmatpush1.bf16.msra.mxu0 %v4694
    %6237 = vmatprep.subr.bf16.mxu0 0
    %6238 = vmatpush1.bf16.msra.mxu0 %v4695
    %6239 = vmatprep.subr.bf16.mxu0 0
    %6240 = vmatpush1.bf16.msra.mxu0 %v4696
    %6241 = vmatprep.subr.bf16.mxu0 0
    %6242 = vmatpush1.bf16.msra.mxu0 %v4697
    %6243 = vmatprep.subr.bf16.mxu0 0
    %6244 = vmatpush1.bf16.msra.mxu0 %v4698
    %6245 = vmatprep.subr.bf16.mxu0 0
    %6246 = vmatpush1.bf16.msra.mxu0 %v4699
    %6247 = vmatprep.subr.bf16.mxu0 0
    %6248 = vmatpush1.bf16.msra.mxu0 %v4700
    %6249 = vmatprep.subr.bf16.mxu0 0
    %6250 = vmatpush1.bf16.msra.mxu0 %v4701
    %6251 = vmatprep.subr.bf16.mxu0 0
    %6252 = vmatpush1.bf16.msra.mxu0 %v4702
    %6253 = vmatprep.subr.bf16.mxu0 0
    %6254 = vmatpush1.bf16.msra.mxu0 %v4703
    %6255 = vmatprep.subr.bf16.mxu0 0
    %6256 = vmatpush1.bf16.msra.mxu0 %v4704
    %6257 = vmatprep.mubr.bf16.mxu0 %v1494
    %6258 = vmatmul.mubr.bf16.gmra.mrb[0].mxu0 %v1480
    %v6259 = vpop.f32.mrb[0].mxu0
    %v6260 = vadd.f32 %v6220, %v6259
    %v6261 = vpop.f32.mrb[0].mxu0
    %v6262 = vpop.f32.mrb[0].mxu0
    %v6263 = vpop.f32.mrb[0].mxu0
    %6264 = vdwg.mxu0
    %6265 = vmatprep.subr.bf16.mxu0 0
    %6266 = vmatpush1.bf16.msra.mxu0 %v4705
    %6267 = vmatprep.subr.bf16.mxu0 0
    %6268 = vmatpush1.bf16.msra.mxu0 %v4706
    %6269 = vmatprep.subr.bf16.mxu0 0
    %6270 = vmatpush1.bf16.msra.mxu0 %v4707
    %6271 = vmatprep.subr.bf16.mxu0 0
    %6272 = vmatpush1.bf16.msra.mxu0 %v4708
    %6273 = vmatprep.subr.bf16.mxu0 0
    %6274 = vmatpush1.bf16.msra.mxu0 %v4709
    %6275 = vmatprep.subr.bf16.mxu0 0
    %6276 = vmatpush1.bf16.msra.mxu0 %v4710
    %6277 = vmatprep.subr.bf16.mxu0 0
    %6278 = vmatpush1.bf16.msra.mxu0 %v4711
    %6279 = vmatprep.subr.bf16.mxu0 0
    %6280 = vmatpush1.bf16.msra.mxu0 %v4712
    %6281 = vmatprep.subr.bf16.mxu0 0
    %6282 = vmatpush1.bf16.msra.mxu0 %v4713
    %6283 = vmatprep.subr.bf16.mxu0 0
    %6284 = vmatpush1.bf16.msra.mxu0 %v4714
    %6285 = vmatprep.subr.bf16.mxu0 0
    %6286 = vmatpush1.bf16.msra.mxu0 %v4715
    %6287 = vmatprep.subr.bf16.mxu0 0
    %6288 = vmatpush1.bf16.msra.mxu0 %v4716
    %6289 = vmatprep.subr.bf16.mxu0 0
    %6290 = vmatpush1.bf16.msra.mxu0 %v4717
    %6291 = vmatprep.subr.bf16.mxu0 0
    %6292 = vmatpush1.bf16.msra.mxu0 %v4718
    %6293 = vmatprep.subr.bf16.mxu0 0
    %6294 = vmatpush1.bf16.msra.mxu0 %v4719
    %6295 = vmatprep.subr.bf16.mxu0 0
    %6296 = vmatpush1.bf16.msra.mxu0 %v4720
    %6297 = vmatprep.mubr.bf16.mxu0 %v1498
    %6298 = vmatmul.mubr.bf16.gmra.mrb[0].mxu0 %v1496
    %v6299 = vpop.f32.mrb[0].mxu0
    %v6300 = vadd.f32 %v6260, %v6299
    %v6301 = vpop.f32.mrb[0].mxu0
    %v6302 = vpop.f32.mrb[0].mxu0
    %v6303 = vpop.f32.mrb[0].mxu0
    %6304 = vdwg.mxu0
    %6305 = vmatprep.subr.bf16.mxu0 0
    %6306 = vmatpush1.bf16.msra.mxu0 %v4721
    %6307 = vmatprep.subr.bf16.mxu0 0
    %6308 = vmatpush1.bf16.msra.mxu0 %v4722
    %6309 = vmatprep.subr.bf16.mxu0 0
    %6310 = vmatpush1.bf16.msra.mxu0 %v4723
    %6311 = vmatprep.subr.bf16.mxu0 0
    %6312 = vmatpush1.bf16.msra.mxu0 %v4724
    %6313 = vmatprep.subr.bf16.mxu0 0
    %6314 = vmatpush1.bf16.msra.mxu0 %v4725
    %6315 = vmatprep.subr.bf16.mxu0 0
    %6316 = vmatpush1.bf16.msra.mxu0 %v4726
    %6317 = vmatprep.subr.bf16.mxu0 0
    %6318 = vmatpush1.bf16.msra.mxu0 %v4727
    %6319 = vmatprep.subr.bf16.mxu0 0
    %6320 = vmatpush1.bf16.msra.mxu0 %v4728
    %6321 = vmatprep.subr.bf16.mxu0 0
    %6322 = vmatpush1.bf16.msra.mxu0 %v4729
    %6323 = vmatprep.subr.bf16.mxu0 0
    %6324 = vmatpush1.bf16.msra.mxu0 %v4730
    %6325 = vmatprep.subr.bf16.mxu0 0
    %6326 = vmatpush1.bf16.msra.mxu0 %v4731
    %6327 = vmatprep.subr.bf16.mxu0 0
    %6328 = vmatpush1.bf16.msra.mxu0 %v4732
    %6329 = vmatprep.subr.bf16.mxu0 0
    %6330 = vmatpush1.bf16.msra.mxu0 %v4733
    %6331 = vmatprep.subr.bf16.mxu0 0
    %6332 = vmatpush1.bf16.msra.mxu0 %v4734
    %6333 = vmatprep.subr.bf16.mxu0 0
    %6334 = vmatpush1.bf16.msra.mxu0 %v4735
    %6335 = vmatprep.subr.bf16.mxu0 0
    %6336 = vmatpush1.bf16.msra.mxu0 %v4736
    %6337 = vmatprep.mubr.bf16.mxu0 %v1536
    %6338 = vmatmul.mubr.bf16.gmra.mrb[0].mxu0 %v1522
    %v6339 = vpop.f32.mrb[0].mxu0
    %v6340 = vadd.f32 %v6300, %v6339
    %v6341 = vpop.f32.mrb[0].mxu0
    %v6342 = vpop.f32.mrb[0].mxu0
    %v6343 = vpop.f32.mrb[0].mxu0
    %6344 = vdwg.mxu0
    %6345 = vmatprep.subr.bf16.mxu0 0
    %6346 = vmatpush1.bf16.msra.mxu0 %v4737
    %6347 = vmatprep.subr.bf16.mxu0 0
    %6348 = vmatpush1.bf16.msra.mxu0 %v4738
    %6349 = vmatprep.subr.bf16.mxu0 0
    %6350 = vmatpush1.bf16.msra.mxu0 %v4739
    %6351 = vmatprep.subr.bf16.mxu0 0
    %6352 = vmatpush1.bf16.msra.mxu0 %v4740
    %6353 = vmatprep.subr.bf16.mxu0 0
    %6354 = vmatpush1.bf16.msra.mxu0 %v4741
    %6355 = vmatprep.subr.bf16.mxu0 0
    %6356 = vmatpush1.bf16.msra.mxu0 %v4742
    %6357 = vmatprep.subr.bf16.mxu0 0
    %6358 = vmatpush1.bf16.msra.mxu0 %v4743
    %6359 = vmatprep.subr.bf16.mxu0 0
    %6360 = vmatpush1.bf16.msra.mxu0 %v4744
    %6361 = vmatprep.subr.bf16.mxu0 0
    %6362 = vmatpush1.bf16.msra.mxu0 %v4745
    %6363 = vmatprep.subr.bf16.mxu0 0
    %6364 = vmatpush1.bf16.msra.mxu0 %v4746
    %6365 = vmatprep.subr.bf16.mxu0 0
    %6366 = vmatpush1.bf16.msra.mxu0 %v4747
    %6367 = vmatprep.subr.bf16.mxu0 0
    %6368 = vmatpush1.bf16.msra.mxu0 %v4748
    %6369 = vmatprep.subr.bf16.mxu0 0
    %6370 = vmatpush1.bf16.msra.mxu0 %v4749
    %6371 = vmatprep.subr.bf16.mxu0 0
    %6372 = vmatpush1.bf16.msra.mxu0 %v4750
    %6373 = vmatprep.subr.bf16.mxu0 0
    %6374 = vmatpush1.bf16.msra.mxu0 %v4751
    %6375 = vmatprep.subr.bf16.mxu0 0
    %6376 = vmatpush1.bf16.msra.mxu0 %v4752
    %6377 = vmatprep.mubr.bf16.mxu0 %v1546
    %6378 = vmatmul.mubr.bf16.gmra.mrb[0].mxu0 %v1544
    %v6379 = vpop.f32.mrb[0].mxu0
    %v6380 = vadd.f32 %v6340, %v6379
    %v6381 = vpop.f32.mrb[0].mxu0
    %v6382 = vpop.f32.mrb[0].mxu0
    %v6383 = vpop.f32.mrb[0].mxu0
    %6384 = vdwg.mxu0
    %6385 = vmatprep.subr.bf16.mxu0 0
    %6386 = vmatpush1.bf16.msra.mxu0 %v4753
    %6387 = vmatprep.subr.bf16.mxu0 0
    %6388 = vmatpush1.bf16.msra.mxu0 %v4754
    %6389 = vmatprep.subr.bf16.mxu0 0
    %6390 = vmatpush1.bf16.msra.mxu0 %v4755
    %6391 = vmatprep.subr.bf16.mxu0 0
    %6392 = vmatpush1.bf16.msra.mxu0 %v4756
    %6393 = vmatprep.subr.bf16.mxu0 0
    %6394 = vmatpush1.bf16.msra.mxu0 %v4757
    %6395 = vmatprep.subr.bf16.mxu0 0
    %6396 = vmatpush1.bf16.msra.mxu0 %v4758
    %6397 = vmatprep.subr.bf16.mxu0 0
    %6398 = vmatpush1.bf16.msra.mxu0 %v4759
    %6399 = vmatprep.subr.bf16.mxu0 0
    %6400 = vmatpush1.bf16.msra.mxu0 %v4760
    %6401 = vmatprep.subr.bf16.mxu0 0
    %6402 = vmatpush1.bf16.msra.mxu0 %v4761
    %6403 = vmatprep.subr.bf16.mxu0 0
    %6404 = vmatpush1.bf16.msra.mxu0 %v4762
    %6405 = vmatprep.subr.bf16.mxu0 0
    %6406 = vmatpush1.bf16.msra.mxu0 %v4763
    %6407 = vmatprep.subr.bf16.mxu0 0
    %6408 = vmatpush1.bf16.msra.mxu0 %v4764
    %6409 = vmatprep.subr.bf16.mxu0 0
    %6410 = vmatpush1.bf16.msra.mxu0 %v4765
    %6411 = vmatprep.subr.bf16.mxu0 0
    %6412 = vmatpush1.bf16.msra.mxu0 %v4766
    %6413 = vmatprep.subr.bf16.mxu0 0
    %6414 = vmatpush1.bf16.msra.mxu0 %v4767
    %6415 = vmatprep.subr.bf16.mxu0 0
    %6416 = vmatpush1.bf16.msra.mxu0 %v4768
    %6417 = vmatprep.mubr.bf16.mxu0 %v1543
    %6418 = vmatmul.mubr.bf16.gmra.mrb[0].mxu0 %v1529
    %v6419 = vpop.f32.mrb[0].mxu0
    %v6420 = vadd.f32 %v6380, %v6419
    %v6421 = vpop.f32.mrb[0].mxu0
    %v6422 = vpop.f32.mrb[0].mxu0
    %v6423 = vpop.f32.mrb[0].mxu0
    %6424 = vdwg.mxu0
    %6425 = vmatprep.subr.bf16.mxu0 0
    %6426 = vmatpush1.bf16.msra.mxu0 %v4769
    %6427 = vmatprep.subr.bf16.mxu0 0
    %6428 = vmatpush1.bf16.msra.mxu0 %v4770
    %6429 = vmatprep.subr.bf16.mxu0 0
    %6430 = vmatpush1.bf16.msra.mxu0 %v4771
    %6431 = vmatprep.subr.bf16.mxu0 0
    %6432 = vmatpush1.bf16.msra.mxu0 %v4772
    %6433 = vmatprep.subr.bf16.mxu0 0
    %6434 = vmatpush1.bf16.msra.mxu0 %v4773
    %6435 = vmatprep.subr.bf16.mxu0 0
    %6436 = vmatpush1.bf16.msra.mxu0 %v4774
    %6437 = vmatprep.subr.bf16.mxu0 0
    %6438 = vmatpush1.bf16.msra.mxu0 %v4775
    %6439 = vmatprep.subr.bf16.mxu0 0
    %6440 = vmatpush1.bf16.msra.mxu0 %v4776
    %6441 = vmatprep.subr.bf16.mxu0 0
    %6442 = vmatpush1.bf16.msra.mxu0 %v4777
    %6443 = vmatprep.subr.bf16.mxu0 0
    %6444 = vmatpush1.bf16.msra.mxu0 %v4778
    %6445 = vmatprep.subr.bf16.mxu0 0
    %6446 = vmatpush1.bf16.msra.mxu0 %v4779
    %6447 = vmatprep.subr.bf16.mxu0 0
    %6448 = vmatpush1.bf16.msra.mxu0 %v4780
    %6449 = vmatprep.subr.bf16.mxu0 0
    %6450 = vmatpush1.bf16.msra.mxu0 %v4781
    %6451 = vmatprep.subr.bf16.mxu0 0
    %6452 = vmatpush1.bf16.msra.mxu0 %v4782
    %6453 = vmatprep.subr.bf16.mxu0 0
    %6454 = vmatpush1.bf16.msra.mxu0 %v4783
    %6455 = vmatprep.subr.bf16.mxu0 0
    %6456 = vmatpush1.bf16.msra.mxu0 %v4784
    %6457 = vmatprep.mubr.bf16.mxu0 %v1547
    %6458 = vmatmul.mubr.bf16.gmra.mrb[0].mxu0 %v1545
    %v6459 = vpop.f32.mrb[0].mxu0
    %v6460 = vadd.f32 %v6420, %v6459
    %v6461 = vpop.f32.mrb[0].mxu0
    %v6462 = vpop.f32.mrb[0].mxu0
    %v6463 = vpop.f32.mrb[0].mxu0
    %6464 = vdwg.mxu0
    %6465 = vmatprep.subr.bf16.mxu0 0
    %6466 = vmatpush1.bf16.msra.mxu0 %v4785
    %6467 = vmatprep.subr.bf16.mxu0 0
    %6468 = vmatpush1.bf16.msra.mxu0 %v4786
    %6469 = vmatprep.subr.bf16.mxu0 0
    %6470 = vmatpush1.bf16.msra.mxu0 %v4787
    %6471 = vmatprep.subr.bf16.mxu0 0
    %6472 = vmatpush1.bf16.msra.mxu0 %v4788
    %6473 = vmatprep.subr.bf16.mxu0 0
    %6474 = vmatpush1.bf16.msra.mxu0 %v4789
    %6475 = vmatprep.subr.bf16.mxu0 0
    %6476 = vmatpush1.bf16.msra.mxu0 %v4790
    %6477 = vmatprep.subr.bf16.mxu0 0
    %6478 = vmatpush1.bf16.msra.mxu0 %v4791
    %6479 = vmatprep.subr.bf16.mxu0 0
    %6480 = vmatpush1.bf16.msra.mxu0 %v4792
    %6481 = vmatprep.subr.bf16.mxu0 0
    %6482 = vmatpush1.bf16.msra.mxu0 %v4793
    %6483 = vmatprep.subr.bf16.mxu0 0
    %6484 = vmatpush1.bf16.msra.mxu0 %v4794
    %6485 = vmatprep.subr.bf16.mxu0 0
    %6486 = vmatpush1.bf16.msra.mxu0 %v4795
    %6487 = vmatprep.subr.bf16.mxu0 0
    %6488 = vmatpush1.bf16.msra.mxu0 %v4796
    %6489 = vmatprep.subr.bf16.mxu0 0
    %6490 = vmatpush1.bf16.msra.mxu0 %v4797
    %6491 = vmatprep.subr.bf16.mxu0 0
    %6492 = vmatpush1.bf16.msra.mxu0 %v4798
    %6493 = vmatprep.subr.bf16.mxu0 0
    %6494 = vmatpush1.bf16.msra.mxu0 %v4799
    %6495 = vmatprep.subr.bf16.mxu0 0
    %6496 = vmatpush1.bf16.msra.mxu0 %v4800
    %6497 = vmatprep.mubr.bf16.mxu0 %v1585
    %6498 = vmatmul.mubr.bf16.gmra.mrb[0].mxu0 %v1571
    %v6499 = vpop.f32.mrb[0].mxu0
    %v6500 = vadd.f32 %v6460, %v6499
    %v6501 = vpop.f32.mrb[0].mxu0
    %v6502 = vpop.f32.mrb[0].mxu0
    %v6503 = vpop.f32.mrb[0].mxu0
    %6504 = vdwg.mxu0
    %6505 = vmatprep.subr.bf16.mxu0 0
    %6506 = vmatpush1.bf16.msra.mxu0 %v4801
    %6507 = vmatprep.subr.bf16.mxu0 0
    %6508 = vmatpush1.bf16.msra.mxu0 %v4802
    %6509 = vmatprep.subr.bf16.mxu0 0
    %6510 = vmatpush1.bf16.msra.mxu0 %v4803
    %6511 = vmatprep.subr.bf16.mxu0 0
    %6512 = vmatpush1.bf16.msra.mxu0 %v4804
    %6513 = vmatprep.subr.bf16.mxu0 0
    %6514 = vmatpush1.bf16.msra.mxu0 %v4805
    %6515 = vmatprep.subr.bf16.mxu0 0
    %6516 = vmatpush1.bf16.msra.mxu0 %v4806
    %6517 = vmatprep.subr.bf16.mxu0 0
    %6518 = vmatpush1.bf16.msra.mxu0 %v4807
    %6519 = vmatprep.subr.bf16.mxu0 0
    %6520 = vmatpush1.bf16.msra.mxu0 %v4808
    %6521 = vmatprep.subr.bf16.mxu0 0
    %6522 = vmatpush1.bf16.msra.mxu0 %v4809
    %6523 = vmatprep.subr.bf16.mxu0 0
    %6524 = vmatpush1.bf16.msra.mxu0 %v4810
    %6525 = vmatprep.subr.bf16.mxu0 0
    %6526 = vmatpush1.bf16.msra.mxu0 %v4811
    %6527 = vmatprep.subr.bf16.mxu0 0
    %6528 = vmatpush1.bf16.msra.mxu0 %v4812
    %6529 = vmatprep.subr.bf16.mxu0 0
    %6530 = vmatpush1.bf16.msra.mxu0 %v4813
    %6531 = vmatprep.subr.bf16.mxu0 0
    %6532 = vmatpush1.bf16.msra.mxu0 %v4814
    %6533 = vmatprep.subr.bf16.mxu0 0
    %6534 = vmatpush1.bf16.msra.mxu0 %v4815
    %6535 = vmatprep.subr.bf16.mxu0 0
    %6536 = vmatpush1.bf16.msra.mxu0 %v4816
    %6537 = vmatprep.mubr.bf16.mxu0 %v1595
    %6538 = vmatmul.mubr.bf16.gmra.mrb[0].mxu0 %v1593
    %v6539 = vpop.f32.mrb[0].mxu0
    %v6540 = vadd.f32 %v6500, %v6539
    %v6541 = vpop.f32.mrb[0].mxu0
    %v6542 = vpop.f32.mrb[0].mxu0
    %v6543 = vpop.f32.mrb[0].mxu0
    %6544 = vdwg.mxu0
    %6545 = vmatprep.subr.bf16.mxu0 0
    %6546 = vmatpush1.bf16.msra.mxu0 %v4817
    %6547 = vmatprep.subr.bf16.mxu0 0
    %6548 = vmatpush1.bf16.msra.mxu0 %v4818
    %6549 = vmatprep.subr.bf16.mxu0 0
    %6550 = vmatpush1.bf16.msra.mxu0 %v4819
    %6551 = vmatprep.subr.bf16.mxu0 0
    %6552 = vmatpush1.bf16.msra.mxu0 %v4820
    %6553 = vmatprep.subr.bf16.mxu0 0
    %6554 = vmatpush1.bf16.msra.mxu0 %v4821
    %6555 = vmatprep.subr.bf16.mxu0 0
    %6556 = vmatpush1.bf16.msra.mxu0 %v4822
    %6557 = vmatprep.subr.bf16.mxu0 0
    %6558 = vmatpush1.bf16.msra.mxu0 %v4823
    %6559 = vmatprep.subr.bf16.mxu0 0
    %6560 = vmatpush1.bf16.msra.mxu0 %v4824
    %6561 = vmatprep.subr.bf16.mxu0 0
    %6562 = vmatpush1.bf16.msra.mxu0 %v4825
    %6563 = vmatprep.subr.bf16.mxu0 0
    %6564 = vmatpush1.bf16.msra.mxu0 %v4826
    %6565 = vmatprep.subr.bf16.mxu0 0
    %6566 = vmatpush1.bf16.msra.mxu0 %v4827
    %6567 = vmatprep.subr.bf16.mxu0 0
    %6568 = vmatpush1.bf16.msra.mxu0 %v4828
    %6569 = vmatprep.subr.bf16.mxu0 0
    %6570 = vmatpush1.bf16.msra.mxu0 %v4829
    %6571 = vmatprep.subr.bf16.mxu0 0
    %6572 = vmatpush1.bf16.msra.mxu0 %v4830
    %6573 = vmatprep.subr.bf16.mxu0 0
    %6574 = vmatpush1.bf16.msra.mxu0 %v4831
    %6575 = vmatprep.subr.bf16.mxu0 0
    %6576 = vmatpush1.bf16.msra.mxu0 %v4832
    %6577 = vmatprep.mubr.bf16.mxu0 %v1592
    %6578 = vmatmul.mubr.bf16.gmra.mrb[0].mxu0 %v1578
    %v6579 = vpop.f32.mrb[0].mxu0
    %v6580 = vadd.f32 %v6540, %v6579
    %v6581 = vpop.f32.mrb[0].mxu0
    %v6582 = vpop.f32.mrb[0].mxu0
    %v6583 = vpop.f32.mrb[0].mxu0
    %6584 = vdwg.mxu0
    %6585 = vmatprep.subr.bf16.mxu0 0
    %6586 = vmatpush1.bf16.msra.mxu0 %v4833
    %6587 = vmatprep.subr.bf16.mxu0 0
    %6588 = vmatpush1.bf16.msra.mxu0 %v4834
    %6589 = vmatprep.subr.bf16.mxu0 0
    %6590 = vmatpush1.bf16.msra.mxu0 %v4835
    %6591 = vmatprep.subr.bf16.mxu0 0
    %6592 = vmatpush1.bf16.msra.mxu0 %v4836
    %6593 = vmatprep.subr.bf16.mxu0 0
    %6594 = vmatpush1.bf16.msra.mxu0 %v4837
    %6595 = vmatprep.subr.bf16.mxu0 0
    %6596 = vmatpush1.bf16.msra.mxu0 %v4838
    %6597 = vmatprep.subr.bf16.mxu0 0
    %6598 = vmatpush1.bf16.msra.mxu0 %v4839
    %6599 = vmatprep.subr.bf16.mxu0 0
    %6600 = vmatpush1.bf16.msra.mxu0 %v4840
    %6601 = vmatprep.subr.bf16.mxu0 0
    %6602 = vmatpush1.bf16.msra.mxu0 %v4841
    %6603 = vmatprep.subr.bf16.mxu0 0
    %6604 = vmatpush1.bf16.msra.mxu0 %v4842
    %6605 = vmatprep.subr.bf16.mxu0 0
    %6606 = vmatpush1.bf16.msra.mxu0 %v4843
    %6607 = vmatprep.subr.bf16.mxu0 0
    %6608 = vmatpush1.bf16.msra.mxu0 %v4844
    %6609 = vmatprep.subr.bf16.mxu0 0
    %6610 = vmatpush1.bf16.msra.mxu0 %v4845
    %6611 = vmatprep.subr.bf16.mxu0 0
    %6612 = vmatpush1.bf16.msra.mxu0 %v4846
    %6613 = vmatprep.subr.bf16.mxu0 0
    %6614 = vmatpush1.bf16.msra.mxu0 %v4847
    %6615 = vmatprep.subr.bf16.mxu0 0
    %6616 = vmatpush1.bf16.msra.mxu0 %v4848
    %6617 = vmatprep.mubr.bf16.mxu0 %v1596
    %6618 = vmatmul.mubr.bf16.gmra.mrb[0].mxu0 %v1594
    %v6619 = vpop.f32.mrb[0].mxu0
    %v6620 = vadd.f32 %v6580, %v6619
    %v6621 = vpop.f32.mrb[0].mxu0
    %v6622 = vpop.f32.mrb[0].mxu0
    %v6623 = vpop.f32.mrb[0].mxu0
    %6624 = vdwg.mxu0
    %6625 = vmatprep.subr.bf16.mxu0 0
    %6626 = vmatpush1.bf16.msra.mxu0 %v4849
    %6627 = vmatprep.subr.bf16.mxu0 0
    %6628 = vmatpush1.bf16.msra.mxu0 %v4850
    %6629 = vmatprep.subr.bf16.mxu0 0
    %6630 = vmatpush1.bf16.msra.mxu0 %v4851
    %6631 = vmatprep.subr.bf16.mxu0 0
    %6632 = vmatpush1.bf16.msra.mxu0 %v4852
    %6633 = vmatprep.subr.bf16.mxu0 0
    %6634 = vmatpush1.bf16.msra.mxu0 %v4853
    %6635 = vmatprep.subr.bf16.mxu0 0
    %6636 = vmatpush1.bf16.msra.mxu0 %v4854
    %6637 = vmatprep.subr.bf16.mxu0 0
    %6638 = vmatpush1.bf16.msra.mxu0 %v4855
    %6639 = vmatprep.subr.bf16.mxu0 0
    %6640 = vmatpush1.bf16.msra.mxu0 %v4856
    %6641 = vmatprep.subr.bf16.mxu0 0
    %6642 = vmatpush1.bf16.msra.mxu0 %v4857
    %6643 = vmatprep.subr.bf16.mxu0 0
    %6644 = vmatpush1.bf16.msra.mxu0 %v4858
    %6645 = vmatprep.subr.bf16.mxu0 0
    %6646 = vmatpush1.bf16.msra.mxu0 %v4859
    %6647 = vmatprep.subr.bf16.mxu0 0
    %6648 = vmatpush1.bf16.msra.mxu0 %v4860
    %6649 = vmatprep.subr.bf16.mxu0 0
    %6650 = vmatpush1.bf16.msra.mxu0 %v4861
    %6651 = vmatprep.subr.bf16.mxu0 0
    %6652 = vmatpush1.bf16.msra.mxu0 %v4862
    %6653 = vmatprep.subr.bf16.mxu0 0
    %6654 = vmatpush1.bf16.msra.mxu0 %v4863
    %6655 = vmatprep.subr.bf16.mxu0 0
    %6656 = vmatpush1.bf16.msra.mxu0 %v4864
    %6657 = vmatprep.mubr.bf16.mxu0 %v1634
    %6658 = vmatmul.mubr.bf16.gmra.mrb[0].mxu0 %v1620
    %v6659 = vpop.f32.mrb[0].mxu0
    %v6660 = vadd.f32 %v6620, %v6659
    %v6661 = vpop.f32.mrb[0].mxu0
    %v6662 = vpop.f32.mrb[0].mxu0
    %v6663 = vpop.f32.mrb[0].mxu0
    %6664 = vdwg.mxu0
    %6665 = vmatprep.subr.bf16.mxu0 0
    %6666 = vmatpush1.bf16.msra.mxu0 %v4865
    %6667 = vmatprep.subr.bf16.mxu0 0
    %6668 = vmatpush1.bf16.msra.mxu0 %v4866
    %6669 = vmatprep.subr.bf16.mxu0 0
    %6670 = vmatpush1.bf16.msra.mxu0 %v4867
    %6671 = vmatprep.subr.bf16.mxu0 0
    %6672 = vmatpush1.bf16.msra.mxu0 %v4868
    %6673 = vmatprep.subr.bf16.mxu0 0
    %6674 = vmatpush1.bf16.msra.mxu0 %v4869
    %6675 = vmatprep.subr.bf16.mxu0 0
    %6676 = vmatpush1.bf16.msra.mxu0 %v4870
    %6677 = vmatprep.subr.bf16.mxu0 0
    %6678 = vmatpush1.bf16.msra.mxu0 %v4871
    %6679 = vmatprep.subr.bf16.mxu0 0
    %6680 = vmatpush1.bf16.msra.mxu0 %v4872
    %6681 = vmatprep.subr.bf16.mxu0 0
    %6682 = vmatpush1.bf16.msra.mxu0 %v4873
    %6683 = vmatprep.subr.bf16.mxu0 0
    %6684 = vmatpush1.bf16.msra.mxu0 %v4874
    %6685 = vmatprep.subr.bf16.mxu0 0
    %6686 = vmatpush1.bf16.msra.mxu0 %v4875
    %6687 = vmatprep.subr.bf16.mxu0 0
    %6688 = vmatpush1.bf16.msra.mxu0 %v4876
    %6689 = vmatprep.subr.bf16.mxu0 0
    %6690 = vmatpush1.bf16.msra.mxu0 %v4877
    %6691 = vmatprep.subr.bf16.mxu0 0
    %6692 = vmatpush1.bf16.msra.mxu0 %v4878
    %6693 = vmatprep.subr.bf16.mxu0 0
    %6694 = vmatpush1.bf16.msra.mxu0 %v4879
    %6695 = vmatprep.subr.bf16.mxu0 0
    %6696 = vmatpush1.bf16.msra.mxu0 %v4880
    %6697 = vmatprep.mubr.bf16.mxu0 %v1644
    %6698 = vmatmul.mubr.bf16.gmra.mrb[0].mxu0 %v1642
    %v6699 = vpop.f32.mrb[0].mxu0
    %v6700 = vadd.f32 %v6660, %v6699
    %v6701 = vpop.f32.mrb[0].mxu0
    %v6702 = vpop.f32.mrb[0].mxu0
    %v6703 = vpop.f32.mrb[0].mxu0
    %6704 = vdwg.mxu0
    %6705 = vmatprep.subr.bf16.mxu0 0
    %6706 = vmatpush1.bf16.msra.mxu0 %v4881
    %6707 = vmatprep.subr.bf16.mxu0 0
    %6708 = vmatpush1.bf16.msra.mxu0 %v4882
    %6709 = vmatprep.subr.bf16.mxu0 0
    %6710 = vmatpush1.bf16.msra.mxu0 %v4883
    %6711 = vmatprep.subr.bf16.mxu0 0
    %6712 = vmatpush1.bf16.msra.mxu0 %v4884
    %6713 = vmatprep.subr.bf16.mxu0 0
    %6714 = vmatpush1.bf16.msra.mxu0 %v4885
    %6715 = vmatprep.subr.bf16.mxu0 0
    %6716 = vmatpush1.bf16.msra.mxu0 %v4886
    %6717 = vmatprep.subr.bf16.mxu0 0
    %6718 = vmatpush1.bf16.msra.mxu0 %v4887
    %6719 = vmatprep.subr.bf16.mxu0 0
    %6720 = vmatpush1.bf16.msra.mxu0 %v4888
    %6721 = vmatprep.subr.bf16.mxu0 0
    %6722 = vmatpush1.bf16.msra.mxu0 %v4889
    %6723 = vmatprep.subr.bf16.mxu0 0
    %6724 = vmatpush1.bf16.msra.mxu0 %v4890
    %6725 = vmatprep.subr.bf16.mxu0 0
    %6726 = vmatpush1.bf16.msra.mxu0 %v4891
    %6727 = vmatprep.subr.bf16.mxu0 0
    %6728 = vmatpush1.bf16.msra.mxu0 %v4892
    %6729 = vmatprep.subr.bf16.mxu0 0
    %6730 = vmatpush1.bf16.msra.mxu0 %v4893
    %6731 = vmatprep.subr.bf16.mxu0 0
    %6732 = vmatpush1.bf16.msra.mxu0 %v4894
    %6733 = vmatprep.subr.bf16.mxu0 0
    %6734 = vmatpush1.bf16.msra.mxu0 %v4895
    %6735 = vmatprep.subr.bf16.mxu0 0
    %6736 = vmatpush1.bf16.msra.mxu0 %v4896
    %6737 = vmatprep.mubr.bf16.mxu0 %v1641
    %6738 = vmatmul.mubr.bf16.gmra.mrb[0].mxu0 %v1627
    %v6739 = vpop.f32.mrb[0].mxu0
    %v6740 = vadd.f32 %v6700, %v6739
    %v6741 = vpop.f32.mrb[0].mxu0
    %v6742 = vpop.f32.mrb[0].mxu0
    %v6743 = vpop.f32.mrb[0].mxu0
    %6744 = vdwg.mxu0
    %6745 = vmatprep.subr.bf16.mxu0 0
    %6746 = vmatpush1.bf16.msra.mxu0 %v4897
    %6747 = vmatprep.subr.bf16.mxu0 0
    %6748 = vmatpush1.bf16.msra.mxu0 %v4898
    %6749 = vmatprep.subr.bf16.mxu0 0
    %6750 = vmatpush1.bf16.msra.mxu0 %v4899
    %6751 = vmatprep.subr.bf16.mxu0 0
    %6752 = vmatpush1.bf16.msra.mxu0 %v4900
    %6753 = vmatprep.subr.bf16.mxu0 0
    %6754 = vmatpush1.bf16.msra.mxu0 %v4901
    %6755 = vmatprep.subr.bf16.mxu0 0
    %6756 = vmatpush1.bf16.msra.mxu0 %v4902
    %6757 = vmatprep.subr.bf16.mxu0 0
    %6758 = vmatpush1.bf16.msra.mxu0 %v4903
    %6759 = vmatprep.subr.bf16.mxu0 0
    %6760 = vmatpush1.bf16.msra.mxu0 %v4904
    %6761 = vmatprep.subr.bf16.mxu0 0
    %6762 = vmatpush1.bf16.msra.mxu0 %v4905
    %6763 = vmatprep.subr.bf16.mxu0 0
    %6764 = vmatpush1.bf16.msra.mxu0 %v4906
    %6765 = vmatprep.subr.bf16.mxu0 0
    %6766 = vmatpush1.bf16.msra.mxu0 %v4907
    %6767 = vmatprep.subr.bf16.mxu0 0
    %6768 = vmatpush1.bf16.msra.mxu0 %v4908
    %6769 = vmatprep.subr.bf16.mxu0 0
    %6770 = vmatpush1.bf16.msra.mxu0 %v4909
    %6771 = vmatprep.subr.bf16.mxu0 0
    %6772 = vmatpush1.bf16.msra.mxu0 %v4910
    %6773 = vmatprep.subr.bf16.mxu0 0
    %6774 = vmatpush1.bf16.msra.mxu0 %v4911
    %6775 = vmatprep.subr.bf16.mxu0 0
    %6776 = vmatpush1.bf16.msra.mxu0 %v4912
    %6777 = vmatprep.mubr.bf16.mxu0 %v1645
    %6778 = vmatmul.mubr.bf16.gmra.mrb[0].mxu0 %v1643
    %v6779 = vpop.f32.mrb[0].mxu0
    %v6780 = vadd.f32 %v6740, %v6779
    %v6781 = vpop.f32.mrb[0].mxu0
    %v6782 = vpop.f32.mrb[0].mxu0
    %v6783 = vpop.f32.mrb[0].mxu0
    %6784 = vdwg.mxu0
    %6785 = vmatprep.subr.bf16.mxu0 0
    %6786 = vmatpush1.bf16.msra.mxu0 %v4913
    %6787 = vmatprep.subr.bf16.mxu0 0
    %6788 = vmatpush1.bf16.msra.mxu0 %v4914
    %6789 = vmatprep.subr.bf16.mxu0 0
    %6790 = vmatpush1.bf16.msra.mxu0 %v4915
    %6791 = vmatprep.subr.bf16.mxu0 0
    %6792 = vmatpush1.bf16.msra.mxu0 %v4916
    %6793 = vmatprep.subr.bf16.mxu0 0
    %6794 = vmatpush1.bf16.msra.mxu0 %v4917
    %6795 = vmatprep.subr.bf16.mxu0 0
    %6796 = vmatpush1.bf16.msra.mxu0 %v4918
    %6797 = vmatprep.subr.bf16.mxu0 0
    %6798 = vmatpush1.bf16.msra.mxu0 %v4919
    %6799 = vmatprep.subr.bf16.mxu0 0
    %6800 = vmatpush1.bf16.msra.mxu0 %v4920
    %6801 = vmatprep.subr.bf16.mxu0 0
    %6802 = vmatpush1.bf16.msra.mxu0 %v4921
    %6803 = vmatprep.subr.bf16.mxu0 0
    %6804 = vmatpush1.bf16.msra.mxu0 %v4922
    %6805 = vmatprep.subr.bf16.mxu0 0
    %6806 = vmatpush1.bf16.msra.mxu0 %v4923
    %6807 = vmatprep.subr.bf16.mxu0 0
    %6808 = vmatpush1.bf16.msra.mxu0 %v4924
    %6809 = vmatprep.subr.bf16.mxu0 0
    %6810 = vmatpush1.bf16.msra.mxu0 %v4925
    %6811 = vmatprep.subr.bf16.mxu0 0
    %6812 = vmatpush1.bf16.msra.mxu0 %v4926
    %6813 = vmatprep.subr.bf16.mxu0 0
    %6814 = vmatpush1.bf16.msra.mxu0 %v4927
    %6815 = vmatprep.subr.bf16.mxu0 0
    %6816 = vmatpush1.bf16.msra.mxu0 %v4928
    %6817 = vmatprep.mubr.bf16.mxu0 %v1683
    %6818 = vmatmul.mubr.bf16.gmra.mrb[0].mxu0 %v1669
    %v6819 = vpop.f32.mrb[0].mxu0
    %v6820 = vadd.f32 %v6780, %v6819
    %v6821 = vpop.f32.mrb[0].mxu0
    %v6822 = vpop.f32.mrb[0].mxu0
    %v6823 = vpop.f32.mrb[0].mxu0
    %6824 = vdwg.mxu0
    %6825 = vmatprep.subr.bf16.mxu0 0
    %6826 = vmatpush1.bf16.msra.mxu0 %v4929
    %6827 = vmatprep.subr.bf16.mxu0 0
    %6828 = vmatpush1.bf16.msra.mxu0 %v4930
    %6829 = vmatprep.subr.bf16.mxu0 0
    %6830 = vmatpush1.bf16.msra.mxu0 %v4931
    %6831 = vmatprep.subr.bf16.mxu0 0
    %6832 = vmatpush1.bf16.msra.mxu0 %v4932
    %6833 = vmatprep.subr.bf16.mxu0 0
    %6834 = vmatpush1.bf16.msra.mxu0 %v4933
    %6835 = vmatprep.subr.bf16.mxu0 0
    %6836 = vmatpush1.bf16.msra.mxu0 %v4934
    %6837 = vmatprep.subr.bf16.mxu0 0
    %6838 = vmatpush1.bf16.msra.mxu0 %v4935
    %6839 = vmatprep.subr.bf16.mxu0 0
    %6840 = vmatpush1.bf16.msra.mxu0 %v4936
    %6841 = vmatprep.subr.bf16.mxu0 0
    %6842 = vmatpush1.bf16.msra.mxu0 %v4937
    %6843 = vmatprep.subr.bf16.mxu0 0
    %6844 = vmatpush1.bf16.msra.mxu0 %v4938
    %6845 = vmatprep.subr.bf16.mxu0 0
    %6846 = vmatpush1.bf16.msra.mxu0 %v4939
    %6847 = vmatprep.subr.bf16.mxu0 0
    %6848 = vmatpush1.bf16.msra.mxu0 %v4940
    %6849 = vmatprep.subr.bf16.mxu0 0
    %6850 = vmatpush1.bf16.msra.mxu0 %v4941
    %6851 = vmatprep.subr.bf16.mxu0 0
    %6852 = vmatpush1.bf16.msra.mxu0 %v4942
    %6853 = vmatprep.subr.bf16.mxu0 0
    %6854 = vmatpush1.bf16.msra.mxu0 %v4943
    %6855 = vmatprep.subr.bf16.mxu0 0
    %6856 = vmatpush1.bf16.msra.mxu0 %v4944
    %6857 = vmatprep.mubr.bf16.mxu0 %v1693
    %6858 = vmatmul.mubr.bf16.gmra.mrb[0].mxu0 %v1691
    %v6859 = vpop.f32.mrb[0].mxu0
    %v6860 = vadd.f32 %v6820, %v6859
    %v6861 = vpop.f32.mrb[0].mxu0
    %v6862 = vpop.f32.mrb[0].mxu0
    %v6863 = vpop.f32.mrb[0].mxu0
    %6864 = vdwg.mxu0
    %6865 = vmatprep.subr.bf16.mxu0 0
    %6866 = vmatpush1.bf16.msra.mxu0 %v4945
    %6867 = vmatprep.subr.bf16.mxu0 0
    %6868 = vmatpush1.bf16.msra.mxu0 %v4946
    %6869 = vmatprep.subr.bf16.mxu0 0
    %6870 = vmatpush1.bf16.msra.mxu0 %v4947
    %6871 = vmatprep.subr.bf16.mxu0 0
    %6872 = vmatpush1.bf16.msra.mxu0 %v4948
    %6873 = vmatprep.subr.bf16.mxu0 0
    %6874 = vmatpush1.bf16.msra.mxu0 %v4949
    %6875 = vmatprep.subr.bf16.mxu0 0
    %6876 = vmatpush1.bf16.msra.mxu0 %v4950
    %6877 = vmatprep.subr.bf16.mxu0 0
    %6878 = vmatpush1.bf16.msra.mxu0 %v4951
    %6879 = vmatprep.subr.bf16.mxu0 0
    %6880 = vmatpush1.bf16.msra.mxu0 %v4952
    %6881 = vmatprep.subr.bf16.mxu0 0
    %6882 = vmatpush1.bf16.msra.mxu0 %v4953
    %6883 = vmatprep.subr.bf16.mxu0 0
    %6884 = vmatpush1.bf16.msra.mxu0 %v4954
    %6885 = vmatprep.subr.bf16.mxu0 0
    %6886 = vmatpush1.bf16.msra.mxu0 %v4955
    %6887 = vmatprep.subr.bf16.mxu0 0
    %6888 = vmatpush1.bf16.msra.mxu0 %v4956
    %6889 = vmatprep.subr.bf16.mxu0 0
    %6890 = vmatpush1.bf16.msra.mxu0 %v4957
    %6891 = vmatprep.subr.bf16.mxu0 0
    %6892 = vmatpush1.bf16.msra.mxu0 %v4958
    %6893 = vmatprep.subr.bf16.mxu0 0
    %6894 = vmatpush1.bf16.msra.mxu0 %v4959
    %6895 = vmatprep.subr.bf16.mxu0 0
    %6896 = vmatpush1.bf16.msra.mxu0 %v4960
    %6897 = vmatprep.mubr.bf16.mxu0 %v1690
    %6898 = vmatmul.mubr.bf16.gmra.mrb[0].mxu0 %v1676
    %v6899 = vpop.f32.mrb[0].mxu0
    %v6900 = vadd.f32 %v6860, %v6899
    %v6901 = vpop.f32.mrb[0].mxu0
    %v6902 = vpop.f32.mrb[0].mxu0
    %v6903 = vpop.f32.mrb[0].mxu0
    %6904 = vdwg.mxu0
    %6905 = vmatprep.subr.bf16.mxu0 0
    %6906 = vmatpush1.bf16.msra.mxu0 %v4961
    %6907 = vmatprep.subr.bf16.mxu0 0
    %6908 = vmatpush1.bf16.msra.mxu0 %v4962
    %6909 = vmatprep.subr.bf16.mxu0 0
    %6910 = vmatpush1.bf16.msra.mxu0 %v4963
    %6911 = vmatprep.subr.bf16.mxu0 0
    %6912 = vmatpush1.bf16.msra.mxu0 %v4964
    %6913 = vmatprep.subr.bf16.mxu0 0
    %6914 = vmatpush1.bf16.msra.mxu0 %v4965
    %6915 = vmatprep.subr.bf16.mxu0 0
    %6916 = vmatpush1.bf16.msra.mxu0 %v4966
    %6917 = vmatprep.subr.bf16.mxu0 0
    %6918 = vmatpush1.bf16.msra.mxu0 %v4967
    %6919 = vmatprep.subr.bf16.mxu0 0
    %6920 = vmatpush1.bf16.msra.mxu0 %v4968
    %6921 = vmatprep.subr.bf16.mxu0 0
    %6922 = vmatpush1.bf16.msra.mxu0 %v4969
    %6923 = vmatprep.subr.bf16.mxu0 0
    %6924 = vmatpush1.bf16.msra.mxu0 %v4970
    %6925 = vmatprep.subr.bf16.mxu0 0
    %6926 = vmatpush1.bf16.msra.mxu0 %v4971
    %6927 = vmatprep.subr.bf16.mxu0 0
    %6928 = vmatpush1.bf16.msra.mxu0 %v4972
    %6929 = vmatprep.subr.bf16.mxu0 0
    %6930 = vmatpush1.bf16.msra.mxu0 %v4973
    %6931 = vmatprep.subr.bf16.mxu0 0
    %6932 = vmatpush1.bf16.msra.mxu0 %v4974
    %6933 = vmatprep.subr.bf16.mxu0 0
    %6934 = vmatpush1.bf16.msra.mxu0 %v4975
    %6935 = vmatprep.subr.bf16.mxu0 0
    %6936 = vmatpush1.bf16.msra.mxu0 %v4976
    %6937 = vmatprep.mubr.bf16.mxu0 %v1694
    %6938 = vmatmul.mubr.bf16.gmra.mrb[0].mxu0 %v1692
    %v6939 = vpop.f32.mrb[0].mxu0
    %v6940 = vadd.f32 %v6900, %v6939
    %v6941 = vpop.f32.mrb[0].mxu0
    %v6942 = vpop.f32.mrb[0].mxu0
    %v6943 = vpop.f32.mrb[0].mxu0
    %6944 = vdwg.mxu0
    %6945 = vmatprep.subr.bf16.mxu0 0
    %6946 = vmatpush1.bf16.msra.mxu0 %v4977
    %6947 = vmatprep.subr.bf16.mxu0 0
    %6948 = vmatpush1.bf16.msra.mxu0 %v4978
    %6949 = vmatprep.subr.bf16.mxu0 0
    %6950 = vmatpush1.bf16.msra.mxu0 %v4979
    %6951 = vmatprep.subr.bf16.mxu0 0
    %6952 = vmatpush1.bf16.msra.mxu0 %v4980
    %6953 = vmatprep.subr.bf16.mxu0 0
    %6954 = vmatpush1.bf16.msra.mxu0 %v4981
    %6955 = vmatprep.subr.bf16.mxu0 0
    %6956 = vmatpush1.bf16.msra.mxu0 %v4982
    %6957 = vmatprep.subr.bf16.mxu0 0
    %6958 = vmatpush1.bf16.msra.mxu0 %v4983
    %6959 = vmatprep.subr.bf16.mxu0 0
    %6960 = vmatpush1.bf16.msra.mxu0 %v4984
    %6961 = vmatprep.subr.bf16.mxu0 0
    %6962 = vmatpush1.bf16.msra.mxu0 %v4985
    %6963 = vmatprep.subr.bf16.mxu0 0
    %6964 = vmatpush1.bf16.msra.mxu0 %v4986
    %6965 = vmatprep.subr.bf16.mxu0 0
    %6966 = vmatpush1.bf16.msra.mxu0 %v4987
    %6967 = vmatprep.subr.bf16.mxu0 0
    %6968 = vmatpush1.bf16.msra.mxu0 %v4988
    %6969 = vmatprep.subr.bf16.mxu0 0
    %6970 = vmatpush1.bf16.msra.mxu0 %v4989
    %6971 = vmatprep.subr.bf16.mxu0 0
    %6972 = vmatpush1.bf16.msra.mxu0 %v4990
    %6973 = vmatprep.subr.bf16.mxu0 0
    %6974 = vmatpush1.bf16.msra.mxu0 %v4991
    %6975 = vmatprep.subr.bf16.mxu0 0
    %6976 = vmatpush1.bf16.msra.mxu0 %v4992
    %6977 = vmatprep.mubr.bf16.mxu0 %v1732
    %6978 = vmatmul.mubr.bf16.gmra.mrb[0].mxu0 %v1718
    %v6979 = vpop.f32.mrb[0].mxu0
    %v6980 = vadd.f32 %v6940, %v6979
    %v6981 = vpop.f32.mrb[0].mxu0
    %v6982 = vpop.f32.mrb[0].mxu0
    %v6983 = vpop.f32.mrb[0].mxu0
    %6984 = vdwg.mxu0
    %6985 = vmatprep.subr.bf16.mxu0 0
    %6986 = vmatpush1.bf16.msra.mxu0 %v4993
    %6987 = vmatprep.subr.bf16.mxu0 0
    %6988 = vmatpush1.bf16.msra.mxu0 %v4994
    %6989 = vmatprep.subr.bf16.mxu0 0
    %6990 = vmatpush1.bf16.msra.mxu0 %v4995
    %6991 = vmatprep.subr.bf16.mxu0 0
    %6992 = vmatpush1.bf16.msra.mxu0 %v4996
    %6993 = vmatprep.subr.bf16.mxu0 0
    %6994 = vmatpush1.bf16.msra.mxu0 %v4997
    %6995 = vmatprep.subr.bf16.mxu0 0
    %6996 = vmatpush1.bf16.msra.mxu0 %v4998
    %6997 = vmatprep.subr.bf16.mxu0 0
    %6998 = vmatpush1.bf16.msra.mxu0 %v4999
    %6999 = vmatprep.subr.bf16.mxu0 0
    %7000 = vmatpush1.bf16.msra.mxu0 %v5000
    %7001 = vmatprep.subr.bf16.mxu0 0
    %7002 = vmatpush1.bf16.msra.mxu0 %v5001
    %7003 = vmatprep.subr.bf16.mxu0 0
    %7004 = vmatpush1.bf16.msra.mxu0 %v5002
    %7005 = vmatprep.subr.bf16.mxu0 0
    %7006 = vmatpush1.bf16.msra.mxu0 %v5003
    %7007 = vmatprep.subr.bf16.mxu0 0
    %7008 = vmatpush1.bf16.msra.mxu0 %v5004
    %7009 = vmatprep.subr.bf16.mxu0 0
    %7010 = vmatpush1.bf16.msra.mxu0 %v5005
    %7011 = vmatprep.subr.bf16.mxu0 0
    %7012 = vmatpush1.bf16.msra.mxu0 %v5006
    %7013 = vmatprep.subr.bf16.mxu0 0
    %7014 = vmatpush1.bf16.msra.mxu0 %v5007
    %7015 = vmatprep.subr.bf16.mxu0 0
    %7016 = vmatpush1.bf16.msra.mxu0 %v5008
    %7017 = vmatprep.mubr.bf16.mxu0 %v1742
    %7018 = vmatmul.mubr.bf16.gmra.mrb[0].mxu0 %v1740
    %v7019 = vpop.f32.mrb[0].mxu0
    %v7020 = vadd.f32 %v6980, %v7019
    %v7021 = vpop.f32.mrb[0].mxu0
    %v7022 = vpop.f32.mrb[0].mxu0
    %v7023 = vpop.f32.mrb[0].mxu0
    %7024 = vdwg.mxu0
    %7025 = vmatprep.subr.bf16.mxu0 0
    %7026 = vmatpush1.bf16.msra.mxu0 %v5009
    %7027 = vmatprep.subr.bf16.mxu0 0
    %7028 = vmatpush1.bf16.msra.mxu0 %v5010
    %7029 = vmatprep.subr.bf16.mxu0 0
    %7030 = vmatpush1.bf16.msra.mxu0 %v5011
    %7031 = vmatprep.subr.bf16.mxu0 0
    %7032 = vmatpush1.bf16.msra.mxu0 %v5012
    %7033 = vmatprep.subr.bf16.mxu0 0
    %7034 = vmatpush1.bf16.msra.mxu0 %v5013
    %7035 = vmatprep.subr.bf16.mxu0 0
    %7036 = vmatpush1.bf16.msra.mxu0 %v5014
    %7037 = vmatprep.subr.bf16.mxu0 0
    %7038 = vmatpush1.bf16.msra.mxu0 %v5015
    %7039 = vmatprep.subr.bf16.mxu0 0
    %7040 = vmatpush1.bf16.msra.mxu0 %v5016
    %7041 = vmatprep.subr.bf16.mxu0 0
    %7042 = vmatpush1.bf16.msra.mxu0 %v5017
    %7043 = vmatprep.subr.bf16.mxu0 0
    %7044 = vmatpush1.bf16.msra.mxu0 %v5018
    %7045 = vmatprep.subr.bf16.mxu0 0
    %7046 = vmatpush1.bf16.msra.mxu0 %v5019
    %7047 = vmatprep.subr.bf16.mxu0 0
    %7048 = vmatpush1.bf16.msra.mxu0 %v5020
    %7049 = vmatprep.subr.bf16.mxu0 0
    %7050 = vmatpush1.bf16.msra.mxu0 %v5021
    %7051 = vmatprep.subr.bf16.mxu0 0
    %7052 = vmatpush1.bf16.msra.mxu0 %v5022
    %7053 = vmatprep.subr.bf16.mxu0 0
    %7054 = vmatpush1.bf16.msra.mxu0 %v5023
    %7055 = vmatprep.subr.bf16.mxu0 0
    %7056 = vmatpush1.bf16.msra.mxu0 %v5024
    %7057 = vmatprep.mubr.bf16.mxu0 %v1739
    %7058 = vmatmul.mubr.bf16.gmra.mrb[0].mxu0 %v1725
    %v7059 = vpop.f32.mrb[0].mxu0
    %v7060 = vadd.f32 %v7020, %v7059
    %v7061 = vpop.f32.mrb[0].mxu0
    %v7062 = vpop.f32.mrb[0].mxu0
    %v7063 = vpop.f32.mrb[0].mxu0
    %7064 = vdwg.mxu0
    %7065 = vmatprep.subr.bf16.mxu0 0
    %7066 = vmatpush1.bf16.msra.mxu0 %v5025
    %7067 = vmatprep.subr.bf16.mxu0 0
    %7068 = vmatpush1.bf16.msra.mxu0 %v5026
    %7069 = vmatprep.subr.bf16.mxu0 0
    %7070 = vmatpush1.bf16.msra.mxu0 %v5027
    %7071 = vmatprep.subr.bf16.mxu0 0
    %7072 = vmatpush1.bf16.msra.mxu0 %v5028
    %7073 = vmatprep.subr.bf16.mxu0 0
    %7074 = vmatpush1.bf16.msra.mxu0 %v5029
    %7075 = vmatprep.subr.bf16.mxu0 0
    %7076 = vmatpush1.bf16.msra.mxu0 %v5030
    %7077 = vmatprep.subr.bf16.mxu0 0
    %7078 = vmatpush1.bf16.msra.mxu0 %v5031
    %7079 = vmatprep.subr.bf16.mxu0 0
    %7080 = vmatpush1.bf16.msra.mxu0 %v5032
    %7081 = vmatprep.subr.bf16.mxu0 0
    %7082 = vmatpush1.bf16.msra.mxu0 %v5033
    %7083 = vmatprep.subr.bf16.mxu0 0
    %7084 = vmatpush1.bf16.msra.mxu0 %v5034
    %7085 = vmatprep.subr.bf16.mxu0 0
    %7086 = vmatpush1.bf16.msra.mxu0 %v5035
    %7087 = vmatprep.subr.bf16.mxu0 0
    %7088 = vmatpush1.bf16.msra.mxu0 %v5036
    %7089 = vmatprep.subr.bf16.mxu0 0
    %7090 = vmatpush1.bf16.msra.mxu0 %v5037
    %7091 = vmatprep.subr.bf16.mxu0 0
    %7092 = vmatpush1.bf16.msra.mxu0 %v5038
    %7093 = vmatprep.subr.bf16.mxu0 0
    %7094 = vmatpush1.bf16.msra.mxu0 %v5039
    %7095 = vmatprep.subr.bf16.mxu0 0
    %7096 = vmatpush1.bf16.msra.mxu0 %v5040
    %7097 = vmatprep.mubr.bf16.mxu0 %v1743
    %7098 = vmatmul.mubr.bf16.gmra.mrb[0].mxu0 %v1741
    %v7099 = vpop.f32.mrb[0].mxu0
    %v7100 = vadd.f32 %v7060, %v7099
    %v7101 = vpop.f32.mrb[0].mxu0
    %v7102 = vpop.f32.mrb[0].mxu0
    %v7103 = vpop.f32.mrb[0].mxu0
    %7104 = vdwg.mxu0
    %7105 = vmatprep.subr.bf16.mxu0 0
    %7106 = vmatpush1.bf16.msra.mxu0 %v5041
    %7107 = vmatprep.subr.bf16.mxu0 0
    %7108 = vmatpush1.bf16.msra.mxu0 %v5042
    %7109 = vmatprep.subr.bf16.mxu0 0
    %7110 = vmatpush1.bf16.msra.mxu0 %v5043
    %7111 = vmatprep.subr.bf16.mxu0 0
    %7112 = vmatpush1.bf16.msra.mxu0 %v5044
    %7113 = vmatprep.subr.bf16.mxu0 0
    %7114 = vmatpush1.bf16.msra.mxu0 %v5045
    %7115 = vmatprep.subr.bf16.mxu0 0
    %7116 = vmatpush1.bf16.msra.mxu0 %v5046
    %7117 = vmatprep.subr.bf16.mxu0 0
    %7118 = vmatpush1.bf16.msra.mxu0 %v5047
    %7119 = vmatprep.subr.bf16.mxu0 0
    %7120 = vmatpush1.bf16.msra.mxu0 %v5048
    %7121 = vmatprep.subr.bf16.mxu0 0
    %7122 = vmatpush1.bf16.msra.mxu0 %v5049
    %7123 = vmatprep.subr.bf16.mxu0 0
    %7124 = vmatpush1.bf16.msra.mxu0 %v5050
    %7125 = vmatprep.subr.bf16.mxu0 0
    %7126 = vmatpush1.bf16.msra.mxu0 %v5051
    %7127 = vmatprep.subr.bf16.mxu0 0
    %7128 = vmatpush1.bf16.msra.mxu0 %v5052
    %7129 = vmatprep.subr.bf16.mxu0 0
    %7130 = vmatpush1.bf16.msra.mxu0 %v5053
    %7131 = vmatprep.subr.bf16.mxu0 0
    %7132 = vmatpush1.bf16.msra.mxu0 %v5054
    %7133 = vmatprep.subr.bf16.mxu0 0
    %7134 = vmatpush1.bf16.msra.mxu0 %v5055
    %7135 = vmatprep.subr.bf16.mxu0 0
    %7136 = vmatpush1.bf16.msra.mxu0 %v5056
    %7137 = vmatprep.mubr.bf16.mxu0 %v1781
    %7138 = vmatmul.mubr.bf16.gmra.mrb[0].mxu0 %v1767
    %v7139 = vpop.f32.mrb[0].mxu0
    %v7140 = vadd.f32 %v7100, %v7139
    %v7141 = vpop.f32.mrb[0].mxu0
    %v7142 = vpop.f32.mrb[0].mxu0
    %v7143 = vpop.f32.mrb[0].mxu0
    %7144 = vdwg.mxu0
    %7145 = vmatprep.subr.bf16.mxu0 0
    %7146 = vmatpush1.bf16.msra.mxu0 %v5057
    %7147 = vmatprep.subr.bf16.mxu0 0
    %7148 = vmatpush1.bf16.msra.mxu0 %v5058
    %7149 = vmatprep.subr.bf16.mxu0 0
    %7150 = vmatpush1.bf16.msra.mxu0 %v5059
    %7151 = vmatprep.subr.bf16.mxu0 0
    %7152 = vmatpush1.bf16.msra.mxu0 %v5060
    %7153 = vmatprep.subr.bf16.mxu0 0
    %7154 = vmatpush1.bf16.msra.mxu0 %v5061
    %7155 = vmatprep.subr.bf16.mxu0 0
    %7156 = vmatpush1.bf16.msra.mxu0 %v5062
    %7157 = vmatprep.subr.bf16.mxu0 0
    %7158 = vmatpush1.bf16.msra.mxu0 %v5063
    %7159 = vmatprep.subr.bf16.mxu0 0
    %7160 = vmatpush1.bf16.msra.mxu0 %v5064
    %7161 = vmatprep.subr.bf16.mxu0 0
    %7162 = vmatpush1.bf16.msra.mxu0 %v5065
    %7163 = vmatprep.subr.bf16.mxu0 0
    %7164 = vmatpush1.bf16.msra.mxu0 %v5066
    %7165 = vmatprep.subr.bf16.mxu0 0
    %7166 = vmatpush1.bf16.msra.mxu0 %v5067
    %7167 = vmatprep.subr.bf16.mxu0 0
    %7168 = vmatpush1.bf16.msra.mxu0 %v5068
    %7169 = vmatprep.subr.bf16.mxu0 0
    %7170 = vmatpush1.bf16.msra.mxu0 %v5069
    %7171 = vmatprep.subr.bf16.mxu0 0
    %7172 = vmatpush1.bf16.msra.mxu0 %v5070
    %7173 = vmatprep.subr.bf16.mxu0 0
    %7174 = vmatpush1.bf16.msra.mxu0 %v5071
    %7175 = vmatprep.subr.bf16.mxu0 0
    %7176 = vmatpush1.bf16.msra.mxu0 %v5072
    %7177 = vmatprep.mubr.bf16.mxu0 %v1791
    %7178 = vmatmul.mubr.bf16.gmra.mrb[0].mxu0 %v1789
    %v7179 = vpop.f32.mrb[0].mxu0
    %v7180 = vadd.f32 %v7140, %v7179
    %v7181 = vpop.f32.mrb[0].mxu0
    %v7182 = vpop.f32.mrb[0].mxu0
    %v7183 = vpop.f32.mrb[0].mxu0
    %7184 = vdwg.mxu0
    %7185 = vmatprep.subr.bf16.mxu0 0
    %7186 = vmatpush1.bf16.msra.mxu0 %v5073
    %7187 = vmatprep.subr.bf16.mxu0 0
    %7188 = vmatpush1.bf16.msra.mxu0 %v5074
    %7189 = vmatprep.subr.bf16.mxu0 0
    %7190 = vmatpush1.bf16.msra.mxu0 %v5075
    %7191 = vmatprep.subr.bf16.mxu0 0
    %7192 = vmatpush1.bf16.msra.mxu0 %v5076
    %7193 = vmatprep.subr.bf16.mxu0 0
    %7194 = vmatpush1.bf16.msra.mxu0 %v5077
    %7195 = vmatprep.subr.bf16.mxu0 0
    %7196 = vmatpush1.bf16.msra.mxu0 %v5078
    %7197 = vmatprep.subr.bf16.mxu0 0
    %7198 = vmatpush1.bf16.msra.mxu0 %v5079
    %7199 = vmatprep.subr.bf16.mxu0 0
    %7200 = vmatpush1.bf16.msra.mxu0 %v5080
    %7201 = vmatprep.subr.bf16.mxu0 0
    %7202 = vmatpush1.bf16.msra.mxu0 %v5081
    %7203 = vmatprep.subr.bf16.mxu0 0
    %7204 = vmatpush1.bf16.msra.mxu0 %v5082
    %7205 = vmatprep.subr.bf16.mxu0 0
    %7206 = vmatpush1.bf16.msra.mxu0 %v5083
    %7207 = vmatprep.subr.bf16.mxu0 0
    %7208 = vmatpush1.bf16.msra.mxu0 %v5084
    %7209 = vmatprep.subr.bf16.mxu0 0
    %7210 = vmatpush1.bf16.msra.mxu0 %v5085
    %7211 = vmatprep.subr.bf16.mxu0 0
    %7212 = vmatpush1.bf16.msra.mxu0 %v5086
    %7213 = vmatprep.subr.bf16.mxu0 0
    %7214 = vmatpush1.bf16.msra.mxu0 %v5087
    %7215 = vmatprep.subr.bf16.mxu0 0
    %7216 = vmatpush1.bf16.msra.mxu0 %v5088
    %7217 = vmatprep.mubr.bf16.mxu0 %v1788
    %7218 = vmatmul.mubr.bf16.gmra.mrb[0].mxu0 %v1774
    %v7219 = vpop.f32.mrb[0].mxu0
    %v7220 = vadd.f32 %v7180, %v7219
    %v7221 = vpop.f32.mrb[0].mxu0
    %v7222 = vpop.f32.mrb[0].mxu0
    %v7223 = vpop.f32.mrb[0].mxu0
    %7224 = vdwg.mxu0
    %7225 = vmatprep.subr.bf16.mxu0 0
    %7226 = vmatpush1.bf16.msra.mxu0 %v5089
    %7227 = vmatprep.subr.bf16.mxu0 0
    %7228 = vmatpush1.bf16.msra.mxu0 %v5090
    %7229 = vmatprep.subr.bf16.mxu0 0
    %7230 = vmatpush1.bf16.msra.mxu0 %v5091
    %7231 = vmatprep.subr.bf16.mxu0 0
    %7232 = vmatpush1.bf16.msra.mxu0 %v5092
    %7233 = vmatprep.subr.bf16.mxu0 0
    %7234 = vmatpush1.bf16.msra.mxu0 %v5093
    %7235 = vmatprep.subr.bf16.mxu0 0
    %7236 = vmatpush1.bf16.msra.mxu0 %v5094
    %7237 = vmatprep.subr.bf16.mxu0 0
    %7238 = vmatpush1.bf16.msra.mxu0 %v5095
    %7239 = vmatprep.subr.bf16.mxu0 0
    %7240 = vmatpush1.bf16.msra.mxu0 %v5096
    %7241 = vmatprep.subr.bf16.mxu0 0
    %7242 = vmatpush1.bf16.msra.mxu0 %v5097
    %7243 = vmatprep.subr.bf16.mxu0 0
    %7244 = vmatpush1.bf16.msra.mxu0 %v5098
    %7245 = vmatprep.subr.bf16.mxu0 0
    %7246 = vmatpush1.bf16.msra.mxu0 %v5099
    %7247 = vmatprep.subr.bf16.mxu0 0
    %7248 = vmatpush1.bf16.msra.mxu0 %v5100
    %7249 = vmatprep.subr.bf16.mxu0 0
    %7250 = vmatpush1.bf16.msra.mxu0 %v5101
    %7251 = vmatprep.subr.bf16.mxu0 0
    %7252 = vmatpush1.bf16.msra.mxu0 %v5102
    %7253 = vmatprep.subr.bf16.mxu0 0
    %7254 = vmatpush1.bf16.msra.mxu0 %v5103
    %7255 = vmatprep.subr.bf16.mxu0 0
    %7256 = vmatpush1.bf16.msra.mxu0 %v5104
    %7257 = vmatprep.mubr.bf16.mxu0 %v1792
    %7258 = vmatmul.mubr.bf16.gmra.mrb[0].mxu0 %v1790
    %v7259 = vpop.f32.mrb[0].mxu0
    %v7260 = vadd.f32 %v7220, %v7259
    %v7261 = vpop.f32.mrb[0].mxu0
    %v7262 = vpop.f32.mrb[0].mxu0
    %v7263 = vpop.f32.mrb[0].mxu0
    %7264 = vdwg.mxu0
    %7265 = vmatprep.subr.bf16.mxu0 0
    %7266 = vmatpush1.bf16.msra.mxu0 %v5105
    %7267 = vmatprep.subr.bf16.mxu0 0
    %7268 = vmatpush1.bf16.msra.mxu0 %v5106
    %7269 = vmatprep.subr.bf16.mxu0 0
    %7270 = vmatpush1.bf16.msra.mxu0 %v5107
    %7271 = vmatprep.subr.bf16.mxu0 0
    %7272 = vmatpush1.bf16.msra.mxu0 %v5108
    %7273 = vmatprep.subr.bf16.mxu0 0
    %7274 = vmatpush1.bf16.msra.mxu0 %v5109
    %7275 = vmatprep.subr.bf16.mxu0 0
    %7276 = vmatpush1.bf16.msra.mxu0 %v5110
    %7277 = vmatprep.subr.bf16.mxu0 0
    %7278 = vmatpush1.bf16.msra.mxu0 %v5111
    %7279 = vmatprep.subr.bf16.mxu0 0
    %7280 = vmatpush1.bf16.msra.mxu0 %v5112
    %7281 = vmatprep.subr.bf16.mxu0 0
    %7282 = vmatpush1.bf16.msra.mxu0 %v5113
    %7283 = vmatprep.subr.bf16.mxu0 0
    %7284 = vmatpush1.bf16.msra.mxu0 %v5114
    %7285 = vmatprep.subr.bf16.mxu0 0
    %7286 = vmatpush1.bf16.msra.mxu0 %v5115
    %7287 = vmatprep.subr.bf16.mxu0 0
    %7288 = vmatpush1.bf16.msra.mxu0 %v5116
    %7289 = vmatprep.subr.bf16.mxu0 0
    %7290 = vmatpush1.bf16.msra.mxu0 %v5117
    %7291 = vmatprep.subr.bf16.mxu0 0
    %7292 = vmatpush1.bf16.msra.mxu0 %v5118
    %7293 = vmatprep.subr.bf16.mxu0 0
    %7294 = vmatpush1.bf16.msra.mxu0 %v5119
    %7295 = vmatprep.subr.bf16.mxu0 0
    %7296 = vmatpush1.bf16.msra.mxu0 %v5120
    %7297 = vmatprep.mubr.bf16.mxu0 %v1830
    %7298 = vmatmul.mubr.bf16.gmra.mrb[0].mxu0 %v1816
    %v7299 = vpop.f32.mrb[0].mxu0
    %v7300 = vadd.f32 %v7260, %v7299
    %v7301 = vpop.f32.mrb[0].mxu0
    %v7302 = vpop.f32.mrb[0].mxu0
    %v7303 = vpop.f32.mrb[0].mxu0
    %7304 = vdwg.mxu0
    %7305 = vmatprep.subr.bf16.mxu0 0
    %7306 = vmatpush1.bf16.msra.mxu0 %v5121
    %7307 = vmatprep.subr.bf16.mxu0 0
    %7308 = vmatpush1.bf16.msra.mxu0 %v5122
    %7309 = vmatprep.subr.bf16.mxu0 0
    %7310 = vmatpush1.bf16.msra.mxu0 %v5123
    %7311 = vmatprep.subr.bf16.mxu0 0
    %7312 = vmatpush1.bf16.msra.mxu0 %v5124
    %7313 = vmatprep.subr.bf16.mxu0 0
    %7314 = vmatpush1.bf16.msra.mxu0 %v5125
    %7315 = vmatprep.subr.bf16.mxu0 0
    %7316 = vmatpush1.bf16.msra.mxu0 %v5126
    %7317 = vmatprep.subr.bf16.mxu0 0
    %7318 = vmatpush1.bf16.msra.mxu0 %v5127
    %7319 = vmatprep.subr.bf16.mxu0 0
    %7320 = vmatpush1.bf16.msra.mxu0 %v5128
    %7321 = vmatprep.subr.bf16.mxu0 0
    %7322 = vmatpush1.bf16.msra.mxu0 %v5129
    %7323 = vmatprep.subr.bf16.mxu0 0
    %7324 = vmatpush1.bf16.msra.mxu0 %v5130
    %7325 = vmatprep.subr.bf16.mxu0 0
    %7326 = vmatpush1.bf16.msra.mxu0 %v5131
    %7327 = vmatprep.subr.bf16.mxu0 0
    %7328 = vmatpush1.bf16.msra.mxu0 %v5132
    %7329 = vmatprep.subr.bf16.mxu0 0
    %7330 = vmatpush1.bf16.msra.mxu0 %v5133
    %7331 = vmatprep.subr.bf16.mxu0 0
    %7332 = vmatpush1.bf16.msra.mxu0 %v5134
    %7333 = vmatprep.subr.bf16.mxu0 0
    %7334 = vmatpush1.bf16.msra.mxu0 %v5135
    %7335 = vmatprep.subr.bf16.mxu0 0
    %7336 = vmatpush1.bf16.msra.mxu0 %v5136
    %7337 = vmatprep.mubr.bf16.mxu0 %v1840
    %7338 = vmatmul.mubr.bf16.gmra.mrb[0].mxu0 %v1838
    %v7339 = vpop.f32.mrb[0].mxu0
    %v7340 = vadd.f32 %v7300, %v7339
    %v7341 = vpop.f32.mrb[0].mxu0
    %v7342 = vpop.f32.mrb[0].mxu0
    %v7343 = vpop.f32.mrb[0].mxu0
    %7344 = vdwg.mxu0
    %7345 = vmatprep.subr.bf16.mxu0 0
    %7346 = vmatpush1.bf16.msra.mxu0 %v5137
    %7347 = vmatprep.subr.bf16.mxu0 0
    %7348 = vmatpush1.bf16.msra.mxu0 %v5138
    %7349 = vmatprep.subr.bf16.mxu0 0
    %7350 = vmatpush1.bf16.msra.mxu0 %v5139
    %7351 = vmatprep.subr.bf16.mxu0 0
    %7352 = vmatpush1.bf16.msra.mxu0 %v5140
    %7353 = vmatprep.subr.bf16.mxu0 0
    %7354 = vmatpush1.bf16.msra.mxu0 %v5141
    %7355 = vmatprep.subr.bf16.mxu0 0
    %7356 = vmatpush1.bf16.msra.mxu0 %v5142
    %7357 = vmatprep.subr.bf16.mxu0 0
    %7358 = vmatpush1.bf16.msra.mxu0 %v5143
    %7359 = vmatprep.subr.bf16.mxu0 0
    %7360 = vmatpush1.bf16.msra.mxu0 %v5144
    %7361 = vmatprep.subr.bf16.mxu0 0
    %7362 = vmatpush1.bf16.msra.mxu0 %v5145
    %7363 = vmatprep.subr.bf16.mxu0 0
    %7364 = vmatpush1.bf16.msra.mxu0 %v5146
    %7365 = vmatprep.subr.bf16.mxu0 0
    %7366 = vmatpush1.bf16.msra.mxu0 %v5147
    %7367 = vmatprep.subr.bf16.mxu0 0
    %7368 = vmatpush1.bf16.msra.mxu0 %v5148
    %7369 = vmatprep.subr.bf16.mxu0 0
    %7370 = vmatpush1.bf16.msra.mxu0 %v5149
    %7371 = vmatprep.subr.bf16.mxu0 0
    %7372 = vmatpush1.bf16.msra.mxu0 %v5150
    %7373 = vmatprep.subr.bf16.mxu0 0
    %7374 = vmatpush1.bf16.msra.mxu0 %v5151
    %7375 = vmatprep.subr.bf16.mxu0 0
    %7376 = vmatpush1.bf16.msra.mxu0 %v5152
    %7377 = vmatprep.mubr.bf16.mxu0 %v1837
    %7378 = vmatmul.mubr.bf16.gmra.mrb[0].mxu0 %v1823
    %v7379 = vpop.f32.mrb[0].mxu0
    %v7380 = vadd.f32 %v7340, %v7379
    %v7381 = vpop.f32.mrb[0].mxu0
    %v7382 = vpop.f32.mrb[0].mxu0
    %v7383 = vpop.f32.mrb[0].mxu0
    %7384 = vdwg.mxu0
    %7385 = vmatprep.subr.bf16.mxu0 0
    %7386 = vmatpush1.bf16.msra.mxu0 %v5153
    %7387 = vmatprep.subr.bf16.mxu0 0
    %7388 = vmatpush1.bf16.msra.mxu0 %v5154
    %7389 = vmatprep.subr.bf16.mxu0 0
    %7390 = vmatpush1.bf16.msra.mxu0 %v5155
    %7391 = vmatprep.subr.bf16.mxu0 0
    %7392 = vmatpush1.bf16.msra.mxu0 %v5156
    %7393 = vmatprep.subr.bf16.mxu0 0
    %7394 = vmatpush1.bf16.msra.mxu0 %v5157
    %7395 = vmatprep.subr.bf16.mxu0 0
    %7396 = vmatpush1.bf16.msra.mxu0 %v5158
    %7397 = vmatprep.subr.bf16.mxu0 0
    %7398 = vmatpush1.bf16.msra.mxu0 %v5159
    %7399 = vmatprep.subr.bf16.mxu0 0
    %7400 = vmatpush1.bf16.msra.mxu0 %v5160
    %7401 = vmatprep.subr.bf16.mxu0 0
    %7402 = vmatpush1.bf16.msra.mxu0 %v5161
    %7403 = vmatprep.subr.bf16.mxu0 0
    %7404 = vmatpush1.bf16.msra.mxu0 %v5162
    %7405 = vmatprep.subr.bf16.mxu0 0
    %7406 = vmatpush1.bf16.msra.mxu0 %v5163
    %7407 = vmatprep.subr.bf16.mxu0 0
    %7408 = vmatpush1.bf16.msra.mxu0 %v5164
    %7409 = vmatprep.subr.bf16.mxu0 0
    %7410 = vmatpush1.bf16.msra.mxu0 %v5165
    %7411 = vmatprep.subr.bf16.mxu0 0
    %7412 = vmatpush1.bf16.msra.mxu0 %v5166
    %7413 = vmatprep.subr.bf16.mxu0 0
    %7414 = vmatpush1.bf16.msra.mxu0 %v5167
    %7415 = vmatprep.subr.bf16.mxu0 0
    %7416 = vmatpush1.bf16.msra.mxu0 %v5168
    %7417 = vmatprep.mubr.bf16.mxu0 %v1841
    %7418 = vmatmul.mubr.bf16.gmra.mrb[0].mxu0 %v1839
    %v7419 = vpop.f32.mrb[0].mxu0
    %v7420 = vadd.f32 %v7380, %v7419
    %v7421 = vpop.f32.mrb[0].mxu0
    %v7422 = vpop.f32.mrb[0].mxu0
    %v7423 = vpop.f32.mrb[0].mxu0
    %7424 = vdwg.mxu0
    %7425 = vmatprep.subr.bf16.mxu0 0
    %7426 = vmatpush1.bf16.msra.mxu0 %v5169
    %7427 = vmatprep.subr.bf16.mxu0 0
    %7428 = vmatpush1.bf16.msra.mxu0 %v5170
    %7429 = vmatprep.subr.bf16.mxu0 0
    %7430 = vmatpush1.bf16.msra.mxu0 %v5171
    %7431 = vmatprep.subr.bf16.mxu0 0
    %7432 = vmatpush1.bf16.msra.mxu0 %v5172
    %7433 = vmatprep.subr.bf16.mxu0 0
    %7434 = vmatpush1.bf16.msra.mxu0 %v5173
    %7435 = vmatprep.subr.bf16.mxu0 0
    %7436 = vmatpush1.bf16.msra.mxu0 %v5174
    %7437 = vmatprep.subr.bf16.mxu0 0
    %7438 = vmatpush1.bf16.msra.mxu0 %v5175
    %7439 = vmatprep.subr.bf16.mxu0 0
    %7440 = vmatpush1.bf16.msra.mxu0 %v5176
    %7441 = vmatprep.subr.bf16.mxu0 0
    %7442 = vmatpush1.bf16.msra.mxu0 0
    %7443 = vmatprep.subr.bf16.mxu0 0
    %7444 = vmatpush1.bf16.msra.mxu0 0
    %7445 = vmatprep.subr.bf16.mxu0 0
    %7446 = vmatpush1.bf16.msra.mxu0 0
    %7447 = vmatprep.subr.bf16.mxu0 0
    %7448 = vmatpush1.bf16.msra.mxu0 0
    %7449 = vmatprep.subr.bf16.mxu0 0
    %7450 = vmatpush1.bf16.msra.mxu0 0
    %7451 = vmatprep.subr.bf16.mxu0 0
    %7452 = vmatpush1.bf16.msra.mxu0 0
    %7453 = vmatprep.subr.bf16.mxu0 0
    %7454 = vmatpush1.bf16.msra.mxu0 0
    %7455 = vmatprep.subr.bf16.mxu0 0
    %7456 = vmatpush1.bf16.msra.mxu0 0
    %7457 = vmatprep.mubr.bf16.mxu0 0
    %7458 = vmatmul.mubr.bf16.gmra.mrb[0].mxu0 %v1855
    %v7459 = vpop.f32.mrb[0].mxu0
    %v7460 = vadd.f32 %v7420, %v7459
    %v7461 = vpop.f32.mrb[0].mxu0
    %v7462 = vpop.f32.mrb[0].mxu0
    %v7463 = vpop.f32.mrb[0].mxu0
    %7464 = vdwg.mxu0
    %v7465 = vld [vmem:[%s2] sm:$0x1]
    %v7466 = vld [vmem:[%s3] sm:$0x1]
    %vm7467 = vcmask 254976
    %v7468 = vsel %vm7467, %v7460, 0.0
    %v7469 = vrot.slane %v7468, 4
    %v7470 = vadd.f32 %v7468, %v7469
    %v7471 = vrot.slane %v7470, 2
    %v7472 = vadd.f32 %v7470, %v7471
    %v7473 = vrot.slane %v7472, 1
    %v7474 = vadd.f32 %v7472, %v7473
    %v7475 = vrcp.pop 2.0
    %v7476 = vmul.f32 %v7474, %v7475
    %v7477 = vmul.f32 %v7460, %v7460
    %v7478 = vsel %vm7467, %v7477, 0.0
    %v7479 = vrot.slane %v7478, 4
    %v7480 = vadd.f32 %v7478, %v7479
    %v7481 = vrot.slane %v7480, 2
    %v7482 = vadd.f32 %v7480, %v7481
    %v7483 = vrot.slane %v7482, 1
    %v7484 = vadd.f32 %v7482, %v7483
    %v7485 = vmul.f32 %v7484, %v7475
    %v7486 = vmul.f32 %v7476, %v7476
    %v7487 = vsub.f32 %v7485, %v7486
    %v7488 = vmax.f32 %v7487, 0.0
    %v7489 = vsub.f32 %v7460, %v7476
    %v7490 = vadd.f32 %v7488, 1e-05
    %v7491 = vrsqrt.pop %v7490
    %v7492 = vmul.f32 %v7489, %v7491
    %v7494 = vlaneseq
    %v7495 = vshrl.u32 %v7494, 7
    %v7496 = vsub.s32 0, %v7495
    %v7497 = vrot.slane %v7465, %v7496
    %v7499 = vmul.f32 %v7492, %v7497
    %v7501 = vlaneseq
    %v7502 = vshrl.u32 %v7501, 7
    %v7503 = vsub.s32 0, %v7502
    %v7504 = vrot.slane %v7466, %v7503
    %v7506 = vadd.f32 %v7499, %v7504
    %v7507 = vmax.f32 %v7506, 0.0
    %v7508 = vpack.c.bf16 %v7507, %v7507
    %v7509 = vld [vmem:[%s4] sm:$0xf]
    %v7510 = vld [vmem:[%s4 + $0x4] sm:$0xf]
    %v7511 = vld [vmem:[%s4 + $0x8] sm:$0xf]
    %v7512 = vld [vmem:[%s4 + $0xc] sm:$0xf]
    %v7517 = vunpack.c.l.b16 %v7509
    %v7518 = vunpack.c.l.b16 %v7510
    %v7519 = vunpack.c.l.b16 %v7511
    %v7520 = vunpack.c.l.b16 %v7512
    %v7521 = vpack.c.b16 %v7518, %v7517
    %v7522 = vpack.c.b16 %v7520, %v7519
    %vm7525 = vcmask 261120
    %v7527 = vsel %vm7525, %v7508, 0
    %7529 = vmatprep.subr.bf16.mxu0 0
    %7530 = vmatpush1.bf16.msra.mxu0 %v7521
    %7531 = vmatprep.subr.bf16.mxu0 0
    %7532 = vmatpush1.bf16.msra.mxu0 %v7522
    %7533 = vmatprep.subr.bf16.mxu0 0
    %7534 = vmatpush1.bf16.msra.mxu0 0
    %7535 = vmatprep.subr.bf16.mxu0 0
    %7536 = vmatpush1.bf16.msra.mxu0 0
    %7537 = vmatprep.subr.bf16.mxu0 0
    %7538 = vmatpush1.bf16.msra.mxu0 0
    %7539 = vmatprep.subr.bf16.mxu0 0
    %7540 = vmatpush1.bf16.msra.mxu0 0
    %7541 = vmatprep.subr.bf16.mxu0 0
    %7542 = vmatpush1.bf16.msra.mxu0 0
    %7543 = vmatprep.subr.bf16.mxu0 0
    %7544 = vmatpush1.bf16.msra.mxu0 0
    %7545 = vmatprep.subr.bf16.mxu0 0
    %7546 = vmatpush1.bf16.msra.mxu0 0
    %7547 = vmatprep.subr.bf16.mxu0 0
    %7548 = vmatpush1.bf16.msra.mxu0 0
    %7549 = vmatprep.subr.bf16.mxu0 0
    %7550 = vmatpush1.bf16.msra.mxu0 0
    %7551 = vmatprep.subr.bf16.mxu0 0
    %7552 = vmatpush1.bf16.msra.mxu0 0
    %7553 = vmatprep.subr.bf16.mxu0 0
    %7554 = vmatpush1.bf16.msra.mxu0 0
    %7555 = vmatprep.subr.bf16.mxu0 0
    %7556 = vmatpush1.bf16.msra.mxu0 0
    %7557 = vmatprep.subr.bf16.mxu0 0
    %7558 = vmatpush1.bf16.msra.mxu0 0
    %7559 = vmatprep.subr.bf16.mxu0 0
    %7560 = vmatpush1.bf16.msra.mxu0 0
    %7561 = vmatprep.mubr.bf16.mxu0 0
    %7562 = vmatmul.mubr.bf16.gmra.mrb[0].mxu0 %v7527
    %v7563 = vpop.f32.mrb[0].mxu0
    %v7564 = vadd.f32 0.0, %v7563
    %v7565 = vpop.f32.mrb[0].mxu0
    %v7566 = vpop.f32.mrb[0].mxu0
    %v7567 = vpop.f32.mrb[0].mxu0
    %7568 = vdwg.mxu0
    %v7569 = vld [vmem:[%s5] sm:$0x1]
    %v7570 = vld [vmem:[%s6] sm:$0x1]
    %v7571 = vsel %vm7467, %v7564, 0.0
    %v7572 = vrot.slane %v7571, 4
    %v7573 = vadd.f32 %v7571, %v7572
    %v7574 = vrot.slane %v7573, 2
    %v7575 = vadd.f32 %v7573, %v7574
    %v7576 = vrot.slane %v7575, 1
    %v7577 = vadd.f32 %v7575, %v7576
    %v7578 = vmul.f32 %v7577, %v7475
    %v7579 = vmul.f32 %v7564, %v7564
    %v7580 = vsel %vm7467, %v7579, 0.0
    %v7581 = vrot.slane %v7580, 4
    %v7582 = vadd.f32 %v7580, %v7581
    %v7583 = vrot.slane %v7582, 2
    %v7584 = vadd.f32 %v7582, %v7583
    %v7585 = vrot.slane %v7584, 1
    %v7586 = vadd.f32 %v7584, %v7585
    %v7587 = vmul.f32 %v7586, %v7475
    %v7588 = vmul.f32 %v7578, %v7578
    %v7589 = vsub.f32 %v7587, %v7588
    %v7590 = vmax.f32 %v7589, 0.0
    %v7591 = vsub.f32 %v7564, %v7578
    %v7592 = vadd.f32 %v7590, 1e-05
    %v7593 = vrsqrt.pop %v7592
    %v7594 = vmul.f32 %v7591, %v7593
    %v7596 = vlaneseq
    %v7597 = vshrl.u32 %v7596, 7
    %v7598 = vsub.s32 0, %v7597
    %v7599 = vrot.slane %v7569, %v7598
    %v7601 = vmul.f32 %v7594, %v7599
    %v7603 = vlaneseq
    %v7604 = vshrl.u32 %v7603, 7
    %v7605 = vsub.s32 0, %v7604
    %v7606 = vrot.slane %v7570, %v7605
    %v7608 = vadd.f32 %v7601, %v7606
    %v7609 = vmax.f32 %v7608, 0.0
    %v7610 = vpack.c.bf16 %v7609, %v7609
    %v7611 = vld [vmem:[%s7] sm:$0xf]
    %v7612 = vld [vmem:[%s7 + $0x4] sm:$0xf]
    %v7613 = vld [vmem:[%s7 + $0x8] sm:$0xf]
    %v7614 = vld [vmem:[%s7 + $0xc] sm:$0xf]
    %v7615 = vld [vmem:[%s8] sm:$0x1]
    %v7617 = vlaneseq
    %v7618 = vshrl.u32 %v7617, 7
    %v7619 = vsub.s32 0, %v7618
    %v7620 = vrot.slane %v7615, %v7619
    %v7626 = vunpack.c.l.b16 %v7611
    %v7627 = vunpack.c.l.b16 %v7612
    %v7628 = vunpack.c.l.b16 %v7613
    %v7629 = vunpack.c.l.b16 %v7614
    %v7630 = vpack.c.b16 %v7627, %v7626
    %v7631 = vpack.c.b16 %v7629, %v7628
    %v7635 = vsel %vm7525, %v7610, 0
    %7637 = vmatprep.subr.bf16.mxu0 0
    %7638 = vmatpush1.bf16.msra.mxu0 %v7630
    %7639 = vmatprep.subr.bf16.mxu0 0
    %7640 = vmatpush1.bf16.msra.mxu0 %v7631
    %7641 = vmatprep.subr.bf16.mxu0 0
    %7642 = vmatpush1.bf16.msra.mxu0 0
    %7643 = vmatprep.subr.bf16.mxu0 0
    %7644 = vmatpush1.bf16.msra.mxu0 0
    %7645 = vmatprep.subr.bf16.mxu0 0
    %7646 = vmatpush1.bf16.msra.mxu0 0
    %7647 = vmatprep.subr.bf16.mxu0 0
    %7648 = vmatpush1.bf16.msra.mxu0 0
    %7649 = vmatprep.subr.bf16.mxu0 0
    %7650 = vmatpush1.bf16.msra.mxu0 0
    %7651 = vmatprep.subr.bf16.mxu0 0
    %7652 = vmatpush1.bf16.msra.mxu0 0
    %7653 = vmatprep.subr.bf16.mxu0 0
    %7654 = vmatpush1.bf16.msra.mxu0 0
    %7655 = vmatprep.subr.bf16.mxu0 0
    %7656 = vmatpush1.bf16.msra.mxu0 0
    %7657 = vmatprep.subr.bf16.mxu0 0
    %7658 = vmatpush1.bf16.msra.mxu0 0
    %7659 = vmatprep.subr.bf16.mxu0 0
    %7660 = vmatpush1.bf16.msra.mxu0 0
    %7661 = vmatprep.subr.bf16.mxu0 0
    %7662 = vmatpush1.bf16.msra.mxu0 0
    %7663 = vmatprep.subr.bf16.mxu0 0
    %7664 = vmatpush1.bf16.msra.mxu0 0
    %7665 = vmatprep.subr.bf16.mxu0 0
    %7666 = vmatpush1.bf16.msra.mxu0 0
    %7667 = vmatprep.subr.bf16.mxu0 0
    %7668 = vmatpush1.bf16.msra.mxu0 0
    %7669 = vmatprep.mubr.bf16.mxu0 0
    %7670 = vmatmul.mubr.bf16.gmra.mrb[0].mxu0 %v7635
    %v7671 = vpop.f32.mrb[0].mxu0
    %v7672 = vadd.f32 %v7620, %v7671
    %v7673 = vpop.f32.mrb[0].mxu0
    %v7674 = vpop.f32.mrb[0].mxu0
    %v7675 = vpop.f32.mrb[0].mxu0
    %7676 = vdwg.mxu0
    %7677 = vst.msk [vmem:[#allocation2] sm:$0x3] %vm7467, %v7672
    // Predicated region
    $region38: #{encoder_forward.13} parent=1 // pred_check
      _
    $region39: #{encoder_forward.13} parent=1 // pred_check_branch
      %7679 = sbr.rel (0) target = $region41
    $region40: #{encoder_forward.13} parent=1 // pred_region
      %s7681 = ssub.s32 32, 32
      %7682 = vsyncadd [#allocation3], %s7681
      %s7684 = sshll.u32 [#allocation2], 4
      %s7685 = int_to_ptr.vmem [resolvable:$true] %s7684
      %7687 = dma.vmem_to_hbm [thread:$0]  %s7685, 32, %s9, [#allocation3]
    $region41: #{encoder_forward.13} parent=1 // pred_fallthru
      _
    // Predicated region
    $region42: #{encoder_forward.13} parent=1 // pred_check
      _
    $region43: #{encoder_forward.13} parent=1 // pred_check_branch
      %7689 = sbr.rel (0) target = $region45
    $region44: #{encoder_forward.13} parent=1 // pred_region
      %7690 = dma.done [#allocation3], 32
    $region45: #{encoder_forward.13} parent=1 // pred_fallthru
      _
    %7691 = vsyncpa [#allocation3], 1

</llo_original>
